<compile_context>
chip_gen: v7x
topology: tpu7x:2x2x1
jax: 0.10.0
libtpu: 0.0.40
codegen_flags: <defaults>
</compile_context>

<pallas_src>
import functools
import math

import jax
import jax.numpy as jnp
from jax import lax
from jax.experimental import pallas as pl
from jax.experimental.pallas import tpu as pltpu

# ----------------------------- configuration (small, consistent with module) --
B = 2                      # batch
IN_H = IN_W = 64           # input mask spatial size -> backbone feats 2x2 -> S = 4
EMB = 128                  # embedding_dim  (must be % 4 == 0 and % NHEAD == 0)
NHEAD = 4
HEAD_DIM = EMB // NHEAD
NLAYERS = 2                # num_decoder_layers
FF = 256                   # dim_feedforward
NPTS = 8                   # num_spline_points
OUT = 3                    # out_dim
HEAD_PAD = 128             # lane-dense padded width of the spline-head output
MAX_FEAT_RES = 64          # max_feat_resolution (pos-encoding max_size)
LN_EPS = 1e-5
NEG_INF = -1e30


# ============================= backbone (plain JAX) ===========================
def conv2d(x, w, stride, padding):
    return lax.conv_general_dilated(
        x, w, window_strides=(stride, stride),
        padding=[(padding, padding), (padding, padding)],
        dimension_numbers=("NCHW", "OIHW", "NCHW"))


def batchnorm(x, gamma, beta, mean, var, eps=1e-5):
    inv = lax.rsqrt(var + eps)
    scale = (gamma * inv)[None, :, None, None]
    shift = (beta - mean * gamma * inv)[None, :, None, None]
    return x * scale + shift


def basic_block(x, p, stride):
    out = conv2d(x, p["conv1"], stride, 1)
    out = batchnorm(out, *p["bn1"])
    out = jax.nn.relu(out)
    out = conv2d(out, p["conv2"], 1, 1)
    out = batchnorm(out, *p["bn2"])
    if "down_conv" in p:
        identity = batchnorm(conv2d(x, p["down_conv"], stride, 0), *p["down_bn"])
    else:
        identity = x
    return jax.nn.relu(out + identity)


def backbone_forward(x, p):
    x = conv2d(x, p["conv1"], 2, 3)          # 1 -> 64, /2
    x = batchnorm(x, *p["bn1"])
    x = jax.nn.relu(x)
    x = lax.reduce_window(x, -jnp.inf, lax.max,                      # maxpool 3x3 s2 p1
                          (1, 1, 3, 3), (1, 1, 2, 2),
                          [(0, 0), (0, 0), (1, 1), (1, 1)])
    for name, stride in (("layer1", 1), ("layer2", 2), ("layer3", 2), ("layer4", 2)):
        blocks = p[name]
        x = basic_block(x, blocks[0], stride)
        x = basic_block(x, blocks[1], 1)
    return x                                 # (B, 512, H/32, W/32)


def init_backbone(key):
    keys = iter(jax.random.split(key, 64))

    def conv_w(o, i, k):
        std = math.sqrt(2.0 / (i * k * k))
        return std * jax.random.normal(next(keys), (o, i, k, k), jnp.float32)

    def bn(c):
        return (jnp.ones((c,), jnp.float32), jnp.zeros((c,), jnp.float32),
                jnp.zeros((c,), jnp.float32), jnp.ones((c,), jnp.float32))

    def block(cin, cout, downsample):
        p = {"conv1": conv_w(cout, cin, 3), "bn1": bn(cout),
             "conv2": conv_w(cout, cout, 3), "bn2": bn(cout)}
        if downsample:
            p["down_conv"] = conv_w(cout, cin, 1)
            p["down_bn"] = bn(cout)
        return p

    return {
        "conv1": conv_w(64, 1, 7), "bn1": bn(64),
        "layer1": [block(64, 64, False), block(64, 64, False)],
        "layer2": [block(64, 128, True), block(128, 128, False)],
        "layer3": [block(128, 256, True), block(256, 256, False)],
        "layer4": [block(256, 512, True), block(512, 512, False)],
    }


# ================= 2-D sin/cos positional encoding (buffer, plain JAX) ========
# Matches SineCosinePositionalEncoding2D: the module builds a flattened
# (max_size*max_size, d_model) table (y = idx // max_size, x = idx % max_size,
# channels [sin x, cos x, sin y, cos y, ...]) and forward() adds pe[:, :s, :]
# -- i.e. the FIRST s rows of that table, which is exactly what we compute here.
def sincos_pe(seq_len, d_model, max_size=MAX_FEAT_RES, temperature=10000.0):
    idx = jnp.arange(seq_len)
    y = (idx // max_size).astype(jnp.float32)
    x = (idx % max_size).astype(jnp.float32)
    dim_t = temperature ** (jnp.arange(d_model // 4, dtype=jnp.float32) / (d_model // 4))
    pe_x = x[:, None] / dim_t
    pe_y = y[:, None] / dim_t
    pe = jnp.zeros((seq_len, d_model), jnp.float32)
    pe = pe.at[:, 0::4].set(jnp.sin(pe_x))
    pe = pe.at[:, 1::4].set(jnp.cos(pe_x))
    pe = pe.at[:, 2::4].set(jnp.sin(pe_y))
    pe = pe.at[:, 3::4].set(jnp.cos(pe_y))
    return pe


# ============================= fused Pallas kernel ============================
def _layer_norm(x, gamma, beta):
    mu = jnp.mean(x, axis=-1, keepdims=True)
    var = jnp.mean((x - mu) ** 2, axis=-1, keepdims=True)
    return (x - mu) * lax.rsqrt(var + LN_EPS) * gamma + beta


# Order of the per-layer (stacked over layers) weight refs in the kernel signature.
LAYER_KEYS = (
    "sa_wqkv", "sa_bqkv", "sa_wo", "sa_bo",
    "ca_wqkv", "ca_bqkv", "ca_wo", "ca_bo",
    "ln1_g", "ln1_b", "ln2_g", "ln2_b", "ln3_g", "ln3_b",
    "ff_w1", "ff_b1", "ff_w2", "ff_b2",
)


def _transformer_kernel(
        feat_ref, proj_w_ref, bias_pe_ref, tgt0_ref, self_bias_ref, cross_bias_ref,
        sa_wqkv_ref, sa_bqkv_ref, sa_wo_ref, sa_bo_ref,
        ca_wqkv_ref, ca_bqkv_ref, ca_wo_ref, ca_bo_ref,
        ln1_g_ref, ln1_b_ref, ln2_g_ref, ln2_b_ref, ln3_g_ref, ln3_b_ref,
        ff_w1_ref, ff_b1_ref, ff_w2_ref, ff_b2_ref,
        head_w_ref, head_b_ref,
        o_ref, *, nhead, nlayers):
    emb = proj_w_ref.shape[1]
    d = emb // nhead
    scale = 1.0 / math.sqrt(d)

    # ---- feature_proj (1x1 conv == per-pixel linear) fused with (bias + 2-D PE) -------
    mem = jnp.dot(feat_ref[...], proj_w_ref[...],
                  preferred_element_type=jnp.float32) + bias_pe_ref[...]   # (B*S, E)

    x = tgt0_ref[...]                 # (B*T, E)  -- query embeddings, batch folded in rows
    self_bias = self_bias_ref[...]    # (B*T, B*T) block-diagonal additive mask
    cross_bias = cross_bias_ref[...]  # (B*T, B*S)

    def mha(q_in, kv_in, wqkv_ref, bqkv_ref, wo_ref, bo_ref, l, bias):
        # Full 128-lane projection matmuls (the MXU-facing work).
        q = jnp.dot(q_in, wqkv_ref[l, :, 0:emb],
                    preferred_element_type=jnp.float32) + bqkv_ref[l, :, 0:emb]
        k = jnp.dot(kv_in, wqkv_ref[l, :, emb:2 * emb],
                    preferred_element_type=jnp.float32) + bqkv_ref[l, :, emb:2 * emb]
        v = jnp.dot(kv_in, wqkv_ref[l, :, 2 * emb:3 * emb],
                    preferred_element_type=jnp.float32) + bqkv_ref[l, :, 2 * emb:3 * emb]
        # Tiny per-head attention core (scores/softmax/PV); heads re-assembled along lanes
        # so the output projection is a single full-width matmul (no VPU accumulation chain).
        heads = []
        for h in range(nhead):
            sl = slice(h * d, (h + 1) * d)
            s = lax.dot_general(q[:, sl], k[:, sl], (((1,), (1,)), ((), ())),
                                preferred_element_type=jnp.float32) * scale + bias
            s = s - jnp.max(s, axis=-1, keepdims=True)
            p = jnp.exp(s)
            p = p / jnp.sum(p, axis=-1, keepdims=True)
            heads.append(jnp.dot(p, v[:, sl], preferred_element_type=jnp.float32))
        o = jnp.concatenate(heads, axis=-1)                               # (rows_q, E)
        return jnp.dot(o, wo_ref[l], preferred_element_type=jnp.float32) + bo_ref[l]

    # ---- post-norm TransformerDecoderLayer stack (PyTorch default, eval: dropout = id) -
    for l in range(nlayers):
        sa = mha(x, x, sa_wqkv_ref, sa_bqkv_ref, sa_wo_ref, sa_bo_ref, l, self_bias)
        x = _layer_norm(x + sa, ln1_g_ref[l], ln1_b_ref[l])
        ca = mha(x, mem, ca_wqkv_ref, ca_bqkv_ref, ca_wo_ref, ca_bo_ref, l, cross_bias)
        x = _layer_norm(x + ca, ln2_g_ref[l], ln2_b_ref[l])
        hid = jnp.maximum(
            jnp.dot(x, ff_w1_ref[l], preferred_element_type=jnp.float32) + ff_b1_ref[l],
            0.0)
        ff = jnp.dot(hid, ff_w2_ref[l], preferred_element_type=jnp.float32) + ff_b2_ref[l]
        x = _layer_norm(x + ff, ln3_g_ref[l], ln3_b_ref[l])

    # ---- spline_head fused in; output padded to 128 lanes for a lane-dense store -------
    o_ref[...] = (jnp.dot(x, head_w_ref[...], preferred_element_type=jnp.float32)
                  + head_b_ref[...]).astype(o_ref.dtype)


def fused_transformer_call(feat2d, params, bias_pe, tgt0, self_bias, cross_bias):
    layer_args = [params["layers"][k] for k in LAYER_KEYS]
    head_w_pad = jnp.pad(params["head_w"], ((0, 0), (0, HEAD_PAD - OUT)))
    head_b_pad = jnp.pad(params["head_b"], ((0, 0), (0, HEAD_PAD - OUT)))
    args = [feat2d, params["proj_w"], bias_pe, tgt0, self_bias, cross_bias,
            *layer_args, head_w_pad, head_b_pad]
    rows = tgt0.shape[0]
    vmem = pltpu.MemorySpace.VMEM
    return pl.pallas_call(
        functools.partial(_transformer_kernel, nhead=NHEAD, nlayers=NLAYERS),
        out_shape=jax.ShapeDtypeStruct((rows, HEAD_PAD), jnp.float32),
        in_specs=[pl.BlockSpec(memory_space=vmem) for _ in args],   # all weights resident
        out_specs=pl.BlockSpec(memory_space=vmem),
    )(*args)


# ============================= parameter init =================================
def init_decoder_layers(key, nlayers):
    # NOTE: qkv weights packed as (EMB, 3*EMB) columns [q|k|v]; this is in_proj_weight.T
    # of PyTorch's MultiheadAttention -- real checkpoints would need a transpose/permute.
    def one(k):
        ks = iter(jax.random.split(k, 8))
        s_attn = 1.0 / math.sqrt(EMB)

        def nrm(shape, scale):
            return scale * jax.random.normal(next(ks), shape, jnp.float32)

        p = {}
        for pre in ("sa", "ca"):
            p[f"{pre}_wqkv"] = nrm((EMB, 3 * EMB), s_attn)
            p[f"{pre}_bqkv"] = jnp.zeros((1, 3 * EMB), jnp.float32)
            p[f"{pre}_wo"] = nrm((EMB, EMB), s_attn)
            p[f"{pre}_bo"] = jnp.zeros((1, EMB), jnp.float32)
        for i in (1, 2, 3):
            p[f"ln{i}_g"] = jnp.ones((1, EMB), jnp.float32)
            p[f"ln{i}_b"] = jnp.zeros((1, EMB), jnp.float32)
        p["ff_w1"] = nrm((EMB, FF), 1.0 / math.sqrt(EMB))
        p["ff_b1"] = jnp.zeros((1, FF), jnp.float32)
        p["ff_w2"] = nrm((FF, EMB), 1.0 / math.sqrt(FF))
        p["ff_b2"] = jnp.zeros((1, EMB), jnp.float32)
        return p

    per = [one(k) for k in jax.random.split(key, nlayers)]
    return {name: jnp.stack([p[name] for p in per]) for name in per[0]}


def init_params(key):
    k_bb, k_proj, k_dec, k_q, k_head = jax.random.split(key, 5)
    a = math.sqrt(6.0 / (EMB + OUT))  # xavier_uniform for spline_head
    return {
        "backbone": init_backbone(k_bb),
        "proj_w": (1.0 / math.sqrt(512.0)) *
                  jax.random.normal(k_proj, (512, EMB), jnp.float32),
        "proj_b": jnp.zeros((1, EMB), jnp.float32),
        "layers": init_decoder_layers(k_dec, NLAYERS),
        "query_embed": 0.02 * jax.random.normal(k_q, (NPTS, EMB), jnp.float32),
        "head_w": jax.random.uniform(k_head, (EMB, OUT), jnp.float32, -a, a),
        "head_b": jnp.zeros((1, OUT), jnp.float32),
    }


# ============================= full forward ===================================
def spline_point_transformer_forward(mask, params):
    b = mask.shape[0]
    feats = backbone_forward(mask, params["backbone"])        # (B, 512, h, w)
    _, C, h, w = feats.shape
    S = h * w

    # NCHW -> (B*S, C) per-pixel rows (== feats.flatten(2).transpose(1, 2))
    feat2d = feats.reshape(b, C, S).transpose(0, 2, 1).reshape(b * S, C)

    # constant additive term: 1x1-conv bias + 2-D sin/cos positional encoding
    pe = sincos_pe(S, EMB)                                    # (S, EMB)
    bias_pe = jnp.tile(pe + params["proj_b"], (b, 1))         # (B*S, EMB)

    # query embeddings with batch folded into rows
    tgt0 = jnp.tile(params["query_embed"], (b, 1))            # (B*T, EMB)

    # block-diagonal additive attention masks (each query attends only inside its batch)
    qb = jnp.repeat(jnp.arange(b), NPTS)                      # (B*T,)
    kb = jnp.repeat(jnp.arange(b), S)                         # (B*S,)
    self_bias = jnp.where(qb[:, None] == qb[None, :], 0.0, NEG_INF).astype(jnp.float32)
    cross_bias = jnp.where(qb[:, None] == kb[None, :], 0.0, NEG_INF).astype(jnp.float32)

    out_pad = fused_transformer_call(feat2d, params, bias_pe, tgt0,
                                     self_bias, cross_bias)   # (B*T, 128)
    return out_pad[:, :OUT].reshape(b, NPTS, OUT)


# ============================= main ==========================================
if __name__ == "__main__":
    key = jax.random.PRNGKey(0)
    k_params, k_in = jax.random.split(key, 2)
    params = init_params(k_params)
    mask = jax.random.normal(k_in, (B, 1, IN_H, IN_W), jnp.float32)

    fwd = jax.jit(lambda m: spline_point_transformer_forward(m, params))
    out = jax.block_until_ready(fwd(mask))

    assert out.shape == (B, NPTS, OUT), out.shape
    assert bool(jnp.all(jnp.isfinite(out)))
    print("KERNEL_OK")
</pallas_src>

<mosaic_0001>
module attributes {stable_mosaic.version = 11 : i64} {
  func.func @_transformer_kernel(%arg0: memref<8x512xf32, #tpu.memory_space<vmem>>, %arg1: memref<512x128xf32, #tpu.memory_space<vmem>>, %arg2: memref<8x128xf32, #tpu.memory_space<vmem>>, %arg3: memref<16x128xf32, #tpu.memory_space<vmem>>, %arg4: memref<16x16xf32, #tpu.memory_space<vmem>>, %arg5: memref<16x8xf32, #tpu.memory_space<vmem>>, %arg6: memref<2x128x384xf32, #tpu.memory_space<vmem>>, %arg7: memref<2x1x384xf32, #tpu.memory_space<vmem>>, %arg8: memref<2x128x128xf32, #tpu.memory_space<vmem>>, %arg9: memref<2x1x128xf32, #tpu.memory_space<vmem>>, %arg10: memref<2x128x384xf32, #tpu.memory_space<vmem>>, %arg11: memref<2x1x384xf32, #tpu.memory_space<vmem>>, %arg12: memref<2x128x128xf32, #tpu.memory_space<vmem>>, %arg13: memref<2x1x128xf32, #tpu.memory_space<vmem>>, %arg14: memref<2x1x128xf32, #tpu.memory_space<vmem>>, %arg15: memref<2x1x128xf32, #tpu.memory_space<vmem>>, %arg16: memref<2x1x128xf32, #tpu.memory_space<vmem>>, %arg17: memref<2x1x128xf32, #tpu.memory_space<vmem>>, %arg18: memref<2x1x128xf32, #tpu.memory_space<vmem>>, %arg19: memref<2x1x128xf32, #tpu.memory_space<vmem>>, %arg20: memref<2x128x256xf32, #tpu.memory_space<vmem>>, %arg21: memref<2x1x256xf32, #tpu.memory_space<vmem>>, %arg22: memref<2x256x128xf32, #tpu.memory_space<vmem>>, %arg23: memref<2x1x128xf32, #tpu.memory_space<vmem>>, %arg24: memref<128x128xf32, #tpu.memory_space<vmem>>, %arg25: memref<1x128xf32, #tpu.memory_space<vmem>>, %arg26: memref<16x128xf32, #tpu.memory_space<vmem>>) attributes {dimension_semantics = [], scalar_prefetch = 0 : i64, scratch_operands = 0 : i64, tpu.core_type = #tpu.core_type<tc>} {
    %c0 = arith.constant 0 : index
    %c0_0 = arith.constant 0 : index
    %0 = vector.load %arg0[%c0, %c0_0] : memref<8x512xf32, #tpu.memory_space<vmem>>, vector<8x512xf32>
    %c0_1 = arith.constant 0 : index
    %c0_2 = arith.constant 0 : index
    %1 = vector.load %arg1[%c0_1, %c0_2] : memref<512x128xf32, #tpu.memory_space<vmem>>, vector<512x128xf32>
    %cst = arith.constant dense<0.000000e+00> : vector<8x128xf32>
    %2 = tpu.matmul %0, %1, %cst {dimension_numbers = #tpu.dot_dimension_numbers<[1], [0], [0], [1], [0, 0, 1, 1], [], []>} : vector<8x512xf32>, vector<512x128xf32>, vector<8x128xf32> -> vector<8x128xf32>
    %c0_3 = arith.constant 0 : index
    %c0_4 = arith.constant 0 : index
    %3 = vector.load %arg2[%c0_3, %c0_4] : memref<8x128xf32, #tpu.memory_space<vmem>>, vector<8x128xf32>
    %4 = arith.addf %2, %3 : vector<8x128xf32>
    %c0_5 = arith.constant 0 : index
    %c0_6 = arith.constant 0 : index
    %5 = vector.load %arg3[%c0_5, %c0_6] : memref<16x128xf32, #tpu.memory_space<vmem>>, vector<16x128xf32>
    %c0_7 = arith.constant 0 : index
    %c0_8 = arith.constant 0 : index
    %6 = vector.load %arg4[%c0_7, %c0_8] : memref<16x16xf32, #tpu.memory_space<vmem>>, vector<16x16xf32>
    %c0_9 = arith.constant 0 : index
    %c0_10 = arith.constant 0 : index
    %7 = vector.load %arg5[%c0_9, %c0_10] : memref<16x8xf32, #tpu.memory_space<vmem>>, vector<16x8xf32>
    %c0_11 = arith.constant 0 : index
    %c0_12 = arith.constant 0 : index
    %c0_13 = arith.constant 0 : index
    %8 = vector.load %arg6[%c0_11, %c0_12, %c0_13] : memref<2x128x384xf32, #tpu.memory_space<vmem>>, vector<1x128x128xf32>
    %9 = vector.shape_cast %8 : vector<1x128x128xf32> to vector<128x128xf32>
    %cst_14 = arith.constant dense<0.000000e+00> : vector<16x128xf32>
    %10 = tpu.matmul %5, %9, %cst_14 {dimension_numbers = #tpu.dot_dimension_numbers<[1], [0], [0], [1], [0, 0, 1, 1], [], []>} : vector<16x128xf32>, vector<128x128xf32>, vector<16x128xf32> -> vector<16x128xf32>
    %c0_15 = arith.constant 0 : index
    %c0_16 = arith.constant 0 : index
    %c0_17 = arith.constant 0 : index
    %11 = vector.load %arg7[%c0_15, %c0_16, %c0_17] : memref<2x1x384xf32, #tpu.memory_space<vmem>>, vector<1x1x128xf32>
    %12 = vector.shape_cast %11 : vector<1x1x128xf32> to vector<1x128xf32>
    %13 = vector.broadcast %12 : vector<1x128xf32> to vector<16x128xf32>
    %14 = arith.addf %10, %13 : vector<16x128xf32>
    %c0_18 = arith.constant 0 : index
    %c0_19 = arith.constant 0 : index
    %c128 = arith.constant 128 : index
    %15 = vector.load %arg6[%c0_18, %c0_19, %c128] : memref<2x128x384xf32, #tpu.memory_space<vmem>>, vector<1x128x128xf32>
    %16 = vector.shape_cast %15 : vector<1x128x128xf32> to vector<128x128xf32>
    %cst_20 = arith.constant dense<0.000000e+00> : vector<16x128xf32>
    %17 = tpu.matmul %5, %16, %cst_20 {dimension_numbers = #tpu.dot_dimension_numbers<[1], [0], [0], [1], [0, 0, 1, 1], [], []>} : vector<16x128xf32>, vector<128x128xf32>, vector<16x128xf32> -> vector<16x128xf32>
    %c0_21 = arith.constant 0 : index
    %c0_22 = arith.constant 0 : index
    %c128_23 = arith.constant 128 : index
    %18 = vector.load %arg7[%c0_21, %c0_22, %c128_23] : memref<2x1x384xf32, #tpu.memory_space<vmem>>, vector<1x1x128xf32>
    %19 = vector.shape_cast %18 : vector<1x1x128xf32> to vector<1x128xf32>
    %20 = vector.broadcast %19 : vector<1x128xf32> to vector<16x128xf32>
    %21 = arith.addf %17, %20 : vector<16x128xf32>
    %c0_24 = arith.constant 0 : index
    %c0_25 = arith.constant 0 : index
    %c256 = arith.constant 256 : index
    %22 = vector.load %arg6[%c0_24, %c0_25, %c256] : memref<2x128x384xf32, #tpu.memory_space<vmem>>, vector<1x128x128xf32>
    %23 = vector.shape_cast %22 : vector<1x128x128xf32> to vector<128x128xf32>
    %cst_26 = arith.constant dense<0.000000e+00> : vector<16x128xf32>
    %24 = tpu.matmul %5, %23, %cst_26 {dimension_numbers = #tpu.dot_dimension_numbers<[1], [0], [0], [1], [0, 0, 1, 1], [], []>} : vector<16x128xf32>, vector<128x128xf32>, vector<16x128xf32> -> vector<16x128xf32>
    %c0_27 = arith.constant 0 : index
    %c0_28 = arith.constant 0 : index
    %c256_29 = arith.constant 256 : index
    %25 = vector.load %arg7[%c0_27, %c0_28, %c256_29] : memref<2x1x384xf32, #tpu.memory_space<vmem>>, vector<1x1x128xf32>
    %26 = vector.shape_cast %25 : vector<1x1x128xf32> to vector<1x128xf32>
    %27 = vector.broadcast %26 : vector<1x128xf32> to vector<16x128xf32>
    %28 = arith.addf %24, %27 : vector<16x128xf32>
    %29 = vector.extract_strided_slice %14 {offsets = [0, 0], sizes = [16, 32], strides = [1, 1]} : vector<16x128xf32> to vector<16x32xf32>
    %30 = vector.extract_strided_slice %21 {offsets = [0, 0], sizes = [16, 32], strides = [1, 1]} : vector<16x128xf32> to vector<16x32xf32>
    %cst_30 = arith.constant dense<0.000000e+00> : vector<16x16xf32>
    %31 = tpu.matmul %29, %30, %cst_30 {dimension_numbers = #tpu.dot_dimension_numbers<[1], [1], [0], [0], [0, 0, 1, 0], [], []>} : vector<16x32xf32>, vector<16x32xf32>, vector<16x16xf32> -> vector<16x16xf32>
    %cst_31 = arith.constant 0.176776692 : f32
    %32 = vector.broadcast %cst_31 : f32 to vector<16x16xf32>
    %33 = arith.mulf %31, %32 : vector<16x16xf32>
    %34 = arith.addf %33, %6 : vector<16x16xf32>
    %cst_32 = arith.constant dense<0xFF800000> : vector<16xf32>
    %35 = vector.multi_reduction <maximumf>, %34, %cst_32 [1] : vector<16x16xf32> to vector<16xf32>
    %36 = vector.shape_cast %35 : vector<16xf32> to vector<16x1xf32>
    %37 = vector.broadcast %36 : vector<16x1xf32> to vector<16x16xf32>
    %38 = arith.subf %34, %37 : vector<16x16xf32>
    %39 = math.exp %38 : vector<16x16xf32>
    %cst_33 = arith.constant dense<0.000000e+00> : vector<16xf32>
    %40 = vector.multi_reduction <add>, %39, %cst_33 [1] : vector<16x16xf32> to vector<16xf32>
    %41 = vector.shape_cast %40 : vector<16xf32> to vector<16x1xf32>
    %42 = vector.broadcast %41 : vector<16x1xf32> to vector<16x16xf32>
    %43 = arith.divf %39, %42 : vector<16x16xf32>
    %44 = vector.extract_strided_slice %28 {offsets = [0, 0], sizes = [16, 32], strides = [1, 1]} : vector<16x128xf32> to vector<16x32xf32>
    %cst_34 = arith.constant dense<0.000000e+00> : vector<16x32xf32>
    %45 = tpu.matmul %43, %44, %cst_34 {dimension_numbers = #tpu.dot_dimension_numbers<[1], [0], [0], [1], [0, 0, 1, 1], [], []>} : vector<16x16xf32>, vector<16x32xf32>, vector<16x32xf32> -> vector<16x32xf32>
    %46 = vector.extract_strided_slice %14 {offsets = [0, 32], sizes = [16, 32], strides = [1, 1]} : vector<16x128xf32> to vector<16x32xf32>
    %47 = vector.extract_strided_slice %21 {offsets = [0, 32], sizes = [16, 32], strides = [1, 1]} : vector<16x128xf32> to vector<16x32xf32>
    %cst_35 = arith.constant dense<0.000000e+00> : vector<16x16xf32>
    %48 = tpu.matmul %46, %47, %cst_35 {dimension_numbers = #tpu.dot_dimension_numbers<[1], [1], [0], [0], [0, 0, 1, 0], [], []>} : vector<16x32xf32>, vector<16x32xf32>, vector<16x16xf32> -> vector<16x16xf32>
    %cst_36 = arith.constant 0.176776692 : f32
    %49 = vector.broadcast %cst_36 : f32 to vector<16x16xf32>
    %50 = arith.mulf %48, %49 : vector<16x16xf32>
    %51 = arith.addf %50, %6 : vector<16x16xf32>
    %cst_37 = arith.constant dense<0xFF800000> : vector<16xf32>
    %52 = vector.multi_reduction <maximumf>, %51, %cst_37 [1] : vector<16x16xf32> to vector<16xf32>
    %53 = vector.shape_cast %52 : vector<16xf32> to vector<16x1xf32>
    %54 = vector.broadcast %53 : vector<16x1xf32> to vector<16x16xf32>
    %55 = arith.subf %51, %54 : vector<16x16xf32>
    %56 = math.exp %55 : vector<16x16xf32>
    %cst_38 = arith.constant dense<0.000000e+00> : vector<16xf32>
    %57 = vector.multi_reduction <add>, %56, %cst_38 [1] : vector<16x16xf32> to vector<16xf32>
    %58 = vector.shape_cast %57 : vector<16xf32> to vector<16x1xf32>
    %59 = vector.broadcast %58 : vector<16x1xf32> to vector<16x16xf32>
    %60 = arith.divf %56, %59 : vector<16x16xf32>
    %61 = vector.extract_strided_slice %28 {offsets = [0, 32], sizes = [16, 32], strides = [1, 1]} : vector<16x128xf32> to vector<16x32xf32>
    %cst_39 = arith.constant dense<0.000000e+00> : vector<16x32xf32>
    %62 = tpu.matmul %60, %61, %cst_39 {dimension_numbers = #tpu.dot_dimension_numbers<[1], [0], [0], [1], [0, 0, 1, 1], [], []>} : vector<16x16xf32>, vector<16x32xf32>, vector<16x32xf32> -> vector<16x32xf32>
    %63 = vector.extract_strided_slice %14 {offsets = [0, 64], sizes = [16, 32], strides = [1, 1]} : vector<16x128xf32> to vector<16x32xf32>
    %64 = vector.extract_strided_slice %21 {offsets = [0, 64], sizes = [16, 32], strides = [1, 1]} : vector<16x128xf32> to vector<16x32xf32>
    %cst_40 = arith.constant dense<0.000000e+00> : vector<16x16xf32>
    %65 = tpu.matmul %63, %64, %cst_40 {dimension_numbers = #tpu.dot_dimension_numbers<[1], [1], [0], [0], [0, 0, 1, 0], [], []>} : vector<16x32xf32>, vector<16x32xf32>, vector<16x16xf32> -> vector<16x16xf32>
    %cst_41 = arith.constant 0.176776692 : f32
    %66 = vector.broadcast %cst_41 : f32 to vector<16x16xf32>
    %67 = arith.mulf %65, %66 : vector<16x16xf32>
    %68 = arith.addf %67, %6 : vector<16x16xf32>
    %cst_42 = arith.constant dense<0xFF800000> : vector<16xf32>
    %69 = vector.multi_reduction <maximumf>, %68, %cst_42 [1] : vector<16x16xf32> to vector<16xf32>
    %70 = vector.shape_cast %69 : vector<16xf32> to vector<16x1xf32>
    %71 = vector.broadcast %70 : vector<16x1xf32> to vector<16x16xf32>
    %72 = arith.subf %68, %71 : vector<16x16xf32>
    %73 = math.exp %72 : vector<16x16xf32>
    %cst_43 = arith.constant dense<0.000000e+00> : vector<16xf32>
    %74 = vector.multi_reduction <add>, %73, %cst_43 [1] : vector<16x16xf32> to vector<16xf32>
    %75 = vector.shape_cast %74 : vector<16xf32> to vector<16x1xf32>
    %76 = vector.broadcast %75 : vector<16x1xf32> to vector<16x16xf32>
    %77 = arith.divf %73, %76 : vector<16x16xf32>
    %78 = vector.extract_strided_slice %28 {offsets = [0, 64], sizes = [16, 32], strides = [1, 1]} : vector<16x128xf32> to vector<16x32xf32>
    %cst_44 = arith.constant dense<0.000000e+00> : vector<16x32xf32>
    %79 = tpu.matmul %77, %78, %cst_44 {dimension_numbers = #tpu.dot_dimension_numbers<[1], [0], [0], [1], [0, 0, 1, 1], [], []>} : vector<16x16xf32>, vector<16x32xf32>, vector<16x32xf32> -> vector<16x32xf32>
    %80 = vector.extract_strided_slice %14 {offsets = [0, 96], sizes = [16, 32], strides = [1, 1]} : vector<16x128xf32> to vector<16x32xf32>
    %81 = vector.extract_strided_slice %21 {offsets = [0, 96], sizes = [16, 32], strides = [1, 1]} : vector<16x128xf32> to vector<16x32xf32>
    %cst_45 = arith.constant dense<0.000000e+00> : vector<16x16xf32>
    %82 = tpu.matmul %80, %81, %cst_45 {dimension_numbers = #tpu.dot_dimension_numbers<[1], [1], [0], [0], [0, 0, 1, 0], [], []>} : vector<16x32xf32>, vector<16x32xf32>, vector<16x16xf32> -> vector<16x16xf32>
    %cst_46 = arith.constant 0.176776692 : f32
    %83 = vector.broadcast %cst_46 : f32 to vector<16x16xf32>
    %84 = arith.mulf %82, %83 : vector<16x16xf32>
    %85 = arith.addf %84, %6 : vector<16x16xf32>
    %cst_47 = arith.constant dense<0xFF800000> : vector<16xf32>
    %86 = vector.multi_reduction <maximumf>, %85, %cst_47 [1] : vector<16x16xf32> to vector<16xf32>
    %87 = vector.shape_cast %86 : vector<16xf32> to vector<16x1xf32>
    %88 = vector.broadcast %87 : vector<16x1xf32> to vector<16x16xf32>
    %89 = arith.subf %85, %88 : vector<16x16xf32>
    %90 = math.exp %89 : vector<16x16xf32>
    %cst_48 = arith.constant dense<0.000000e+00> : vector<16xf32>
    %91 = vector.multi_reduction <add>, %90, %cst_48 [1] : vector<16x16xf32> to vector<16xf32>
    %92 = vector.shape_cast %91 : vector<16xf32> to vector<16x1xf32>
    %93 = vector.broadcast %92 : vector<16x1xf32> to vector<16x16xf32>
    %94 = arith.divf %90, %93 : vector<16x16xf32>
    %95 = vector.extract_strided_slice %28 {offsets = [0, 96], sizes = [16, 32], strides = [1, 1]} : vector<16x128xf32> to vector<16x32xf32>
    %cst_49 = arith.constant dense<0.000000e+00> : vector<16x32xf32>
    %96 = tpu.matmul %94, %95, %cst_49 {dimension_numbers = #tpu.dot_dimension_numbers<[1], [0], [0], [1], [0, 0, 1, 1], [], []>} : vector<16x16xf32>, vector<16x32xf32>, vector<16x32xf32> -> vector<16x32xf32>
    %97 = tpu.concatenate %45, %62, %79, %96 in 1 : vector<16x32xf32>, vector<16x32xf32>, vector<16x32xf32>, vector<16x32xf32> -> vector<16x128xf32>
    %c0_50 = arith.constant 0 : index
    %c0_51 = arith.constant 0 : index
    %c0_52 = arith.constant 0 : index
    %98 = vector.load %arg8[%c0_50, %c0_51, %c0_52] : memref<2x128x128xf32, #tpu.memory_space<vmem>>, vector<1x128x128xf32>
    %99 = vector.shape_cast %98 : vector<1x128x128xf32> to vector<128x128xf32>
    %cst_53 = arith.constant dense<0.000000e+00> : vector<16x128xf32>
    %100 = tpu.matmul %97, %99, %cst_53 {dimension_numbers = #tpu.dot_dimension_numbers<[1], [0], [0], [1], [0, 0, 1, 1], [], []>} : vector<16x128xf32>, vector<128x128xf32>, vector<16x128xf32> -> vector<16x128xf32>
    %c0_54 = arith.constant 0 : index
    %c0_55 = arith.constant 0 : index
    %c0_56 = arith.constant 0 : index
    %101 = vector.load %arg9[%c0_54, %c0_55, %c0_56] : memref<2x1x128xf32, #tpu.memory_space<vmem>>, vector<1x1x128xf32>
    %102 = vector.shape_cast %101 : vector<1x1x128xf32> to vector<1x128xf32>
    %103 = vector.broadcast %102 : vector<1x128xf32> to vector<16x128xf32>
    %104 = arith.addf %100, %103 : vector<16x128xf32>
    %105 = arith.addf %5, %104 : vector<16x128xf32>
    %c0_57 = arith.constant 0 : index
    %c0_58 = arith.constant 0 : index
    %c0_59 = arith.constant 0 : index
    %106 = vector.load %arg14[%c0_57, %c0_58, %c0_59] : memref<2x1x128xf32, #tpu.memory_space<vmem>>, vector<1x1x128xf32>
    %107 = vector.shape_cast %106 : vector<1x1x128xf32> to vector<1x128xf32>
    %c0_60 = arith.constant 0 : index
    %c0_61 = arith.constant 0 : index
    %c0_62 = arith.constant 0 : index
    %108 = vector.load %arg15[%c0_60, %c0_61, %c0_62] : memref<2x1x128xf32, #tpu.memory_space<vmem>>, vector<1x1x128xf32>
    %109 = vector.shape_cast %108 : vector<1x1x128xf32> to vector<1x128xf32>
    %cst_63 = arith.constant dense<0.000000e+00> : vector<16xf32>
    %110 = vector.multi_reduction <add>, %105, %cst_63 [1] : vector<16x128xf32> to vector<16xf32>
    %111 = vector.shape_cast %110 : vector<16xf32> to vector<16x1xf32>
    %cst_64 = arith.constant 1.280000e+02 : f32
    %112 = vector.broadcast %cst_64 : f32 to vector<16x1xf32>
    %113 = arith.divf %111, %112 : vector<16x1xf32>
    %114 = vector.broadcast %113 : vector<16x1xf32> to vector<16x128xf32>
    %115 = arith.subf %105, %114 : vector<16x128xf32>
    %116 = arith.mulf %115, %115 : vector<16x128xf32>
    %cst_65 = arith.constant dense<0.000000e+00> : vector<16xf32>
    %117 = vector.multi_reduction <add>, %116, %cst_65 [1] : vector<16x128xf32> to vector<16xf32>
    %118 = vector.shape_cast %117 : vector<16xf32> to vector<16x1xf32>
    %cst_66 = arith.constant 1.280000e+02 : f32
    %119 = vector.broadcast %cst_66 : f32 to vector<16x1xf32>
    %120 = arith.divf %118, %119 : vector<16x1xf32>
    %121 = vector.broadcast %113 : vector<16x1xf32> to vector<16x128xf32>
    %122 = arith.subf %105, %121 : vector<16x128xf32>
    %cst_67 = arith.constant 9.99999974E-6 : f32
    %123 = vector.broadcast %cst_67 : f32 to vector<16x1xf32>
    %124 = arith.addf %120, %123 : vector<16x1xf32>
    %125 = math.rsqrt %124 : vector<16x1xf32>
    %126 = vector.broadcast %125 : vector<16x1xf32> to vector<16x128xf32>
    %127 = arith.mulf %122, %126 : vector<16x128xf32>
    %128 = vector.broadcast %107 : vector<1x128xf32> to vector<16x128xf32>
    %129 = arith.mulf %127, %128 : vector<16x128xf32>
    %130 = vector.broadcast %109 : vector<1x128xf32> to vector<16x128xf32>
    %131 = arith.addf %129, %130 : vector<16x128xf32>
    %c0_68 = arith.constant 0 : index
    %c0_69 = arith.constant 0 : index
    %c0_70 = arith.constant 0 : index
    %132 = vector.load %arg10[%c0_68, %c0_69, %c0_70] : memref<2x128x384xf32, #tpu.memory_space<vmem>>, vector<1x128x128xf32>
    %133 = vector.shape_cast %132 : vector<1x128x128xf32> to vector<128x128xf32>
    %cst_71 = arith.constant dense<0.000000e+00> : vector<16x128xf32>
    %134 = tpu.matmul %131, %133, %cst_71 {dimension_numbers = #tpu.dot_dimension_numbers<[1], [0], [0], [1], [0, 0, 1, 1], [], []>} : vector<16x128xf32>, vector<128x128xf32>, vector<16x128xf32> -> vector<16x128xf32>
    %c0_72 = arith.constant 0 : index
    %c0_73 = arith.constant 0 : index
    %c0_74 = arith.constant 0 : index
    %135 = vector.load %arg11[%c0_72, %c0_73, %c0_74] : memref<2x1x384xf32, #tpu.memory_space<vmem>>, vector<1x1x128xf32>
    %136 = vector.shape_cast %135 : vector<1x1x128xf32> to vector<1x128xf32>
    %137 = vector.broadcast %136 : vector<1x128xf32> to vector<16x128xf32>
    %138 = arith.addf %134, %137 : vector<16x128xf32>
    %c0_75 = arith.constant 0 : index
    %c0_76 = arith.constant 0 : index
    %c128_77 = arith.constant 128 : index
    %139 = vector.load %arg10[%c0_75, %c0_76, %c128_77] : memref<2x128x384xf32, #tpu.memory_space<vmem>>, vector<1x128x128xf32>
    %140 = vector.shape_cast %139 : vector<1x128x128xf32> to vector<128x128xf32>
    %cst_78 = arith.constant dense<0.000000e+00> : vector<8x128xf32>
    %141 = tpu.matmul %4, %140, %cst_78 {dimension_numbers = #tpu.dot_dimension_numbers<[1], [0], [0], [1], [0, 0, 1, 1], [], []>} : vector<8x128xf32>, vector<128x128xf32>, vector<8x128xf32> -> vector<8x128xf32>
    %c0_79 = arith.constant 0 : index
    %c0_80 = arith.constant 0 : index
    %c128_81 = arith.constant 128 : index
    %142 = vector.load %arg11[%c0_79, %c0_80, %c128_81] : memref<2x1x384xf32, #tpu.memory_space<vmem>>, vector<1x1x128xf32>
    %143 = vector.shape_cast %142 : vector<1x1x128xf32> to vector<1x128xf32>
    %144 = vector.broadcast %143 : vector<1x128xf32> to vector<8x128xf32>
    %145 = arith.addf %141, %144 : vector<8x128xf32>
    %c0_82 = arith.constant 0 : index
    %c0_83 = arith.constant 0 : index
    %c256_84 = arith.constant 256 : index
    %146 = vector.load %arg10[%c0_82, %c0_83, %c256_84] : memref<2x128x384xf32, #tpu.memory_space<vmem>>, vector<1x128x128xf32>
    %147 = vector.shape_cast %146 : vector<1x128x128xf32> to vector<128x128xf32>
    %cst_85 = arith.constant dense<0.000000e+00> : vector<8x128xf32>
    %148 = tpu.matmul %4, %147, %cst_85 {dimension_numbers = #tpu.dot_dimension_numbers<[1], [0], [0], [1], [0, 0, 1, 1], [], []>} : vector<8x128xf32>, vector<128x128xf32>, vector<8x128xf32> -> vector<8x128xf32>
    %c0_86 = arith.constant 0 : index
    %c0_87 = arith.constant 0 : index
    %c256_88 = arith.constant 256 : index
    %149 = vector.load %arg11[%c0_86, %c0_87, %c256_88] : memref<2x1x384xf32, #tpu.memory_space<vmem>>, vector<1x1x128xf32>
    %150 = vector.shape_cast %149 : vector<1x1x128xf32> to vector<1x128xf32>
    %151 = vector.broadcast %150 : vector<1x128xf32> to vector<8x128xf32>
    %152 = arith.addf %148, %151 : vector<8x128xf32>
    %153 = vector.extract_strided_slice %138 {offsets = [0, 0], sizes = [16, 32], strides = [1, 1]} : vector<16x128xf32> to vector<16x32xf32>
    %154 = vector.extract_strided_slice %145 {offsets = [0, 0], sizes = [8, 32], strides = [1, 1]} : vector<8x128xf32> to vector<8x32xf32>
    %cst_89 = arith.constant dense<0.000000e+00> : vector<16x8xf32>
    %155 = tpu.matmul %153, %154, %cst_89 {dimension_numbers = #tpu.dot_dimension_numbers<[1], [1], [0], [0], [0, 0, 1, 0], [], []>} : vector<16x32xf32>, vector<8x32xf32>, vector<16x8xf32> -> vector<16x8xf32>
    %cst_90 = arith.constant 0.176776692 : f32
    %156 = vector.broadcast %cst_90 : f32 to vector<16x8xf32>
    %157 = arith.mulf %155, %156 : vector<16x8xf32>
    %158 = arith.addf %157, %7 : vector<16x8xf32>
    %cst_91 = arith.constant dense<0xFF800000> : vector<16xf32>
    %159 = vector.multi_reduction <maximumf>, %158, %cst_91 [1] : vector<16x8xf32> to vector<16xf32>
    %160 = vector.shape_cast %159 : vector<16xf32> to vector<16x1xf32>
    %161 = vector.broadcast %160 : vector<16x1xf32> to vector<16x8xf32>
    %162 = arith.subf %158, %161 : vector<16x8xf32>
    %163 = math.exp %162 : vector<16x8xf32>
    %cst_92 = arith.constant dense<0.000000e+00> : vector<16xf32>
    %164 = vector.multi_reduction <add>, %163, %cst_92 [1] : vector<16x8xf32> to vector<16xf32>
    %165 = vector.shape_cast %164 : vector<16xf32> to vector<16x1xf32>
    %166 = vector.broadcast %165 : vector<16x1xf32> to vector<16x8xf32>
    %167 = arith.divf %163, %166 : vector<16x8xf32>
    %168 = vector.extract_strided_slice %152 {offsets = [0, 0], sizes = [8, 32], strides = [1, 1]} : vector<8x128xf32> to vector<8x32xf32>
    %cst_93 = arith.constant dense<0.000000e+00> : vector<16x32xf32>
    %169 = tpu.matmul %167, %168, %cst_93 {dimension_numbers = #tpu.dot_dimension_numbers<[1], [0], [0], [1], [0, 0, 1, 1], [], []>} : vector<16x8xf32>, vector<8x32xf32>, vector<16x32xf32> -> vector<16x32xf32>
    %170 = vector.extract_strided_slice %138 {offsets = [0, 32], sizes = [16, 32], strides = [1, 1]} : vector<16x128xf32> to vector<16x32xf32>
    %171 = vector.extract_strided_slice %145 {offsets = [0, 32], sizes = [8, 32], strides = [1, 1]} : vector<8x128xf32> to vector<8x32xf32>
    %cst_94 = arith.constant dense<0.000000e+00> : vector<16x8xf32>
    %172 = tpu.matmul %170, %171, %cst_94 {dimension_numbers = #tpu.dot_dimension_numbers<[1], [1], [0], [0], [0, 0, 1, 0], [], []>} : vector<16x32xf32>, vector<8x32xf32>, vector<16x8xf32> -> vector<16x8xf32>
    %cst_95 = arith.constant 0.176776692 : f32
    %173 = vector.broadcast %cst_95 : f32 to vector<16x8xf32>
    %174 = arith.mulf %172, %173 : vector<16x8xf32>
    %175 = arith.addf %174, %7 : vector<16x8xf32>
    %cst_96 = arith.constant dense<0xFF800000> : vector<16xf32>
    %176 = vector.multi_reduction <maximumf>, %175, %cst_96 [1] : vector<16x8xf32> to vector<16xf32>
    %177 = vector.shape_cast %176 : vector<16xf32> to vector<16x1xf32>
    %178 = vector.broadcast %177 : vector<16x1xf32> to vector<16x8xf32>
    %179 = arith.subf %175, %178 : vector<16x8xf32>
    %180 = math.exp %179 : vector<16x8xf32>
    %cst_97 = arith.constant dense<0.000000e+00> : vector<16xf32>
    %181 = vector.multi_reduction <add>, %180, %cst_97 [1] : vector<16x8xf32> to vector<16xf32>
    %182 = vector.shape_cast %181 : vector<16xf32> to vector<16x1xf32>
    %183 = vector.broadcast %182 : vector<16x1xf32> to vector<16x8xf32>
    %184 = arith.divf %180, %183 : vector<16x8xf32>
    %185 = vector.extract_strided_slice %152 {offsets = [0, 32], sizes = [8, 32], strides = [1, 1]} : vector<8x128xf32> to vector<8x32xf32>
    %cst_98 = arith.constant dense<0.000000e+00> : vector<16x32xf32>
    %186 = tpu.matmul %184, %185, %cst_98 {dimension_numbers = #tpu.dot_dimension_numbers<[1], [0], [0], [1], [0, 0, 1, 1], [], []>} : vector<16x8xf32>, vector<8x32xf32>, vector<16x32xf32> -> vector<16x32xf32>
    %187 = vector.extract_strided_slice %138 {offsets = [0, 64], sizes = [16, 32], strides = [1, 1]} : vector<16x128xf32> to vector<16x32xf32>
    %188 = vector.extract_strided_slice %145 {offsets = [0, 64], sizes = [8, 32], strides = [1, 1]} : vector<8x128xf32> to vector<8x32xf32>
    %cst_99 = arith.constant dense<0.000000e+00> : vector<16x8xf32>
    %189 = tpu.matmul %187, %188, %cst_99 {dimension_numbers = #tpu.dot_dimension_numbers<[1], [1], [0], [0], [0, 0, 1, 0], [], []>} : vector<16x32xf32>, vector<8x32xf32>, vector<16x8xf32> -> vector<16x8xf32>
    %cst_100 = arith.constant 0.176776692 : f32
    %190 = vector.broadcast %cst_100 : f32 to vector<16x8xf32>
    %191 = arith.mulf %189, %190 : vector<16x8xf32>
    %192 = arith.addf %191, %7 : vector<16x8xf32>
    %cst_101 = arith.constant dense<0xFF800000> : vector<16xf32>
    %193 = vector.multi_reduction <maximumf>, %192, %cst_101 [1] : vector<16x8xf32> to vector<16xf32>
    %194 = vector.shape_cast %193 : vector<16xf32> to vector<16x1xf32>
    %195 = vector.broadcast %194 : vector<16x1xf32> to vector<16x8xf32>
    %196 = arith.subf %192, %195 : vector<16x8xf32>
    %197 = math.exp %196 : vector<16x8xf32>
    %cst_102 = arith.constant dense<0.000000e+00> : vector<16xf32>
    %198 = vector.multi_reduction <add>, %197, %cst_102 [1] : vector<16x8xf32> to vector<16xf32>
    %199 = vector.shape_cast %198 : vector<16xf32> to vector<16x1xf32>
    %200 = vector.broadcast %199 : vector<16x1xf32> to vector<16x8xf32>
    %201 = arith.divf %197, %200 : vector<16x8xf32>
    %202 = vector.extract_strided_slice %152 {offsets = [0, 64], sizes = [8, 32], strides = [1, 1]} : vector<8x128xf32> to vector<8x32xf32>
    %cst_103 = arith.constant dense<0.000000e+00> : vector<16x32xf32>
    %203 = tpu.matmul %201, %202, %cst_103 {dimension_numbers = #tpu.dot_dimension_numbers<[1], [0], [0], [1], [0, 0, 1, 1], [], []>} : vector<16x8xf32>, vector<8x32xf32>, vector<16x32xf32> -> vector<16x32xf32>
    %204 = vector.extract_strided_slice %138 {offsets = [0, 96], sizes = [16, 32], strides = [1, 1]} : vector<16x128xf32> to vector<16x32xf32>
    %205 = vector.extract_strided_slice %145 {offsets = [0, 96], sizes = [8, 32], strides = [1, 1]} : vector<8x128xf32> to vector<8x32xf32>
    %cst_104 = arith.constant dense<0.000000e+00> : vector<16x8xf32>
    %206 = tpu.matmul %204, %205, %cst_104 {dimension_numbers = #tpu.dot_dimension_numbers<[1], [1], [0], [0], [0, 0, 1, 0], [], []>} : vector<16x32xf32>, vector<8x32xf32>, vector<16x8xf32> -> vector<16x8xf32>
    %cst_105 = arith.constant 0.176776692 : f32
    %207 = vector.broadcast %cst_105 : f32 to vector<16x8xf32>
    %208 = arith.mulf %206, %207 : vector<16x8xf32>
    %209 = arith.addf %208, %7 : vector<16x8xf32>
    %cst_106 = arith.constant dense<0xFF800000> : vector<16xf32>
    %210 = vector.multi_reduction <maximumf>, %209, %cst_106 [1] : vector<16x8xf32> to vector<16xf32>
    %211 = vector.shape_cast %210 : vector<16xf32> to vector<16x1xf32>
    %212 = vector.broadcast %211 : vector<16x1xf32> to vector<16x8xf32>
    %213 = arith.subf %209, %212 : vector<16x8xf32>
    %214 = math.exp %213 : vector<16x8xf32>
    %cst_107 = arith.constant dense<0.000000e+00> : vector<16xf32>
    %215 = vector.multi_reduction <add>, %214, %cst_107 [1] : vector<16x8xf32> to vector<16xf32>
    %216 = vector.shape_cast %215 : vector<16xf32> to vector<16x1xf32>
    %217 = vector.broadcast %216 : vector<16x1xf32> to vector<16x8xf32>
    %218 = arith.divf %214, %217 : vector<16x8xf32>
    %219 = vector.extract_strided_slice %152 {offsets = [0, 96], sizes = [8, 32], strides = [1, 1]} : vector<8x128xf32> to vector<8x32xf32>
    %cst_108 = arith.constant dense<0.000000e+00> : vector<16x32xf32>
    %220 = tpu.matmul %218, %219, %cst_108 {dimension_numbers = #tpu.dot_dimension_numbers<[1], [0], [0], [1], [0, 0, 1, 1], [], []>} : vector<16x8xf32>, vector<8x32xf32>, vector<16x32xf32> -> vector<16x32xf32>
    %221 = tpu.concatenate %169, %186, %203, %220 in 1 : vector<16x32xf32>, vector<16x32xf32>, vector<16x32xf32>, vector<16x32xf32> -> vector<16x128xf32>
    %c0_109 = arith.constant 0 : index
    %c0_110 = arith.constant 0 : index
    %c0_111 = arith.constant 0 : index
    %222 = vector.load %arg12[%c0_109, %c0_110, %c0_111] : memref<2x128x128xf32, #tpu.memory_space<vmem>>, vector<1x128x128xf32>
    %223 = vector.shape_cast %222 : vector<1x128x128xf32> to vector<128x128xf32>
    %cst_112 = arith.constant dense<0.000000e+00> : vector<16x128xf32>
    %224 = tpu.matmul %221, %223, %cst_112 {dimension_numbers = #tpu.dot_dimension_numbers<[1], [0], [0], [1], [0, 0, 1, 1], [], []>} : vector<16x128xf32>, vector<128x128xf32>, vector<16x128xf32> -> vector<16x128xf32>
    %c0_113 = arith.constant 0 : index
    %c0_114 = arith.constant 0 : index
    %c0_115 = arith.constant 0 : index
    %225 = vector.load %arg13[%c0_113, %c0_114, %c0_115] : memref<2x1x128xf32, #tpu.memory_space<vmem>>, vector<1x1x128xf32>
    %226 = vector.shape_cast %225 : vector<1x1x128xf32> to vector<1x128xf32>
    %227 = vector.broadcast %226 : vector<1x128xf32> to vector<16x128xf32>
    %228 = arith.addf %224, %227 : vector<16x128xf32>
    %229 = arith.addf %131, %228 : vector<16x128xf32>
    %c0_116 = arith.constant 0 : index
    %c0_117 = arith.constant 0 : index
    %c0_118 = arith.constant 0 : index
    %230 = vector.load %arg16[%c0_116, %c0_117, %c0_118] : memref<2x1x128xf32, #tpu.memory_space<vmem>>, vector<1x1x128xf32>
    %231 = vector.shape_cast %230 : vector<1x1x128xf32> to vector<1x128xf32>
    %c0_119 = arith.constant 0 : index
    %c0_120 = arith.constant 0 : index
    %c0_121 = arith.constant 0 : index
    %232 = vector.load %arg17[%c0_119, %c0_120, %c0_121] : memref<2x1x128xf32, #tpu.memory_space<vmem>>, vector<1x1x128xf32>
    %233 = vector.shape_cast %232 : vector<1x1x128xf32> to vector<1x128xf32>
    %cst_122 = arith.constant dense<0.000000e+00> : vector<16xf32>
    %234 = vector.multi_reduction <add>, %229, %cst_122 [1] : vector<16x128xf32> to vector<16xf32>
    %235 = vector.shape_cast %234 : vector<16xf32> to vector<16x1xf32>
    %cst_123 = arith.constant 1.280000e+02 : f32
    %236 = vector.broadcast %cst_123 : f32 to vector<16x1xf32>
    %237 = arith.divf %235, %236 : vector<16x1xf32>
    %238 = vector.broadcast %237 : vector<16x1xf32> to vector<16x128xf32>
    %239 = arith.subf %229, %238 : vector<16x128xf32>
    %240 = arith.mulf %239, %239 : vector<16x128xf32>
    %cst_124 = arith.constant dense<0.000000e+00> : vector<16xf32>
    %241 = vector.multi_reduction <add>, %240, %cst_124 [1] : vector<16x128xf32> to vector<16xf32>
    %242 = vector.shape_cast %241 : vector<16xf32> to vector<16x1xf32>
    %cst_125 = arith.constant 1.280000e+02 : f32
    %243 = vector.broadcast %cst_125 : f32 to vector<16x1xf32>
    %244 = arith.divf %242, %243 : vector<16x1xf32>
    %245 = vector.broadcast %237 : vector<16x1xf32> to vector<16x128xf32>
    %246 = arith.subf %229, %245 : vector<16x128xf32>
    %cst_126 = arith.constant 9.99999974E-6 : f32
    %247 = vector.broadcast %cst_126 : f32 to vector<16x1xf32>
    %248 = arith.addf %244, %247 : vector<16x1xf32>
    %249 = math.rsqrt %248 : vector<16x1xf32>
    %250 = vector.broadcast %249 : vector<16x1xf32> to vector<16x128xf32>
    %251 = arith.mulf %246, %250 : vector<16x128xf32>
    %252 = vector.broadcast %231 : vector<1x128xf32> to vector<16x128xf32>
    %253 = arith.mulf %251, %252 : vector<16x128xf32>
    %254 = vector.broadcast %233 : vector<1x128xf32> to vector<16x128xf32>
    %255 = arith.addf %253, %254 : vector<16x128xf32>
    %c0_127 = arith.constant 0 : index
    %c0_128 = arith.constant 0 : index
    %c0_129 = arith.constant 0 : index
    %256 = vector.load %arg20[%c0_127, %c0_128, %c0_129] : memref<2x128x256xf32, #tpu.memory_space<vmem>>, vector<1x128x256xf32>
    %257 = vector.shape_cast %256 : vector<1x128x256xf32> to vector<128x256xf32>
    %cst_130 = arith.constant dense<0.000000e+00> : vector<16x256xf32>
    %258 = tpu.matmul %255, %257, %cst_130 {dimension_numbers = #tpu.dot_dimension_numbers<[1], [0], [0], [1], [0, 0, 1, 1], [], []>} : vector<16x128xf32>, vector<128x256xf32>, vector<16x256xf32> -> vector<16x256xf32>
    %c0_131 = arith.constant 0 : index
    %c0_132 = arith.constant 0 : index
    %c0_133 = arith.constant 0 : index
    %259 = vector.load %arg21[%c0_131, %c0_132, %c0_133] : memref<2x1x256xf32, #tpu.memory_space<vmem>>, vector<1x1x256xf32>
    %260 = vector.shape_cast %259 : vector<1x1x256xf32> to vector<1x256xf32>
    %261 = vector.broadcast %260 : vector<1x256xf32> to vector<16x256xf32>
    %262 = arith.addf %258, %261 : vector<16x256xf32>
    %cst_134 = arith.constant 0.000000e+00 : f32
    %263 = vector.broadcast %cst_134 : f32 to vector<16x256xf32>
    %264 = arith.maximumf %262, %263 : vector<16x256xf32>
    %c0_135 = arith.constant 0 : index
    %c0_136 = arith.constant 0 : index
    %c0_137 = arith.constant 0 : index
    %265 = vector.load %arg22[%c0_135, %c0_136, %c0_137] : memref<2x256x128xf32, #tpu.memory_space<vmem>>, vector<1x256x128xf32>
    %266 = vector.shape_cast %265 : vector<1x256x128xf32> to vector<256x128xf32>
    %cst_138 = arith.constant dense<0.000000e+00> : vector<16x128xf32>
    %267 = tpu.matmul %264, %266, %cst_138 {dimension_numbers = #tpu.dot_dimension_numbers<[1], [0], [0], [1], [0, 0, 1, 1], [], []>} : vector<16x256xf32>, vector<256x128xf32>, vector<16x128xf32> -> vector<16x128xf32>
    %c0_139 = arith.constant 0 : index
    %c0_140 = arith.constant 0 : index
    %c0_141 = arith.constant 0 : index
    %268 = vector.load %arg23[%c0_139, %c0_140, %c0_141] : memref<2x1x128xf32, #tpu.memory_space<vmem>>, vector<1x1x128xf32>
    %269 = vector.shape_cast %268 : vector<1x1x128xf32> to vector<1x128xf32>
    %270 = vector.broadcast %269 : vector<1x128xf32> to vector<16x128xf32>
    %271 = arith.addf %267, %270 : vector<16x128xf32>
    %272 = arith.addf %255, %271 : vector<16x128xf32>
    %c0_142 = arith.constant 0 : index
    %c0_143 = arith.constant 0 : index
    %c0_144 = arith.constant 0 : index
    %273 = vector.load %arg18[%c0_142, %c0_143, %c0_144] : memref<2x1x128xf32, #tpu.memory_space<vmem>>, vector<1x1x128xf32>
    %274 = vector.shape_cast %273 : vector<1x1x128xf32> to vector<1x128xf32>
    %c0_145 = arith.constant 0 : index
    %c0_146 = arith.constant 0 : index
    %c0_147 = arith.constant 0 : index
    %275 = vector.load %arg19[%c0_145, %c0_146, %c0_147] : memref<2x1x128xf32, #tpu.memory_space<vmem>>, vector<1x1x128xf32>
    %276 = vector.shape_cast %275 : vector<1x1x128xf32> to vector<1x128xf32>
    %cst_148 = arith.constant dense<0.000000e+00> : vector<16xf32>
    %277 = vector.multi_reduction <add>, %272, %cst_148 [1] : vector<16x128xf32> to vector<16xf32>
    %278 = vector.shape_cast %277 : vector<16xf32> to vector<16x1xf32>
    %cst_149 = arith.constant 1.280000e+02 : f32
    %279 = vector.broadcast %cst_149 : f32 to vector<16x1xf32>
    %280 = arith.divf %278, %279 : vector<16x1xf32>
    %281 = vector.broadcast %280 : vector<16x1xf32> to vector<16x128xf32>
    %282 = arith.subf %272, %281 : vector<16x128xf32>
    %283 = arith.mulf %282, %282 : vector<16x128xf32>
    %cst_150 = arith.constant dense<0.000000e+00> : vector<16xf32>
    %284 = vector.multi_reduction <add>, %283, %cst_150 [1] : vector<16x128xf32> to vector<16xf32>
    %285 = vector.shape_cast %284 : vector<16xf32> to vector<16x1xf32>
    %cst_151 = arith.constant 1.280000e+02 : f32
    %286 = vector.broadcast %cst_151 : f32 to vector<16x1xf32>
    %287 = arith.divf %285, %286 : vector<16x1xf32>
    %288 = vector.broadcast %280 : vector<16x1xf32> to vector<16x128xf32>
    %289 = arith.subf %272, %288 : vector<16x128xf32>
    %cst_152 = arith.constant 9.99999974E-6 : f32
    %290 = vector.broadcast %cst_152 : f32 to vector<16x1xf32>
    %291 = arith.addf %287, %290 : vector<16x1xf32>
    %292 = math.rsqrt %291 : vector<16x1xf32>
    %293 = vector.broadcast %292 : vector<16x1xf32> to vector<16x128xf32>
    %294 = arith.mulf %289, %293 : vector<16x128xf32>
    %295 = vector.broadcast %274 : vector<1x128xf32> to vector<16x128xf32>
    %296 = arith.mulf %294, %295 : vector<16x128xf32>
    %297 = vector.broadcast %276 : vector<1x128xf32> to vector<16x128xf32>
    %298 = arith.addf %296, %297 : vector<16x128xf32>
    %c1 = arith.constant 1 : index
    %c0_153 = arith.constant 0 : index
    %c0_154 = arith.constant 0 : index
    %299 = vector.load %arg6[%c1, %c0_153, %c0_154] : memref<2x128x384xf32, #tpu.memory_space<vmem>>, vector<1x128x128xf32>
    %300 = vector.shape_cast %299 : vector<1x128x128xf32> to vector<128x128xf32>
    %cst_155 = arith.constant dense<0.000000e+00> : vector<16x128xf32>
    %301 = tpu.matmul %298, %300, %cst_155 {dimension_numbers = #tpu.dot_dimension_numbers<[1], [0], [0], [1], [0, 0, 1, 1], [], []>} : vector<16x128xf32>, vector<128x128xf32>, vector<16x128xf32> -> vector<16x128xf32>
    %c1_156 = arith.constant 1 : index
    %c0_157 = arith.constant 0 : index
    %c0_158 = arith.constant 0 : index
    %302 = vector.load %arg7[%c1_156, %c0_157, %c0_158] : memref<2x1x384xf32, #tpu.memory_space<vmem>>, vector<1x1x128xf32>
    %303 = vector.shape_cast %302 : vector<1x1x128xf32> to vector<1x128xf32>
    %304 = vector.broadcast %303 : vector<1x128xf32> to vector<16x128xf32>
    %305 = arith.addf %301, %304 : vector<16x128xf32>
    %c1_159 = arith.constant 1 : index
    %c0_160 = arith.constant 0 : index
    %c128_161 = arith.constant 128 : index
    %306 = vector.load %arg6[%c1_159, %c0_160, %c128_161] : memref<2x128x384xf32, #tpu.memory_space<vmem>>, vector<1x128x128xf32>
    %307 = vector.shape_cast %306 : vector<1x128x128xf32> to vector<128x128xf32>
    %cst_162 = arith.constant dense<0.000000e+00> : vector<16x128xf32>
    %308 = tpu.matmul %298, %307, %cst_162 {dimension_numbers = #tpu.dot_dimension_numbers<[1], [0], [0], [1], [0, 0, 1, 1], [], []>} : vector<16x128xf32>, vector<128x128xf32>, vector<16x128xf32> -> vector<16x128xf32>
    %c1_163 = arith.constant 1 : index
    %c0_164 = arith.constant 0 : index
    %c128_165 = arith.constant 128 : index
    %309 = vector.load %arg7[%c1_163, %c0_164, %c128_165] : memref<2x1x384xf32, #tpu.memory_space<vmem>>, vector<1x1x128xf32>
    %310 = vector.shape_cast %309 : vector<1x1x128xf32> to vector<1x128xf32>
    %311 = vector.broadcast %310 : vector<1x128xf32> to vector<16x128xf32>
    %312 = arith.addf %308, %311 : vector<16x128xf32>
    %c1_166 = arith.constant 1 : index
    %c0_167 = arith.constant 0 : index
    %c256_168 = arith.constant 256 : index
    %313 = vector.load %arg6[%c1_166, %c0_167, %c256_168] : memref<2x128x384xf32, #tpu.memory_space<vmem>>, vector<1x128x128xf32>
    %314 = vector.shape_cast %313 : vector<1x128x128xf32> to vector<128x128xf32>
    %cst_169 = arith.constant dense<0.000000e+00> : vector<16x128xf32>
    %315 = tpu.matmul %298, %314, %cst_169 {dimension_numbers = #tpu.dot_dimension_numbers<[1], [0], [0], [1], [0, 0, 1, 1], [], []>} : vector<16x128xf32>, vector<128x128xf32>, vector<16x128xf32> -> vector<16x128xf32>
    %c1_170 = arith.constant 1 : index
    %c0_171 = arith.constant 0 : index
    %c256_172 = arith.constant 256 : index
    %316 = vector.load %arg7[%c1_170, %c0_171, %c256_172] : memref<2x1x384xf32, #tpu.memory_space<vmem>>, vector<1x1x128xf32>
    %317 = vector.shape_cast %316 : vector<1x1x128xf32> to vector<1x128xf32>
    %318 = vector.broadcast %317 : vector<1x128xf32> to vector<16x128xf32>
    %319 = arith.addf %315, %318 : vector<16x128xf32>
    %320 = vector.extract_strided_slice %305 {offsets = [0, 0], sizes = [16, 32], strides = [1, 1]} : vector<16x128xf32> to vector<16x32xf32>
    %321 = vector.extract_strided_slice %312 {offsets = [0, 0], sizes = [16, 32], strides = [1, 1]} : vector<16x128xf32> to vector<16x32xf32>
    %cst_173 = arith.constant dense<0.000000e+00> : vector<16x16xf32>
    %322 = tpu.matmul %320, %321, %cst_173 {dimension_numbers = #tpu.dot_dimension_numbers<[1], [1], [0], [0], [0, 0, 1, 0], [], []>} : vector<16x32xf32>, vector<16x32xf32>, vector<16x16xf32> -> vector<16x16xf32>
    %cst_174 = arith.constant 0.176776692 : f32
    %323 = vector.broadcast %cst_174 : f32 to vector<16x16xf32>
    %324 = arith.mulf %322, %323 : vector<16x16xf32>
    %325 = arith.addf %324, %6 : vector<16x16xf32>
    %cst_175 = arith.constant dense<0xFF800000> : vector<16xf32>
    %326 = vector.multi_reduction <maximumf>, %325, %cst_175 [1] : vector<16x16xf32> to vector<16xf32>
    %327 = vector.shape_cast %326 : vector<16xf32> to vector<16x1xf32>
    %328 = vector.broadcast %327 : vector<16x1xf32> to vector<16x16xf32>
    %329 = arith.subf %325, %328 : vector<16x16xf32>
    %330 = math.exp %329 : vector<16x16xf32>
    %cst_176 = arith.constant dense<0.000000e+00> : vector<16xf32>
    %331 = vector.multi_reduction <add>, %330, %cst_176 [1] : vector<16x16xf32> to vector<16xf32>
    %332 = vector.shape_cast %331 : vector<16xf32> to vector<16x1xf32>
    %333 = vector.broadcast %332 : vector<16x1xf32> to vector<16x16xf32>
    %334 = arith.divf %330, %333 : vector<16x16xf32>
    %335 = vector.extract_strided_slice %319 {offsets = [0, 0], sizes = [16, 32], strides = [1, 1]} : vector<16x128xf32> to vector<16x32xf32>
    %cst_177 = arith.constant dense<0.000000e+00> : vector<16x32xf32>
    %336 = tpu.matmul %334, %335, %cst_177 {dimension_numbers = #tpu.dot_dimension_numbers<[1], [0], [0], [1], [0, 0, 1, 1], [], []>} : vector<16x16xf32>, vector<16x32xf32>, vector<16x32xf32> -> vector<16x32xf32>
    %337 = vector.extract_strided_slice %305 {offsets = [0, 32], sizes = [16, 32], strides = [1, 1]} : vector<16x128xf32> to vector<16x32xf32>
    %338 = vector.extract_strided_slice %312 {offsets = [0, 32], sizes = [16, 32], strides = [1, 1]} : vector<16x128xf32> to vector<16x32xf32>
    %cst_178 = arith.constant dense<0.000000e+00> : vector<16x16xf32>
    %339 = tpu.matmul %337, %338, %cst_178 {dimension_numbers = #tpu.dot_dimension_numbers<[1], [1], [0], [0], [0, 0, 1, 0], [], []>} : vector<16x32xf32>, vector<16x32xf32>, vector<16x16xf32> -> vector<16x16xf32>
    %cst_179 = arith.constant 0.176776692 : f32
    %340 = vector.broadcast %cst_179 : f32 to vector<16x16xf32>
    %341 = arith.mulf %339, %340 : vector<16x16xf32>
    %342 = arith.addf %341, %6 : vector<16x16xf32>
    %cst_180 = arith.constant dense<0xFF800000> : vector<16xf32>
    %343 = vector.multi_reduction <maximumf>, %342, %cst_180 [1] : vector<16x16xf32> to vector<16xf32>
    %344 = vector.shape_cast %343 : vector<16xf32> to vector<16x1xf32>
    %345 = vector.broadcast %344 : vector<16x1xf32> to vector<16x16xf32>
    %346 = arith.subf %342, %345 : vector<16x16xf32>
    %347 = math.exp %346 : vector<16x16xf32>
    %cst_181 = arith.constant dense<0.000000e+00> : vector<16xf32>
    %348 = vector.multi_reduction <add>, %347, %cst_181 [1] : vector<16x16xf32> to vector<16xf32>
    %349 = vector.shape_cast %348 : vector<16xf32> to vector<16x1xf32>
    %350 = vector.broadcast %349 : vector<16x1xf32> to vector<16x16xf32>
    %351 = arith.divf %347, %350 : vector<16x16xf32>
    %352 = vector.extract_strided_slice %319 {offsets = [0, 32], sizes = [16, 32], strides = [1, 1]} : vector<16x128xf32> to vector<16x32xf32>
    %cst_182 = arith.constant dense<0.000000e+00> : vector<16x32xf32>
    %353 = tpu.matmul %351, %352, %cst_182 {dimension_numbers = #tpu.dot_dimension_numbers<[1], [0], [0], [1], [0, 0, 1, 1], [], []>} : vector<16x16xf32>, vector<16x32xf32>, vector<16x32xf32> -> vector<16x32xf32>
    %354 = vector.extract_strided_slice %305 {offsets = [0, 64], sizes = [16, 32], strides = [1, 1]} : vector<16x128xf32> to vector<16x32xf32>
    %355 = vector.extract_strided_slice %312 {offsets = [0, 64], sizes = [16, 32], strides = [1, 1]} : vector<16x128xf32> to vector<16x32xf32>
    %cst_183 = arith.constant dense<0.000000e+00> : vector<16x16xf32>
    %356 = tpu.matmul %354, %355, %cst_183 {dimension_numbers = #tpu.dot_dimension_numbers<[1], [1], [0], [0], [0, 0, 1, 0], [], []>} : vector<16x32xf32>, vector<16x32xf32>, vector<16x16xf32> -> vector<16x16xf32>
    %cst_184 = arith.constant 0.176776692 : f32
    %357 = vector.broadcast %cst_184 : f32 to vector<16x16xf32>
    %358 = arith.mulf %356, %357 : vector<16x16xf32>
    %359 = arith.addf %358, %6 : vector<16x16xf32>
    %cst_185 = arith.constant dense<0xFF800000> : vector<16xf32>
    %360 = vector.multi_reduction <maximumf>, %359, %cst_185 [1] : vector<16x16xf32> to vector<16xf32>
    %361 = vector.shape_cast %360 : vector<16xf32> to vector<16x1xf32>
    %362 = vector.broadcast %361 : vector<16x1xf32> to vector<16x16xf32>
    %363 = arith.subf %359, %362 : vector<16x16xf32>
    %364 = math.exp %363 : vector<16x16xf32>
    %cst_186 = arith.constant dense<0.000000e+00> : vector<16xf32>
    %365 = vector.multi_reduction <add>, %364, %cst_186 [1] : vector<16x16xf32> to vector<16xf32>
    %366 = vector.shape_cast %365 : vector<16xf32> to vector<16x1xf32>
    %367 = vector.broadcast %366 : vector<16x1xf32> to vector<16x16xf32>
    %368 = arith.divf %364, %367 : vector<16x16xf32>
    %369 = vector.extract_strided_slice %319 {offsets = [0, 64], sizes = [16, 32], strides = [1, 1]} : vector<16x128xf32> to vector<16x32xf32>
    %cst_187 = arith.constant dense<0.000000e+00> : vector<16x32xf32>
    %370 = tpu.matmul %368, %369, %cst_187 {dimension_numbers = #tpu.dot_dimension_numbers<[1], [0], [0], [1], [0, 0, 1, 1], [], []>} : vector<16x16xf32>, vector<16x32xf32>, vector<16x32xf32> -> vector<16x32xf32>
    %371 = vector.extract_strided_slice %305 {offsets = [0, 96], sizes = [16, 32], strides = [1, 1]} : vector<16x128xf32> to vector<16x32xf32>
    %372 = vector.extract_strided_slice %312 {offsets = [0, 96], sizes = [16, 32], strides = [1, 1]} : vector<16x128xf32> to vector<16x32xf32>
    %cst_188 = arith.constant dense<0.000000e+00> : vector<16x16xf32>
    %373 = tpu.matmul %371, %372, %cst_188 {dimension_numbers = #tpu.dot_dimension_numbers<[1], [1], [0], [0], [0, 0, 1, 0], [], []>} : vector<16x32xf32>, vector<16x32xf32>, vector<16x16xf32> -> vector<16x16xf32>
    %cst_189 = arith.constant 0.176776692 : f32
    %374 = vector.broadcast %cst_189 : f32 to vector<16x16xf32>
    %375 = arith.mulf %373, %374 : vector<16x16xf32>
    %376 = arith.addf %375, %6 : vector<16x16xf32>
    %cst_190 = arith.constant dense<0xFF800000> : vector<16xf32>
    %377 = vector.multi_reduction <maximumf>, %376, %cst_190 [1] : vector<16x16xf32> to vector<16xf32>
    %378 = vector.shape_cast %377 : vector<16xf32> to vector<16x1xf32>
    %379 = vector.broadcast %378 : vector<16x1xf32> to vector<16x16xf32>
    %380 = arith.subf %376, %379 : vector<16x16xf32>
    %381 = math.exp %380 : vector<16x16xf32>
    %cst_191 = arith.constant dense<0.000000e+00> : vector<16xf32>
    %382 = vector.multi_reduction <add>, %381, %cst_191 [1] : vector<16x16xf32> to vector<16xf32>
    %383 = vector.shape_cast %382 : vector<16xf32> to vector<16x1xf32>
    %384 = vector.broadcast %383 : vector<16x1xf32> to vector<16x16xf32>
    %385 = arith.divf %381, %384 : vector<16x16xf32>
    %386 = vector.extract_strided_slice %319 {offsets = [0, 96], sizes = [16, 32], strides = [1, 1]} : vector<16x128xf32> to vector<16x32xf32>
    %cst_192 = arith.constant dense<0.000000e+00> : vector<16x32xf32>
    %387 = tpu.matmul %385, %386, %cst_192 {dimension_numbers = #tpu.dot_dimension_numbers<[1], [0], [0], [1], [0, 0, 1, 1], [], []>} : vector<16x16xf32>, vector<16x32xf32>, vector<16x32xf32> -> vector<16x32xf32>
    %388 = tpu.concatenate %336, %353, %370, %387 in 1 : vector<16x32xf32>, vector<16x32xf32>, vector<16x32xf32>, vector<16x32xf32> -> vector<16x128xf32>
    %c1_193 = arith.constant 1 : index
    %c0_194 = arith.constant 0 : index
    %c0_195 = arith.constant 0 : index
    %389 = vector.load %arg8[%c1_193, %c0_194, %c0_195] : memref<2x128x128xf32, #tpu.memory_space<vmem>>, vector<1x128x128xf32>
    %390 = vector.shape_cast %389 : vector<1x128x128xf32> to vector<128x128xf32>
    %cst_196 = arith.constant dense<0.000000e+00> : vector<16x128xf32>
    %391 = tpu.matmul %388, %390, %cst_196 {dimension_numbers = #tpu.dot_dimension_numbers<[1], [0], [0], [1], [0, 0, 1, 1], [], []>} : vector<16x128xf32>, vector<128x128xf32>, vector<16x128xf32> -> vector<16x128xf32>
    %c1_197 = arith.constant 1 : index
    %c0_198 = arith.constant 0 : index
    %c0_199 = arith.constant 0 : index
    %392 = vector.load %arg9[%c1_197, %c0_198, %c0_199] : memref<2x1x128xf32, #tpu.memory_space<vmem>>, vector<1x1x128xf32>
    %393 = vector.shape_cast %392 : vector<1x1x128xf32> to vector<1x128xf32>
    %394 = vector.broadcast %393 : vector<1x128xf32> to vector<16x128xf32>
    %395 = arith.addf %391, %394 : vector<16x128xf32>
    %396 = arith.addf %298, %395 : vector<16x128xf32>
    %c1_200 = arith.constant 1 : index
    %c0_201 = arith.constant 0 : index
    %c0_202 = arith.constant 0 : index
    %397 = vector.load %arg14[%c1_200, %c0_201, %c0_202] : memref<2x1x128xf32, #tpu.memory_space<vmem>>, vector<1x1x128xf32>
    %398 = vector.shape_cast %397 : vector<1x1x128xf32> to vector<1x128xf32>
    %c1_203 = arith.constant 1 : index
    %c0_204 = arith.constant 0 : index
    %c0_205 = arith.constant 0 : index
    %399 = vector.load %arg15[%c1_203, %c0_204, %c0_205] : memref<2x1x128xf32, #tpu.memory_space<vmem>>, vector<1x1x128xf32>
    %400 = vector.shape_cast %399 : vector<1x1x128xf32> to vector<1x128xf32>
    %cst_206 = arith.constant dense<0.000000e+00> : vector<16xf32>
    %401 = vector.multi_reduction <add>, %396, %cst_206 [1] : vector<16x128xf32> to vector<16xf32>
    %402 = vector.shape_cast %401 : vector<16xf32> to vector<16x1xf32>
    %cst_207 = arith.constant 1.280000e+02 : f32
    %403 = vector.broadcast %cst_207 : f32 to vector<16x1xf32>
    %404 = arith.divf %402, %403 : vector<16x1xf32>
    %405 = vector.broadcast %404 : vector<16x1xf32> to vector<16x128xf32>
    %406 = arith.subf %396, %405 : vector<16x128xf32>
    %407 = arith.mulf %406, %406 : vector<16x128xf32>
    %cst_208 = arith.constant dense<0.000000e+00> : vector<16xf32>
    %408 = vector.multi_reduction <add>, %407, %cst_208 [1] : vector<16x128xf32> to vector<16xf32>
    %409 = vector.shape_cast %408 : vector<16xf32> to vector<16x1xf32>
    %cst_209 = arith.constant 1.280000e+02 : f32
    %410 = vector.broadcast %cst_209 : f32 to vector<16x1xf32>
    %411 = arith.divf %409, %410 : vector<16x1xf32>
    %412 = vector.broadcast %404 : vector<16x1xf32> to vector<16x128xf32>
    %413 = arith.subf %396, %412 : vector<16x128xf32>
    %cst_210 = arith.constant 9.99999974E-6 : f32
    %414 = vector.broadcast %cst_210 : f32 to vector<16x1xf32>
    %415 = arith.addf %411, %414 : vector<16x1xf32>
    %416 = math.rsqrt %415 : vector<16x1xf32>
    %417 = vector.broadcast %416 : vector<16x1xf32> to vector<16x128xf32>
    %418 = arith.mulf %413, %417 : vector<16x128xf32>
    %419 = vector.broadcast %398 : vector<1x128xf32> to vector<16x128xf32>
    %420 = arith.mulf %418, %419 : vector<16x128xf32>
    %421 = vector.broadcast %400 : vector<1x128xf32> to vector<16x128xf32>
    %422 = arith.addf %420, %421 : vector<16x128xf32>
    %c1_211 = arith.constant 1 : index
    %c0_212 = arith.constant 0 : index
    %c0_213 = arith.constant 0 : index
    %423 = vector.load %arg10[%c1_211, %c0_212, %c0_213] : memref<2x128x384xf32, #tpu.memory_space<vmem>>, vector<1x128x128xf32>
    %424 = vector.shape_cast %423 : vector<1x128x128xf32> to vector<128x128xf32>
    %cst_214 = arith.constant dense<0.000000e+00> : vector<16x128xf32>
    %425 = tpu.matmul %422, %424, %cst_214 {dimension_numbers = #tpu.dot_dimension_numbers<[1], [0], [0], [1], [0, 0, 1, 1], [], []>} : vector<16x128xf32>, vector<128x128xf32>, vector<16x128xf32> -> vector<16x128xf32>
    %c1_215 = arith.constant 1 : index
    %c0_216 = arith.constant 0 : index
    %c0_217 = arith.constant 0 : index
    %426 = vector.load %arg11[%c1_215, %c0_216, %c0_217] : memref<2x1x384xf32, #tpu.memory_space<vmem>>, vector<1x1x128xf32>
    %427 = vector.shape_cast %426 : vector<1x1x128xf32> to vector<1x128xf32>
    %428 = vector.broadcast %427 : vector<1x128xf32> to vector<16x128xf32>
    %429 = arith.addf %425, %428 : vector<16x128xf32>
    %c1_218 = arith.constant 1 : index
    %c0_219 = arith.constant 0 : index
    %c128_220 = arith.constant 128 : index
    %430 = vector.load %arg10[%c1_218, %c0_219, %c128_220] : memref<2x128x384xf32, #tpu.memory_space<vmem>>, vector<1x128x128xf32>
    %431 = vector.shape_cast %430 : vector<1x128x128xf32> to vector<128x128xf32>
    %cst_221 = arith.constant dense<0.000000e+00> : vector<8x128xf32>
    %432 = tpu.matmul %4, %431, %cst_221 {dimension_numbers = #tpu.dot_dimension_numbers<[1], [0], [0], [1], [0, 0, 1, 1], [], []>} : vector<8x128xf32>, vector<128x128xf32>, vector<8x128xf32> -> vector<8x128xf32>
    %c1_222 = arith.constant 1 : index
    %c0_223 = arith.constant 0 : index
    %c128_224 = arith.constant 128 : index
    %433 = vector.load %arg11[%c1_222, %c0_223, %c128_224] : memref<2x1x384xf32, #tpu.memory_space<vmem>>, vector<1x1x128xf32>
    %434 = vector.shape_cast %433 : vector<1x1x128xf32> to vector<1x128xf32>
    %435 = vector.broadcast %434 : vector<1x128xf32> to vector<8x128xf32>
    %436 = arith.addf %432, %435 : vector<8x128xf32>
    %c1_225 = arith.constant 1 : index
    %c0_226 = arith.constant 0 : index
    %c256_227 = arith.constant 256 : index
    %437 = vector.load %arg10[%c1_225, %c0_226, %c256_227] : memref<2x128x384xf32, #tpu.memory_space<vmem>>, vector<1x128x128xf32>
    %438 = vector.shape_cast %437 : vector<1x128x128xf32> to vector<128x128xf32>
    %cst_228 = arith.constant dense<0.000000e+00> : vector<8x128xf32>
    %439 = tpu.matmul %4, %438, %cst_228 {dimension_numbers = #tpu.dot_dimension_numbers<[1], [0], [0], [1], [0, 0, 1, 1], [], []>} : vector<8x128xf32>, vector<128x128xf32>, vector<8x128xf32> -> vector<8x128xf32>
    %c1_229 = arith.constant 1 : index
    %c0_230 = arith.constant 0 : index
    %c256_231 = arith.constant 256 : index
    %440 = vector.load %arg11[%c1_229, %c0_230, %c256_231] : memref<2x1x384xf32, #tpu.memory_space<vmem>>, vector<1x1x128xf32>
    %441 = vector.shape_cast %440 : vector<1x1x128xf32> to vector<1x128xf32>
    %442 = vector.broadcast %441 : vector<1x128xf32> to vector<8x128xf32>
    %443 = arith.addf %439, %442 : vector<8x128xf32>
    %444 = vector.extract_strided_slice %429 {offsets = [0, 0], sizes = [16, 32], strides = [1, 1]} : vector<16x128xf32> to vector<16x32xf32>
    %445 = vector.extract_strided_slice %436 {offsets = [0, 0], sizes = [8, 32], strides = [1, 1]} : vector<8x128xf32> to vector<8x32xf32>
    %cst_232 = arith.constant dense<0.000000e+00> : vector<16x8xf32>
    %446 = tpu.matmul %444, %445, %cst_232 {dimension_numbers = #tpu.dot_dimension_numbers<[1], [1], [0], [0], [0, 0, 1, 0], [], []>} : vector<16x32xf32>, vector<8x32xf32>, vector<16x8xf32> -> vector<16x8xf32>
    %cst_233 = arith.constant 0.176776692 : f32
    %447 = vector.broadcast %cst_233 : f32 to vector<16x8xf32>
    %448 = arith.mulf %446, %447 : vector<16x8xf32>
    %449 = arith.addf %448, %7 : vector<16x8xf32>
    %cst_234 = arith.constant dense<0xFF800000> : vector<16xf32>
    %450 = vector.multi_reduction <maximumf>, %449, %cst_234 [1] : vector<16x8xf32> to vector<16xf32>
    %451 = vector.shape_cast %450 : vector<16xf32> to vector<16x1xf32>
    %452 = vector.broadcast %451 : vector<16x1xf32> to vector<16x8xf32>
    %453 = arith.subf %449, %452 : vector<16x8xf32>
    %454 = math.exp %453 : vector<16x8xf32>
    %cst_235 = arith.constant dense<0.000000e+00> : vector<16xf32>
    %455 = vector.multi_reduction <add>, %454, %cst_235 [1] : vector<16x8xf32> to vector<16xf32>
    %456 = vector.shape_cast %455 : vector<16xf32> to vector<16x1xf32>
    %457 = vector.broadcast %456 : vector<16x1xf32> to vector<16x8xf32>
    %458 = arith.divf %454, %457 : vector<16x8xf32>
    %459 = vector.extract_strided_slice %443 {offsets = [0, 0], sizes = [8, 32], strides = [1, 1]} : vector<8x128xf32> to vector<8x32xf32>
    %cst_236 = arith.constant dense<0.000000e+00> : vector<16x32xf32>
    %460 = tpu.matmul %458, %459, %cst_236 {dimension_numbers = #tpu.dot_dimension_numbers<[1], [0], [0], [1], [0, 0, 1, 1], [], []>} : vector<16x8xf32>, vector<8x32xf32>, vector<16x32xf32> -> vector<16x32xf32>
    %461 = vector.extract_strided_slice %429 {offsets = [0, 32], sizes = [16, 32], strides = [1, 1]} : vector<16x128xf32> to vector<16x32xf32>
    %462 = vector.extract_strided_slice %436 {offsets = [0, 32], sizes = [8, 32], strides = [1, 1]} : vector<8x128xf32> to vector<8x32xf32>
    %cst_237 = arith.constant dense<0.000000e+00> : vector<16x8xf32>
    %463 = tpu.matmul %461, %462, %cst_237 {dimension_numbers = #tpu.dot_dimension_numbers<[1], [1], [0], [0], [0, 0, 1, 0], [], []>} : vector<16x32xf32>, vector<8x32xf32>, vector<16x8xf32> -> vector<16x8xf32>
    %cst_238 = arith.constant 0.176776692 : f32
    %464 = vector.broadcast %cst_238 : f32 to vector<16x8xf32>
    %465 = arith.mulf %463, %464 : vector<16x8xf32>
    %466 = arith.addf %465, %7 : vector<16x8xf32>
    %cst_239 = arith.constant dense<0xFF800000> : vector<16xf32>
    %467 = vector.multi_reduction <maximumf>, %466, %cst_239 [1] : vector<16x8xf32> to vector<16xf32>
    %468 = vector.shape_cast %467 : vector<16xf32> to vector<16x1xf32>
    %469 = vector.broadcast %468 : vector<16x1xf32> to vector<16x8xf32>
    %470 = arith.subf %466, %469 : vector<16x8xf32>
    %471 = math.exp %470 : vector<16x8xf32>
    %cst_240 = arith.constant dense<0.000000e+00> : vector<16xf32>
    %472 = vector.multi_reduction <add>, %471, %cst_240 [1] : vector<16x8xf32> to vector<16xf32>
    %473 = vector.shape_cast %472 : vector<16xf32> to vector<16x1xf32>
    %474 = vector.broadcast %473 : vector<16x1xf32> to vector<16x8xf32>
    %475 = arith.divf %471, %474 : vector<16x8xf32>
    %476 = vector.extract_strided_slice %443 {offsets = [0, 32], sizes = [8, 32], strides = [1, 1]} : vector<8x128xf32> to vector<8x32xf32>
    %cst_241 = arith.constant dense<0.000000e+00> : vector<16x32xf32>
    %477 = tpu.matmul %475, %476, %cst_241 {dimension_numbers = #tpu.dot_dimension_numbers<[1], [0], [0], [1], [0, 0, 1, 1], [], []>} : vector<16x8xf32>, vector<8x32xf32>, vector<16x32xf32> -> vector<16x32xf32>
    %478 = vector.extract_strided_slice %429 {offsets = [0, 64], sizes = [16, 32], strides = [1, 1]} : vector<16x128xf32> to vector<16x32xf32>
    %479 = vector.extract_strided_slice %436 {offsets = [0, 64], sizes = [8, 32], strides = [1, 1]} : vector<8x128xf32> to vector<8x32xf32>
    %cst_242 = arith.constant dense<0.000000e+00> : vector<16x8xf32>
    %480 = tpu.matmul %478, %479, %cst_242 {dimension_numbers = #tpu.dot_dimension_numbers<[1], [1], [0], [0], [0, 0, 1, 0], [], []>} : vector<16x32xf32>, vector<8x32xf32>, vector<16x8xf32> -> vector<16x8xf32>
    %cst_243 = arith.constant 0.176776692 : f32
    %481 = vector.broadcast %cst_243 : f32 to vector<16x8xf32>
    %482 = arith.mulf %480, %481 : vector<16x8xf32>
    %483 = arith.addf %482, %7 : vector<16x8xf32>
    %cst_244 = arith.constant dense<0xFF800000> : vector<16xf32>
    %484 = vector.multi_reduction <maximumf>, %483, %cst_244 [1] : vector<16x8xf32> to vector<16xf32>
    %485 = vector.shape_cast %484 : vector<16xf32> to vector<16x1xf32>
    %486 = vector.broadcast %485 : vector<16x1xf32> to vector<16x8xf32>
    %487 = arith.subf %483, %486 : vector<16x8xf32>
    %488 = math.exp %487 : vector<16x8xf32>
    %cst_245 = arith.constant dense<0.000000e+00> : vector<16xf32>
    %489 = vector.multi_reduction <add>, %488, %cst_245 [1] : vector<16x8xf32> to vector<16xf32>
    %490 = vector.shape_cast %489 : vector<16xf32> to vector<16x1xf32>
    %491 = vector.broadcast %490 : vector<16x1xf32> to vector<16x8xf32>
    %492 = arith.divf %488, %491 : vector<16x8xf32>
    %493 = vector.extract_strided_slice %443 {offsets = [0, 64], sizes = [8, 32], strides = [1, 1]} : vector<8x128xf32> to vector<8x32xf32>
    %cst_246 = arith.constant dense<0.000000e+00> : vector<16x32xf32>
    %494 = tpu.matmul %492, %493, %cst_246 {dimension_numbers = #tpu.dot_dimension_numbers<[1], [0], [0], [1], [0, 0, 1, 1], [], []>} : vector<16x8xf32>, vector<8x32xf32>, vector<16x32xf32> -> vector<16x32xf32>
    %495 = vector.extract_strided_slice %429 {offsets = [0, 96], sizes = [16, 32], strides = [1, 1]} : vector<16x128xf32> to vector<16x32xf32>
    %496 = vector.extract_strided_slice %436 {offsets = [0, 96], sizes = [8, 32], strides = [1, 1]} : vector<8x128xf32> to vector<8x32xf32>
    %cst_247 = arith.constant dense<0.000000e+00> : vector<16x8xf32>
    %497 = tpu.matmul %495, %496, %cst_247 {dimension_numbers = #tpu.dot_dimension_numbers<[1], [1], [0], [0], [0, 0, 1, 0], [], []>} : vector<16x32xf32>, vector<8x32xf32>, vector<16x8xf32> -> vector<16x8xf32>
    %cst_248 = arith.constant 0.176776692 : f32
    %498 = vector.broadcast %cst_248 : f32 to vector<16x8xf32>
    %499 = arith.mulf %497, %498 : vector<16x8xf32>
    %500 = arith.addf %499, %7 : vector<16x8xf32>
    %cst_249 = arith.constant dense<0xFF800000> : vector<16xf32>
    %501 = vector.multi_reduction <maximumf>, %500, %cst_249 [1] : vector<16x8xf32> to vector<16xf32>
    %502 = vector.shape_cast %501 : vector<16xf32> to vector<16x1xf32>
    %503 = vector.broadcast %502 : vector<16x1xf32> to vector<16x8xf32>
    %504 = arith.subf %500, %503 : vector<16x8xf32>
    %505 = math.exp %504 : vector<16x8xf32>
    %cst_250 = arith.constant dense<0.000000e+00> : vector<16xf32>
    %506 = vector.multi_reduction <add>, %505, %cst_250 [1] : vector<16x8xf32> to vector<16xf32>
    %507 = vector.shape_cast %506 : vector<16xf32> to vector<16x1xf32>
    %508 = vector.broadcast %507 : vector<16x1xf32> to vector<16x8xf32>
    %509 = arith.divf %505, %508 : vector<16x8xf32>
    %510 = vector.extract_strided_slice %443 {offsets = [0, 96], sizes = [8, 32], strides = [1, 1]} : vector<8x128xf32> to vector<8x32xf32>
    %cst_251 = arith.constant dense<0.000000e+00> : vector<16x32xf32>
    %511 = tpu.matmul %509, %510, %cst_251 {dimension_numbers = #tpu.dot_dimension_numbers<[1], [0], [0], [1], [0, 0, 1, 1], [], []>} : vector<16x8xf32>, vector<8x32xf32>, vector<16x32xf32> -> vector<16x32xf32>
    %512 = tpu.concatenate %460, %477, %494, %511 in 1 : vector<16x32xf32>, vector<16x32xf32>, vector<16x32xf32>, vector<16x32xf32> -> vector<16x128xf32>
    %c1_252 = arith.constant 1 : index
    %c0_253 = arith.constant 0 : index
    %c0_254 = arith.constant 0 : index
    %513 = vector.load %arg12[%c1_252, %c0_253, %c0_254] : memref<2x128x128xf32, #tpu.memory_space<vmem>>, vector<1x128x128xf32>
    %514 = vector.shape_cast %513 : vector<1x128x128xf32> to vector<128x128xf32>
    %cst_255 = arith.constant dense<0.000000e+00> : vector<16x128xf32>
    %515 = tpu.matmul %512, %514, %cst_255 {dimension_numbers = #tpu.dot_dimension_numbers<[1], [0], [0], [1], [0, 0, 1, 1], [], []>} : vector<16x128xf32>, vector<128x128xf32>, vector<16x128xf32> -> vector<16x128xf32>
    %c1_256 = arith.constant 1 : index
    %c0_257 = arith.constant 0 : index
    %c0_258 = arith.constant 0 : index
    %516 = vector.load %arg13[%c1_256, %c0_257, %c0_258] : memref<2x1x128xf32, #tpu.memory_space<vmem>>, vector<1x1x128xf32>
    %517 = vector.shape_cast %516 : vector<1x1x128xf32> to vector<1x128xf32>
    %518 = vector.broadcast %517 : vector<1x128xf32> to vector<16x128xf32>
    %519 = arith.addf %515, %518 : vector<16x128xf32>
    %520 = arith.addf %422, %519 : vector<16x128xf32>
    %c1_259 = arith.constant 1 : index
    %c0_260 = arith.constant 0 : index
    %c0_261 = arith.constant 0 : index
    %521 = vector.load %arg16[%c1_259, %c0_260, %c0_261] : memref<2x1x128xf32, #tpu.memory_space<vmem>>, vector<1x1x128xf32>
    %522 = vector.shape_cast %521 : vector<1x1x128xf32> to vector<1x128xf32>
    %c1_262 = arith.constant 1 : index
    %c0_263 = arith.constant 0 : index
    %c0_264 = arith.constant 0 : index
    %523 = vector.load %arg17[%c1_262, %c0_263, %c0_264] : memref<2x1x128xf32, #tpu.memory_space<vmem>>, vector<1x1x128xf32>
    %524 = vector.shape_cast %523 : vector<1x1x128xf32> to vector<1x128xf32>
    %cst_265 = arith.constant dense<0.000000e+00> : vector<16xf32>
    %525 = vector.multi_reduction <add>, %520, %cst_265 [1] : vector<16x128xf32> to vector<16xf32>
    %526 = vector.shape_cast %525 : vector<16xf32> to vector<16x1xf32>
    %cst_266 = arith.constant 1.280000e+02 : f32
    %527 = vector.broadcast %cst_266 : f32 to vector<16x1xf32>
    %528 = arith.divf %526, %527 : vector<16x1xf32>
    %529 = vector.broadcast %528 : vector<16x1xf32> to vector<16x128xf32>
    %530 = arith.subf %520, %529 : vector<16x128xf32>
    %531 = arith.mulf %530, %530 : vector<16x128xf32>
    %cst_267 = arith.constant dense<0.000000e+00> : vector<16xf32>
    %532 = vector.multi_reduction <add>, %531, %cst_267 [1] : vector<16x128xf32> to vector<16xf32>
    %533 = vector.shape_cast %532 : vector<16xf32> to vector<16x1xf32>
    %cst_268 = arith.constant 1.280000e+02 : f32
    %534 = vector.broadcast %cst_268 : f32 to vector<16x1xf32>
    %535 = arith.divf %533, %534 : vector<16x1xf32>
    %536 = vector.broadcast %528 : vector<16x1xf32> to vector<16x128xf32>
    %537 = arith.subf %520, %536 : vector<16x128xf32>
    %cst_269 = arith.constant 9.99999974E-6 : f32
    %538 = vector.broadcast %cst_269 : f32 to vector<16x1xf32>
    %539 = arith.addf %535, %538 : vector<16x1xf32>
    %540 = math.rsqrt %539 : vector<16x1xf32>
    %541 = vector.broadcast %540 : vector<16x1xf32> to vector<16x128xf32>
    %542 = arith.mulf %537, %541 : vector<16x128xf32>
    %543 = vector.broadcast %522 : vector<1x128xf32> to vector<16x128xf32>
    %544 = arith.mulf %542, %543 : vector<16x128xf32>
    %545 = vector.broadcast %524 : vector<1x128xf32> to vector<16x128xf32>
    %546 = arith.addf %544, %545 : vector<16x128xf32>
    %c1_270 = arith.constant 1 : index
    %c0_271 = arith.constant 0 : index
    %c0_272 = arith.constant 0 : index
    %547 = vector.load %arg20[%c1_270, %c0_271, %c0_272] : memref<2x128x256xf32, #tpu.memory_space<vmem>>, vector<1x128x256xf32>
    %548 = vector.shape_cast %547 : vector<1x128x256xf32> to vector<128x256xf32>
    %cst_273 = arith.constant dense<0.000000e+00> : vector<16x256xf32>
    %549 = tpu.matmul %546, %548, %cst_273 {dimension_numbers = #tpu.dot_dimension_numbers<[1], [0], [0], [1], [0, 0, 1, 1], [], []>} : vector<16x128xf32>, vector<128x256xf32>, vector<16x256xf32> -> vector<16x256xf32>
    %c1_274 = arith.constant 1 : index
    %c0_275 = arith.constant 0 : index
    %c0_276 = arith.constant 0 : index
    %550 = vector.load %arg21[%c1_274, %c0_275, %c0_276] : memref<2x1x256xf32, #tpu.memory_space<vmem>>, vector<1x1x256xf32>
    %551 = vector.shape_cast %550 : vector<1x1x256xf32> to vector<1x256xf32>
    %552 = vector.broadcast %551 : vector<1x256xf32> to vector<16x256xf32>
    %553 = arith.addf %549, %552 : vector<16x256xf32>
    %cst_277 = arith.constant 0.000000e+00 : f32
    %554 = vector.broadcast %cst_277 : f32 to vector<16x256xf32>
    %555 = arith.maximumf %553, %554 : vector<16x256xf32>
    %c1_278 = arith.constant 1 : index
    %c0_279 = arith.constant 0 : index
    %c0_280 = arith.constant 0 : index
    %556 = vector.load %arg22[%c1_278, %c0_279, %c0_280] : memref<2x256x128xf32, #tpu.memory_space<vmem>>, vector<1x256x128xf32>
    %557 = vector.shape_cast %556 : vector<1x256x128xf32> to vector<256x128xf32>
    %cst_281 = arith.constant dense<0.000000e+00> : vector<16x128xf32>
    %558 = tpu.matmul %555, %557, %cst_281 {dimension_numbers = #tpu.dot_dimension_numbers<[1], [0], [0], [1], [0, 0, 1, 1], [], []>} : vector<16x256xf32>, vector<256x128xf32>, vector<16x128xf32> -> vector<16x128xf32>
    %c1_282 = arith.constant 1 : index
    %c0_283 = arith.constant 0 : index
    %c0_284 = arith.constant 0 : index
    %559 = vector.load %arg23[%c1_282, %c0_283, %c0_284] : memref<2x1x128xf32, #tpu.memory_space<vmem>>, vector<1x1x128xf32>
    %560 = vector.shape_cast %559 : vector<1x1x128xf32> to vector<1x128xf32>
    %561 = vector.broadcast %560 : vector<1x128xf32> to vector<16x128xf32>
    %562 = arith.addf %558, %561 : vector<16x128xf32>
    %563 = arith.addf %546, %562 : vector<16x128xf32>
    %c1_285 = arith.constant 1 : index
    %c0_286 = arith.constant 0 : index
    %c0_287 = arith.constant 0 : index
    %564 = vector.load %arg18[%c1_285, %c0_286, %c0_287] : memref<2x1x128xf32, #tpu.memory_space<vmem>>, vector<1x1x128xf32>
    %565 = vector.shape_cast %564 : vector<1x1x128xf32> to vector<1x128xf32>
    %c1_288 = arith.constant 1 : index
    %c0_289 = arith.constant 0 : index
    %c0_290 = arith.constant 0 : index
    %566 = vector.load %arg19[%c1_288, %c0_289, %c0_290] : memref<2x1x128xf32, #tpu.memory_space<vmem>>, vector<1x1x128xf32>
    %567 = vector.shape_cast %566 : vector<1x1x128xf32> to vector<1x128xf32>
    %cst_291 = arith.constant dense<0.000000e+00> : vector<16xf32>
    %568 = vector.multi_reduction <add>, %563, %cst_291 [1] : vector<16x128xf32> to vector<16xf32>
    %569 = vector.shape_cast %568 : vector<16xf32> to vector<16x1xf32>
    %cst_292 = arith.constant 1.280000e+02 : f32
    %570 = vector.broadcast %cst_292 : f32 to vector<16x1xf32>
    %571 = arith.divf %569, %570 : vector<16x1xf32>
    %572 = vector.broadcast %571 : vector<16x1xf32> to vector<16x128xf32>
    %573 = arith.subf %563, %572 : vector<16x128xf32>
    %574 = arith.mulf %573, %573 : vector<16x128xf32>
    %cst_293 = arith.constant dense<0.000000e+00> : vector<16xf32>
    %575 = vector.multi_reduction <add>, %574, %cst_293 [1] : vector<16x128xf32> to vector<16xf32>
    %576 = vector.shape_cast %575 : vector<16xf32> to vector<16x1xf32>
    %cst_294 = arith.constant 1.280000e+02 : f32
    %577 = vector.broadcast %cst_294 : f32 to vector<16x1xf32>
    %578 = arith.divf %576, %577 : vector<16x1xf32>
    %579 = vector.broadcast %571 : vector<16x1xf32> to vector<16x128xf32>
    %580 = arith.subf %563, %579 : vector<16x128xf32>
    %cst_295 = arith.constant 9.99999974E-6 : f32
    %581 = vector.broadcast %cst_295 : f32 to vector<16x1xf32>
    %582 = arith.addf %578, %581 : vector<16x1xf32>
    %583 = math.rsqrt %582 : vector<16x1xf32>
    %584 = vector.broadcast %583 : vector<16x1xf32> to vector<16x128xf32>
    %585 = arith.mulf %580, %584 : vector<16x128xf32>
    %586 = vector.broadcast %565 : vector<1x128xf32> to vector<16x128xf32>
    %587 = arith.mulf %585, %586 : vector<16x128xf32>
    %588 = vector.broadcast %567 : vector<1x128xf32> to vector<16x128xf32>
    %589 = arith.addf %587, %588 : vector<16x128xf32>
    %c0_296 = arith.constant 0 : index
    %c0_297 = arith.constant 0 : index
    %590 = vector.load %arg24[%c0_296, %c0_297] : memref<128x128xf32, #tpu.memory_space<vmem>>, vector<128x128xf32>
    %cst_298 = arith.constant dense<0.000000e+00> : vector<16x128xf32>
    %591 = tpu.matmul %589, %590, %cst_298 {dimension_numbers = #tpu.dot_dimension_numbers<[1], [0], [0], [1], [0, 0, 1, 1], [], []>} : vector<16x128xf32>, vector<128x128xf32>, vector<16x128xf32> -> vector<16x128xf32>
    %c0_299 = arith.constant 0 : index
    %c0_300 = arith.constant 0 : index
    %592 = vector.load %arg25[%c0_299, %c0_300] : memref<1x128xf32, #tpu.memory_space<vmem>>, vector<1x128xf32>
    %593 = vector.broadcast %592 : vector<1x128xf32> to vector<16x128xf32>
    %594 = arith.addf %591, %593 : vector<16x128xf32>
    %c0_301 = arith.constant 0 : index
    %c0_302 = arith.constant 0 : index
    %595 = vector.load %arg26[%c0_301, %c0_302] : memref<16x128xf32, #tpu.memory_space<vmem>>, vector<16x128xf32>
    tpu.vector_store %arg26[%c0_301, %c0_302], %594 {strides = array<i32>} : memref<16x128xf32, #tpu.memory_space<vmem>>, vector<16x128xf32>,
    return
  }
}

</mosaic_0001>

<llo_original>
// kernel: eq.17
$region0: #{eq.17}
  %s0 = inlined_call_operand.vmem [shape: s32[2,8], index: 0, kind: input, shape index: {}]
  %s1 = inlined_call_operand.vmem [shape: s32[16], index: 1, kind: output, shape index: {}]
  $region1: #{eq.17} parent=0
    #allocation0 [shape = 'u8[4096]{0}', space=vmem, size = 0x1000, scoped, tag = 'scoped mem for output reshape']
    #allocation1 [shape = 'u8[4096]{0}', space=vmem, size = 0x1000, scoped, tag = 'scoped mem for input reshape']
    %s3 = sshllo.u32 0, 2
    %v4 = vld [vmem:[%s0] sm:%s3]
    %5 = vst [vmem:[#allocation1] sm:%s3] %v4
    %v6 = vld [vmem:[#allocation1] sm:$0x1]
    %vm7 = vcmask 64512
    %8 = vst.msk [vmem:[#allocation0] sm:$0x1] %vm7, %v6
    %s9 = scalar_lea.vmem [#allocation1], 1
    %v10 = vld [vmem:[%s9] sm:$0x1]
    %11 = vrot.lane.b32.xlu0 %v10, 8
    %v12 = vpop.permute.xlu0 %11
    %vm13 = vcmask 130112
    %14 = vst.msk [vmem:[#allocation0] sm:$0x1] %vm13, %v12
    %s16 = sshllo.u32 0, 1
    %v18 = vld [vmem:[#allocation0] sm:%s16]
    %s19 = sshllo.u32 0, 1
    %20 = vst [vmem:[%s1] sm:%s19] %v18

// kernel: eq.27
$region0: #{eq.27}
  %s0 = inlined_call_operand.vmem [shape: s32[2,4], index: 0, kind: input, shape index: {}]
  %s1 = inlined_call_operand.vmem [shape: s32[8], index: 1, kind: output, shape index: {}]
  $region1: #{eq.27} parent=0
    #allocation0 [shape = 'u8[4096]{0}', space=vmem, size = 0x1000, scoped, tag = 'scoped mem for output reshape']
    #allocation1 [shape = 'u8[4096]{0}', space=vmem, size = 0x1000, scoped, tag = 'scoped mem for input reshape']
    %s3 = sshllo.u32 0, 2
    %v4 = vld [vmem:[%s0] sm:%s3]
    %5 = vst [vmem:[#allocation1] sm:%s3] %v4
    %v6 = vld [vmem:[#allocation1] sm:$0x1]
    %vm7 = vcmask 31744
    %8 = vst.msk [vmem:[#allocation0] sm:$0x1] %vm7, %v6
    %s9 = scalar_lea.vmem [#allocation1], 1
    %v10 = vld [vmem:[%s9] sm:$0x1]
    %11 = vrot.lane.b32.xlu0 %v10, 4
    %v12 = vpop.permute.xlu0 %11
    %vm13 = vcmask 64544
    %14 = vst.msk [vmem:[#allocation0] sm:$0x1] %vm13, %v12
    %s16 = sshllo.u32 0, 1
    %v18 = vld [vmem:[#allocation0] sm:%s16]
    %s19 = sshllo.u32 0, 1
    %20 = vst [vmem:[%s1] sm:%s19] %v18

// kernel: _lambda_.1
$region0: #{_lambda_.1}
  #allocation0 [shape = 'u32[]', space=smem, size = 0x4, offset = 0x4, fixed_abs, tag = 'smem constant byte address 0x4 - core index']
  #allocation1 [shape = 'u32[144,128]{1,0:T(1,128)}', space=vmem, size = 0x12000, scoped, tag = 'internal scratch']
  %s0 = inlined_call_operand.vmem [shape: f32[8,512], index: 0, kind: input, shape index: {}]
  %s1 = inlined_call_operand.vmem [shape: f32[512,128], index: 1, kind: input, shape index: {}]
  %s2 = inlined_call_operand.vmem [shape: f32[8,128], index: 2, kind: input, shape index: {}]
  %s3 = inlined_call_operand.vmem [shape: f32[16,128], index: 3, kind: input, shape index: {}]
  %s4 = inlined_call_operand.vmem [shape: f32[16,16], index: 4, kind: input, shape index: {}]
  %s5 = inlined_call_operand.vmem [shape: f32[16,8], index: 5, kind: input, shape index: {}]
  %s6 = inlined_call_operand.vmem [shape: f32[2,128,384], index: 6, kind: input, shape index: {}]
  %s7 = inlined_call_operand.vmem [shape: f32[2,1,384], index: 7, kind: input, shape index: {}, may-alias: {7,11}]
  %s8 = inlined_call_operand.vmem [shape: f32[2,128,128], index: 8, kind: input, shape index: {}]
  %s9 = inlined_call_operand.vmem [shape: f32[2,1,128], index: 9, kind: input, shape index: {}, may-alias: {9,13,15,17,19,23}]
  %s10 = inlined_call_operand.vmem [shape: f32[2,128,384], index: 10, kind: input, shape index: {}]
  %s11 = inlined_call_operand.vmem [shape: f32[2,1,384], index: 11, kind: input, shape index: {}, may-alias: {7,11}]
  %s12 = inlined_call_operand.vmem [shape: f32[2,128,128], index: 12, kind: input, shape index: {}]
  %s13 = inlined_call_operand.vmem [shape: f32[2,1,128], index: 13, kind: input, shape index: {}, may-alias: {9,13,15,17,19,23}]
  %s14 = inlined_call_operand.vmem [shape: f32[2,1,128], index: 14, kind: input, shape index: {}, may-alias: {14,16,18}]
  %s15 = inlined_call_operand.vmem [shape: f32[2,1,128], index: 15, kind: input, shape index: {}, may-alias: {9,13,15,17,19,23}]
  %s16 = inlined_call_operand.vmem [shape: f32[2,1,128], index: 16, kind: input, shape index: {}, may-alias: {14,16,18}]
  %s17 = inlined_call_operand.vmem [shape: f32[2,1,128], index: 17, kind: input, shape index: {}, may-alias: {9,13,15,17,19,23}]
  %s18 = inlined_call_operand.vmem [shape: f32[2,1,128], index: 18, kind: input, shape index: {}, may-alias: {14,16,18}]
  %s19 = inlined_call_operand.vmem [shape: f32[2,1,128], index: 19, kind: input, shape index: {}, may-alias: {9,13,15,17,19,23}]
  %s20 = inlined_call_operand.vmem [shape: f32[2,128,256], index: 20, kind: input, shape index: {}]
  %s21 = inlined_call_operand.vmem [shape: f32[2,1,256], index: 21, kind: input, shape index: {}]
  %s22 = inlined_call_operand.vmem [shape: f32[2,256,128], index: 22, kind: input, shape index: {}]
  %s23 = inlined_call_operand.vmem [shape: f32[2,1,128], index: 23, kind: input, shape index: {}, may-alias: {9,13,15,17,19,23}]
  %s24 = inlined_call_operand.vmem [shape: f32[128,128], index: 24, kind: input, shape index: {}]
  %s25 = inlined_call_operand.vmem [shape: f32[1,128], index: 25, kind: input, shape index: {}]
  %s26 = inlined_call_operand.vmem [shape: f32[16,128], index: 26, kind: output, shape index: {}]
  %s27 = sld [smem:[#allocation0]]
  $region114: #{_lambda_.1} parent=0
    _
  %s29 = ssub.s32 1, %s27
  %s30 = scalar_select 0, %s29, %s27
  // Predicated region
  $region2: #{_lambda_.1} parent=0 // pred_check
    _
  $region3: #{_lambda_.1} parent=0 // pred_check_branch
    %32 = sbr.rel (0) target = $region5
  $region4: #{_lambda_.1} parent=0 // pred_region
    _
  $region5: #{_lambda_.1} parent=0 // pred_fallthru
    _
  // Predicated region
  $region6: #{_lambda_.1} parent=0 // pred_check
    _
  $region7: #{_lambda_.1} parent=0 // pred_check_branch
    %34 = sbr.rel (0) target = $region9
  $region8: #{_lambda_.1} parent=0 // pred_region
    _
  $region9: #{_lambda_.1} parent=0 // pred_fallthru
    _
  // Predicated region
  $region10: #{_lambda_.1} parent=0 // pred_check
    _
  $region11: #{_lambda_.1} parent=0 // pred_check_branch
    %36 = sbr.rel (0) target = $region13
  $region12: #{_lambda_.1} parent=0 // pred_region
    _
  $region13: #{_lambda_.1} parent=0 // pred_fallthru
    _
  // Predicated region
  $region14: #{_lambda_.1} parent=0 // pred_check
    _
  $region15: #{_lambda_.1} parent=0 // pred_check_branch
    %38 = sbr.rel (0) target = $region17
  $region16: #{_lambda_.1} parent=0 // pred_region
    _
  $region17: #{_lambda_.1} parent=0 // pred_fallthru
    _
  // Predicated region
  $region18: #{_lambda_.1} parent=0 // pred_check
    _
  $region19: #{_lambda_.1} parent=0 // pred_check_branch
    %40 = sbr.rel (0) target = $region21
  $region20: #{_lambda_.1} parent=0 // pred_region
    _
  $region21: #{_lambda_.1} parent=0 // pred_fallthru
    _
  // Predicated region
  $region22: #{_lambda_.1} parent=0 // pred_check
    _
  $region23: #{_lambda_.1} parent=0 // pred_check_branch
    %42 = sbr.rel (0) target = $region25
  $region24: #{_lambda_.1} parent=0 // pred_region
    _
  $region25: #{_lambda_.1} parent=0 // pred_fallthru
    _
  // Predicated region
  $region26: #{_lambda_.1} parent=0 // pred_check
    _
  $region27: #{_lambda_.1} parent=0 // pred_check_branch
    %44 = sbr.rel (0) target = $region29
  $region28: #{_lambda_.1} parent=0 // pred_region
    _
  $region29: #{_lambda_.1} parent=0 // pred_fallthru
    _
  // Predicated region
  $region30: #{_lambda_.1} parent=0 // pred_check
    _
  $region31: #{_lambda_.1} parent=0 // pred_check_branch
    %46 = sbr.rel (0) target = $region33
  $region32: #{_lambda_.1} parent=0 // pred_region
    _
  $region33: #{_lambda_.1} parent=0 // pred_fallthru
    _
  // Predicated region
  $region34: #{_lambda_.1} parent=0 // pred_check
    _
  $region35: #{_lambda_.1} parent=0 // pred_check_branch
    %48 = sbr.rel (0) target = $region37
  $region36: #{_lambda_.1} parent=0 // pred_region
    _
  $region37: #{_lambda_.1} parent=0 // pred_fallthru
    _
  // Predicated region
  $region38: #{_lambda_.1} parent=0 // pred_check
    _
  $region39: #{_lambda_.1} parent=0 // pred_check_branch
    %50 = sbr.rel (0) target = $region41
  $region40: #{_lambda_.1} parent=0 // pred_region
    _
  $region41: #{_lambda_.1} parent=0 // pred_fallthru
    _
  // Predicated region
  $region42: #{_lambda_.1} parent=0 // pred_check
    _
  $region43: #{_lambda_.1} parent=0 // pred_check_branch
    %52 = sbr.rel (0) target = $region45
  $region44: #{_lambda_.1} parent=0 // pred_region
    _
  $region45: #{_lambda_.1} parent=0 // pred_fallthru
    _
  // Predicated region
  $region46: #{_lambda_.1} parent=0 // pred_check
    _
  $region47: #{_lambda_.1} parent=0 // pred_check_branch
    %54 = sbr.rel (0) target = $region49
  $region48: #{_lambda_.1} parent=0 // pred_region
    _
  $region49: #{_lambda_.1} parent=0 // pred_fallthru
    _
  // Predicated region
  $region50: #{_lambda_.1} parent=0 // pred_check
    _
  $region51: #{_lambda_.1} parent=0 // pred_check_branch
    %56 = sbr.rel (0) target = $region53
  $region52: #{_lambda_.1} parent=0 // pred_region
    _
  $region53: #{_lambda_.1} parent=0 // pred_fallthru
    _
  // Predicated region
  $region54: #{_lambda_.1} parent=0 // pred_check
    _
  $region55: #{_lambda_.1} parent=0 // pred_check_branch
    %58 = sbr.rel (0) target = $region57
  $region56: #{_lambda_.1} parent=0 // pred_region
    _
  $region57: #{_lambda_.1} parent=0 // pred_fallthru
    _
  // Predicated region
  $region58: #{_lambda_.1} parent=0 // pred_check
    _
  $region59: #{_lambda_.1} parent=0 // pred_check_branch
    %60 = sbr.rel (0) target = $region61
  $region60: #{_lambda_.1} parent=0 // pred_region
    _
  $region61: #{_lambda_.1} parent=0 // pred_fallthru
    _
  // Predicated region
  $region62: #{_lambda_.1} parent=0 // pred_check
    _
  $region63: #{_lambda_.1} parent=0 // pred_check_branch
    %62 = sbr.rel (0) target = $region65
  $region64: #{_lambda_.1} parent=0 // pred_region
    _
  $region65: #{_lambda_.1} parent=0 // pred_fallthru
    _
  // Predicated region
  $region66: #{_lambda_.1} parent=0 // pred_check
    _
  $region67: #{_lambda_.1} parent=0 // pred_check_branch
    %64 = sbr.rel (0) target = $region69
  $region68: #{_lambda_.1} parent=0 // pred_region
    _
  $region69: #{_lambda_.1} parent=0 // pred_fallthru
    _
  // Predicated region
  $region70: #{_lambda_.1} parent=0 // pred_check
    _
  $region71: #{_lambda_.1} parent=0 // pred_check_branch
    %66 = sbr.rel (0) target = $region73
  $region72: #{_lambda_.1} parent=0 // pred_region
    _
  $region73: #{_lambda_.1} parent=0 // pred_fallthru
    _
  // Predicated region
  $region74: #{_lambda_.1} parent=0 // pred_check
    _
  $region75: #{_lambda_.1} parent=0 // pred_check_branch
    %68 = sbr.rel (0) target = $region77
  $region76: #{_lambda_.1} parent=0 // pred_region
    _
  $region77: #{_lambda_.1} parent=0 // pred_fallthru
    _
  // Predicated region
  $region78: #{_lambda_.1} parent=0 // pred_check
    _
  $region79: #{_lambda_.1} parent=0 // pred_check_branch
    %70 = sbr.rel (0) target = $region81
  $region80: #{_lambda_.1} parent=0 // pred_region
    _
  $region81: #{_lambda_.1} parent=0 // pred_fallthru
    _
  // Predicated region
  $region82: #{_lambda_.1} parent=0 // pred_check
    _
  $region83: #{_lambda_.1} parent=0 // pred_check_branch
    %72 = sbr.rel (0) target = $region85
  $region84: #{_lambda_.1} parent=0 // pred_region
    _
  $region85: #{_lambda_.1} parent=0 // pred_fallthru
    _
  // Predicated region
  $region86: #{_lambda_.1} parent=0 // pred_check
    _
  $region87: #{_lambda_.1} parent=0 // pred_check_branch
    %74 = sbr.rel (0) target = $region89
  $region88: #{_lambda_.1} parent=0 // pred_region
    _
  $region89: #{_lambda_.1} parent=0 // pred_fallthru
    _
  // Predicated region
  $region90: #{_lambda_.1} parent=0 // pred_check
    _
  $region91: #{_lambda_.1} parent=0 // pred_check_branch
    %76 = sbr.rel (0) target = $region93
  $region92: #{_lambda_.1} parent=0 // pred_region
    _
  $region93: #{_lambda_.1} parent=0 // pred_fallthru
    _
  // Predicated region
  $region94: #{_lambda_.1} parent=0 // pred_check
    _
  $region95: #{_lambda_.1} parent=0 // pred_check_branch
    %78 = sbr.rel (0) target = $region97
  $region96: #{_lambda_.1} parent=0 // pred_region
    _
  $region97: #{_lambda_.1} parent=0 // pred_fallthru
    _
  // Predicated region
  $region98: #{_lambda_.1} parent=0 // pred_check
    _
  $region99: #{_lambda_.1} parent=0 // pred_check_branch
    %80 = sbr.rel (0) target = $region101
  $region100: #{_lambda_.1} parent=0 // pred_region
    _
  $region101: #{_lambda_.1} parent=0 // pred_fallthru
    _
  // Predicated region
  $region102: #{_lambda_.1} parent=0 // pred_check
    _
  $region103: #{_lambda_.1} parent=0 // pred_check_branch
    %82 = sbr.rel (0) target = $region105
  $region104: #{_lambda_.1} parent=0 // pred_region
    _
  $region105: #{_lambda_.1} parent=0 // pred_fallthru
    _
  %v83 = vld [vmem:[%s0] sm:$0xff]
  %v84 = vld [vmem:[%s0 + $0x8] sm:$0xff]
  %v85 = vld [vmem:[%s0 + $0x10] sm:$0xff]
  %v86 = vld [vmem:[%s0 + $0x18] sm:$0xff]
  %v87 = vld [vmem:[%s1] sm:$0xff]
  %v88 = vld [vmem:[%s1 + $0x8] sm:$0xff]
  %v89 = vld [vmem:[%s1 + $0x10] sm:$0xff]
  %v90 = vld [vmem:[%s1 + $0x18] sm:$0xff]
  %v91 = vld [vmem:[%s1 + $0x20] sm:$0xff]
  %v92 = vld [vmem:[%s1 + $0x28] sm:$0xff]
  %v93 = vld [vmem:[%s1 + $0x30] sm:$0xff]
  %v94 = vld [vmem:[%s1 + $0x38] sm:$0xff]
  %v95 = vld [vmem:[%s1 + $0x40] sm:$0xff]
  %v96 = vld [vmem:[%s1 + $0x48] sm:$0xff]
  %v97 = vld [vmem:[%s1 + $0x50] sm:$0xff]
  %v98 = vld [vmem:[%s1 + $0x58] sm:$0xff]
  %v99 = vld [vmem:[%s1 + $0x60] sm:$0xff]
  %v100 = vld [vmem:[%s1 + $0x68] sm:$0xff]
  %v101 = vld [vmem:[%s1 + $0x70] sm:$0xff]
  %v102 = vld [vmem:[%s1 + $0x78] sm:$0xff]
  %v103 = vld [vmem:[%s1 + $0x80] sm:$0xff]
  %v104 = vld [vmem:[%s1 + $0x88] sm:$0xff]
  %v105 = vld [vmem:[%s1 + $0x90] sm:$0xff]
  %v106 = vld [vmem:[%s1 + $0x98] sm:$0xff]
  %v107 = vld [vmem:[%s1 + $0xa0] sm:$0xff]
  %v108 = vld [vmem:[%s1 + $0xa8] sm:$0xff]
  %v109 = vld [vmem:[%s1 + $0xb0] sm:$0xff]
  %v110 = vld [vmem:[%s1 + $0xb8] sm:$0xff]
  %v111 = vld [vmem:[%s1 + $0xc0] sm:$0xff]
  %v112 = vld [vmem:[%s1 + $0xc8] sm:$0xff]
  %v113 = vld [vmem:[%s1 + $0xd0] sm:$0xff]
  %v114 = vld [vmem:[%s1 + $0xd8] sm:$0xff]
  %v115 = vld [vmem:[%s1 + $0xe0] sm:$0xff]
  %v116 = vld [vmem:[%s1 + $0xe8] sm:$0xff]
  %v117 = vld [vmem:[%s1 + $0xf0] sm:$0xff]
  %v118 = vld [vmem:[%s1 + $0xf8] sm:$0xff]
  %v119 = vld [vmem:[%s1 + $0x100] sm:$0xff]
  %v120 = vld [vmem:[%s1 + $0x108] sm:$0xff]
  %v121 = vld [vmem:[%s1 + $0x110] sm:$0xff]
  %v122 = vld [vmem:[%s1 + $0x118] sm:$0xff]
  %v123 = vld [vmem:[%s1 + $0x120] sm:$0xff]
  %v124 = vld [vmem:[%s1 + $0x128] sm:$0xff]
  %v125 = vld [vmem:[%s1 + $0x130] sm:$0xff]
  %v126 = vld [vmem:[%s1 + $0x138] sm:$0xff]
  %v127 = vld [vmem:[%s1 + $0x140] sm:$0xff]
  %v128 = vld [vmem:[%s1 + $0x148] sm:$0xff]
  %v129 = vld [vmem:[%s1 + $0x150] sm:$0xff]
  %v130 = vld [vmem:[%s1 + $0x158] sm:$0xff]
  %v131 = vld [vmem:[%s1 + $0x160] sm:$0xff]
  %v132 = vld [vmem:[%s1 + $0x168] sm:$0xff]
  %v133 = vld [vmem:[%s1 + $0x170] sm:$0xff]
  %v134 = vld [vmem:[%s1 + $0x178] sm:$0xff]
  %v135 = vld [vmem:[%s1 + $0x180] sm:$0xff]
  %v136 = vld [vmem:[%s1 + $0x188] sm:$0xff]
  %v137 = vld [vmem:[%s1 + $0x190] sm:$0xff]
  %v138 = vld [vmem:[%s1 + $0x198] sm:$0xff]
  %v139 = vld [vmem:[%s1 + $0x1a0] sm:$0xff]
  %v140 = vld [vmem:[%s1 + $0x1a8] sm:$0xff]
  %v141 = vld [vmem:[%s1 + $0x1b0] sm:$0xff]
  %v142 = vld [vmem:[%s1 + $0x1b8] sm:$0xff]
  %v143 = vld [vmem:[%s1 + $0x1c0] sm:$0xff]
  %v144 = vld [vmem:[%s1 + $0x1c8] sm:$0xff]
  %v145 = vld [vmem:[%s1 + $0x1d0] sm:$0xff]
  %v146 = vld [vmem:[%s1 + $0x1d8] sm:$0xff]
  %v147 = vld [vmem:[%s1 + $0x1e0] sm:$0xff]
  %v148 = vld [vmem:[%s1 + $0x1e8] sm:$0xff]
  %v149 = vld [vmem:[%s1 + $0x1f0] sm:$0xff]
  %v150 = vld [vmem:[%s1 + $0x1f8] sm:$0xff]
  %v151 = vld [vmem:[%s2] sm:$0xff]
  %152 = vmatprep.subr.mxu0 0.0
  %153 = vmatpush1.msra.mxu0 %v87
  %154 = vmatprep.subr.mxu0 0.0
  %155 = vmatpush1.msra.mxu0 %v88
  %156 = vmatprep.subr.mxu0 0.0
  %157 = vmatpush1.msra.mxu0 %v89
  %158 = vmatprep.subr.mxu0 0.0
  %159 = vmatpush1.msra.mxu0 %v90
  %160 = vmatprep.subr.mxu0 0.0
  %161 = vmatpush1.msra.mxu0 %v91
  %162 = vmatprep.subr.mxu0 0.0
  %163 = vmatpush1.msra.mxu0 %v92
  %164 = vmatprep.subr.mxu0 0.0
  %165 = vmatpush1.msra.mxu0 %v93
  %166 = vmatprep.subr.mxu0 0.0
  %167 = vmatpush1.msra.mxu0 %v94
  %168 = vmatprep.subr.mxu0 0.0
  %169 = vmatpush1.msra.mxu0 %v95
  %170 = vmatprep.subr.mxu0 0.0
  %171 = vmatpush1.msra.mxu0 %v96
  %172 = vmatprep.subr.mxu0 0.0
  %173 = vmatpush1.msra.mxu0 %v97
  %174 = vmatprep.subr.mxu0 0.0
  %175 = vmatpush1.msra.mxu0 %v98
  %176 = vmatprep.subr.mxu0 0.0
  %177 = vmatpush1.msra.mxu0 %v99
  %178 = vmatprep.subr.mxu0 0.0
  %179 = vmatpush1.msra.mxu0 %v100
  %180 = vmatprep.subr.mxu0 0.0
  %181 = vmatpush1.msra.mxu0 %v101
  %182 = vmatprep.subr.mxu0 0.0
  %183 = vmatpush1.msra.mxu0 %v102
  %184 = vmatprep.subr.mxu0 0.0
  %185 = vmatpush1.msra.mxu0 %v103
  %186 = vmatprep.subr.mxu0 0.0
  %187 = vmatpush1.msra.mxu0 %v104
  %188 = vmatprep.subr.mxu0 0.0
  %189 = vmatpush1.msra.mxu0 %v105
  %190 = vmatprep.subr.mxu0 0.0
  %191 = vmatpush1.msra.mxu0 %v106
  %192 = vmatprep.subr.mxu0 0.0
  %193 = vmatpush1.msra.mxu0 %v107
  %194 = vmatprep.subr.mxu0 0.0
  %195 = vmatpush1.msra.mxu0 %v108
  %196 = vmatprep.subr.mxu0 0.0
  %197 = vmatpush1.msra.mxu0 %v109
  %198 = vmatprep.subr.mxu0 0.0
  %199 = vmatpush1.msra.mxu0 %v110
  %200 = vmatprep.subr.mxu0 0.0
  %201 = vmatpush1.msra.mxu0 %v111
  %202 = vmatprep.subr.mxu0 0.0
  %203 = vmatpush1.msra.mxu0 %v112
  %204 = vmatprep.subr.mxu0 0.0
  %205 = vmatpush1.msra.mxu0 %v113
  %206 = vmatprep.subr.mxu0 0.0
  %207 = vmatpush1.msra.mxu0 %v114
  %208 = vmatprep.subr.mxu0 0.0
  %209 = vmatpush1.msra.mxu0 %v115
  %210 = vmatprep.subr.mxu0 0.0
  %211 = vmatpush1.msra.mxu0 %v116
  %212 = vmatprep.subr.mxu0 0.0
  %213 = vmatpush1.msra.mxu0 %v117
  %214 = vmatprep.subr.mxu0 0.0
  %215 = vmatpush1.msra.mxu0 %v118
  %216 = vmatprep.mubr.f32.mxu0 %v84
  %217 = vmatmul.mubr.f32.gmra.mrb[0].mxu0 %v83
  %v218 = vpop.f32.mrb[0].mxu0
  %v219 = vadd.f32 %v151, %v218
  %v220 = vpop.f32.mrb[0].mxu0
  %221 = vdwg.mxu0
  %222 = vmatprep.subr.mxu0 0.0
  %223 = vmatpush1.msra.mxu0 %v119
  %224 = vmatprep.subr.mxu0 0.0
  %225 = vmatpush1.msra.mxu0 %v120
  %226 = vmatprep.subr.mxu0 0.0
  %227 = vmatpush1.msra.mxu0 %v121
  %228 = vmatprep.subr.mxu0 0.0
  %229 = vmatpush1.msra.mxu0 %v122
  %230 = vmatprep.subr.mxu0 0.0
  %231 = vmatpush1.msra.mxu0 %v123
  %232 = vmatprep.subr.mxu0 0.0
  %233 = vmatpush1.msra.mxu0 %v124
  %234 = vmatprep.subr.mxu0 0.0
  %235 = vmatpush1.msra.mxu0 %v125
  %236 = vmatprep.subr.mxu0 0.0
  %237 = vmatpush1.msra.mxu0 %v126
  %238 = vmatprep.subr.mxu0 0.0
  %239 = vmatpush1.msra.mxu0 %v127
  %240 = vmatprep.subr.mxu0 0.0
  %241 = vmatpush1.msra.mxu0 %v128
  %242 = vmatprep.subr.mxu0 0.0
  %243 = vmatpush1.msra.mxu0 %v129
  %244 = vmatprep.subr.mxu0 0.0
  %245 = vmatpush1.msra.mxu0 %v130
  %246 = vmatprep.subr.mxu0 0.0
  %247 = vmatpush1.msra.mxu0 %v131
  %248 = vmatprep.subr.mxu0 0.0
  %249 = vmatpush1.msra.mxu0 %v132
  %250 = vmatprep.subr.mxu0 0.0
  %251 = vmatpush1.msra.mxu0 %v133
  %252 = vmatprep.subr.mxu0 0.0
  %253 = vmatpush1.msra.mxu0 %v134
  %254 = vmatprep.subr.mxu0 0.0
  %255 = vmatpush1.msra.mxu0 %v135
  %256 = vmatprep.subr.mxu0 0.0
  %257 = vmatpush1.msra.mxu0 %v136
  %258 = vmatprep.subr.mxu0 0.0
  %259 = vmatpush1.msra.mxu0 %v137
  %260 = vmatprep.subr.mxu0 0.0
  %261 = vmatpush1.msra.mxu0 %v138
  %262 = vmatprep.subr.mxu0 0.0
  %263 = vmatpush1.msra.mxu0 %v139
  %264 = vmatprep.subr.mxu0 0.0
  %265 = vmatpush1.msra.mxu0 %v140
  %266 = vmatprep.subr.mxu0 0.0
  %267 = vmatpush1.msra.mxu0 %v141
  %268 = vmatprep.subr.mxu0 0.0
  %269 = vmatpush1.msra.mxu0 %v142
  %270 = vmatprep.subr.mxu0 0.0
  %271 = vmatpush1.msra.mxu0 %v143
  %272 = vmatprep.subr.mxu0 0.0
  %273 = vmatpush1.msra.mxu0 %v144
  %274 = vmatprep.subr.mxu0 0.0
  %275 = vmatpush1.msra.mxu0 %v145
  %276 = vmatprep.subr.mxu0 0.0
  %277 = vmatpush1.msra.mxu0 %v146
  %278 = vmatprep.subr.mxu0 0.0
  %279 = vmatpush1.msra.mxu0 %v147
  %280 = vmatprep.subr.mxu0 0.0
  %281 = vmatpush1.msra.mxu0 %v148
  %282 = vmatprep.subr.mxu0 0.0
  %283 = vmatpush1.msra.mxu0 %v149
  %284 = vmatprep.subr.mxu0 0.0
  %285 = vmatpush1.msra.mxu0 %v150
  %286 = vmatprep.mubr.f32.mxu0 %v86
  %287 = vmatmul.mubr.f32.gmra.mrb[0].mxu0 %v85
  %v288 = vpop.f32.mrb[0].mxu0
  %v289 = vadd.f32 %v219, %v288
  %v290 = vpop.f32.mrb[0].mxu0
  %291 = vdwg.mxu0
  %v292 = vld [vmem:[%s3] sm:$0xff]
  %v293 = vld [vmem:[%s3 + $0x8] sm:$0xff]
  %v294 = vld [vmem:[%s4] sm:$0xff]
  %v295 = vld [vmem:[%s4 + $0x8] sm:$0xff]
  %v296 = vld [vmem:[%s5] sm:$0xff]
  %v297 = vld [vmem:[%s5 + $0x8] sm:$0xff]
  %v298 = vld [vmem:[%s6] sm:$0xff]
  %v299 = vld [vmem:[%s6 + $0x18] sm:$0xff]
  %v300 = vld [vmem:[%s6 + $0x30] sm:$0xff]
  %v301 = vld [vmem:[%s6 + $0x48] sm:$0xff]
  %v302 = vld [vmem:[%s6 + $0x60] sm:$0xff]
  %v303 = vld [vmem:[%s6 + $0x78] sm:$0xff]
  %v304 = vld [vmem:[%s6 + $0x90] sm:$0xff]
  %v305 = vld [vmem:[%s6 + $0xa8] sm:$0xff]
  %v306 = vld [vmem:[%s6 + $0xc0] sm:$0xff]
  %v307 = vld [vmem:[%s6 + $0xd8] sm:$0xff]
  %v308 = vld [vmem:[%s6 + $0xf0] sm:$0xff]
  %v309 = vld [vmem:[%s6 + $0x108] sm:$0xff]
  %v310 = vld [vmem:[%s6 + $0x120] sm:$0xff]
  %v311 = vld [vmem:[%s6 + $0x138] sm:$0xff]
  %v312 = vld [vmem:[%s6 + $0x150] sm:$0xff]
  %v313 = vld [vmem:[%s6 + $0x168] sm:$0xff]
  %v314 = vld [vmem:[%s7] sm:$0x1]
  %v316 = vlaneseq
  %v317 = vshrl.u32 %v316, 7
  %v318 = vsub.s32 0, %v317
  %v319 = vrot.slane %v314, %v318
  %321 = vmatprep.subr.mxu0 0.0
  %322 = vmatpush1.msra.mxu0 %v298
  %323 = vmatprep.subr.mxu0 0.0
  %324 = vmatpush1.msra.mxu0 %v299
  %325 = vmatprep.subr.mxu0 0.0
  %326 = vmatpush1.msra.mxu0 %v300
  %327 = vmatprep.subr.mxu0 0.0
  %328 = vmatpush1.msra.mxu0 %v301
  %329 = vmatprep.subr.mxu0 0.0
  %330 = vmatpush1.msra.mxu0 %v302
  %331 = vmatprep.subr.mxu0 0.0
  %332 = vmatpush1.msra.mxu0 %v303
  %333 = vmatprep.subr.mxu0 0.0
  %334 = vmatpush1.msra.mxu0 %v304
  %335 = vmatprep.subr.mxu0 0.0
  %336 = vmatpush1.msra.mxu0 %v305
  %337 = vmatprep.subr.mxu0 0.0
  %338 = vmatpush1.msra.mxu0 %v306
  %339 = vmatprep.subr.mxu0 0.0
  %340 = vmatpush1.msra.mxu0 %v307
  %341 = vmatprep.subr.mxu0 0.0
  %342 = vmatpush1.msra.mxu0 %v308
  %343 = vmatprep.subr.mxu0 0.0
  %344 = vmatpush1.msra.mxu0 %v309
  %345 = vmatprep.subr.mxu0 0.0
  %346 = vmatpush1.msra.mxu0 %v310
  %347 = vmatprep.subr.mxu0 0.0
  %348 = vmatpush1.msra.mxu0 %v311
  %349 = vmatprep.subr.mxu0 0.0
  %350 = vmatpush1.msra.mxu0 %v312
  %351 = vmatprep.subr.mxu0 0.0
  %352 = vmatpush1.msra.mxu0 %v313
  %353 = vmatprep.subr.mxu0 0.0
  %354 = vmatpush1.msra.mxu0 0.0
  %355 = vmatprep.subr.mxu0 0.0
  %356 = vmatpush1.msra.mxu0 0.0
  %357 = vmatprep.subr.mxu0 0.0
  %358 = vmatpush1.msra.mxu0 0.0
  %359 = vmatprep.subr.mxu0 0.0
  %360 = vmatpush1.msra.mxu0 0.0
  %361 = vmatprep.subr.mxu0 0.0
  %362 = vmatpush1.msra.mxu0 0.0
  %363 = vmatprep.subr.mxu0 0.0
  %364 = vmatpush1.msra.mxu0 0.0
  %365 = vmatprep.subr.mxu0 0.0
  %366 = vmatpush1.msra.mxu0 0.0
  %367 = vmatprep.subr.mxu0 0.0
  %368 = vmatpush1.msra.mxu0 0.0
  %369 = vmatprep.subr.mxu0 0.0
  %370 = vmatpush1.msra.mxu0 0.0
  %371 = vmatprep.subr.mxu0 0.0
  %372 = vmatpush1.msra.mxu0 0.0
  %373 = vmatprep.subr.mxu0 0.0
  %374 = vmatpush1.msra.mxu0 0.0
  %375 = vmatprep.subr.mxu0 0.0
  %376 = vmatpush1.msra.mxu0 0.0
  %377 = vmatprep.subr.mxu0 0.0
  %378 = vmatpush1.msra.mxu0 0.0
  %379 = vmatprep.subr.mxu0 0.0
  %380 = vmatpush1.msra.mxu0 0.0
  %381 = vmatprep.subr.mxu0 0.0
  %382 = vmatpush1.msra.mxu0 0.0
  %383 = vmatprep.subr.mxu0 0.0
  %384 = vmatpush1.msra.mxu0 0.0
  %385 = vmatprep.mubr.f32.mxu0 0.0
  %386 = vmatmul.mubr.f32.gmra.mrb[0].mxu0 %v292
  %v387 = vpop.f32.mrb[0].mxu0
  %v388 = vadd.f32 %v319, %v387
  %v389 = vpop.f32.mrb[0].mxu0
  %390 = vmatprep.mubr.f32.mxu0 0.0
  %391 = vmatmul.mubr.f32.gmra.mrb[0].mxu0 %v293
  %v392 = vpop.f32.mrb[0].mxu0
  %v393 = vadd.f32 %v319, %v392
  %v394 = vpop.f32.mrb[0].mxu0
  %395 = vdwg.mxu0
  %v396 = vld [vmem:[%s6 + $0x8] sm:$0xff]
  %v397 = vld [vmem:[%s6 + $0x20] sm:$0xff]
  %v398 = vld [vmem:[%s6 + $0x38] sm:$0xff]
  %v399 = vld [vmem:[%s6 + $0x50] sm:$0xff]
  %v400 = vld [vmem:[%s6 + $0x68] sm:$0xff]
  %v401 = vld [vmem:[%s6 + $0x80] sm:$0xff]
  %v402 = vld [vmem:[%s6 + $0x98] sm:$0xff]
  %v403 = vld [vmem:[%s6 + $0xb0] sm:$0xff]
  %v404 = vld [vmem:[%s6 + $0xc8] sm:$0xff]
  %v405 = vld [vmem:[%s6 + $0xe0] sm:$0xff]
  %v406 = vld [vmem:[%s6 + $0xf8] sm:$0xff]
  %v407 = vld [vmem:[%s6 + $0x110] sm:$0xff]
  %v408 = vld [vmem:[%s6 + $0x128] sm:$0xff]
  %v409 = vld [vmem:[%s6 + $0x140] sm:$0xff]
  %v410 = vld [vmem:[%s6 + $0x158] sm:$0xff]
  %v411 = vld [vmem:[%s6 + $0x170] sm:$0xff]
  %v412 = vld [vmem:[%s7 + $0x1] sm:$0x1]
  %v414 = vlaneseq
  %v415 = vshrl.u32 %v414, 7
  %v416 = vsub.s32 0, %v415
  %v417 = vrot.slane %v412, %v416
  %419 = vmatprep.subr.mxu0 0.0
  %420 = vmatpush1.msra.mxu0 %v396
  %421 = vmatprep.subr.mxu0 0.0
  %422 = vmatpush1.msra.mxu0 %v397
  %423 = vmatprep.subr.mxu0 0.0
  %424 = vmatpush1.msra.mxu0 %v398
  %425 = vmatprep.subr.mxu0 0.0
  %426 = vmatpush1.msra.mxu0 %v399
  %427 = vmatprep.subr.mxu0 0.0
  %428 = vmatpush1.msra.mxu0 %v400
  %429 = vmatprep.subr.mxu0 0.0
  %430 = vmatpush1.msra.mxu0 %v401
  %431 = vmatprep.subr.mxu0 0.0
  %432 = vmatpush1.msra.mxu0 %v402
  %433 = vmatprep.subr.mxu0 0.0
  %434 = vmatpush1.msra.mxu0 %v403
  %435 = vmatprep.subr.mxu0 0.0
  %436 = vmatpush1.msra.mxu0 %v404
  %437 = vmatprep.subr.mxu0 0.0
  %438 = vmatpush1.msra.mxu0 %v405
  %439 = vmatprep.subr.mxu0 0.0
  %440 = vmatpush1.msra.mxu0 %v406
  %441 = vmatprep.subr.mxu0 0.0
  %442 = vmatpush1.msra.mxu0 %v407
  %443 = vmatprep.subr.mxu0 0.0
  %444 = vmatpush1.msra.mxu0 %v408
  %445 = vmatprep.subr.mxu0 0.0
  %446 = vmatpush1.msra.mxu0 %v409
  %447 = vmatprep.subr.mxu0 0.0
  %448 = vmatpush1.msra.mxu0 %v410
  %449 = vmatprep.subr.mxu0 0.0
  %450 = vmatpush1.msra.mxu0 %v411
  %451 = vmatprep.subr.mxu0 0.0
  %452 = vmatpush1.msra.mxu0 0.0
  %453 = vmatprep.subr.mxu0 0.0
  %454 = vmatpush1.msra.mxu0 0.0
  %455 = vmatprep.subr.mxu0 0.0
  %456 = vmatpush1.msra.mxu0 0.0
  %457 = vmatprep.subr.mxu0 0.0
  %458 = vmatpush1.msra.mxu0 0.0
  %459 = vmatprep.subr.mxu0 0.0
  %460 = vmatpush1.msra.mxu0 0.0
  %461 = vmatprep.subr.mxu0 0.0
  %462 = vmatpush1.msra.mxu0 0.0
  %463 = vmatprep.subr.mxu0 0.0
  %464 = vmatpush1.msra.mxu0 0.0
  %465 = vmatprep.subr.mxu0 0.0
  %466 = vmatpush1.msra.mxu0 0.0
  %467 = vmatprep.subr.mxu0 0.0
  %468 = vmatpush1.msra.mxu0 0.0
  %469 = vmatprep.subr.mxu0 0.0
  %470 = vmatpush1.msra.mxu0 0.0
  %471 = vmatprep.subr.mxu0 0.0
  %472 = vmatpush1.msra.mxu0 0.0
  %473 = vmatprep.subr.mxu0 0.0
  %474 = vmatpush1.msra.mxu0 0.0
  %475 = vmatprep.subr.mxu0 0.0
  %476 = vmatpush1.msra.mxu0 0.0
  %477 = vmatprep.subr.mxu0 0.0
  %478 = vmatpush1.msra.mxu0 0.0
  %479 = vmatprep.subr.mxu0 0.0
  %480 = vmatpush1.msra.mxu0 0.0
  %481 = vmatprep.subr.mxu0 0.0
  %482 = vmatpush1.msra.mxu0 0.0
  %483 = vmatprep.mubr.f32.mxu0 0.0
  %484 = vmatmul.mubr.f32.gmra.mrb[0].mxu0 %v292
  %v485 = vpop.f32.mrb[0].mxu0
  %v486 = vadd.f32 %v417, %v485
  %v487 = vpop.f32.mrb[0].mxu0
  %488 = vmatprep.mubr.f32.mxu0 0.0
  %489 = vmatmul.mubr.f32.gmra.mrb[0].mxu0 %v293
  %v490 = vpop.f32.mrb[0].mxu0
  %v491 = vadd.f32 %v417, %v490
  %v492 = vpop.f32.mrb[0].mxu0
  %493 = vdwg.mxu0
  %v494 = vld [vmem:[%s6 + $0x10] sm:$0xff]
  %v495 = vld [vmem:[%s6 + $0x28] sm:$0xff]
  %v496 = vld [vmem:[%s6 + $0x40] sm:$0xff]
  %v497 = vld [vmem:[%s6 + $0x58] sm:$0xff]
  %v498 = vld [vmem:[%s6 + $0x70] sm:$0xff]
  %v499 = vld [vmem:[%s6 + $0x88] sm:$0xff]
  %v500 = vld [vmem:[%s6 + $0xa0] sm:$0xff]
  %v501 = vld [vmem:[%s6 + $0xb8] sm:$0xff]
  %v502 = vld [vmem:[%s6 + $0xd0] sm:$0xff]
  %v503 = vld [vmem:[%s6 + $0xe8] sm:$0xff]
  %v504 = vld [vmem:[%s6 + $0x100] sm:$0xff]
  %v505 = vld [vmem:[%s6 + $0x118] sm:$0xff]
  %v506 = vld [vmem:[%s6 + $0x130] sm:$0xff]
  %v507 = vld [vmem:[%s6 + $0x148] sm:$0xff]
  %v508 = vld [vmem:[%s6 + $0x160] sm:$0xff]
  %v509 = vld [vmem:[%s6 + $0x178] sm:$0xff]
  %v510 = vld [vmem:[%s7 + $0x2] sm:$0x1]
  %v512 = vlaneseq
  %v513 = vshrl.u32 %v512, 7
  %v514 = vsub.s32 0, %v513
  %v515 = vrot.slane %v510, %v514
  %517 = vmatprep.subr.mxu0 0.0
  %518 = vmatpush1.msra.mxu0 %v494
  %519 = vmatprep.subr.mxu0 0.0
  %520 = vmatpush1.msra.mxu0 %v495
  %521 = vmatprep.subr.mxu0 0.0
  %522 = vmatpush1.msra.mxu0 %v496
  %523 = vmatprep.subr.mxu0 0.0
  %524 = vmatpush1.msra.mxu0 %v497
  %525 = vmatprep.subr.mxu0 0.0
  %526 = vmatpush1.msra.mxu0 %v498
  %527 = vmatprep.subr.mxu0 0.0
  %528 = vmatpush1.msra.mxu0 %v499
  %529 = vmatprep.subr.mxu0 0.0
  %530 = vmatpush1.msra.mxu0 %v500
  %531 = vmatprep.subr.mxu0 0.0
  %532 = vmatpush1.msra.mxu0 %v501
  %533 = vmatprep.subr.mxu0 0.0
  %534 = vmatpush1.msra.mxu0 %v502
  %535 = vmatprep.subr.mxu0 0.0
  %536 = vmatpush1.msra.mxu0 %v503
  %537 = vmatprep.subr.mxu0 0.0
  %538 = vmatpush1.msra.mxu0 %v504
  %539 = vmatprep.subr.mxu0 0.0
  %540 = vmatpush1.msra.mxu0 %v505
  %541 = vmatprep.subr.mxu0 0.0
  %542 = vmatpush1.msra.mxu0 %v506
  %543 = vmatprep.subr.mxu0 0.0
  %544 = vmatpush1.msra.mxu0 %v507
  %545 = vmatprep.subr.mxu0 0.0
  %546 = vmatpush1.msra.mxu0 %v508
  %547 = vmatprep.subr.mxu0 0.0
  %548 = vmatpush1.msra.mxu0 %v509
  %549 = vmatprep.subr.mxu0 0.0
  %550 = vmatpush1.msra.mxu0 0.0
  %551 = vmatprep.subr.mxu0 0.0
  %552 = vmatpush1.msra.mxu0 0.0
  %553 = vmatprep.subr.mxu0 0.0
  %554 = vmatpush1.msra.mxu0 0.0
  %555 = vmatprep.subr.mxu0 0.0
  %556 = vmatpush1.msra.mxu0 0.0
  %557 = vmatprep.subr.mxu0 0.0
  %558 = vmatpush1.msra.mxu0 0.0
  %559 = vmatprep.subr.mxu0 0.0
  %560 = vmatpush1.msra.mxu0 0.0
  %561 = vmatprep.subr.mxu0 0.0
  %562 = vmatpush1.msra.mxu0 0.0
  %563 = vmatprep.subr.mxu0 0.0
  %564 = vmatpush1.msra.mxu0 0.0
  %565 = vmatprep.subr.mxu0 0.0
  %566 = vmatpush1.msra.mxu0 0.0
  %567 = vmatprep.subr.mxu0 0.0
  %568 = vmatpush1.msra.mxu0 0.0
  %569 = vmatprep.subr.mxu0 0.0
  %570 = vmatpush1.msra.mxu0 0.0
  %571 = vmatprep.subr.mxu0 0.0
  %572 = vmatpush1.msra.mxu0 0.0
  %573 = vmatprep.subr.mxu0 0.0
  %574 = vmatpush1.msra.mxu0 0.0
  %575 = vmatprep.subr.mxu0 0.0
  %576 = vmatpush1.msra.mxu0 0.0
  %577 = vmatprep.subr.mxu0 0.0
  %578 = vmatpush1.msra.mxu0 0.0
  %579 = vmatprep.subr.mxu0 0.0
  %580 = vmatpush1.msra.mxu0 0.0
  %581 = vmatprep.mubr.f32.mxu0 0.0
  %582 = vmatmul.mubr.f32.gmra.mrb[0].mxu0 %v292
  %v583 = vpop.f32.mrb[0].mxu0
  %v584 = vadd.f32 %v515, %v583
  %v585 = vpop.f32.mrb[0].mxu0
  %586 = vmatprep.mubr.f32.mxu0 0.0
  %587 = vmatmul.mubr.f32.gmra.mrb[0].mxu0 %v293
  %v588 = vpop.f32.mrb[0].mxu0
  %v589 = vadd.f32 %v515, %v588
  %v590 = vpop.f32.mrb[0].mxu0
  %591 = vdwg.mxu0
  %vm592 = vcmask 261120
  %v594 = vsel %vm592, %v388, 0
  %v597 = vsel %vm592, %v393, 0
  %v600 = vsel %vm592, %v486, 0
  %v603 = vsel %vm592, %v491, 0
  %605 = vmatprep.subr.mxu0 0.0
  %606 = vmatpush1.xpose.msra.mxu0 %v600
  %607 = vmatprep.subr.mxu0 0.0
  %608 = vmatpush1.xpose.msra.mxu0 %v603
  %609 = vmatprep.subr.mxu0 0.0
  %610 = vmatpush1.xpose.msra.mxu0 0.0
  %611 = vmatprep.subr.mxu0 0.0
  %612 = vmatpush1.xpose.msra.mxu0 0.0
  %613 = vmatprep.subr.mxu0 0.0
  %614 = vmatpush1.xpose.msra.mxu0 0.0
  %615 = vmatprep.subr.mxu0 0.0
  %616 = vmatpush1.xpose.msra.mxu0 0.0
  %617 = vmatprep.subr.mxu0 0.0
  %618 = vmatpush1.xpose.msra.mxu0 0.0
  %619 = vmatprep.subr.mxu0 0.0
  %620 = vmatpush1.xpose.msra.mxu0 0.0
  %621 = vmatprep.subr.mxu0 0.0
  %622 = vmatpush1.xpose.msra.mxu0 0.0
  %623 = vmatprep.subr.mxu0 0.0
  %624 = vmatpush1.xpose.msra.mxu0 0.0
  %625 = vmatprep.subr.mxu0 0.0
  %626 = vmatpush1.xpose.msra.mxu0 0.0
  %627 = vmatprep.subr.mxu0 0.0
  %628 = vmatpush1.xpose.msra.mxu0 0.0
  %629 = vmatprep.subr.mxu0 0.0
  %630 = vmatpush1.xpose.msra.mxu0 0.0
  %631 = vmatprep.subr.mxu0 0.0
  %632 = vmatpush1.xpose.msra.mxu0 0.0
  %633 = vmatprep.subr.mxu0 0.0
  %634 = vmatpush1.xpose.msra.mxu0 0.0
  %635 = vmatprep.subr.mxu0 0.0
  %636 = vmatpush1.xpose.msra.mxu0 0.0
  %637 = vmatprep.subr.mxu0 0.0
  %638 = vmatpush1.xpose.msra.mxu0 0.0
  %639 = vmatprep.subr.mxu0 0.0
  %640 = vmatpush1.xpose.msra.mxu0 0.0
  %641 = vmatprep.subr.mxu0 0.0
  %642 = vmatpush1.xpose.msra.mxu0 0.0
  %643 = vmatprep.subr.mxu0 0.0
  %644 = vmatpush1.xpose.msra.mxu0 0.0
  %645 = vmatprep.subr.mxu0 0.0
  %646 = vmatpush1.xpose.msra.mxu0 0.0
  %647 = vmatprep.subr.mxu0 0.0
  %648 = vmatpush1.xpose.msra.mxu0 0.0
  %649 = vmatprep.subr.mxu0 0.0
  %650 = vmatpush1.xpose.msra.mxu0 0.0
  %651 = vmatprep.subr.mxu0 0.0
  %652 = vmatpush1.xpose.msra.mxu0 0.0
  %653 = vmatprep.subr.mxu0 0.0
  %654 = vmatpush1.xpose.msra.mxu0 0.0
  %655 = vmatprep.subr.mxu0 0.0
  %656 = vmatpush1.xpose.msra.mxu0 0.0
  %657 = vmatprep.subr.mxu0 0.0
  %658 = vmatpush1.xpose.msra.mxu0 0.0
  %659 = vmatprep.subr.mxu0 0.0
  %660 = vmatpush1.xpose.msra.mxu0 0.0
  %661 = vmatprep.subr.mxu0 0.0
  %662 = vmatpush1.xpose.msra.mxu0 0.0
  %663 = vmatprep.subr.mxu0 0.0
  %664 = vmatpush1.xpose.msra.mxu0 0.0
  %665 = vmatprep.subr.mxu0 0.0
  %666 = vmatpush1.xpose.msra.mxu0 0.0
  %667 = vmatprep.subr.mxu0 0.0
  %668 = vmatpush1.xpose.msra.mxu0 0.0
  %669 = vmatprep.mubr.f32.mxu0 0.0
  %670 = vmatmul.mubr.f32.gmra.mrb[0].mxu0 %v594
  %v671 = vpop.f32.mrb[0].mxu0
  %v672 = vadd.f32 0.0, %v671
  %v673 = vpop.f32.mrb[0].mxu0
  %674 = vmatprep.mubr.f32.mxu0 0.0
  %675 = vmatmul.mubr.f32.gmra.mrb[0].mxu0 %v597
  %v676 = vpop.f32.mrb[0].mxu0
  %v677 = vadd.f32 0.0, %v676
  %v678 = vpop.f32.mrb[0].mxu0
  %679 = vdwg.mxu0
  %v680 = vmul.f32 %v672, 0.17677669
  %v681 = vmul.f32 %v677, 0.17677669
  %v682 = vadd.f32 %v680, %v294
  %v683 = vadd.f32 %v681, %v295
  %vm684 = vcmask 130048
  %v685 = vsel %vm684, %v682, -inf
  %686 = vmax.xlane.f32.xlu0 %v685
  %v687 = vpop.xlane.xlu0 %686
  %v688 = vsel %vm684, %v683, -inf
  %689 = vmax.xlane.f32.xlu0 %v688
  %v690 = vpop.xlane.xlu0 %689
  %v691 = vsub.f32 %v682, %v687
  %v692 = vsub.f32 %v683, %v690
  %v693 = vmul.f32 %v691, 1.442695
  %v694 = vpow.pop %v693
  %v695 = vmul.f32 %v692, 1.442695
  %v696 = vpow.pop %v695
  %v697 = vsel %vm684, %v694, 0.0
  %698 = vadd.xlane.f32.xlu0 %v697
  %v699 = vpop.xlane.xlu0 %698
  %v700 = vsel %vm684, %v696, 0.0
  %701 = vadd.xlane.f32.xlu0 %v700
  %v702 = vpop.xlane.xlu0 %701
  %v703 = vrcp.pop %v699
  %v704 = vmul.f32 %v694, %v703
  %v705 = vrcp.pop %v702
  %v706 = vmul.f32 %v696, %v705
  %v708 = vsel %vm684, %v704, 0
  %v711 = vsel %vm684, %v706, 0
  %713 = vmatprep.subr.mxu0 0.0
  %714 = vmatpush1.msra.mxu0 %v584
  %715 = vmatprep.subr.mxu0 0.0
  %716 = vmatpush1.msra.mxu0 %v589
  %717 = vmatprep.subr.mxu0 0.0
  %718 = vmatpush1.msra.mxu0 0.0
  %719 = vmatprep.subr.mxu0 0.0
  %720 = vmatpush1.msra.mxu0 0.0
  %721 = vmatprep.subr.mxu0 0.0
  %722 = vmatpush1.msra.mxu0 0.0
  %723 = vmatprep.subr.mxu0 0.0
  %724 = vmatpush1.msra.mxu0 0.0
  %725 = vmatprep.subr.mxu0 0.0
  %726 = vmatpush1.msra.mxu0 0.0
  %727 = vmatprep.subr.mxu0 0.0
  %728 = vmatpush1.msra.mxu0 0.0
  %729 = vmatprep.subr.mxu0 0.0
  %730 = vmatpush1.msra.mxu0 0.0
  %731 = vmatprep.subr.mxu0 0.0
  %732 = vmatpush1.msra.mxu0 0.0
  %733 = vmatprep.subr.mxu0 0.0
  %734 = vmatpush1.msra.mxu0 0.0
  %735 = vmatprep.subr.mxu0 0.0
  %736 = vmatpush1.msra.mxu0 0.0
  %737 = vmatprep.subr.mxu0 0.0
  %738 = vmatpush1.msra.mxu0 0.0
  %739 = vmatprep.subr.mxu0 0.0
  %740 = vmatpush1.msra.mxu0 0.0
  %741 = vmatprep.subr.mxu0 0.0
  %742 = vmatpush1.msra.mxu0 0.0
  %743 = vmatprep.subr.mxu0 0.0
  %744 = vmatpush1.msra.mxu0 0.0
  %745 = vmatprep.subr.mxu0 0.0
  %746 = vmatpush1.msra.mxu0 0.0
  %747 = vmatprep.subr.mxu0 0.0
  %748 = vmatpush1.msra.mxu0 0.0
  %749 = vmatprep.subr.mxu0 0.0
  %750 = vmatpush1.msra.mxu0 0.0
  %751 = vmatprep.subr.mxu0 0.0
  %752 = vmatpush1.msra.mxu0 0.0
  %753 = vmatprep.subr.mxu0 0.0
  %754 = vmatpush1.msra.mxu0 0.0
  %755 = vmatprep.subr.mxu0 0.0
  %756 = vmatpush1.msra.mxu0 0.0
  %757 = vmatprep.subr.mxu0 0.0
  %758 = vmatpush1.msra.mxu0 0.0
  %759 = vmatprep.subr.mxu0 0.0
  %760 = vmatpush1.msra.mxu0 0.0
  %761 = vmatprep.subr.mxu0 0.0
  %762 = vmatpush1.msra.mxu0 0.0
  %763 = vmatprep.subr.mxu0 0.0
  %764 = vmatpush1.msra.mxu0 0.0
  %765 = vmatprep.subr.mxu0 0.0
  %766 = vmatpush1.msra.mxu0 0.0
  %767 = vmatprep.subr.mxu0 0.0
  %768 = vmatpush1.msra.mxu0 0.0
  %769 = vmatprep.subr.mxu0 0.0
  %770 = vmatpush1.msra.mxu0 0.0
  %771 = vmatprep.subr.mxu0 0.0
  %772 = vmatpush1.msra.mxu0 0.0
  %773 = vmatprep.subr.mxu0 0.0
  %774 = vmatpush1.msra.mxu0 0.0
  %775 = vmatprep.subr.mxu0 0.0
  %776 = vmatpush1.msra.mxu0 0.0
  %777 = vmatprep.mubr.f32.mxu0 0.0
  %778 = vmatmul.mubr.f32.gmra.mrb[0].mxu0 %v708
  %v779 = vpop.f32.mrb[0].mxu0
  %v780 = vadd.f32 0.0, %v779
  %v781 = vpop.f32.mrb[0].mxu0
  %782 = vmatprep.mubr.f32.mxu0 0.0
  %783 = vmatmul.mubr.f32.gmra.mrb[0].mxu0 %v711
  %v784 = vpop.f32.mrb[0].mxu0
  %v785 = vadd.f32 0.0, %v784
  %v786 = vpop.f32.mrb[0].mxu0
  %787 = vdwg.mxu0
  %788 = vrot.lane.b32.xlu0 %v388, 96
  %v789 = vpop.permute.xlu0 %788
  %790 = vrot.lane.b32.xlu0 %v393, 96
  %v791 = vpop.permute.xlu0 %790
  %792 = vrot.lane.b32.xlu0 %v486, 96
  %v793 = vpop.permute.xlu0 %792
  %794 = vrot.lane.b32.xlu0 %v491, 96
  %v795 = vpop.permute.xlu0 %794
  %v796 = vsel %vm592, %v789, 0
  %v798 = vsel %vm592, %v791, 0
  %v800 = vsel %vm592, %v793, 0
  %v802 = vsel %vm592, %v795, 0
  %804 = vmatprep.subr.mxu0 0.0
  %805 = vmatpush1.xpose.msra.mxu0 %v800
  %806 = vmatprep.subr.mxu0 0.0
  %807 = vmatpush1.xpose.msra.mxu0 %v802
  %808 = vmatprep.subr.mxu0 0.0
  %809 = vmatpush1.xpose.msra.mxu0 0.0
  %810 = vmatprep.subr.mxu0 0.0
  %811 = vmatpush1.xpose.msra.mxu0 0.0
  %812 = vmatprep.subr.mxu0 0.0
  %813 = vmatpush1.xpose.msra.mxu0 0.0
  %814 = vmatprep.subr.mxu0 0.0
  %815 = vmatpush1.xpose.msra.mxu0 0.0
  %816 = vmatprep.subr.mxu0 0.0
  %817 = vmatpush1.xpose.msra.mxu0 0.0
  %818 = vmatprep.subr.mxu0 0.0
  %819 = vmatpush1.xpose.msra.mxu0 0.0
  %820 = vmatprep.subr.mxu0 0.0
  %821 = vmatpush1.xpose.msra.mxu0 0.0
  %822 = vmatprep.subr.mxu0 0.0
  %823 = vmatpush1.xpose.msra.mxu0 0.0
  %824 = vmatprep.subr.mxu0 0.0
  %825 = vmatpush1.xpose.msra.mxu0 0.0
  %826 = vmatprep.subr.mxu0 0.0
  %827 = vmatpush1.xpose.msra.mxu0 0.0
  %828 = vmatprep.subr.mxu0 0.0
  %829 = vmatpush1.xpose.msra.mxu0 0.0
  %830 = vmatprep.subr.mxu0 0.0
  %831 = vmatpush1.xpose.msra.mxu0 0.0
  %832 = vmatprep.subr.mxu0 0.0
  %833 = vmatpush1.xpose.msra.mxu0 0.0
  %834 = vmatprep.subr.mxu0 0.0
  %835 = vmatpush1.xpose.msra.mxu0 0.0
  %836 = vmatprep.subr.mxu0 0.0
  %837 = vmatpush1.xpose.msra.mxu0 0.0
  %838 = vmatprep.subr.mxu0 0.0
  %839 = vmatpush1.xpose.msra.mxu0 0.0
  %840 = vmatprep.subr.mxu0 0.0
  %841 = vmatpush1.xpose.msra.mxu0 0.0
  %842 = vmatprep.subr.mxu0 0.0
  %843 = vmatpush1.xpose.msra.mxu0 0.0
  %844 = vmatprep.subr.mxu0 0.0
  %845 = vmatpush1.xpose.msra.mxu0 0.0
  %846 = vmatprep.subr.mxu0 0.0
  %847 = vmatpush1.xpose.msra.mxu0 0.0
  %848 = vmatprep.subr.mxu0 0.0
  %849 = vmatpush1.xpose.msra.mxu0 0.0
  %850 = vmatprep.subr.mxu0 0.0
  %851 = vmatpush1.xpose.msra.mxu0 0.0
  %852 = vmatprep.subr.mxu0 0.0
  %853 = vmatpush1.xpose.msra.mxu0 0.0
  %854 = vmatprep.subr.mxu0 0.0
  %855 = vmatpush1.xpose.msra.mxu0 0.0
  %856 = vmatprep.subr.mxu0 0.0
  %857 = vmatpush1.xpose.msra.mxu0 0.0
  %858 = vmatprep.subr.mxu0 0.0
  %859 = vmatpush1.xpose.msra.mxu0 0.0
  %860 = vmatprep.subr.mxu0 0.0
  %861 = vmatpush1.xpose.msra.mxu0 0.0
  %862 = vmatprep.subr.mxu0 0.0
  %863 = vmatpush1.xpose.msra.mxu0 0.0
  %864 = vmatprep.subr.mxu0 0.0
  %865 = vmatpush1.xpose.msra.mxu0 0.0
  %866 = vmatprep.subr.mxu0 0.0
  %867 = vmatpush1.xpose.msra.mxu0 0.0
  %868 = vmatprep.mubr.f32.mxu0 0.0
  %869 = vmatmul.mubr.f32.gmra.mrb[0].mxu0 %v796
  %v870 = vpop.f32.mrb[0].mxu0
  %v871 = vadd.f32 0.0, %v870
  %v872 = vpop.f32.mrb[0].mxu0
  %873 = vmatprep.mubr.f32.mxu0 0.0
  %874 = vmatmul.mubr.f32.gmra.mrb[0].mxu0 %v798
  %v875 = vpop.f32.mrb[0].mxu0
  %v876 = vadd.f32 0.0, %v875
  %v877 = vpop.f32.mrb[0].mxu0
  %878 = vdwg.mxu0
  %v879 = vmul.f32 %v871, 0.17677669
  %v880 = vmul.f32 %v876, 0.17677669
  %v881 = vadd.f32 %v879, %v294
  %v882 = vadd.f32 %v880, %v295
  %v883 = vsel %vm684, %v881, -inf
  %884 = vmax.xlane.f32.xlu0 %v883
  %v885 = vpop.xlane.xlu0 %884
  %v886 = vsel %vm684, %v882, -inf
  %887 = vmax.xlane.f32.xlu0 %v886
  %v888 = vpop.xlane.xlu0 %887
  %v889 = vsub.f32 %v881, %v885
  %v890 = vsub.f32 %v882, %v888
  %v891 = vmul.f32 %v889, 1.442695
  %v892 = vpow.pop %v891
  %v893 = vmul.f32 %v890, 1.442695
  %v894 = vpow.pop %v893
  %v895 = vsel %vm684, %v892, 0.0
  %896 = vadd.xlane.f32.xlu0 %v895
  %v897 = vpop.xlane.xlu0 %896
  %v898 = vsel %vm684, %v894, 0.0
  %899 = vadd.xlane.f32.xlu0 %v898
  %v900 = vpop.xlane.xlu0 %899
  %v901 = vrcp.pop %v897
  %v902 = vmul.f32 %v892, %v901
  %v903 = vrcp.pop %v900
  %v904 = vmul.f32 %v894, %v903
  %907 = vrot.lane.b32.xlu0 %v584, 96
  %v908 = vpop.permute.xlu0 %907
  %909 = vrot.lane.b32.xlu0 %v589, 96
  %v910 = vpop.permute.xlu0 %909
  %v914 = vsel %vm684, %v902, 0
  %v917 = vsel %vm684, %v904, 0
  %919 = vmatprep.subr.mxu0 0.0
  %920 = vmatpush1.msra.mxu0 %v908
  %921 = vmatprep.subr.mxu0 0.0
  %922 = vmatpush1.msra.mxu0 %v910
  %923 = vmatprep.subr.mxu0 0.0
  %924 = vmatpush1.msra.mxu0 0.0
  %925 = vmatprep.subr.mxu0 0.0
  %926 = vmatpush1.msra.mxu0 0.0
  %927 = vmatprep.subr.mxu0 0.0
  %928 = vmatpush1.msra.mxu0 0.0
  %929 = vmatprep.subr.mxu0 0.0
  %930 = vmatpush1.msra.mxu0 0.0
  %931 = vmatprep.subr.mxu0 0.0
  %932 = vmatpush1.msra.mxu0 0.0
  %933 = vmatprep.subr.mxu0 0.0
  %934 = vmatpush1.msra.mxu0 0.0
  %935 = vmatprep.subr.mxu0 0.0
  %936 = vmatpush1.msra.mxu0 0.0
  %937 = vmatprep.subr.mxu0 0.0
  %938 = vmatpush1.msra.mxu0 0.0
  %939 = vmatprep.subr.mxu0 0.0
  %940 = vmatpush1.msra.mxu0 0.0
  %941 = vmatprep.subr.mxu0 0.0
  %942 = vmatpush1.msra.mxu0 0.0
  %943 = vmatprep.subr.mxu0 0.0
  %944 = vmatpush1.msra.mxu0 0.0
  %945 = vmatprep.subr.mxu0 0.0
  %946 = vmatpush1.msra.mxu0 0.0
  %947 = vmatprep.subr.mxu0 0.0
  %948 = vmatpush1.msra.mxu0 0.0
  %949 = vmatprep.subr.mxu0 0.0
  %950 = vmatpush1.msra.mxu0 0.0
  %951 = vmatprep.subr.mxu0 0.0
  %952 = vmatpush1.msra.mxu0 0.0
  %953 = vmatprep.subr.mxu0 0.0
  %954 = vmatpush1.msra.mxu0 0.0
  %955 = vmatprep.subr.mxu0 0.0
  %956 = vmatpush1.msra.mxu0 0.0
  %957 = vmatprep.subr.mxu0 0.0
  %958 = vmatpush1.msra.mxu0 0.0
  %959 = vmatprep.subr.mxu0 0.0
  %960 = vmatpush1.msra.mxu0 0.0
  %961 = vmatprep.subr.mxu0 0.0
  %962 = vmatpush1.msra.mxu0 0.0
  %963 = vmatprep.subr.mxu0 0.0
  %964 = vmatpush1.msra.mxu0 0.0
  %965 = vmatprep.subr.mxu0 0.0
  %966 = vmatpush1.msra.mxu0 0.0
  %967 = vmatprep.subr.mxu0 0.0
  %968 = vmatpush1.msra.mxu0 0.0
  %969 = vmatprep.subr.mxu0 0.0
  %970 = vmatpush1.msra.mxu0 0.0
  %971 = vmatprep.subr.mxu0 0.0
  %972 = vmatpush1.msra.mxu0 0.0
  %973 = vmatprep.subr.mxu0 0.0
  %974 = vmatpush1.msra.mxu0 0.0
  %975 = vmatprep.subr.mxu0 0.0
  %976 = vmatpush1.msra.mxu0 0.0
  %977 = vmatprep.subr.mxu0 0.0
  %978 = vmatpush1.msra.mxu0 0.0
  %979 = vmatprep.subr.mxu0 0.0
  %980 = vmatpush1.msra.mxu0 0.0
  %981 = vmatprep.subr.mxu0 0.0
  %982 = vmatpush1.msra.mxu0 0.0
  %983 = vmatprep.mubr.f32.mxu0 0.0
  %984 = vmatmul.mubr.f32.gmra.mrb[0].mxu0 %v914
  %v985 = vpop.f32.mrb[0].mxu0
  %v986 = vadd.f32 0.0, %v985
  %v987 = vpop.f32.mrb[0].mxu0
  %988 = vmatprep.mubr.f32.mxu0 0.0
  %989 = vmatmul.mubr.f32.gmra.mrb[0].mxu0 %v917
  %v990 = vpop.f32.mrb[0].mxu0
  %v991 = vadd.f32 0.0, %v990
  %v992 = vpop.f32.mrb[0].mxu0
  %993 = vdwg.mxu0
  %994 = vrot.lane.b32.xlu0 %v388, 64
  %v995 = vpop.permute.xlu0 %994
  %996 = vrot.lane.b32.xlu0 %v393, 64
  %v997 = vpop.permute.xlu0 %996
  %998 = vrot.lane.b32.xlu0 %v486, 64
  %v999 = vpop.permute.xlu0 %998
  %1000 = vrot.lane.b32.xlu0 %v491, 64
  %v1001 = vpop.permute.xlu0 %1000
  %v1002 = vsel %vm592, %v995, 0
  %v1004 = vsel %vm592, %v997, 0
  %v1006 = vsel %vm592, %v999, 0
  %v1008 = vsel %vm592, %v1001, 0
  %1010 = vmatprep.subr.mxu0 0.0
  %1011 = vmatpush1.xpose.msra.mxu0 %v1006
  %1012 = vmatprep.subr.mxu0 0.0
  %1013 = vmatpush1.xpose.msra.mxu0 %v1008
  %1014 = vmatprep.subr.mxu0 0.0
  %1015 = vmatpush1.xpose.msra.mxu0 0.0
  %1016 = vmatprep.subr.mxu0 0.0
  %1017 = vmatpush1.xpose.msra.mxu0 0.0
  %1018 = vmatprep.subr.mxu0 0.0
  %1019 = vmatpush1.xpose.msra.mxu0 0.0
  %1020 = vmatprep.subr.mxu0 0.0
  %1021 = vmatpush1.xpose.msra.mxu0 0.0
  %1022 = vmatprep.subr.mxu0 0.0
  %1023 = vmatpush1.xpose.msra.mxu0 0.0
  %1024 = vmatprep.subr.mxu0 0.0
  %1025 = vmatpush1.xpose.msra.mxu0 0.0
  %1026 = vmatprep.subr.mxu0 0.0
  %1027 = vmatpush1.xpose.msra.mxu0 0.0
  %1028 = vmatprep.subr.mxu0 0.0
  %1029 = vmatpush1.xpose.msra.mxu0 0.0
  %1030 = vmatprep.subr.mxu0 0.0
  %1031 = vmatpush1.xpose.msra.mxu0 0.0
  %1032 = vmatprep.subr.mxu0 0.0
  %1033 = vmatpush1.xpose.msra.mxu0 0.0
  %1034 = vmatprep.subr.mxu0 0.0
  %1035 = vmatpush1.xpose.msra.mxu0 0.0
  %1036 = vmatprep.subr.mxu0 0.0
  %1037 = vmatpush1.xpose.msra.mxu0 0.0
  %1038 = vmatprep.subr.mxu0 0.0
  %1039 = vmatpush1.xpose.msra.mxu0 0.0
  %1040 = vmatprep.subr.mxu0 0.0
  %1041 = vmatpush1.xpose.msra.mxu0 0.0
  %1042 = vmatprep.subr.mxu0 0.0
  %1043 = vmatpush1.xpose.msra.mxu0 0.0
  %1044 = vmatprep.subr.mxu0 0.0
  %1045 = vmatpush1.xpose.msra.mxu0 0.0
  %1046 = vmatprep.subr.mxu0 0.0
  %1047 = vmatpush1.xpose.msra.mxu0 0.0
  %1048 = vmatprep.subr.mxu0 0.0
  %1049 = vmatpush1.xpose.msra.mxu0 0.0
  %1050 = vmatprep.subr.mxu0 0.0
  %1051 = vmatpush1.xpose.msra.mxu0 0.0
  %1052 = vmatprep.subr.mxu0 0.0
  %1053 = vmatpush1.xpose.msra.mxu0 0.0
  %1054 = vmatprep.subr.mxu0 0.0
  %1055 = vmatpush1.xpose.msra.mxu0 0.0
  %1056 = vmatprep.subr.mxu0 0.0
  %1057 = vmatpush1.xpose.msra.mxu0 0.0
  %1058 = vmatprep.subr.mxu0 0.0
  %1059 = vmatpush1.xpose.msra.mxu0 0.0
  %1060 = vmatprep.subr.mxu0 0.0
  %1061 = vmatpush1.xpose.msra.mxu0 0.0
  %1062 = vmatprep.subr.mxu0 0.0
  %1063 = vmatpush1.xpose.msra.mxu0 0.0
  %1064 = vmatprep.subr.mxu0 0.0
  %1065 = vmatpush1.xpose.msra.mxu0 0.0
  %1066 = vmatprep.subr.mxu0 0.0
  %1067 = vmatpush1.xpose.msra.mxu0 0.0
  %1068 = vmatprep.subr.mxu0 0.0
  %1069 = vmatpush1.xpose.msra.mxu0 0.0
  %1070 = vmatprep.subr.mxu0 0.0
  %1071 = vmatpush1.xpose.msra.mxu0 0.0
  %1072 = vmatprep.subr.mxu0 0.0
  %1073 = vmatpush1.xpose.msra.mxu0 0.0
  %1074 = vmatprep.mubr.f32.mxu0 0.0
  %1075 = vmatmul.mubr.f32.gmra.mrb[0].mxu0 %v1002
  %v1076 = vpop.f32.mrb[0].mxu0
  %v1077 = vadd.f32 0.0, %v1076
  %v1078 = vpop.f32.mrb[0].mxu0
  %1079 = vmatprep.mubr.f32.mxu0 0.0
  %1080 = vmatmul.mubr.f32.gmra.mrb[0].mxu0 %v1004
  %v1081 = vpop.f32.mrb[0].mxu0
  %v1082 = vadd.f32 0.0, %v1081
  %v1083 = vpop.f32.mrb[0].mxu0
  %1084 = vdwg.mxu0
  %v1085 = vmul.f32 %v1077, 0.17677669
  %v1086 = vmul.f32 %v1082, 0.17677669
  %v1087 = vadd.f32 %v1085, %v294
  %v1088 = vadd.f32 %v1086, %v295
  %v1089 = vsel %vm684, %v1087, -inf
  %1090 = vmax.xlane.f32.xlu0 %v1089
  %v1091 = vpop.xlane.xlu0 %1090
  %v1092 = vsel %vm684, %v1088, -inf
  %1093 = vmax.xlane.f32.xlu0 %v1092
  %v1094 = vpop.xlane.xlu0 %1093
  %v1095 = vsub.f32 %v1087, %v1091
  %v1096 = vsub.f32 %v1088, %v1094
  %v1097 = vmul.f32 %v1095, 1.442695
  %v1098 = vpow.pop %v1097
  %v1099 = vmul.f32 %v1096, 1.442695
  %v1100 = vpow.pop %v1099
  %v1101 = vsel %vm684, %v1098, 0.0
  %1102 = vadd.xlane.f32.xlu0 %v1101
  %v1103 = vpop.xlane.xlu0 %1102
  %v1104 = vsel %vm684, %v1100, 0.0
  %1105 = vadd.xlane.f32.xlu0 %v1104
  %v1106 = vpop.xlane.xlu0 %1105
  %v1107 = vrcp.pop %v1103
  %v1108 = vmul.f32 %v1098, %v1107
  %v1109 = vrcp.pop %v1106
  %v1110 = vmul.f32 %v1100, %v1109
  %1111 = vrot.lane.b32.xlu0 %v584, 64
  %v1112 = vpop.permute.xlu0 %1111
  %1113 = vrot.lane.b32.xlu0 %v589, 64
  %v1114 = vpop.permute.xlu0 %1113
  %v1118 = vsel %vm684, %v1108, 0
  %v1121 = vsel %vm684, %v1110, 0
  %1123 = vmatprep.subr.mxu0 0.0
  %1124 = vmatpush1.msra.mxu0 %v1112
  %1125 = vmatprep.subr.mxu0 0.0
  %1126 = vmatpush1.msra.mxu0 %v1114
  %1127 = vmatprep.subr.mxu0 0.0
  %1128 = vmatpush1.msra.mxu0 0.0
  %1129 = vmatprep.subr.mxu0 0.0
  %1130 = vmatpush1.msra.mxu0 0.0
  %1131 = vmatprep.subr.mxu0 0.0
  %1132 = vmatpush1.msra.mxu0 0.0
  %1133 = vmatprep.subr.mxu0 0.0
  %1134 = vmatpush1.msra.mxu0 0.0
  %1135 = vmatprep.subr.mxu0 0.0
  %1136 = vmatpush1.msra.mxu0 0.0
  %1137 = vmatprep.subr.mxu0 0.0
  %1138 = vmatpush1.msra.mxu0 0.0
  %1139 = vmatprep.subr.mxu0 0.0
  %1140 = vmatpush1.msra.mxu0 0.0
  %1141 = vmatprep.subr.mxu0 0.0
  %1142 = vmatpush1.msra.mxu0 0.0
  %1143 = vmatprep.subr.mxu0 0.0
  %1144 = vmatpush1.msra.mxu0 0.0
  %1145 = vmatprep.subr.mxu0 0.0
  %1146 = vmatpush1.msra.mxu0 0.0
  %1147 = vmatprep.subr.mxu0 0.0
  %1148 = vmatpush1.msra.mxu0 0.0
  %1149 = vmatprep.subr.mxu0 0.0
  %1150 = vmatpush1.msra.mxu0 0.0
  %1151 = vmatprep.subr.mxu0 0.0
  %1152 = vmatpush1.msra.mxu0 0.0
  %1153 = vmatprep.subr.mxu0 0.0
  %1154 = vmatpush1.msra.mxu0 0.0
  %1155 = vmatprep.subr.mxu0 0.0
  %1156 = vmatpush1.msra.mxu0 0.0
  %1157 = vmatprep.subr.mxu0 0.0
  %1158 = vmatpush1.msra.mxu0 0.0
  %1159 = vmatprep.subr.mxu0 0.0
  %1160 = vmatpush1.msra.mxu0 0.0
  %1161 = vmatprep.subr.mxu0 0.0
  %1162 = vmatpush1.msra.mxu0 0.0
  %1163 = vmatprep.subr.mxu0 0.0
  %1164 = vmatpush1.msra.mxu0 0.0
  %1165 = vmatprep.subr.mxu0 0.0
  %1166 = vmatpush1.msra.mxu0 0.0
  %1167 = vmatprep.subr.mxu0 0.0
  %1168 = vmatpush1.msra.mxu0 0.0
  %1169 = vmatprep.subr.mxu0 0.0
  %1170 = vmatpush1.msra.mxu0 0.0
  %1171 = vmatprep.subr.mxu0 0.0
  %1172 = vmatpush1.msra.mxu0 0.0
  %1173 = vmatprep.subr.mxu0 0.0
  %1174 = vmatpush1.msra.mxu0 0.0
  %1175 = vmatprep.subr.mxu0 0.0
  %1176 = vmatpush1.msra.mxu0 0.0
  %1177 = vmatprep.subr.mxu0 0.0
  %1178 = vmatpush1.msra.mxu0 0.0
  %1179 = vmatprep.subr.mxu0 0.0
  %1180 = vmatpush1.msra.mxu0 0.0
  %1181 = vmatprep.subr.mxu0 0.0
  %1182 = vmatpush1.msra.mxu0 0.0
  %1183 = vmatprep.subr.mxu0 0.0
  %1184 = vmatpush1.msra.mxu0 0.0
  %1185 = vmatprep.subr.mxu0 0.0
  %1186 = vmatpush1.msra.mxu0 0.0
  %1187 = vmatprep.mubr.f32.mxu0 0.0
  %1188 = vmatmul.mubr.f32.gmra.mrb[0].mxu0 %v1118
  %v1189 = vpop.f32.mrb[0].mxu0
  %v1190 = vadd.f32 0.0, %v1189
  %v1191 = vpop.f32.mrb[0].mxu0
  %1192 = vmatprep.mubr.f32.mxu0 0.0
  %1193 = vmatmul.mubr.f32.gmra.mrb[0].mxu0 %v1121
  %v1194 = vpop.f32.mrb[0].mxu0
  %v1195 = vadd.f32 0.0, %v1194
  %v1196 = vpop.f32.mrb[0].mxu0
  %1197 = vdwg.mxu0
  %1198 = vrot.lane.b32.xlu0 %v388, 32
  %v1199 = vpop.permute.xlu0 %1198
  %1200 = vrot.lane.b32.xlu0 %v393, 32
  %v1201 = vpop.permute.xlu0 %1200
  %1202 = vrot.lane.b32.xlu0 %v486, 32
  %v1203 = vpop.permute.xlu0 %1202
  %1204 = vrot.lane.b32.xlu0 %v491, 32
  %v1205 = vpop.permute.xlu0 %1204
  %v1206 = vsel %vm592, %v1199, 0
  %v1208 = vsel %vm592, %v1201, 0
  %v1210 = vsel %vm592, %v1203, 0
  %v1212 = vsel %vm592, %v1205, 0
  %1214 = vmatprep.subr.mxu0 0.0
  %1215 = vmatpush1.xpose.msra.mxu0 %v1210
  %1216 = vmatprep.subr.mxu0 0.0
  %1217 = vmatpush1.xpose.msra.mxu0 %v1212
  %1218 = vmatprep.subr.mxu0 0.0
  %1219 = vmatpush1.xpose.msra.mxu0 0.0
  %1220 = vmatprep.subr.mxu0 0.0
  %1221 = vmatpush1.xpose.msra.mxu0 0.0
  %1222 = vmatprep.subr.mxu0 0.0
  %1223 = vmatpush1.xpose.msra.mxu0 0.0
  %1224 = vmatprep.subr.mxu0 0.0
  %1225 = vmatpush1.xpose.msra.mxu0 0.0
  %1226 = vmatprep.subr.mxu0 0.0
  %1227 = vmatpush1.xpose.msra.mxu0 0.0
  %1228 = vmatprep.subr.mxu0 0.0
  %1229 = vmatpush1.xpose.msra.mxu0 0.0
  %1230 = vmatprep.subr.mxu0 0.0
  %1231 = vmatpush1.xpose.msra.mxu0 0.0
  %1232 = vmatprep.subr.mxu0 0.0
  %1233 = vmatpush1.xpose.msra.mxu0 0.0
  %1234 = vmatprep.subr.mxu0 0.0
  %1235 = vmatpush1.xpose.msra.mxu0 0.0
  %1236 = vmatprep.subr.mxu0 0.0
  %1237 = vmatpush1.xpose.msra.mxu0 0.0
  %1238 = vmatprep.subr.mxu0 0.0
  %1239 = vmatpush1.xpose.msra.mxu0 0.0
  %1240 = vmatprep.subr.mxu0 0.0
  %1241 = vmatpush1.xpose.msra.mxu0 0.0
  %1242 = vmatprep.subr.mxu0 0.0
  %1243 = vmatpush1.xpose.msra.mxu0 0.0
  %1244 = vmatprep.subr.mxu0 0.0
  %1245 = vmatpush1.xpose.msra.mxu0 0.0
  %1246 = vmatprep.subr.mxu0 0.0
  %1247 = vmatpush1.xpose.msra.mxu0 0.0
  %1248 = vmatprep.subr.mxu0 0.0
  %1249 = vmatpush1.xpose.msra.mxu0 0.0
  %1250 = vmatprep.subr.mxu0 0.0
  %1251 = vmatpush1.xpose.msra.mxu0 0.0
  %1252 = vmatprep.subr.mxu0 0.0
  %1253 = vmatpush1.xpose.msra.mxu0 0.0
  %1254 = vmatprep.subr.mxu0 0.0
  %1255 = vmatpush1.xpose.msra.mxu0 0.0
  %1256 = vmatprep.subr.mxu0 0.0
  %1257 = vmatpush1.xpose.msra.mxu0 0.0
  %1258 = vmatprep.subr.mxu0 0.0
  %1259 = vmatpush1.xpose.msra.mxu0 0.0
  %1260 = vmatprep.subr.mxu0 0.0
  %1261 = vmatpush1.xpose.msra.mxu0 0.0
  %1262 = vmatprep.subr.mxu0 0.0
  %1263 = vmatpush1.xpose.msra.mxu0 0.0
  %1264 = vmatprep.subr.mxu0 0.0
  %1265 = vmatpush1.xpose.msra.mxu0 0.0
  %1266 = vmatprep.subr.mxu0 0.0
  %1267 = vmatpush1.xpose.msra.mxu0 0.0
  %1268 = vmatprep.subr.mxu0 0.0
  %1269 = vmatpush1.xpose.msra.mxu0 0.0
  %1270 = vmatprep.subr.mxu0 0.0
  %1271 = vmatpush1.xpose.msra.mxu0 0.0
  %1272 = vmatprep.subr.mxu0 0.0
  %1273 = vmatpush1.xpose.msra.mxu0 0.0
  %1274 = vmatprep.subr.mxu0 0.0
  %1275 = vmatpush1.xpose.msra.mxu0 0.0
  %1276 = vmatprep.subr.mxu0 0.0
  %1277 = vmatpush1.xpose.msra.mxu0 0.0
  %1278 = vmatprep.mubr.f32.mxu0 0.0
  %1279 = vmatmul.mubr.f32.gmra.mrb[0].mxu0 %v1206
  %v1280 = vpop.f32.mrb[0].mxu0
  %v1281 = vadd.f32 0.0, %v1280
  %v1282 = vpop.f32.mrb[0].mxu0
  %1283 = vmatprep.mubr.f32.mxu0 0.0
  %1284 = vmatmul.mubr.f32.gmra.mrb[0].mxu0 %v1208
  %v1285 = vpop.f32.mrb[0].mxu0
  %v1286 = vadd.f32 0.0, %v1285
  %v1287 = vpop.f32.mrb[0].mxu0
  %1288 = vdwg.mxu0
  %v1289 = vmul.f32 %v1281, 0.17677669
  %v1290 = vmul.f32 %v1286, 0.17677669
  %v1291 = vadd.f32 %v1289, %v294
  %v1292 = vadd.f32 %v1290, %v295
  %v1293 = vsel %vm684, %v1291, -inf
  %1294 = vmax.xlane.f32.xlu0 %v1293
  %v1295 = vpop.xlane.xlu0 %1294
  %v1296 = vsel %vm684, %v1292, -inf
  %1297 = vmax.xlane.f32.xlu0 %v1296
  %v1298 = vpop.xlane.xlu0 %1297
  %v1299 = vsub.f32 %v1291, %v1295
  %v1300 = vsub.f32 %v1292, %v1298
  %v1301 = vmul.f32 %v1299, 1.442695
  %v1302 = vpow.pop %v1301
  %v1303 = vmul.f32 %v1300, 1.442695
  %v1304 = vpow.pop %v1303
  %v1305 = vsel %vm684, %v1302, 0.0
  %1306 = vadd.xlane.f32.xlu0 %v1305
  %v1307 = vpop.xlane.xlu0 %1306
  %v1308 = vsel %vm684, %v1304, 0.0
  %1309 = vadd.xlane.f32.xlu0 %v1308
  %v1310 = vpop.xlane.xlu0 %1309
  %v1311 = vrcp.pop %v1307
  %v1312 = vmul.f32 %v1302, %v1311
  %v1313 = vrcp.pop %v1310
  %v1314 = vmul.f32 %v1304, %v1313
  %1315 = vrot.lane.b32.xlu0 %v584, 32
  %v1316 = vpop.permute.xlu0 %1315
  %1317 = vrot.lane.b32.xlu0 %v589, 32
  %v1318 = vpop.permute.xlu0 %1317
  %v1322 = vsel %vm684, %v1312, 0
  %v1325 = vsel %vm684, %v1314, 0
  %1327 = vmatprep.subr.mxu0 0.0
  %1328 = vmatpush1.msra.mxu0 %v1316
  %1329 = vmatprep.subr.mxu0 0.0
  %1330 = vmatpush1.msra.mxu0 %v1318
  %1331 = vmatprep.subr.mxu0 0.0
  %1332 = vmatpush1.msra.mxu0 0.0
  %1333 = vmatprep.subr.mxu0 0.0
  %1334 = vmatpush1.msra.mxu0 0.0
  %1335 = vmatprep.subr.mxu0 0.0
  %1336 = vmatpush1.msra.mxu0 0.0
  %1337 = vmatprep.subr.mxu0 0.0
  %1338 = vmatpush1.msra.mxu0 0.0
  %1339 = vmatprep.subr.mxu0 0.0
  %1340 = vmatpush1.msra.mxu0 0.0
  %1341 = vmatprep.subr.mxu0 0.0
  %1342 = vmatpush1.msra.mxu0 0.0
  %1343 = vmatprep.subr.mxu0 0.0
  %1344 = vmatpush1.msra.mxu0 0.0
  %1345 = vmatprep.subr.mxu0 0.0
  %1346 = vmatpush1.msra.mxu0 0.0
  %1347 = vmatprep.subr.mxu0 0.0
  %1348 = vmatpush1.msra.mxu0 0.0
  %1349 = vmatprep.subr.mxu0 0.0
  %1350 = vmatpush1.msra.mxu0 0.0
  %1351 = vmatprep.subr.mxu0 0.0
  %1352 = vmatpush1.msra.mxu0 0.0
  %1353 = vmatprep.subr.mxu0 0.0
  %1354 = vmatpush1.msra.mxu0 0.0
  %1355 = vmatprep.subr.mxu0 0.0
  %1356 = vmatpush1.msra.mxu0 0.0
  %1357 = vmatprep.subr.mxu0 0.0
  %1358 = vmatpush1.msra.mxu0 0.0
  %1359 = vmatprep.subr.mxu0 0.0
  %1360 = vmatpush1.msra.mxu0 0.0
  %1361 = vmatprep.subr.mxu0 0.0
  %1362 = vmatpush1.msra.mxu0 0.0
  %1363 = vmatprep.subr.mxu0 0.0
  %1364 = vmatpush1.msra.mxu0 0.0
  %1365 = vmatprep.subr.mxu0 0.0
  %1366 = vmatpush1.msra.mxu0 0.0
  %1367 = vmatprep.subr.mxu0 0.0
  %1368 = vmatpush1.msra.mxu0 0.0
  %1369 = vmatprep.subr.mxu0 0.0
  %1370 = vmatpush1.msra.mxu0 0.0
  %1371 = vmatprep.subr.mxu0 0.0
  %1372 = vmatpush1.msra.mxu0 0.0
  %1373 = vmatprep.subr.mxu0 0.0
  %1374 = vmatpush1.msra.mxu0 0.0
  %1375 = vmatprep.subr.mxu0 0.0
  %1376 = vmatpush1.msra.mxu0 0.0
  %1377 = vmatprep.subr.mxu0 0.0
  %1378 = vmatpush1.msra.mxu0 0.0
  %1379 = vmatprep.subr.mxu0 0.0
  %1380 = vmatpush1.msra.mxu0 0.0
  %1381 = vmatprep.subr.mxu0 0.0
  %1382 = vmatpush1.msra.mxu0 0.0
  %1383 = vmatprep.subr.mxu0 0.0
  %1384 = vmatpush1.msra.mxu0 0.0
  %1385 = vmatprep.subr.mxu0 0.0
  %1386 = vmatpush1.msra.mxu0 0.0
  %1387 = vmatprep.subr.mxu0 0.0
  %1388 = vmatpush1.msra.mxu0 0.0
  %1389 = vmatprep.subr.mxu0 0.0
  %1390 = vmatpush1.msra.mxu0 0.0
  %1391 = vmatprep.mubr.f32.mxu0 0.0
  %1392 = vmatmul.mubr.f32.gmra.mrb[0].mxu0 %v1322
  %v1393 = vpop.f32.mrb[0].mxu0
  %v1394 = vadd.f32 0.0, %v1393
  %v1395 = vpop.f32.mrb[0].mxu0
  %1396 = vmatprep.mubr.f32.mxu0 0.0
  %1397 = vmatmul.mubr.f32.gmra.mrb[0].mxu0 %v1325
  %v1398 = vpop.f32.mrb[0].mxu0
  %v1399 = vadd.f32 0.0, %v1398
  %v1400 = vpop.f32.mrb[0].mxu0
  %1401 = vdwg.mxu0
  %1404 = vrot.lane.b32.xlu0 %v986, 32
  %v1405 = vpop.permute.xlu0 %1404
  %1406 = vrot.lane.b32.xlu0 %v991, 32
  %v1407 = vpop.permute.xlu0 %1406
  %1412 = vrot.lane.b32.xlu0 %v1190, 64
  %v1413 = vpop.permute.xlu0 %1412
  %1414 = vrot.lane.b32.xlu0 %v1195, 64
  %v1415 = vpop.permute.xlu0 %1414
  %1420 = vrot.lane.b32.xlu0 %v1394, 96
  %v1421 = vpop.permute.xlu0 %1420
  %1422 = vrot.lane.b32.xlu0 %v1399, 96
  %v1423 = vpop.permute.xlu0 %1422
  %v1426 = vsel %vm592, %v780, %v1405
  %v1427 = vsel %vm592, %v785, %v1407
  %vm1428 = vcmask 523264
  %v1429 = vsel %vm1428, %v1426, %v1413
  %v1430 = vsel %vm1428, %v1427, %v1415
  %vm1431 = vcmask 785408
  %v1432 = vsel %vm1431, %v1429, %v1421
  %v1433 = vsel %vm1431, %v1430, %v1423
  %v1434 = vld [vmem:[%s8] sm:$0xff]
  %v1435 = vld [vmem:[%s8 + $0x8] sm:$0xff]
  %v1436 = vld [vmem:[%s8 + $0x10] sm:$0xff]
  %v1437 = vld [vmem:[%s8 + $0x18] sm:$0xff]
  %v1438 = vld [vmem:[%s8 + $0x20] sm:$0xff]
  %v1439 = vld [vmem:[%s8 + $0x28] sm:$0xff]
  %v1440 = vld [vmem:[%s8 + $0x30] sm:$0xff]
  %v1441 = vld [vmem:[%s8 + $0x38] sm:$0xff]
  %v1442 = vld [vmem:[%s8 + $0x40] sm:$0xff]
  %v1443 = vld [vmem:[%s8 + $0x48] sm:$0xff]
  %v1444 = vld [vmem:[%s8 + $0x50] sm:$0xff]
  %v1445 = vld [vmem:[%s8 + $0x58] sm:$0xff]
  %v1446 = vld [vmem:[%s8 + $0x60] sm:$0xff]
  %v1447 = vld [vmem:[%s8 + $0x68] sm:$0xff]
  %v1448 = vld [vmem:[%s8 + $0x70] sm:$0xff]
  %v1449 = vld [vmem:[%s8 + $0x78] sm:$0xff]
  %v1450 = vld [vmem:[%s9] sm:$0x1]
  %v1452 = vlaneseq
  %v1453 = vshrl.u32 %v1452, 7
  %v1454 = vsub.s32 0, %v1453
  %v1455 = vrot.slane %v1450, %v1454
  %1457 = vmatprep.subr.mxu0 0.0
  %1458 = vmatpush1.msra.mxu0 %v1434
  %1459 = vmatprep.subr.mxu0 0.0
  %1460 = vmatpush1.msra.mxu0 %v1435
  %1461 = vmatprep.subr.mxu0 0.0
  %1462 = vmatpush1.msra.mxu0 %v1436
  %1463 = vmatprep.subr.mxu0 0.0
  %1464 = vmatpush1.msra.mxu0 %v1437
  %1465 = vmatprep.subr.mxu0 0.0
  %1466 = vmatpush1.msra.mxu0 %v1438
  %1467 = vmatprep.subr.mxu0 0.0
  %1468 = vmatpush1.msra.mxu0 %v1439
  %1469 = vmatprep.subr.mxu0 0.0
  %1470 = vmatpush1.msra.mxu0 %v1440
  %1471 = vmatprep.subr.mxu0 0.0
  %1472 = vmatpush1.msra.mxu0 %v1441
  %1473 = vmatprep.subr.mxu0 0.0
  %1474 = vmatpush1.msra.mxu0 %v1442
  %1475 = vmatprep.subr.mxu0 0.0
  %1476 = vmatpush1.msra.mxu0 %v1443
  %1477 = vmatprep.subr.mxu0 0.0
  %1478 = vmatpush1.msra.mxu0 %v1444
  %1479 = vmatprep.subr.mxu0 0.0
  %1480 = vmatpush1.msra.mxu0 %v1445
  %1481 = vmatprep.subr.mxu0 0.0
  %1482 = vmatpush1.msra.mxu0 %v1446
  %1483 = vmatprep.subr.mxu0 0.0
  %1484 = vmatpush1.msra.mxu0 %v1447
  %1485 = vmatprep.subr.mxu0 0.0
  %1486 = vmatpush1.msra.mxu0 %v1448
  %1487 = vmatprep.subr.mxu0 0.0
  %1488 = vmatpush1.msra.mxu0 %v1449
  %1489 = vmatprep.subr.mxu0 0.0
  %1490 = vmatpush1.msra.mxu0 0.0
  %1491 = vmatprep.subr.mxu0 0.0
  %1492 = vmatpush1.msra.mxu0 0.0
  %1493 = vmatprep.subr.mxu0 0.0
  %1494 = vmatpush1.msra.mxu0 0.0
  %1495 = vmatprep.subr.mxu0 0.0
  %1496 = vmatpush1.msra.mxu0 0.0
  %1497 = vmatprep.subr.mxu0 0.0
  %1498 = vmatpush1.msra.mxu0 0.0
  %1499 = vmatprep.subr.mxu0 0.0
  %1500 = vmatpush1.msra.mxu0 0.0
  %1501 = vmatprep.subr.mxu0 0.0
  %1502 = vmatpush1.msra.mxu0 0.0
  %1503 = vmatprep.subr.mxu0 0.0
  %1504 = vmatpush1.msra.mxu0 0.0
  %1505 = vmatprep.subr.mxu0 0.0
  %1506 = vmatpush1.msra.mxu0 0.0
  %1507 = vmatprep.subr.mxu0 0.0
  %1508 = vmatpush1.msra.mxu0 0.0
  %1509 = vmatprep.subr.mxu0 0.0
  %1510 = vmatpush1.msra.mxu0 0.0
  %1511 = vmatprep.subr.mxu0 0.0
  %1512 = vmatpush1.msra.mxu0 0.0
  %1513 = vmatprep.subr.mxu0 0.0
  %1514 = vmatpush1.msra.mxu0 0.0
  %1515 = vmatprep.subr.mxu0 0.0
  %1516 = vmatpush1.msra.mxu0 0.0
  %1517 = vmatprep.subr.mxu0 0.0
  %1518 = vmatpush1.msra.mxu0 0.0
  %1519 = vmatprep.subr.mxu0 0.0
  %1520 = vmatpush1.msra.mxu0 0.0
  %1521 = vmatprep.mubr.f32.mxu0 0.0
  %1522 = vmatmul.mubr.f32.gmra.mrb[0].mxu0 %v1432
  %v1523 = vpop.f32.mrb[0].mxu0
  %v1524 = vadd.f32 %v1455, %v1523
  %v1525 = vpop.f32.mrb[0].mxu0
  %1526 = vmatprep.mubr.f32.mxu0 0.0
  %1527 = vmatmul.mubr.f32.gmra.mrb[0].mxu0 %v1433
  %v1528 = vpop.f32.mrb[0].mxu0
  %v1529 = vadd.f32 %v1455, %v1528
  %v1530 = vpop.f32.mrb[0].mxu0
  %1531 = vdwg.mxu0
  %v1532 = vadd.f32 %v292, %v1524
  %v1533 = vadd.f32 %v293, %v1529
  %v1534 = vld [vmem:[%s14] sm:$0x1]
  %v1535 = vld [vmem:[%s15] sm:$0x1]
  %1536 = vadd.xlane.f32.xlu0 %v1532
  %v1537 = vpop.xlane.xlu0 %1536
  %1538 = vadd.xlane.f32.xlu0 %v1533
  %v1539 = vpop.xlane.xlu0 %1538
  %v1540 = vrcp.pop 128.0
  %v1541 = vmul.f32 %v1537, %v1540
  %v1542 = vmul.f32 %v1539, %v1540
  %v1543 = vsub.f32 %v1532, %v1541
  %v1544 = vsub.f32 %v1533, %v1542
  %v1545 = vmul.f32 %v1543, %v1543
  %v1546 = vmul.f32 %v1544, %v1544
  %1547 = vadd.xlane.f32.xlu0 %v1545
  %v1548 = vpop.xlane.xlu0 %1547
  %1549 = vadd.xlane.f32.xlu0 %v1546
  %v1550 = vpop.xlane.xlu0 %1549
  %v1551 = vmul.f32 %v1548, %v1540
  %v1552 = vmul.f32 %v1550, %v1540
  %v1553 = vadd.f32 %v1551, 1e-05
  %v1554 = vadd.f32 %v1552, 1e-05
  %v1555 = vrsqrt.pop %v1553
  %v1556 = vrsqrt.pop %v1554
  %v1557 = vmul.f32 %v1543, %v1555
  %v1558 = vmul.f32 %v1544, %v1556
  %v1560 = vlaneseq
  %v1561 = vshrl.u32 %v1560, 7
  %v1562 = vsub.s32 0, %v1561
  %v1563 = vrot.slane %v1534, %v1562
  %v1565 = vmul.f32 %v1557, %v1563
  %v1566 = vmul.f32 %v1558, %v1563
  %v1568 = vlaneseq
  %v1569 = vshrl.u32 %v1568, 7
  %v1570 = vsub.s32 0, %v1569
  %v1571 = vrot.slane %v1535, %v1570
  %v1573 = vadd.f32 %v1565, %v1571
  %v1574 = vadd.f32 %v1566, %v1571
  %v1575 = vld [vmem:[%s10] sm:$0xff]
  %v1576 = vld [vmem:[%s10 + $0x18] sm:$0xff]
  %v1577 = vld [vmem:[%s10 + $0x30] sm:$0xff]
  %v1578 = vld [vmem:[%s10 + $0x48] sm:$0xff]
  %v1579 = vld [vmem:[%s10 + $0x60] sm:$0xff]
  %v1580 = vld [vmem:[%s10 + $0x78] sm:$0xff]
  %v1581 = vld [vmem:[%s10 + $0x90] sm:$0xff]
  %v1582 = vld [vmem:[%s10 + $0xa8] sm:$0xff]
  %v1583 = vld [vmem:[%s10 + $0xc0] sm:$0xff]
  %v1584 = vld [vmem:[%s10 + $0xd8] sm:$0xff]
  %v1585 = vld [vmem:[%s10 + $0xf0] sm:$0xff]
  %v1586 = vld [vmem:[%s10 + $0x108] sm:$0xff]
  %v1587 = vld [vmem:[%s10 + $0x120] sm:$0xff]
  %v1588 = vld [vmem:[%s10 + $0x138] sm:$0xff]
  %v1589 = vld [vmem:[%s10 + $0x150] sm:$0xff]
  %v1590 = vld [vmem:[%s10 + $0x168] sm:$0xff]
  %v1591 = vld [vmem:[%s11] sm:$0x1]
  %v1593 = vlaneseq
  %v1594 = vshrl.u32 %v1593, 7
  %v1595 = vsub.s32 0, %v1594
  %v1596 = vrot.slane %v1591, %v1595
  %1598 = vmatprep.subr.mxu0 0.0
  %1599 = vmatpush1.msra.mxu0 %v1575
  %1600 = vmatprep.subr.mxu0 0.0
  %1601 = vmatpush1.msra.mxu0 %v1576
  %1602 = vmatprep.subr.mxu0 0.0
  %1603 = vmatpush1.msra.mxu0 %v1577
  %1604 = vmatprep.subr.mxu0 0.0
  %1605 = vmatpush1.msra.mxu0 %v1578
  %1606 = vmatprep.subr.mxu0 0.0
  %1607 = vmatpush1.msra.mxu0 %v1579
  %1608 = vmatprep.subr.mxu0 0.0
  %1609 = vmatpush1.msra.mxu0 %v1580
  %1610 = vmatprep.subr.mxu0 0.0
  %1611 = vmatpush1.msra.mxu0 %v1581
  %1612 = vmatprep.subr.mxu0 0.0
  %1613 = vmatpush1.msra.mxu0 %v1582
  %1614 = vmatprep.subr.mxu0 0.0
  %1615 = vmatpush1.msra.mxu0 %v1583
  %1616 = vmatprep.subr.mxu0 0.0
  %1617 = vmatpush1.msra.mxu0 %v1584
  %1618 = vmatprep.subr.mxu0 0.0
  %1619 = vmatpush1.msra.mxu0 %v1585
  %1620 = vmatprep.subr.mxu0 0.0
  %1621 = vmatpush1.msra.mxu0 %v1586
  %1622 = vmatprep.subr.mxu0 0.0
  %1623 = vmatpush1.msra.mxu0 %v1587
  %1624 = vmatprep.subr.mxu0 0.0
  %1625 = vmatpush1.msra.mxu0 %v1588
  %1626 = vmatprep.subr.mxu0 0.0
  %1627 = vmatpush1.msra.mxu0 %v1589
  %1628 = vmatprep.subr.mxu0 0.0
  %1629 = vmatpush1.msra.mxu0 %v1590
  %1630 = vmatprep.subr.mxu0 0.0
  %1631 = vmatpush1.msra.mxu0 0.0
  %1632 = vmatprep.subr.mxu0 0.0
  %1633 = vmatpush1.msra.mxu0 0.0
  %1634 = vmatprep.subr.mxu0 0.0
  %1635 = vmatpush1.msra.mxu0 0.0
  %1636 = vmatprep.subr.mxu0 0.0
  %1637 = vmatpush1.msra.mxu0 0.0
  %1638 = vmatprep.subr.mxu0 0.0
  %1639 = vmatpush1.msra.mxu0 0.0
  %1640 = vmatprep.subr.mxu0 0.0
  %1641 = vmatpush1.msra.mxu0 0.0
  %1642 = vmatprep.subr.mxu0 0.0
  %1643 = vmatpush1.msra.mxu0 0.0
  %1644 = vmatprep.subr.mxu0 0.0
  %1645 = vmatpush1.msra.mxu0 0.0
  %1646 = vmatprep.subr.mxu0 0.0
  %1647 = vmatpush1.msra.mxu0 0.0
  %1648 = vmatprep.subr.mxu0 0.0
  %1649 = vmatpush1.msra.mxu0 0.0
  %1650 = vmatprep.subr.mxu0 0.0
  %1651 = vmatpush1.msra.mxu0 0.0
  %1652 = vmatprep.subr.mxu0 0.0
  %1653 = vmatpush1.msra.mxu0 0.0
  %1654 = vmatprep.subr.mxu0 0.0
  %1655 = vmatpush1.msra.mxu0 0.0
  %1656 = vmatprep.subr.mxu0 0.0
  %1657 = vmatpush1.msra.mxu0 0.0
  %1658 = vmatprep.subr.mxu0 0.0
  %1659 = vmatpush1.msra.mxu0 0.0
  %1660 = vmatprep.subr.mxu0 0.0
  %1661 = vmatpush1.msra.mxu0 0.0
  %1662 = vmatprep.mubr.f32.mxu0 0.0
  %1663 = vmatmul.mubr.f32.gmra.mrb[0].mxu0 %v1573
  %v1664 = vpop.f32.mrb[0].mxu0
  %v1665 = vadd.f32 %v1596, %v1664
  %v1666 = vpop.f32.mrb[0].mxu0
  %1667 = vmatprep.mubr.f32.mxu0 0.0
  %1668 = vmatmul.mubr.f32.gmra.mrb[0].mxu0 %v1574
  %v1669 = vpop.f32.mrb[0].mxu0
  %v1670 = vadd.f32 %v1596, %v1669
  %v1671 = vpop.f32.mrb[0].mxu0
  %1672 = vdwg.mxu0
  %v1673 = vld [vmem:[%s10 + $0x8] sm:$0xff]
  %v1674 = vld [vmem:[%s10 + $0x20] sm:$0xff]
  %v1675 = vld [vmem:[%s10 + $0x38] sm:$0xff]
  %v1676 = vld [vmem:[%s10 + $0x50] sm:$0xff]
  %v1677 = vld [vmem:[%s10 + $0x68] sm:$0xff]
  %v1678 = vld [vmem:[%s10 + $0x80] sm:$0xff]
  %v1679 = vld [vmem:[%s10 + $0x98] sm:$0xff]
  %v1680 = vld [vmem:[%s10 + $0xb0] sm:$0xff]
  %v1681 = vld [vmem:[%s10 + $0xc8] sm:$0xff]
  %v1682 = vld [vmem:[%s10 + $0xe0] sm:$0xff]
  %v1683 = vld [vmem:[%s10 + $0xf8] sm:$0xff]
  %v1684 = vld [vmem:[%s10 + $0x110] sm:$0xff]
  %v1685 = vld [vmem:[%s10 + $0x128] sm:$0xff]
  %v1686 = vld [vmem:[%s10 + $0x140] sm:$0xff]
  %v1687 = vld [vmem:[%s10 + $0x158] sm:$0xff]
  %v1688 = vld [vmem:[%s10 + $0x170] sm:$0xff]
  %v1689 = vld [vmem:[%s11 + $0x1] sm:$0x1]
  %v1691 = vlaneseq
  %v1692 = vshrl.u32 %v1691, 7
  %v1693 = vsub.s32 0, %v1692
  %v1694 = vrot.slane %v1689, %v1693
  %1696 = vmatprep.subr.mxu0 0.0
  %1697 = vmatpush1.msra.mxu0 %v1673
  %1698 = vmatprep.subr.mxu0 0.0
  %1699 = vmatpush1.msra.mxu0 %v1674
  %1700 = vmatprep.subr.mxu0 0.0
  %1701 = vmatpush1.msra.mxu0 %v1675
  %1702 = vmatprep.subr.mxu0 0.0
  %1703 = vmatpush1.msra.mxu0 %v1676
  %1704 = vmatprep.subr.mxu0 0.0
  %1705 = vmatpush1.msra.mxu0 %v1677
  %1706 = vmatprep.subr.mxu0 0.0
  %1707 = vmatpush1.msra.mxu0 %v1678
  %1708 = vmatprep.subr.mxu0 0.0
  %1709 = vmatpush1.msra.mxu0 %v1679
  %1710 = vmatprep.subr.mxu0 0.0
  %1711 = vmatpush1.msra.mxu0 %v1680
  %1712 = vmatprep.subr.mxu0 0.0
  %1713 = vmatpush1.msra.mxu0 %v1681
  %1714 = vmatprep.subr.mxu0 0.0
  %1715 = vmatpush1.msra.mxu0 %v1682
  %1716 = vmatprep.subr.mxu0 0.0
  %1717 = vmatpush1.msra.mxu0 %v1683
  %1718 = vmatprep.subr.mxu0 0.0
  %1719 = vmatpush1.msra.mxu0 %v1684
  %1720 = vmatprep.subr.mxu0 0.0
  %1721 = vmatpush1.msra.mxu0 %v1685
  %1722 = vmatprep.subr.mxu0 0.0
  %1723 = vmatpush1.msra.mxu0 %v1686
  %1724 = vmatprep.subr.mxu0 0.0
  %1725 = vmatpush1.msra.mxu0 %v1687
  %1726 = vmatprep.subr.mxu0 0.0
  %1727 = vmatpush1.msra.mxu0 %v1688
  %1728 = vmatprep.subr.mxu0 0.0
  %1729 = vmatpush1.msra.mxu0 0.0
  %1730 = vmatprep.subr.mxu0 0.0
  %1731 = vmatpush1.msra.mxu0 0.0
  %1732 = vmatprep.subr.mxu0 0.0
  %1733 = vmatpush1.msra.mxu0 0.0
  %1734 = vmatprep.subr.mxu0 0.0
  %1735 = vmatpush1.msra.mxu0 0.0
  %1736 = vmatprep.subr.mxu0 0.0
  %1737 = vmatpush1.msra.mxu0 0.0
  %1738 = vmatprep.subr.mxu0 0.0
  %1739 = vmatpush1.msra.mxu0 0.0
  %1740 = vmatprep.subr.mxu0 0.0
  %1741 = vmatpush1.msra.mxu0 0.0
  %1742 = vmatprep.subr.mxu0 0.0
  %1743 = vmatpush1.msra.mxu0 0.0
  %1744 = vmatprep.subr.mxu0 0.0
  %1745 = vmatpush1.msra.mxu0 0.0
  %1746 = vmatprep.subr.mxu0 0.0
  %1747 = vmatpush1.msra.mxu0 0.0
  %1748 = vmatprep.subr.mxu0 0.0
  %1749 = vmatpush1.msra.mxu0 0.0
  %1750 = vmatprep.subr.mxu0 0.0
  %1751 = vmatpush1.msra.mxu0 0.0
  %1752 = vmatprep.subr.mxu0 0.0
  %1753 = vmatpush1.msra.mxu0 0.0
  %1754 = vmatprep.subr.mxu0 0.0
  %1755 = vmatpush1.msra.mxu0 0.0
  %1756 = vmatprep.subr.mxu0 0.0
  %1757 = vmatpush1.msra.mxu0 0.0
  %1758 = vmatprep.subr.mxu0 0.0
  %1759 = vmatpush1.msra.mxu0 0.0
  %1760 = vmatprep.mubr.f32.mxu0 0.0
  %1761 = vmatmul.mubr.f32.gmra.mrb[0].mxu0 %v289
  %v1762 = vpop.f32.mrb[0].mxu0
  %v1763 = vadd.f32 %v1694, %v1762
  %v1764 = vpop.f32.mrb[0].mxu0
  %1765 = vdwg.mxu0
  %v1766 = vld [vmem:[%s10 + $0x10] sm:$0xff]
  %v1767 = vld [vmem:[%s10 + $0x28] sm:$0xff]
  %v1768 = vld [vmem:[%s10 + $0x40] sm:$0xff]
  %v1769 = vld [vmem:[%s10 + $0x58] sm:$0xff]
  %v1770 = vld [vmem:[%s10 + $0x70] sm:$0xff]
  %v1771 = vld [vmem:[%s10 + $0x88] sm:$0xff]
  %v1772 = vld [vmem:[%s10 + $0xa0] sm:$0xff]
  %v1773 = vld [vmem:[%s10 + $0xb8] sm:$0xff]
  %v1774 = vld [vmem:[%s10 + $0xd0] sm:$0xff]
  %v1775 = vld [vmem:[%s10 + $0xe8] sm:$0xff]
  %v1776 = vld [vmem:[%s10 + $0x100] sm:$0xff]
  %v1777 = vld [vmem:[%s10 + $0x118] sm:$0xff]
  %v1778 = vld [vmem:[%s10 + $0x130] sm:$0xff]
  %v1779 = vld [vmem:[%s10 + $0x148] sm:$0xff]
  %v1780 = vld [vmem:[%s10 + $0x160] sm:$0xff]
  %v1781 = vld [vmem:[%s10 + $0x178] sm:$0xff]
  %v1782 = vld [vmem:[%s11 + $0x2] sm:$0x1]
  %v1784 = vlaneseq
  %v1785 = vshrl.u32 %v1784, 7
  %v1786 = vsub.s32 0, %v1785
  %v1787 = vrot.slane %v1782, %v1786
  %1789 = vmatprep.subr.mxu0 0.0
  %1790 = vmatpush1.msra.mxu0 %v1766
  %1791 = vmatprep.subr.mxu0 0.0
  %1792 = vmatpush1.msra.mxu0 %v1767
  %1793 = vmatprep.subr.mxu0 0.0
  %1794 = vmatpush1.msra.mxu0 %v1768
  %1795 = vmatprep.subr.mxu0 0.0
  %1796 = vmatpush1.msra.mxu0 %v1769
  %1797 = vmatprep.subr.mxu0 0.0
  %1798 = vmatpush1.msra.mxu0 %v1770
  %1799 = vmatprep.subr.mxu0 0.0
  %1800 = vmatpush1.msra.mxu0 %v1771
  %1801 = vmatprep.subr.mxu0 0.0
  %1802 = vmatpush1.msra.mxu0 %v1772
  %1803 = vmatprep.subr.mxu0 0.0
  %1804 = vmatpush1.msra.mxu0 %v1773
  %1805 = vmatprep.subr.mxu0 0.0
  %1806 = vmatpush1.msra.mxu0 %v1774
  %1807 = vmatprep.subr.mxu0 0.0
  %1808 = vmatpush1.msra.mxu0 %v1775
  %1809 = vmatprep.subr.mxu0 0.0
  %1810 = vmatpush1.msra.mxu0 %v1776
  %1811 = vmatprep.subr.mxu0 0.0
  %1812 = vmatpush1.msra.mxu0 %v1777
  %1813 = vmatprep.subr.mxu0 0.0
  %1814 = vmatpush1.msra.mxu0 %v1778
  %1815 = vmatprep.subr.mxu0 0.0
  %1816 = vmatpush1.msra.mxu0 %v1779
  %1817 = vmatprep.subr.mxu0 0.0
  %1818 = vmatpush1.msra.mxu0 %v1780
  %1819 = vmatprep.subr.mxu0 0.0
  %1820 = vmatpush1.msra.mxu0 %v1781
  %1821 = vmatprep.subr.mxu0 0.0
  %1822 = vmatpush1.msra.mxu0 0.0
  %1823 = vmatprep.subr.mxu0 0.0
  %1824 = vmatpush1.msra.mxu0 0.0
  %1825 = vmatprep.subr.mxu0 0.0
  %1826 = vmatpush1.msra.mxu0 0.0
  %1827 = vmatprep.subr.mxu0 0.0
  %1828 = vmatpush1.msra.mxu0 0.0
  %1829 = vmatprep.subr.mxu0 0.0
  %1830 = vmatpush1.msra.mxu0 0.0
  %1831 = vmatprep.subr.mxu0 0.0
  %1832 = vmatpush1.msra.mxu0 0.0
  %1833 = vmatprep.subr.mxu0 0.0
  %1834 = vmatpush1.msra.mxu0 0.0
  %1835 = vmatprep.subr.mxu0 0.0
  %1836 = vmatpush1.msra.mxu0 0.0
  %1837 = vmatprep.subr.mxu0 0.0
  %1838 = vmatpush1.msra.mxu0 0.0
  %1839 = vmatprep.subr.mxu0 0.0
  %1840 = vmatpush1.msra.mxu0 0.0
  %1841 = vmatprep.subr.mxu0 0.0
  %1842 = vmatpush1.msra.mxu0 0.0
  %1843 = vmatprep.subr.mxu0 0.0
  %1844 = vmatpush1.msra.mxu0 0.0
  %1845 = vmatprep.subr.mxu0 0.0
  %1846 = vmatpush1.msra.mxu0 0.0
  %1847 = vmatprep.subr.mxu0 0.0
  %1848 = vmatpush1.msra.mxu0 0.0
  %1849 = vmatprep.subr.mxu0 0.0
  %1850 = vmatpush1.msra.mxu0 0.0
  %1851 = vmatprep.subr.mxu0 0.0
  %1852 = vmatpush1.msra.mxu0 0.0
  %1853 = vmatprep.mubr.f32.mxu0 0.0
  %1854 = vmatmul.mubr.f32.gmra.mrb[0].mxu0 %v289
  %v1855 = vpop.f32.mrb[0].mxu0
  %v1856 = vadd.f32 %v1787, %v1855
  %v1857 = vpop.f32.mrb[0].mxu0
  %1858 = vdwg.mxu0
  %v1860 = vsel %vm592, %v1665, 0
  %v1863 = vsel %vm592, %v1670, 0
  %v1866 = vsel %vm592, %v1763, 0
  %1868 = vmatprep.subr.mxu0 0.0
  %1869 = vmatpush1.xpose.msra.mxu0 %v1866
  %1870 = vmatprep.subr.mxu0 0.0
  %1871 = vmatpush1.xpose.msra.mxu0 0.0
  %1872 = vmatprep.subr.mxu0 0.0
  %1873 = vmatpush1.xpose.msra.mxu0 0.0
  %1874 = vmatprep.subr.mxu0 0.0
  %1875 = vmatpush1.xpose.msra.mxu0 0.0
  %1876 = vmatprep.subr.mxu0 0.0
  %1877 = vmatpush1.xpose.msra.mxu0 0.0
  %1878 = vmatprep.subr.mxu0 0.0
  %1879 = vmatpush1.xpose.msra.mxu0 0.0
  %1880 = vmatprep.subr.mxu0 0.0
  %1881 = vmatpush1.xpose.msra.mxu0 0.0
  %1882 = vmatprep.subr.mxu0 0.0
  %1883 = vmatpush1.xpose.msra.mxu0 0.0
  %1884 = vmatprep.subr.mxu0 0.0
  %1885 = vmatpush1.xpose.msra.mxu0 0.0
  %1886 = vmatprep.subr.mxu0 0.0
  %1887 = vmatpush1.xpose.msra.mxu0 0.0
  %1888 = vmatprep.subr.mxu0 0.0
  %1889 = vmatpush1.xpose.msra.mxu0 0.0
  %1890 = vmatprep.subr.mxu0 0.0
  %1891 = vmatpush1.xpose.msra.mxu0 0.0
  %1892 = vmatprep.subr.mxu0 0.0
  %1893 = vmatpush1.xpose.msra.mxu0 0.0
  %1894 = vmatprep.subr.mxu0 0.0
  %1895 = vmatpush1.xpose.msra.mxu0 0.0
  %1896 = vmatprep.subr.mxu0 0.0
  %1897 = vmatpush1.xpose.msra.mxu0 0.0
  %1898 = vmatprep.subr.mxu0 0.0
  %1899 = vmatpush1.xpose.msra.mxu0 0.0
  %1900 = vmatprep.subr.mxu0 0.0
  %1901 = vmatpush1.xpose.msra.mxu0 0.0
  %1902 = vmatprep.subr.mxu0 0.0
  %1903 = vmatpush1.xpose.msra.mxu0 0.0
  %1904 = vmatprep.subr.mxu0 0.0
  %1905 = vmatpush1.xpose.msra.mxu0 0.0
  %1906 = vmatprep.subr.mxu0 0.0
  %1907 = vmatpush1.xpose.msra.mxu0 0.0
  %1908 = vmatprep.subr.mxu0 0.0
  %1909 = vmatpush1.xpose.msra.mxu0 0.0
  %1910 = vmatprep.subr.mxu0 0.0
  %1911 = vmatpush1.xpose.msra.mxu0 0.0
  %1912 = vmatprep.subr.mxu0 0.0
  %1913 = vmatpush1.xpose.msra.mxu0 0.0
  %1914 = vmatprep.subr.mxu0 0.0
  %1915 = vmatpush1.xpose.msra.mxu0 0.0
  %1916 = vmatprep.subr.mxu0 0.0
  %1917 = vmatpush1.xpose.msra.mxu0 0.0
  %1918 = vmatprep.subr.mxu0 0.0
  %1919 = vmatpush1.xpose.msra.mxu0 0.0
  %1920 = vmatprep.subr.mxu0 0.0
  %1921 = vmatpush1.xpose.msra.mxu0 0.0
  %1922 = vmatprep.subr.mxu0 0.0
  %1923 = vmatpush1.xpose.msra.mxu0 0.0
  %1924 = vmatprep.subr.mxu0 0.0
  %1925 = vmatpush1.xpose.msra.mxu0 0.0
  %1926 = vmatprep.subr.mxu0 0.0
  %1927 = vmatpush1.xpose.msra.mxu0 0.0
  %1928 = vmatprep.subr.mxu0 0.0
  %1929 = vmatpush1.xpose.msra.mxu0 0.0
  %1930 = vmatprep.subr.mxu0 0.0
  %1931 = vmatpush1.xpose.msra.mxu0 0.0
  %1932 = vmatprep.mubr.f32.mxu0 0.0
  %1933 = vmatmul.mubr.f32.gmra.mrb[0].mxu0 %v1860
  %v1934 = vpop.f32.mrb[0].mxu0
  %v1935 = vadd.f32 0.0, %v1934
  %v1936 = vpop.f32.mrb[0].mxu0
  %1937 = vmatprep.mubr.f32.mxu0 0.0
  %1938 = vmatmul.mubr.f32.gmra.mrb[0].mxu0 %v1863
  %v1939 = vpop.f32.mrb[0].mxu0
  %v1940 = vadd.f32 0.0, %v1939
  %v1941 = vpop.f32.mrb[0].mxu0
  %1942 = vdwg.mxu0
  %v1943 = vmul.f32 %v1935, 0.17677669
  %v1944 = vmul.f32 %v1940, 0.17677669
  %v1945 = vadd.f32 %v1943, %v296
  %v1946 = vadd.f32 %v1944, %v297
  %vm1947 = vcmask 64512
  %v1948 = vsel %vm1947, %v1945, -inf
  %1949 = vmax.xlane.f32.xlu0 %v1948
  %v1950 = vpop.xlane.xlu0 %1949
  %v1951 = vsel %vm1947, %v1946, -inf
  %1952 = vmax.xlane.f32.xlu0 %v1951
  %v1953 = vpop.xlane.xlu0 %1952
  %v1954 = vsub.f32 %v1945, %v1950
  %v1955 = vsub.f32 %v1946, %v1953
  %v1956 = vmul.f32 %v1954, 1.442695
  %v1957 = vpow.pop %v1956
  %v1958 = vmul.f32 %v1955, 1.442695
  %v1959 = vpow.pop %v1958
  %v1960 = vsel %vm1947, %v1957, 0.0
  %1961 = vadd.xlane.f32.xlu0 %v1960
  %v1962 = vpop.xlane.xlu0 %1961
  %v1963 = vsel %vm1947, %v1959, 0.0
  %1964 = vadd.xlane.f32.xlu0 %v1963
  %v1965 = vpop.xlane.xlu0 %1964
  %v1966 = vrcp.pop %v1962
  %v1967 = vmul.f32 %v1957, %v1966
  %v1968 = vrcp.pop %v1965
  %v1969 = vmul.f32 %v1959, %v1968
  %v1971 = vsel %vm1947, %v1967, 0
  %v1974 = vsel %vm1947, %v1969, 0
  %1976 = vmatprep.subr.mxu0 0.0
  %1977 = vmatpush1.msra.mxu0 %v1856
  %1978 = vmatprep.subr.mxu0 0.0
  %1979 = vmatpush1.msra.mxu0 0.0
  %1980 = vmatprep.subr.mxu0 0.0
  %1981 = vmatpush1.msra.mxu0 0.0
  %1982 = vmatprep.subr.mxu0 0.0
  %1983 = vmatpush1.msra.mxu0 0.0
  %1984 = vmatprep.subr.mxu0 0.0
  %1985 = vmatpush1.msra.mxu0 0.0
  %1986 = vmatprep.subr.mxu0 0.0
  %1987 = vmatpush1.msra.mxu0 0.0
  %1988 = vmatprep.subr.mxu0 0.0
  %1989 = vmatpush1.msra.mxu0 0.0
  %1990 = vmatprep.subr.mxu0 0.0
  %1991 = vmatpush1.msra.mxu0 0.0
  %1992 = vmatprep.subr.mxu0 0.0
  %1993 = vmatpush1.msra.mxu0 0.0
  %1994 = vmatprep.subr.mxu0 0.0
  %1995 = vmatpush1.msra.mxu0 0.0
  %1996 = vmatprep.subr.mxu0 0.0
  %1997 = vmatpush1.msra.mxu0 0.0
  %1998 = vmatprep.subr.mxu0 0.0
  %1999 = vmatpush1.msra.mxu0 0.0
  %2000 = vmatprep.subr.mxu0 0.0
  %2001 = vmatpush1.msra.mxu0 0.0
  %2002 = vmatprep.subr.mxu0 0.0
  %2003 = vmatpush1.msra.mxu0 0.0
  %2004 = vmatprep.subr.mxu0 0.0
  %2005 = vmatpush1.msra.mxu0 0.0
  %2006 = vmatprep.subr.mxu0 0.0
  %2007 = vmatpush1.msra.mxu0 0.0
  %2008 = vmatprep.subr.mxu0 0.0
  %2009 = vmatpush1.msra.mxu0 0.0
  %2010 = vmatprep.subr.mxu0 0.0
  %2011 = vmatpush1.msra.mxu0 0.0
  %2012 = vmatprep.subr.mxu0 0.0
  %2013 = vmatpush1.msra.mxu0 0.0
  %2014 = vmatprep.subr.mxu0 0.0
  %2015 = vmatpush1.msra.mxu0 0.0
  %2016 = vmatprep.subr.mxu0 0.0
  %2017 = vmatpush1.msra.mxu0 0.0
  %2018 = vmatprep.subr.mxu0 0.0
  %2019 = vmatpush1.msra.mxu0 0.0
  %2020 = vmatprep.subr.mxu0 0.0
  %2021 = vmatpush1.msra.mxu0 0.0
  %2022 = vmatprep.subr.mxu0 0.0
  %2023 = vmatpush1.msra.mxu0 0.0
  %2024 = vmatprep.subr.mxu0 0.0
  %2025 = vmatpush1.msra.mxu0 0.0
  %2026 = vmatprep.subr.mxu0 0.0
  %2027 = vmatpush1.msra.mxu0 0.0
  %2028 = vmatprep.subr.mxu0 0.0
  %2029 = vmatpush1.msra.mxu0 0.0
  %2030 = vmatprep.subr.mxu0 0.0
  %2031 = vmatpush1.msra.mxu0 0.0
  %2032 = vmatprep.subr.mxu0 0.0
  %2033 = vmatpush1.msra.mxu0 0.0
  %2034 = vmatprep.subr.mxu0 0.0
  %2035 = vmatpush1.msra.mxu0 0.0
  %2036 = vmatprep.subr.mxu0 0.0
  %2037 = vmatpush1.msra.mxu0 0.0
  %2038 = vmatprep.subr.mxu0 0.0
  %2039 = vmatpush1.msra.mxu0 0.0
  %2040 = vmatprep.mubr.f32.mxu0 0.0
  %2041 = vmatmul.mubr.f32.gmra.mrb[0].mxu0 %v1971
  %v2042 = vpop.f32.mrb[0].mxu0
  %v2043 = vadd.f32 0.0, %v2042
  %v2044 = vpop.f32.mrb[0].mxu0
  %2045 = vmatprep.mubr.f32.mxu0 0.0
  %2046 = vmatmul.mubr.f32.gmra.mrb[0].mxu0 %v1974
  %v2047 = vpop.f32.mrb[0].mxu0
  %v2048 = vadd.f32 0.0, %v2047
  %v2049 = vpop.f32.mrb[0].mxu0
  %2050 = vdwg.mxu0
  %2051 = vrot.lane.b32.xlu0 %v1665, 96
  %v2052 = vpop.permute.xlu0 %2051
  %2053 = vrot.lane.b32.xlu0 %v1670, 96
  %v2054 = vpop.permute.xlu0 %2053
  %2055 = vrot.lane.b32.xlu0 %v1763, 96
  %v2056 = vpop.permute.xlu0 %2055
  %v2057 = vsel %vm592, %v2052, 0
  %v2059 = vsel %vm592, %v2054, 0
  %v2061 = vsel %vm592, %v2056, 0
  %2063 = vmatprep.subr.mxu0 0.0
  %2064 = vmatpush1.xpose.msra.mxu0 %v2061
  %2065 = vmatprep.subr.mxu0 0.0
  %2066 = vmatpush1.xpose.msra.mxu0 0.0
  %2067 = vmatprep.subr.mxu0 0.0
  %2068 = vmatpush1.xpose.msra.mxu0 0.0
  %2069 = vmatprep.subr.mxu0 0.0
  %2070 = vmatpush1.xpose.msra.mxu0 0.0
  %2071 = vmatprep.subr.mxu0 0.0
  %2072 = vmatpush1.xpose.msra.mxu0 0.0
  %2073 = vmatprep.subr.mxu0 0.0
  %2074 = vmatpush1.xpose.msra.mxu0 0.0
  %2075 = vmatprep.subr.mxu0 0.0
  %2076 = vmatpush1.xpose.msra.mxu0 0.0
  %2077 = vmatprep.subr.mxu0 0.0
  %2078 = vmatpush1.xpose.msra.mxu0 0.0
  %2079 = vmatprep.subr.mxu0 0.0
  %2080 = vmatpush1.xpose.msra.mxu0 0.0
  %2081 = vmatprep.subr.mxu0 0.0
  %2082 = vmatpush1.xpose.msra.mxu0 0.0
  %2083 = vmatprep.subr.mxu0 0.0
  %2084 = vmatpush1.xpose.msra.mxu0 0.0
  %2085 = vmatprep.subr.mxu0 0.0
  %2086 = vmatpush1.xpose.msra.mxu0 0.0
  %2087 = vmatprep.subr.mxu0 0.0
  %2088 = vmatpush1.xpose.msra.mxu0 0.0
  %2089 = vmatprep.subr.mxu0 0.0
  %2090 = vmatpush1.xpose.msra.mxu0 0.0
  %2091 = vmatprep.subr.mxu0 0.0
  %2092 = vmatpush1.xpose.msra.mxu0 0.0
  %2093 = vmatprep.subr.mxu0 0.0
  %2094 = vmatpush1.xpose.msra.mxu0 0.0
  %2095 = vmatprep.subr.mxu0 0.0
  %2096 = vmatpush1.xpose.msra.mxu0 0.0
  %2097 = vmatprep.subr.mxu0 0.0
  %2098 = vmatpush1.xpose.msra.mxu0 0.0
  %2099 = vmatprep.subr.mxu0 0.0
  %2100 = vmatpush1.xpose.msra.mxu0 0.0
  %2101 = vmatprep.subr.mxu0 0.0
  %2102 = vmatpush1.xpose.msra.mxu0 0.0
  %2103 = vmatprep.subr.mxu0 0.0
  %2104 = vmatpush1.xpose.msra.mxu0 0.0
  %2105 = vmatprep.subr.mxu0 0.0
  %2106 = vmatpush1.xpose.msra.mxu0 0.0
  %2107 = vmatprep.subr.mxu0 0.0
  %2108 = vmatpush1.xpose.msra.mxu0 0.0
  %2109 = vmatprep.subr.mxu0 0.0
  %2110 = vmatpush1.xpose.msra.mxu0 0.0
  %2111 = vmatprep.subr.mxu0 0.0
  %2112 = vmatpush1.xpose.msra.mxu0 0.0
  %2113 = vmatprep.subr.mxu0 0.0
  %2114 = vmatpush1.xpose.msra.mxu0 0.0
  %2115 = vmatprep.subr.mxu0 0.0
  %2116 = vmatpush1.xpose.msra.mxu0 0.0
  %2117 = vmatprep.subr.mxu0 0.0
  %2118 = vmatpush1.xpose.msra.mxu0 0.0
  %2119 = vmatprep.subr.mxu0 0.0
  %2120 = vmatpush1.xpose.msra.mxu0 0.0
  %2121 = vmatprep.subr.mxu0 0.0
  %2122 = vmatpush1.xpose.msra.mxu0 0.0
  %2123 = vmatprep.subr.mxu0 0.0
  %2124 = vmatpush1.xpose.msra.mxu0 0.0
  %2125 = vmatprep.subr.mxu0 0.0
  %2126 = vmatpush1.xpose.msra.mxu0 0.0
  %2127 = vmatprep.mubr.f32.mxu0 0.0
  %2128 = vmatmul.mubr.f32.gmra.mrb[0].mxu0 %v2057
  %v2129 = vpop.f32.mrb[0].mxu0
  %v2130 = vadd.f32 0.0, %v2129
  %v2131 = vpop.f32.mrb[0].mxu0
  %2132 = vmatprep.mubr.f32.mxu0 0.0
  %2133 = vmatmul.mubr.f32.gmra.mrb[0].mxu0 %v2059
  %v2134 = vpop.f32.mrb[0].mxu0
  %v2135 = vadd.f32 0.0, %v2134
  %v2136 = vpop.f32.mrb[0].mxu0
  %2137 = vdwg.mxu0
  %v2138 = vmul.f32 %v2130, 0.17677669
  %v2139 = vmul.f32 %v2135, 0.17677669
  %v2140 = vadd.f32 %v2138, %v296
  %v2141 = vadd.f32 %v2139, %v297
  %v2142 = vsel %vm1947, %v2140, -inf
  %2143 = vmax.xlane.f32.xlu0 %v2142
  %v2144 = vpop.xlane.xlu0 %2143
  %v2145 = vsel %vm1947, %v2141, -inf
  %2146 = vmax.xlane.f32.xlu0 %v2145
  %v2147 = vpop.xlane.xlu0 %2146
  %v2148 = vsub.f32 %v2140, %v2144
  %v2149 = vsub.f32 %v2141, %v2147
  %v2150 = vmul.f32 %v2148, 1.442695
  %v2151 = vpow.pop %v2150
  %v2152 = vmul.f32 %v2149, 1.442695
  %v2153 = vpow.pop %v2152
  %v2154 = vsel %vm1947, %v2151, 0.0
  %2155 = vadd.xlane.f32.xlu0 %v2154
  %v2156 = vpop.xlane.xlu0 %2155
  %v2157 = vsel %vm1947, %v2153, 0.0
  %2158 = vadd.xlane.f32.xlu0 %v2157
  %v2159 = vpop.xlane.xlu0 %2158
  %v2160 = vrcp.pop %v2156
  %v2161 = vmul.f32 %v2151, %v2160
  %v2162 = vrcp.pop %v2159
  %v2163 = vmul.f32 %v2153, %v2162
  %2165 = vrot.lane.b32.xlu0 %v1856, 96
  %v2166 = vpop.permute.xlu0 %2165
  %v2169 = vsel %vm1947, %v2161, 0
  %v2172 = vsel %vm1947, %v2163, 0
  %2174 = vmatprep.subr.mxu0 0.0
  %2175 = vmatpush1.msra.mxu0 %v2166
  %2176 = vmatprep.subr.mxu0 0.0
  %2177 = vmatpush1.msra.mxu0 0.0
  %2178 = vmatprep.subr.mxu0 0.0
  %2179 = vmatpush1.msra.mxu0 0.0
  %2180 = vmatprep.subr.mxu0 0.0
  %2181 = vmatpush1.msra.mxu0 0.0
  %2182 = vmatprep.subr.mxu0 0.0
  %2183 = vmatpush1.msra.mxu0 0.0
  %2184 = vmatprep.subr.mxu0 0.0
  %2185 = vmatpush1.msra.mxu0 0.0
  %2186 = vmatprep.subr.mxu0 0.0
  %2187 = vmatpush1.msra.mxu0 0.0
  %2188 = vmatprep.subr.mxu0 0.0
  %2189 = vmatpush1.msra.mxu0 0.0
  %2190 = vmatprep.subr.mxu0 0.0
  %2191 = vmatpush1.msra.mxu0 0.0
  %2192 = vmatprep.subr.mxu0 0.0
  %2193 = vmatpush1.msra.mxu0 0.0
  %2194 = vmatprep.subr.mxu0 0.0
  %2195 = vmatpush1.msra.mxu0 0.0
  %2196 = vmatprep.subr.mxu0 0.0
  %2197 = vmatpush1.msra.mxu0 0.0
  %2198 = vmatprep.subr.mxu0 0.0
  %2199 = vmatpush1.msra.mxu0 0.0
  %2200 = vmatprep.subr.mxu0 0.0
  %2201 = vmatpush1.msra.mxu0 0.0
  %2202 = vmatprep.subr.mxu0 0.0
  %2203 = vmatpush1.msra.mxu0 0.0
  %2204 = vmatprep.subr.mxu0 0.0
  %2205 = vmatpush1.msra.mxu0 0.0
  %2206 = vmatprep.subr.mxu0 0.0
  %2207 = vmatpush1.msra.mxu0 0.0
  %2208 = vmatprep.subr.mxu0 0.0
  %2209 = vmatpush1.msra.mxu0 0.0
  %2210 = vmatprep.subr.mxu0 0.0
  %2211 = vmatpush1.msra.mxu0 0.0
  %2212 = vmatprep.subr.mxu0 0.0
  %2213 = vmatpush1.msra.mxu0 0.0
  %2214 = vmatprep.subr.mxu0 0.0
  %2215 = vmatpush1.msra.mxu0 0.0
  %2216 = vmatprep.subr.mxu0 0.0
  %2217 = vmatpush1.msra.mxu0 0.0
  %2218 = vmatprep.subr.mxu0 0.0
  %2219 = vmatpush1.msra.mxu0 0.0
  %2220 = vmatprep.subr.mxu0 0.0
  %2221 = vmatpush1.msra.mxu0 0.0
  %2222 = vmatprep.subr.mxu0 0.0
  %2223 = vmatpush1.msra.mxu0 0.0
  %2224 = vmatprep.subr.mxu0 0.0
  %2225 = vmatpush1.msra.mxu0 0.0
  %2226 = vmatprep.subr.mxu0 0.0
  %2227 = vmatpush1.msra.mxu0 0.0
  %2228 = vmatprep.subr.mxu0 0.0
  %2229 = vmatpush1.msra.mxu0 0.0
  %2230 = vmatprep.subr.mxu0 0.0
  %2231 = vmatpush1.msra.mxu0 0.0
  %2232 = vmatprep.subr.mxu0 0.0
  %2233 = vmatpush1.msra.mxu0 0.0
  %2234 = vmatprep.subr.mxu0 0.0
  %2235 = vmatpush1.msra.mxu0 0.0
  %2236 = vmatprep.subr.mxu0 0.0
  %2237 = vmatpush1.msra.mxu0 0.0
  %2238 = vmatprep.mubr.f32.mxu0 0.0
  %2239 = vmatmul.mubr.f32.gmra.mrb[0].mxu0 %v2169
  %v2240 = vpop.f32.mrb[0].mxu0
  %v2241 = vadd.f32 0.0, %v2240
  %v2242 = vpop.f32.mrb[0].mxu0
  %2243 = vmatprep.mubr.f32.mxu0 0.0
  %2244 = vmatmul.mubr.f32.gmra.mrb[0].mxu0 %v2172
  %v2245 = vpop.f32.mrb[0].mxu0
  %v2246 = vadd.f32 0.0, %v2245
  %v2247 = vpop.f32.mrb[0].mxu0
  %2248 = vdwg.mxu0
  %2249 = vrot.lane.b32.xlu0 %v1665, 64
  %v2250 = vpop.permute.xlu0 %2249
  %2251 = vrot.lane.b32.xlu0 %v1670, 64
  %v2252 = vpop.permute.xlu0 %2251
  %2253 = vrot.lane.b32.xlu0 %v1763, 64
  %v2254 = vpop.permute.xlu0 %2253
  %v2255 = vsel %vm592, %v2250, 0
  %v2257 = vsel %vm592, %v2252, 0
  %v2259 = vsel %vm592, %v2254, 0
  %2261 = vmatprep.subr.mxu0 0.0
  %2262 = vmatpush1.xpose.msra.mxu0 %v2259
  %2263 = vmatprep.subr.mxu0 0.0
  %2264 = vmatpush1.xpose.msra.mxu0 0.0
  %2265 = vmatprep.subr.mxu0 0.0
  %2266 = vmatpush1.xpose.msra.mxu0 0.0
  %2267 = vmatprep.subr.mxu0 0.0
  %2268 = vmatpush1.xpose.msra.mxu0 0.0
  %2269 = vmatprep.subr.mxu0 0.0
  %2270 = vmatpush1.xpose.msra.mxu0 0.0
  %2271 = vmatprep.subr.mxu0 0.0
  %2272 = vmatpush1.xpose.msra.mxu0 0.0
  %2273 = vmatprep.subr.mxu0 0.0
  %2274 = vmatpush1.xpose.msra.mxu0 0.0
  %2275 = vmatprep.subr.mxu0 0.0
  %2276 = vmatpush1.xpose.msra.mxu0 0.0
  %2277 = vmatprep.subr.mxu0 0.0
  %2278 = vmatpush1.xpose.msra.mxu0 0.0
  %2279 = vmatprep.subr.mxu0 0.0
  %2280 = vmatpush1.xpose.msra.mxu0 0.0
  %2281 = vmatprep.subr.mxu0 0.0
  %2282 = vmatpush1.xpose.msra.mxu0 0.0
  %2283 = vmatprep.subr.mxu0 0.0
  %2284 = vmatpush1.xpose.msra.mxu0 0.0
  %2285 = vmatprep.subr.mxu0 0.0
  %2286 = vmatpush1.xpose.msra.mxu0 0.0
  %2287 = vmatprep.subr.mxu0 0.0
  %2288 = vmatpush1.xpose.msra.mxu0 0.0
  %2289 = vmatprep.subr.mxu0 0.0
  %2290 = vmatpush1.xpose.msra.mxu0 0.0
  %2291 = vmatprep.subr.mxu0 0.0
  %2292 = vmatpush1.xpose.msra.mxu0 0.0
  %2293 = vmatprep.subr.mxu0 0.0
  %2294 = vmatpush1.xpose.msra.mxu0 0.0
  %2295 = vmatprep.subr.mxu0 0.0
  %2296 = vmatpush1.xpose.msra.mxu0 0.0
  %2297 = vmatprep.subr.mxu0 0.0
  %2298 = vmatpush1.xpose.msra.mxu0 0.0
  %2299 = vmatprep.subr.mxu0 0.0
  %2300 = vmatpush1.xpose.msra.mxu0 0.0
  %2301 = vmatprep.subr.mxu0 0.0
  %2302 = vmatpush1.xpose.msra.mxu0 0.0
  %2303 = vmatprep.subr.mxu0 0.0
  %2304 = vmatpush1.xpose.msra.mxu0 0.0
  %2305 = vmatprep.subr.mxu0 0.0
  %2306 = vmatpush1.xpose.msra.mxu0 0.0
  %2307 = vmatprep.subr.mxu0 0.0
  %2308 = vmatpush1.xpose.msra.mxu0 0.0
  %2309 = vmatprep.subr.mxu0 0.0
  %2310 = vmatpush1.xpose.msra.mxu0 0.0
  %2311 = vmatprep.subr.mxu0 0.0
  %2312 = vmatpush1.xpose.msra.mxu0 0.0
  %2313 = vmatprep.subr.mxu0 0.0
  %2314 = vmatpush1.xpose.msra.mxu0 0.0
  %2315 = vmatprep.subr.mxu0 0.0
  %2316 = vmatpush1.xpose.msra.mxu0 0.0
  %2317 = vmatprep.subr.mxu0 0.0
  %2318 = vmatpush1.xpose.msra.mxu0 0.0
  %2319 = vmatprep.subr.mxu0 0.0
  %2320 = vmatpush1.xpose.msra.mxu0 0.0
  %2321 = vmatprep.subr.mxu0 0.0
  %2322 = vmatpush1.xpose.msra.mxu0 0.0
  %2323 = vmatprep.subr.mxu0 0.0
  %2324 = vmatpush1.xpose.msra.mxu0 0.0
  %2325 = vmatprep.mubr.f32.mxu0 0.0
  %2326 = vmatmul.mubr.f32.gmra.mrb[0].mxu0 %v2255
  %v2327 = vpop.f32.mrb[0].mxu0
  %v2328 = vadd.f32 0.0, %v2327
  %v2329 = vpop.f32.mrb[0].mxu0
  %2330 = vmatprep.mubr.f32.mxu0 0.0
  %2331 = vmatmul.mubr.f32.gmra.mrb[0].mxu0 %v2257
  %v2332 = vpop.f32.mrb[0].mxu0
  %v2333 = vadd.f32 0.0, %v2332
  %v2334 = vpop.f32.mrb[0].mxu0
  %2335 = vdwg.mxu0
  %v2336 = vmul.f32 %v2328, 0.17677669
  %v2337 = vmul.f32 %v2333, 0.17677669
  %v2338 = vadd.f32 %v2336, %v296
  %v2339 = vadd.f32 %v2337, %v297
  %v2340 = vsel %vm1947, %v2338, -inf
  %2341 = vmax.xlane.f32.xlu0 %v2340
  %v2342 = vpop.xlane.xlu0 %2341
  %v2343 = vsel %vm1947, %v2339, -inf
  %2344 = vmax.xlane.f32.xlu0 %v2343
  %v2345 = vpop.xlane.xlu0 %2344
  %v2346 = vsub.f32 %v2338, %v2342
  %v2347 = vsub.f32 %v2339, %v2345
  %v2348 = vmul.f32 %v2346, 1.442695
  %v2349 = vpow.pop %v2348
  %v2350 = vmul.f32 %v2347, 1.442695
  %v2351 = vpow.pop %v2350
  %v2352 = vsel %vm1947, %v2349, 0.0
  %2353 = vadd.xlane.f32.xlu0 %v2352
  %v2354 = vpop.xlane.xlu0 %2353
  %v2355 = vsel %vm1947, %v2351, 0.0
  %2356 = vadd.xlane.f32.xlu0 %v2355
  %v2357 = vpop.xlane.xlu0 %2356
  %v2358 = vrcp.pop %v2354
  %v2359 = vmul.f32 %v2349, %v2358
  %v2360 = vrcp.pop %v2357
  %v2361 = vmul.f32 %v2351, %v2360
  %2362 = vrot.lane.b32.xlu0 %v1856, 64
  %v2363 = vpop.permute.xlu0 %2362
  %v2366 = vsel %vm1947, %v2359, 0
  %v2369 = vsel %vm1947, %v2361, 0
  %2371 = vmatprep.subr.mxu0 0.0
  %2372 = vmatpush1.msra.mxu0 %v2363
  %2373 = vmatprep.subr.mxu0 0.0
  %2374 = vmatpush1.msra.mxu0 0.0
  %2375 = vmatprep.subr.mxu0 0.0
  %2376 = vmatpush1.msra.mxu0 0.0
  %2377 = vmatprep.subr.mxu0 0.0
  %2378 = vmatpush1.msra.mxu0 0.0
  %2379 = vmatprep.subr.mxu0 0.0
  %2380 = vmatpush1.msra.mxu0 0.0
  %2381 = vmatprep.subr.mxu0 0.0
  %2382 = vmatpush1.msra.mxu0 0.0
  %2383 = vmatprep.subr.mxu0 0.0
  %2384 = vmatpush1.msra.mxu0 0.0
  %2385 = vmatprep.subr.mxu0 0.0
  %2386 = vmatpush1.msra.mxu0 0.0
  %2387 = vmatprep.subr.mxu0 0.0
  %2388 = vmatpush1.msra.mxu0 0.0
  %2389 = vmatprep.subr.mxu0 0.0
  %2390 = vmatpush1.msra.mxu0 0.0
  %2391 = vmatprep.subr.mxu0 0.0
  %2392 = vmatpush1.msra.mxu0 0.0
  %2393 = vmatprep.subr.mxu0 0.0
  %2394 = vmatpush1.msra.mxu0 0.0
  %2395 = vmatprep.subr.mxu0 0.0
  %2396 = vmatpush1.msra.mxu0 0.0
  %2397 = vmatprep.subr.mxu0 0.0
  %2398 = vmatpush1.msra.mxu0 0.0
  %2399 = vmatprep.subr.mxu0 0.0
  %2400 = vmatpush1.msra.mxu0 0.0
  %2401 = vmatprep.subr.mxu0 0.0
  %2402 = vmatpush1.msra.mxu0 0.0
  %2403 = vmatprep.subr.mxu0 0.0
  %2404 = vmatpush1.msra.mxu0 0.0
  %2405 = vmatprep.subr.mxu0 0.0
  %2406 = vmatpush1.msra.mxu0 0.0
  %2407 = vmatprep.subr.mxu0 0.0
  %2408 = vmatpush1.msra.mxu0 0.0
  %2409 = vmatprep.subr.mxu0 0.0
  %2410 = vmatpush1.msra.mxu0 0.0
  %2411 = vmatprep.subr.mxu0 0.0
  %2412 = vmatpush1.msra.mxu0 0.0
  %2413 = vmatprep.subr.mxu0 0.0
  %2414 = vmatpush1.msra.mxu0 0.0
  %2415 = vmatprep.subr.mxu0 0.0
  %2416 = vmatpush1.msra.mxu0 0.0
  %2417 = vmatprep.subr.mxu0 0.0
  %2418 = vmatpush1.msra.mxu0 0.0
  %2419 = vmatprep.subr.mxu0 0.0
  %2420 = vmatpush1.msra.mxu0 0.0
  %2421 = vmatprep.subr.mxu0 0.0
  %2422 = vmatpush1.msra.mxu0 0.0
  %2423 = vmatprep.subr.mxu0 0.0
  %2424 = vmatpush1.msra.mxu0 0.0
  %2425 = vmatprep.subr.mxu0 0.0
  %2426 = vmatpush1.msra.mxu0 0.0
  %2427 = vmatprep.subr.mxu0 0.0
  %2428 = vmatpush1.msra.mxu0 0.0
  %2429 = vmatprep.subr.mxu0 0.0
  %2430 = vmatpush1.msra.mxu0 0.0
  %2431 = vmatprep.subr.mxu0 0.0
  %2432 = vmatpush1.msra.mxu0 0.0
  %2433 = vmatprep.subr.mxu0 0.0
  %2434 = vmatpush1.msra.mxu0 0.0
  %2435 = vmatprep.mubr.f32.mxu0 0.0
  %2436 = vmatmul.mubr.f32.gmra.mrb[0].mxu0 %v2366
  %v2437 = vpop.f32.mrb[0].mxu0
  %v2438 = vadd.f32 0.0, %v2437
  %v2439 = vpop.f32.mrb[0].mxu0
  %2440 = vmatprep.mubr.f32.mxu0 0.0
  %2441 = vmatmul.mubr.f32.gmra.mrb[0].mxu0 %v2369
  %v2442 = vpop.f32.mrb[0].mxu0
  %v2443 = vadd.f32 0.0, %v2442
  %v2444 = vpop.f32.mrb[0].mxu0
  %2445 = vdwg.mxu0
  %2446 = vrot.lane.b32.xlu0 %v1665, 32
  %v2447 = vpop.permute.xlu0 %2446
  %2448 = vrot.lane.b32.xlu0 %v1670, 32
  %v2449 = vpop.permute.xlu0 %2448
  %2450 = vrot.lane.b32.xlu0 %v1763, 32
  %v2451 = vpop.permute.xlu0 %2450
  %v2452 = vsel %vm592, %v2447, 0
  %v2454 = vsel %vm592, %v2449, 0
  %v2456 = vsel %vm592, %v2451, 0
  %2458 = vmatprep.subr.mxu0 0.0
  %2459 = vmatpush1.xpose.msra.mxu0 %v2456
  %2460 = vmatprep.subr.mxu0 0.0
  %2461 = vmatpush1.xpose.msra.mxu0 0.0
  %2462 = vmatprep.subr.mxu0 0.0
  %2463 = vmatpush1.xpose.msra.mxu0 0.0
  %2464 = vmatprep.subr.mxu0 0.0
  %2465 = vmatpush1.xpose.msra.mxu0 0.0
  %2466 = vmatprep.subr.mxu0 0.0
  %2467 = vmatpush1.xpose.msra.mxu0 0.0
  %2468 = vmatprep.subr.mxu0 0.0
  %2469 = vmatpush1.xpose.msra.mxu0 0.0
  %2470 = vmatprep.subr.mxu0 0.0
  %2471 = vmatpush1.xpose.msra.mxu0 0.0
  %2472 = vmatprep.subr.mxu0 0.0
  %2473 = vmatpush1.xpose.msra.mxu0 0.0
  %2474 = vmatprep.subr.mxu0 0.0
  %2475 = vmatpush1.xpose.msra.mxu0 0.0
  %2476 = vmatprep.subr.mxu0 0.0
  %2477 = vmatpush1.xpose.msra.mxu0 0.0
  %2478 = vmatprep.subr.mxu0 0.0
  %2479 = vmatpush1.xpose.msra.mxu0 0.0
  %2480 = vmatprep.subr.mxu0 0.0
  %2481 = vmatpush1.xpose.msra.mxu0 0.0
  %2482 = vmatprep.subr.mxu0 0.0
  %2483 = vmatpush1.xpose.msra.mxu0 0.0
  %2484 = vmatprep.subr.mxu0 0.0
  %2485 = vmatpush1.xpose.msra.mxu0 0.0
  %2486 = vmatprep.subr.mxu0 0.0
  %2487 = vmatpush1.xpose.msra.mxu0 0.0
  %2488 = vmatprep.subr.mxu0 0.0
  %2489 = vmatpush1.xpose.msra.mxu0 0.0
  %2490 = vmatprep.subr.mxu0 0.0
  %2491 = vmatpush1.xpose.msra.mxu0 0.0
  %2492 = vmatprep.subr.mxu0 0.0
  %2493 = vmatpush1.xpose.msra.mxu0 0.0
  %2494 = vmatprep.subr.mxu0 0.0
  %2495 = vmatpush1.xpose.msra.mxu0 0.0
  %2496 = vmatprep.subr.mxu0 0.0
  %2497 = vmatpush1.xpose.msra.mxu0 0.0
  %2498 = vmatprep.subr.mxu0 0.0
  %2499 = vmatpush1.xpose.msra.mxu0 0.0
  %2500 = vmatprep.subr.mxu0 0.0
  %2501 = vmatpush1.xpose.msra.mxu0 0.0
  %2502 = vmatprep.subr.mxu0 0.0
  %2503 = vmatpush1.xpose.msra.mxu0 0.0
  %2504 = vmatprep.subr.mxu0 0.0
  %2505 = vmatpush1.xpose.msra.mxu0 0.0
  %2506 = vmatprep.subr.mxu0 0.0
  %2507 = vmatpush1.xpose.msra.mxu0 0.0
  %2508 = vmatprep.subr.mxu0 0.0
  %2509 = vmatpush1.xpose.msra.mxu0 0.0
  %2510 = vmatprep.subr.mxu0 0.0
  %2511 = vmatpush1.xpose.msra.mxu0 0.0
  %2512 = vmatprep.subr.mxu0 0.0
  %2513 = vmatpush1.xpose.msra.mxu0 0.0
  %2514 = vmatprep.subr.mxu0 0.0
  %2515 = vmatpush1.xpose.msra.mxu0 0.0
  %2516 = vmatprep.subr.mxu0 0.0
  %2517 = vmatpush1.xpose.msra.mxu0 0.0
  %2518 = vmatprep.subr.mxu0 0.0
  %2519 = vmatpush1.xpose.msra.mxu0 0.0
  %2520 = vmatprep.subr.mxu0 0.0
  %2521 = vmatpush1.xpose.msra.mxu0 0.0
  %2522 = vmatprep.mubr.f32.mxu0 0.0
  %2523 = vmatmul.mubr.f32.gmra.mrb[0].mxu0 %v2452
  %v2524 = vpop.f32.mrb[0].mxu0
  %v2525 = vadd.f32 0.0, %v2524
  %v2526 = vpop.f32.mrb[0].mxu0
  %2527 = vmatprep.mubr.f32.mxu0 0.0
  %2528 = vmatmul.mubr.f32.gmra.mrb[0].mxu0 %v2454
  %v2529 = vpop.f32.mrb[0].mxu0
  %v2530 = vadd.f32 0.0, %v2529
  %v2531 = vpop.f32.mrb[0].mxu0
  %2532 = vdwg.mxu0
  %v2533 = vmul.f32 %v2525, 0.17677669
  %v2534 = vmul.f32 %v2530, 0.17677669
  %v2535 = vadd.f32 %v2533, %v296
  %v2536 = vadd.f32 %v2534, %v297
  %v2537 = vsel %vm1947, %v2535, -inf
  %2538 = vmax.xlane.f32.xlu0 %v2537
  %v2539 = vpop.xlane.xlu0 %2538
  %v2540 = vsel %vm1947, %v2536, -inf
  %2541 = vmax.xlane.f32.xlu0 %v2540
  %v2542 = vpop.xlane.xlu0 %2541
  %v2543 = vsub.f32 %v2535, %v2539
  %v2544 = vsub.f32 %v2536, %v2542
  %v2545 = vmul.f32 %v2543, 1.442695
  %v2546 = vpow.pop %v2545
  %v2547 = vmul.f32 %v2544, 1.442695
  %v2548 = vpow.pop %v2547
  %v2549 = vsel %vm1947, %v2546, 0.0
  %2550 = vadd.xlane.f32.xlu0 %v2549
  %v2551 = vpop.xlane.xlu0 %2550
  %v2552 = vsel %vm1947, %v2548, 0.0
  %2553 = vadd.xlane.f32.xlu0 %v2552
  %v2554 = vpop.xlane.xlu0 %2553
  %v2555 = vrcp.pop %v2551
  %v2556 = vmul.f32 %v2546, %v2555
  %v2557 = vrcp.pop %v2554
  %v2558 = vmul.f32 %v2548, %v2557
  %2559 = vrot.lane.b32.xlu0 %v1856, 32
  %v2560 = vpop.permute.xlu0 %2559
  %v2563 = vsel %vm1947, %v2556, 0
  %v2566 = vsel %vm1947, %v2558, 0
  %2568 = vmatprep.subr.mxu0 0.0
  %2569 = vmatpush1.msra.mxu0 %v2560
  %2570 = vmatprep.subr.mxu0 0.0
  %2571 = vmatpush1.msra.mxu0 0.0
  %2572 = vmatprep.subr.mxu0 0.0
  %2573 = vmatpush1.msra.mxu0 0.0
  %2574 = vmatprep.subr.mxu0 0.0
  %2575 = vmatpush1.msra.mxu0 0.0
  %2576 = vmatprep.subr.mxu0 0.0
  %2577 = vmatpush1.msra.mxu0 0.0
  %2578 = vmatprep.subr.mxu0 0.0
  %2579 = vmatpush1.msra.mxu0 0.0
  %2580 = vmatprep.subr.mxu0 0.0
  %2581 = vmatpush1.msra.mxu0 0.0
  %2582 = vmatprep.subr.mxu0 0.0
  %2583 = vmatpush1.msra.mxu0 0.0
  %2584 = vmatprep.subr.mxu0 0.0
  %2585 = vmatpush1.msra.mxu0 0.0
  %2586 = vmatprep.subr.mxu0 0.0
  %2587 = vmatpush1.msra.mxu0 0.0
  %2588 = vmatprep.subr.mxu0 0.0
  %2589 = vmatpush1.msra.mxu0 0.0
  %2590 = vmatprep.subr.mxu0 0.0
  %2591 = vmatpush1.msra.mxu0 0.0
  %2592 = vmatprep.subr.mxu0 0.0
  %2593 = vmatpush1.msra.mxu0 0.0
  %2594 = vmatprep.subr.mxu0 0.0
  %2595 = vmatpush1.msra.mxu0 0.0
  %2596 = vmatprep.subr.mxu0 0.0
  %2597 = vmatpush1.msra.mxu0 0.0
  %2598 = vmatprep.subr.mxu0 0.0
  %2599 = vmatpush1.msra.mxu0 0.0
  %2600 = vmatprep.subr.mxu0 0.0
  %2601 = vmatpush1.msra.mxu0 0.0
  %2602 = vmatprep.subr.mxu0 0.0
  %2603 = vmatpush1.msra.mxu0 0.0
  %2604 = vmatprep.subr.mxu0 0.0
  %2605 = vmatpush1.msra.mxu0 0.0
  %2606 = vmatprep.subr.mxu0 0.0
  %2607 = vmatpush1.msra.mxu0 0.0
  %2608 = vmatprep.subr.mxu0 0.0
  %2609 = vmatpush1.msra.mxu0 0.0
  %2610 = vmatprep.subr.mxu0 0.0
  %2611 = vmatpush1.msra.mxu0 0.0
  %2612 = vmatprep.subr.mxu0 0.0
  %2613 = vmatpush1.msra.mxu0 0.0
  %2614 = vmatprep.subr.mxu0 0.0
  %2615 = vmatpush1.msra.mxu0 0.0
  %2616 = vmatprep.subr.mxu0 0.0
  %2617 = vmatpush1.msra.mxu0 0.0
  %2618 = vmatprep.subr.mxu0 0.0
  %2619 = vmatpush1.msra.mxu0 0.0
  %2620 = vmatprep.subr.mxu0 0.0
  %2621 = vmatpush1.msra.mxu0 0.0
  %2622 = vmatprep.subr.mxu0 0.0
  %2623 = vmatpush1.msra.mxu0 0.0
  %2624 = vmatprep.subr.mxu0 0.0
  %2625 = vmatpush1.msra.mxu0 0.0
  %2626 = vmatprep.subr.mxu0 0.0
  %2627 = vmatpush1.msra.mxu0 0.0
  %2628 = vmatprep.subr.mxu0 0.0
  %2629 = vmatpush1.msra.mxu0 0.0
  %2630 = vmatprep.subr.mxu0 0.0
  %2631 = vmatpush1.msra.mxu0 0.0
  %2632 = vmatprep.mubr.f32.mxu0 0.0
  %2633 = vmatmul.mubr.f32.gmra.mrb[0].mxu0 %v2563
  %v2634 = vpop.f32.mrb[0].mxu0
  %v2635 = vadd.f32 0.0, %v2634
  %v2636 = vpop.f32.mrb[0].mxu0
  %2637 = vmatprep.mubr.f32.mxu0 0.0
  %2638 = vmatmul.mubr.f32.gmra.mrb[0].mxu0 %v2566
  %v2639 = vpop.f32.mrb[0].mxu0
  %v2640 = vadd.f32 0.0, %v2639
  %v2641 = vpop.f32.mrb[0].mxu0
  %2642 = vdwg.mxu0
  %2645 = vrot.lane.b32.xlu0 %v2241, 32
  %v2646 = vpop.permute.xlu0 %2645
  %2647 = vrot.lane.b32.xlu0 %v2246, 32
  %v2648 = vpop.permute.xlu0 %2647
  %2653 = vrot.lane.b32.xlu0 %v2438, 64
  %v2654 = vpop.permute.xlu0 %2653
  %2655 = vrot.lane.b32.xlu0 %v2443, 64
  %v2656 = vpop.permute.xlu0 %2655
  %2661 = vrot.lane.b32.xlu0 %v2635, 96
  %v2662 = vpop.permute.xlu0 %2661
  %2663 = vrot.lane.b32.xlu0 %v2640, 96
  %v2664 = vpop.permute.xlu0 %2663
  %v2667 = vsel %vm592, %v2043, %v2646
  %v2668 = vsel %vm592, %v2048, %v2648
  %v2669 = vsel %vm1428, %v2667, %v2654
  %v2670 = vsel %vm1428, %v2668, %v2656
  %v2671 = vsel %vm1431, %v2669, %v2662
  %v2672 = vsel %vm1431, %v2670, %v2664
  %v2673 = vld [vmem:[%s12] sm:$0xff]
  %v2674 = vld [vmem:[%s12 + $0x8] sm:$0xff]
  %v2675 = vld [vmem:[%s12 + $0x10] sm:$0xff]
  %v2676 = vld [vmem:[%s12 + $0x18] sm:$0xff]
  %v2677 = vld [vmem:[%s12 + $0x20] sm:$0xff]
  %v2678 = vld [vmem:[%s12 + $0x28] sm:$0xff]
  %v2679 = vld [vmem:[%s12 + $0x30] sm:$0xff]
  %v2680 = vld [vmem:[%s12 + $0x38] sm:$0xff]
  %v2681 = vld [vmem:[%s12 + $0x40] sm:$0xff]
  %v2682 = vld [vmem:[%s12 + $0x48] sm:$0xff]
  %v2683 = vld [vmem:[%s12 + $0x50] sm:$0xff]
  %v2684 = vld [vmem:[%s12 + $0x58] sm:$0xff]
  %v2685 = vld [vmem:[%s12 + $0x60] sm:$0xff]
  %v2686 = vld [vmem:[%s12 + $0x68] sm:$0xff]
  %v2687 = vld [vmem:[%s12 + $0x70] sm:$0xff]
  %v2688 = vld [vmem:[%s12 + $0x78] sm:$0xff]
  %v2689 = vld [vmem:[%s13] sm:$0x1]
  %v2691 = vlaneseq
  %v2692 = vshrl.u32 %v2691, 7
  %v2693 = vsub.s32 0, %v2692
  %v2694 = vrot.slane %v2689, %v2693
  %2696 = vmatprep.subr.mxu0 0.0
  %2697 = vmatpush1.msra.mxu0 %v2673
  %2698 = vmatprep.subr.mxu0 0.0
  %2699 = vmatpush1.msra.mxu0 %v2674
  %2700 = vmatprep.subr.mxu0 0.0
  %2701 = vmatpush1.msra.mxu0 %v2675
  %2702 = vmatprep.subr.mxu0 0.0
  %2703 = vmatpush1.msra.mxu0 %v2676
  %2704 = vmatprep.subr.mxu0 0.0
  %2705 = vmatpush1.msra.mxu0 %v2677
  %2706 = vmatprep.subr.mxu0 0.0
  %2707 = vmatpush1.msra.mxu0 %v2678
  %2708 = vmatprep.subr.mxu0 0.0
  %2709 = vmatpush1.msra.mxu0 %v2679
  %2710 = vmatprep.subr.mxu0 0.0
  %2711 = vmatpush1.msra.mxu0 %v2680
  %2712 = vmatprep.subr.mxu0 0.0
  %2713 = vmatpush1.msra.mxu0 %v2681
  %2714 = vmatprep.subr.mxu0 0.0
  %2715 = vmatpush1.msra.mxu0 %v2682
  %2716 = vmatprep.subr.mxu0 0.0
  %2717 = vmatpush1.msra.mxu0 %v2683
  %2718 = vmatprep.subr.mxu0 0.0
  %2719 = vmatpush1.msra.mxu0 %v2684
  %2720 = vmatprep.subr.mxu0 0.0
  %2721 = vmatpush1.msra.mxu0 %v2685
  %2722 = vmatprep.subr.mxu0 0.0
  %2723 = vmatpush1.msra.mxu0 %v2686
  %2724 = vmatprep.subr.mxu0 0.0
  %2725 = vmatpush1.msra.mxu0 %v2687
  %2726 = vmatprep.subr.mxu0 0.0
  %2727 = vmatpush1.msra.mxu0 %v2688
  %2728 = vmatprep.subr.mxu0 0.0
  %2729 = vmatpush1.msra.mxu0 0.0
  %2730 = vmatprep.subr.mxu0 0.0
  %2731 = vmatpush1.msra.mxu0 0.0
  %2732 = vmatprep.subr.mxu0 0.0
  %2733 = vmatpush1.msra.mxu0 0.0
  %2734 = vmatprep.subr.mxu0 0.0
  %2735 = vmatpush1.msra.mxu0 0.0
  %2736 = vmatprep.subr.mxu0 0.0
  %2737 = vmatpush1.msra.mxu0 0.0
  %2738 = vmatprep.subr.mxu0 0.0
  %2739 = vmatpush1.msra.mxu0 0.0
  %2740 = vmatprep.subr.mxu0 0.0
  %2741 = vmatpush1.msra.mxu0 0.0
  %2742 = vmatprep.subr.mxu0 0.0
  %2743 = vmatpush1.msra.mxu0 0.0
  %2744 = vmatprep.subr.mxu0 0.0
  %2745 = vmatpush1.msra.mxu0 0.0
  %2746 = vmatprep.subr.mxu0 0.0
  %2747 = vmatpush1.msra.mxu0 0.0
  %2748 = vmatprep.subr.mxu0 0.0
  %2749 = vmatpush1.msra.mxu0 0.0
  %2750 = vmatprep.subr.mxu0 0.0
  %2751 = vmatpush1.msra.mxu0 0.0
  %2752 = vmatprep.subr.mxu0 0.0
  %2753 = vmatpush1.msra.mxu0 0.0
  %2754 = vmatprep.subr.mxu0 0.0
  %2755 = vmatpush1.msra.mxu0 0.0
  %2756 = vmatprep.subr.mxu0 0.0
  %2757 = vmatpush1.msra.mxu0 0.0
  %2758 = vmatprep.subr.mxu0 0.0
  %2759 = vmatpush1.msra.mxu0 0.0
  %2760 = vmatprep.mubr.f32.mxu0 0.0
  %2761 = vmatmul.mubr.f32.gmra.mrb[0].mxu0 %v2671
  %v2762 = vpop.f32.mrb[0].mxu0
  %v2763 = vadd.f32 %v2694, %v2762
  %v2764 = vpop.f32.mrb[0].mxu0
  %2765 = vmatprep.mubr.f32.mxu0 0.0
  %2766 = vmatmul.mubr.f32.gmra.mrb[0].mxu0 %v2672
  %v2767 = vpop.f32.mrb[0].mxu0
  %v2768 = vadd.f32 %v2694, %v2767
  %v2769 = vpop.f32.mrb[0].mxu0
  %2770 = vdwg.mxu0
  %v2771 = vadd.f32 %v1573, %v2763
  %v2772 = vadd.f32 %v1574, %v2768
  %v2773 = vld [vmem:[%s16] sm:$0x1]
  %v2774 = vld [vmem:[%s17] sm:$0x1]
  %2775 = vadd.xlane.f32.xlu0 %v2771
  %v2776 = vpop.xlane.xlu0 %2775
  %2777 = vadd.xlane.f32.xlu0 %v2772
  %v2778 = vpop.xlane.xlu0 %2777
  %v2779 = vmul.f32 %v2776, %v1540
  %v2780 = vmul.f32 %v2778, %v1540
  %v2781 = vsub.f32 %v2771, %v2779
  %v2782 = vsub.f32 %v2772, %v2780
  %v2783 = vmul.f32 %v2781, %v2781
  %v2784 = vmul.f32 %v2782, %v2782
  %2785 = vadd.xlane.f32.xlu0 %v2783
  %v2786 = vpop.xlane.xlu0 %2785
  %2787 = vadd.xlane.f32.xlu0 %v2784
  %v2788 = vpop.xlane.xlu0 %2787
  %v2789 = vmul.f32 %v2786, %v1540
  %v2790 = vmul.f32 %v2788, %v1540
  %v2791 = vadd.f32 %v2789, 1e-05
  %v2792 = vadd.f32 %v2790, 1e-05
  %v2793 = vrsqrt.pop %v2791
  %v2794 = vrsqrt.pop %v2792
  %v2795 = vmul.f32 %v2781, %v2793
  %v2796 = vmul.f32 %v2782, %v2794
  %v2798 = vlaneseq
  %v2799 = vshrl.u32 %v2798, 7
  %v2800 = vsub.s32 0, %v2799
  %v2801 = vrot.slane %v2773, %v2800
  %v2803 = vmul.f32 %v2795, %v2801
  %v2804 = vmul.f32 %v2796, %v2801
  %v2806 = vlaneseq
  %v2807 = vshrl.u32 %v2806, 7
  %v2808 = vsub.s32 0, %v2807
  %v2809 = vrot.slane %v2774, %v2808
  %v2811 = vadd.f32 %v2803, %v2809
  %v2812 = vadd.f32 %v2804, %v2809
  %v2813 = vld [vmem:[%s20] sm:$0xff]
  %v2814 = vld [vmem:[%s20 + $0x8] sm:$0xff]
  %v2815 = vld [vmem:[%s20 + $0x10] sm:$0xff]
  %v2816 = vld [vmem:[%s20 + $0x18] sm:$0xff]
  %v2817 = vld [vmem:[%s20 + $0x20] sm:$0xff]
  %v2818 = vld [vmem:[%s20 + $0x28] sm:$0xff]
  %v2819 = vld [vmem:[%s20 + $0x30] sm:$0xff]
  %v2820 = vld [vmem:[%s20 + $0x38] sm:$0xff]
  %v2821 = vld [vmem:[%s20 + $0x40] sm:$0xff]
  %v2822 = vld [vmem:[%s20 + $0x48] sm:$0xff]
  %v2823 = vld [vmem:[%s20 + $0x50] sm:$0xff]
  %v2824 = vld [vmem:[%s20 + $0x58] sm:$0xff]
  %v2825 = vld [vmem:[%s20 + $0x60] sm:$0xff]
  %v2826 = vld [vmem:[%s20 + $0x68] sm:$0xff]
  %v2827 = vld [vmem:[%s20 + $0x70] sm:$0xff]
  %v2828 = vld [vmem:[%s20 + $0x78] sm:$0xff]
  %v2829 = vld [vmem:[%s20 + $0x80] sm:$0xff]
  %v2830 = vld [vmem:[%s20 + $0x88] sm:$0xff]
  %v2831 = vld [vmem:[%s20 + $0x90] sm:$0xff]
  %v2832 = vld [vmem:[%s20 + $0x98] sm:$0xff]
  %v2833 = vld [vmem:[%s20 + $0xa0] sm:$0xff]
  %v2834 = vld [vmem:[%s20 + $0xa8] sm:$0xff]
  %v2835 = vld [vmem:[%s20 + $0xb0] sm:$0xff]
  %v2836 = vld [vmem:[%s20 + $0xb8] sm:$0xff]
  %v2837 = vld [vmem:[%s20 + $0xc0] sm:$0xff]
  %v2838 = vld [vmem:[%s20 + $0xc8] sm:$0xff]
  %v2839 = vld [vmem:[%s20 + $0xd0] sm:$0xff]
  %v2840 = vld [vmem:[%s20 + $0xd8] sm:$0xff]
  %v2841 = vld [vmem:[%s20 + $0xe0] sm:$0xff]
  %v2842 = vld [vmem:[%s20 + $0xe8] sm:$0xff]
  %v2843 = vld [vmem:[%s20 + $0xf0] sm:$0xff]
  %v2844 = vld [vmem:[%s20 + $0xf8] sm:$0xff]
  %v2845 = vld [vmem:[%s21] sm:$0x3]
  %v2847 = vlaneseq
  %v2848 = vshrl.u32 %v2847, 7
  %v2849 = vsub.s32 0, %v2848
  %v2850 = vrot.slane %v2845, %v2849
  %v2851 = vlaneseq
  %v2852 = vshrl.u32 %v2851, 7
  %v2853 = vsub.s32 1, %v2852
  %v2854 = vrot.slane %v2845, %v2853
  %2857 = vmatprep.subr.mxu0 %v2814
  %2858 = vmatpush1.msra.mxu0 %v2813
  %2859 = vmatprep.subr.mxu0 %v2816
  %2860 = vmatpush1.msra.mxu0 %v2815
  %2861 = vmatprep.subr.mxu0 %v2818
  %2862 = vmatpush1.msra.mxu0 %v2817
  %2863 = vmatprep.subr.mxu0 %v2820
  %2864 = vmatpush1.msra.mxu0 %v2819
  %2865 = vmatprep.subr.mxu0 %v2822
  %2866 = vmatpush1.msra.mxu0 %v2821
  %2867 = vmatprep.subr.mxu0 %v2824
  %2868 = vmatpush1.msra.mxu0 %v2823
  %2869 = vmatprep.subr.mxu0 %v2826
  %2870 = vmatpush1.msra.mxu0 %v2825
  %2871 = vmatprep.subr.mxu0 %v2828
  %2872 = vmatpush1.msra.mxu0 %v2827
  %2873 = vmatprep.subr.mxu0 %v2830
  %2874 = vmatpush1.msra.mxu0 %v2829
  %2875 = vmatprep.subr.mxu0 %v2832
  %2876 = vmatpush1.msra.mxu0 %v2831
  %2877 = vmatprep.subr.mxu0 %v2834
  %2878 = vmatpush1.msra.mxu0 %v2833
  %2879 = vmatprep.subr.mxu0 %v2836
  %2880 = vmatpush1.msra.mxu0 %v2835
  %2881 = vmatprep.subr.mxu0 %v2838
  %2882 = vmatpush1.msra.mxu0 %v2837
  %2883 = vmatprep.subr.mxu0 %v2840
  %2884 = vmatpush1.msra.mxu0 %v2839
  %2885 = vmatprep.subr.mxu0 %v2842
  %2886 = vmatpush1.msra.mxu0 %v2841
  %2887 = vmatprep.subr.mxu0 %v2844
  %2888 = vmatpush1.msra.mxu0 %v2843
  %2889 = vmatprep.subr.mxu0 0.0
  %2890 = vmatpush1.msra.mxu0 0.0
  %2891 = vmatprep.subr.mxu0 0.0
  %2892 = vmatpush1.msra.mxu0 0.0
  %2893 = vmatprep.subr.mxu0 0.0
  %2894 = vmatpush1.msra.mxu0 0.0
  %2895 = vmatprep.subr.mxu0 0.0
  %2896 = vmatpush1.msra.mxu0 0.0
  %2897 = vmatprep.subr.mxu0 0.0
  %2898 = vmatpush1.msra.mxu0 0.0
  %2899 = vmatprep.subr.mxu0 0.0
  %2900 = vmatpush1.msra.mxu0 0.0
  %2901 = vmatprep.subr.mxu0 0.0
  %2902 = vmatpush1.msra.mxu0 0.0
  %2903 = vmatprep.subr.mxu0 0.0
  %2904 = vmatpush1.msra.mxu0 0.0
  %2905 = vmatprep.subr.mxu0 0.0
  %2906 = vmatpush1.msra.mxu0 0.0
  %2907 = vmatprep.subr.mxu0 0.0
  %2908 = vmatpush1.msra.mxu0 0.0
  %2909 = vmatprep.subr.mxu0 0.0
  %2910 = vmatpush1.msra.mxu0 0.0
  %2911 = vmatprep.subr.mxu0 0.0
  %2912 = vmatpush1.msra.mxu0 0.0
  %2913 = vmatprep.subr.mxu0 0.0
  %2914 = vmatpush1.msra.mxu0 0.0
  %2915 = vmatprep.subr.mxu0 0.0
  %2916 = vmatpush1.msra.mxu0 0.0
  %2917 = vmatprep.subr.mxu0 0.0
  %2918 = vmatpush1.msra.mxu0 0.0
  %2919 = vmatprep.subr.mxu0 0.0
  %2920 = vmatpush1.msra.mxu0 0.0
  %2921 = vmatprep.mubr.f32.mxu0 0.0
  %2922 = vmatmul.mubr.f32.gmra.mrb[0].mxu0 %v2811
  %v2923 = vpop.f32.mrb[0].mxu0
  %v2924 = vadd.f32 %v2850, %v2923
  %v2925 = vpop.f32.mrb[0].mxu0
  %v2926 = vadd.f32 %v2854, %v2925
  %2927 = vmatprep.mubr.f32.mxu0 0.0
  %2928 = vmatmul.mubr.f32.gmra.mrb[0].mxu0 %v2812
  %v2929 = vpop.f32.mrb[0].mxu0
  %v2930 = vadd.f32 %v2850, %v2929
  %v2931 = vpop.f32.mrb[0].mxu0
  %v2932 = vadd.f32 %v2854, %v2931
  %2933 = vdwg.mxu0
  %v2934 = vmax.f32 %v2924, 0.0
  %v2935 = vmax.f32 %v2926, 0.0
  %v2936 = vmax.f32 %v2930, 0.0
  %v2937 = vmax.f32 %v2932, 0.0
  %v2938 = vld [vmem:[%s22] sm:$0xff]
  %v2939 = vld [vmem:[%s22 + $0x8] sm:$0xff]
  %v2940 = vld [vmem:[%s22 + $0x10] sm:$0xff]
  %v2941 = vld [vmem:[%s22 + $0x18] sm:$0xff]
  %v2942 = vld [vmem:[%s22 + $0x20] sm:$0xff]
  %v2943 = vld [vmem:[%s22 + $0x28] sm:$0xff]
  %v2944 = vld [vmem:[%s22 + $0x30] sm:$0xff]
  %v2945 = vld [vmem:[%s22 + $0x38] sm:$0xff]
  %v2946 = vld [vmem:[%s22 + $0x40] sm:$0xff]
  %v2947 = vld [vmem:[%s22 + $0x48] sm:$0xff]
  %v2948 = vld [vmem:[%s22 + $0x50] sm:$0xff]
  %v2949 = vld [vmem:[%s22 + $0x58] sm:$0xff]
  %v2950 = vld [vmem:[%s22 + $0x60] sm:$0xff]
  %v2951 = vld [vmem:[%s22 + $0x68] sm:$0xff]
  %v2952 = vld [vmem:[%s22 + $0x70] sm:$0xff]
  %v2953 = vld [vmem:[%s22 + $0x78] sm:$0xff]
  %v2954 = vld [vmem:[%s22 + $0x80] sm:$0xff]
  %v2955 = vld [vmem:[%s22 + $0x88] sm:$0xff]
  %v2956 = vld [vmem:[%s22 + $0x90] sm:$0xff]
  %v2957 = vld [vmem:[%s22 + $0x98] sm:$0xff]
  %v2958 = vld [vmem:[%s22 + $0xa0] sm:$0xff]
  %v2959 = vld [vmem:[%s22 + $0xa8] sm:$0xff]
  %v2960 = vld [vmem:[%s22 + $0xb0] sm:$0xff]
  %v2961 = vld [vmem:[%s22 + $0xb8] sm:$0xff]
  %v2962 = vld [vmem:[%s22 + $0xc0] sm:$0xff]
  %v2963 = vld [vmem:[%s22 + $0xc8] sm:$0xff]
  %v2964 = vld [vmem:[%s22 + $0xd0] sm:$0xff]
  %v2965 = vld [vmem:[%s22 + $0xd8] sm:$0xff]
  %v2966 = vld [vmem:[%s22 + $0xe0] sm:$0xff]
  %v2967 = vld [vmem:[%s22 + $0xe8] sm:$0xff]
  %v2968 = vld [vmem:[%s22 + $0xf0] sm:$0xff]
  %v2969 = vld [vmem:[%s22 + $0xf8] sm:$0xff]
  %v2970 = vld [vmem:[%s23] sm:$0x1]
  %v2972 = vlaneseq
  %v2973 = vshrl.u32 %v2972, 7
  %v2974 = vsub.s32 0, %v2973
  %v2975 = vrot.slane %v2970, %v2974
  %2977 = vmatprep.subr.mxu0 0.0
  %2978 = vmatpush1.msra.mxu0 %v2938
  %2979 = vmatprep.subr.mxu0 0.0
  %2980 = vmatpush1.msra.mxu0 %v2939
  %2981 = vmatprep.subr.mxu0 0.0
  %2982 = vmatpush1.msra.mxu0 %v2940
  %2983 = vmatprep.subr.mxu0 0.0
  %2984 = vmatpush1.msra.mxu0 %v2941
  %2985 = vmatprep.subr.mxu0 0.0
  %2986 = vmatpush1.msra.mxu0 %v2942
  %2987 = vmatprep.subr.mxu0 0.0
  %2988 = vmatpush1.msra.mxu0 %v2943
  %2989 = vmatprep.subr.mxu0 0.0
  %2990 = vmatpush1.msra.mxu0 %v2944
  %2991 = vmatprep.subr.mxu0 0.0
  %2992 = vmatpush1.msra.mxu0 %v2945
  %2993 = vmatprep.subr.mxu0 0.0
  %2994 = vmatpush1.msra.mxu0 %v2946
  %2995 = vmatprep.subr.mxu0 0.0
  %2996 = vmatpush1.msra.mxu0 %v2947
  %2997 = vmatprep.subr.mxu0 0.0
  %2998 = vmatpush1.msra.mxu0 %v2948
  %2999 = vmatprep.subr.mxu0 0.0
  %3000 = vmatpush1.msra.mxu0 %v2949
  %3001 = vmatprep.subr.mxu0 0.0
  %3002 = vmatpush1.msra.mxu0 %v2950
  %3003 = vmatprep.subr.mxu0 0.0
  %3004 = vmatpush1.msra.mxu0 %v2951
  %3005 = vmatprep.subr.mxu0 0.0
  %3006 = vmatpush1.msra.mxu0 %v2952
  %3007 = vmatprep.subr.mxu0 0.0
  %3008 = vmatpush1.msra.mxu0 %v2953
  %3009 = vmatprep.subr.mxu0 0.0
  %3010 = vmatpush1.msra.mxu0 %v2954
  %3011 = vmatprep.subr.mxu0 0.0
  %3012 = vmatpush1.msra.mxu0 %v2955
  %3013 = vmatprep.subr.mxu0 0.0
  %3014 = vmatpush1.msra.mxu0 %v2956
  %3015 = vmatprep.subr.mxu0 0.0
  %3016 = vmatpush1.msra.mxu0 %v2957
  %3017 = vmatprep.subr.mxu0 0.0
  %3018 = vmatpush1.msra.mxu0 %v2958
  %3019 = vmatprep.subr.mxu0 0.0
  %3020 = vmatpush1.msra.mxu0 %v2959
  %3021 = vmatprep.subr.mxu0 0.0
  %3022 = vmatpush1.msra.mxu0 %v2960
  %3023 = vmatprep.subr.mxu0 0.0
  %3024 = vmatpush1.msra.mxu0 %v2961
  %3025 = vmatprep.subr.mxu0 0.0
  %3026 = vmatpush1.msra.mxu0 %v2962
  %3027 = vmatprep.subr.mxu0 0.0
  %3028 = vmatpush1.msra.mxu0 %v2963
  %3029 = vmatprep.subr.mxu0 0.0
  %3030 = vmatpush1.msra.mxu0 %v2964
  %3031 = vmatprep.subr.mxu0 0.0
  %3032 = vmatpush1.msra.mxu0 %v2965
  %3033 = vmatprep.subr.mxu0 0.0
  %3034 = vmatpush1.msra.mxu0 %v2966
  %3035 = vmatprep.subr.mxu0 0.0
  %3036 = vmatpush1.msra.mxu0 %v2967
  %3037 = vmatprep.subr.mxu0 0.0
  %3038 = vmatpush1.msra.mxu0 %v2968
  %3039 = vmatprep.subr.mxu0 0.0
  %3040 = vmatpush1.msra.mxu0 %v2969
  %3041 = vmatprep.mubr.f32.mxu0 %v2935
  %3042 = vmatmul.mubr.f32.gmra.mrb[0].mxu0 %v2934
  %v3043 = vpop.f32.mrb[0].mxu0
  %v3044 = vadd.f32 %v2975, %v3043
  %v3045 = vpop.f32.mrb[0].mxu0
  %3046 = vmatprep.mubr.f32.mxu0 %v2937
  %3047 = vmatmul.mubr.f32.gmra.mrb[0].mxu0 %v2936
  %v3048 = vpop.f32.mrb[0].mxu0
  %v3049 = vadd.f32 %v2975, %v3048
  %v3050 = vpop.f32.mrb[0].mxu0
  %3051 = vdwg.mxu0
  %v3052 = vadd.f32 %v2811, %v3044
  %v3053 = vadd.f32 %v2812, %v3049
  %v3054 = vld [vmem:[%s18] sm:$0x1]
  %v3055 = vld [vmem:[%s19] sm:$0x1]
  %3056 = vadd.xlane.f32.xlu0 %v3052
  %v3057 = vpop.xlane.xlu0 %3056
  %3058 = vadd.xlane.f32.xlu0 %v3053
  %v3059 = vpop.xlane.xlu0 %3058
  %v3060 = vmul.f32 %v3057, %v1540
  %v3061 = vmul.f32 %v3059, %v1540
  %v3062 = vsub.f32 %v3052, %v3060
  %v3063 = vsub.f32 %v3053, %v3061
  %v3064 = vmul.f32 %v3062, %v3062
  %v3065 = vmul.f32 %v3063, %v3063
  %3066 = vadd.xlane.f32.xlu0 %v3064
  %v3067 = vpop.xlane.xlu0 %3066
  %3068 = vadd.xlane.f32.xlu0 %v3065
  %v3069 = vpop.xlane.xlu0 %3068
  %v3070 = vmul.f32 %v3067, %v1540
  %v3071 = vmul.f32 %v3069, %v1540
  %v3072 = vadd.f32 %v3070, 1e-05
  %v3073 = vadd.f32 %v3071, 1e-05
  %v3074 = vrsqrt.pop %v3072
  %v3075 = vrsqrt.pop %v3073
  %v3076 = vmul.f32 %v3062, %v3074
  %v3077 = vmul.f32 %v3063, %v3075
  %v3079 = vlaneseq
  %v3080 = vshrl.u32 %v3079, 7
  %v3081 = vsub.s32 0, %v3080
  %v3082 = vrot.slane %v3054, %v3081
  %v3084 = vmul.f32 %v3076, %v3082
  %v3085 = vmul.f32 %v3077, %v3082
  %v3087 = vlaneseq
  %v3088 = vshrl.u32 %v3087, 7
  %v3089 = vsub.s32 0, %v3088
  %v3090 = vrot.slane %v3055, %v3089
  %v3092 = vadd.f32 %v3084, %v3090
  %v3093 = vadd.f32 %v3085, %v3090
  %s3094 = scalar_lea.vmem %s6, 384
  %v3095 = vld [vmem:[%s3094] sm:$0xff]
  %v3096 = vld [vmem:[%s3094 + $0x18] sm:$0xff]
  %v3097 = vld [vmem:[%s3094 + $0x30] sm:$0xff]
  %v3098 = vld [vmem:[%s3094 + $0x48] sm:$0xff]
  %v3099 = vld [vmem:[%s3094 + $0x60] sm:$0xff]
  %v3100 = vld [vmem:[%s3094 + $0x78] sm:$0xff]
  %v3101 = vld [vmem:[%s3094 + $0x90] sm:$0xff]
  %v3102 = vld [vmem:[%s3094 + $0xa8] sm:$0xff]
  %v3103 = vld [vmem:[%s3094 + $0xc0] sm:$0xff]
  %v3104 = vld [vmem:[%s3094 + $0xd8] sm:$0xff]
  %v3105 = vld [vmem:[%s3094 + $0xf0] sm:$0xff]
  %v3106 = vld [vmem:[%s3094 + $0x108] sm:$0xff]
  %v3107 = vld [vmem:[%s3094 + $0x120] sm:$0xff]
  %v3108 = vld [vmem:[%s3094 + $0x138] sm:$0xff]
  %v3109 = vld [vmem:[%s3094 + $0x150] sm:$0xff]
  %v3110 = vld [vmem:[%s3094 + $0x168] sm:$0xff]
  %s3111 = scalar_lea.vmem %s7, 3
  %v3112 = vld [vmem:[%s3111] sm:$0x1]
  %v3114 = vlaneseq
  %v3115 = vshrl.u32 %v3114, 7
  %v3116 = vsub.s32 0, %v3115
  %v3117 = vrot.slane %v3112, %v3116
  %3119 = vmatprep.subr.mxu0 0.0
  %3120 = vmatpush1.msra.mxu0 %v3095
  %3121 = vmatprep.subr.mxu0 0.0
  %3122 = vmatpush1.msra.mxu0 %v3096
  %3123 = vmatprep.subr.mxu0 0.0
  %3124 = vmatpush1.msra.mxu0 %v3097
  %3125 = vmatprep.subr.mxu0 0.0
  %3126 = vmatpush1.msra.mxu0 %v3098
  %3127 = vmatprep.subr.mxu0 0.0
  %3128 = vmatpush1.msra.mxu0 %v3099
  %3129 = vmatprep.subr.mxu0 0.0
  %3130 = vmatpush1.msra.mxu0 %v3100
  %3131 = vmatprep.subr.mxu0 0.0
  %3132 = vmatpush1.msra.mxu0 %v3101
  %3133 = vmatprep.subr.mxu0 0.0
  %3134 = vmatpush1.msra.mxu0 %v3102
  %3135 = vmatprep.subr.mxu0 0.0
  %3136 = vmatpush1.msra.mxu0 %v3103
  %3137 = vmatprep.subr.mxu0 0.0
  %3138 = vmatpush1.msra.mxu0 %v3104
  %3139 = vmatprep.subr.mxu0 0.0
  %3140 = vmatpush1.msra.mxu0 %v3105
  %3141 = vmatprep.subr.mxu0 0.0
  %3142 = vmatpush1.msra.mxu0 %v3106
  %3143 = vmatprep.subr.mxu0 0.0
  %3144 = vmatpush1.msra.mxu0 %v3107
  %3145 = vmatprep.subr.mxu0 0.0
  %3146 = vmatpush1.msra.mxu0 %v3108
  %3147 = vmatprep.subr.mxu0 0.0
  %3148 = vmatpush1.msra.mxu0 %v3109
  %3149 = vmatprep.subr.mxu0 0.0
  %3150 = vmatpush1.msra.mxu0 %v3110
  %3151 = vmatprep.subr.mxu0 0.0
  %3152 = vmatpush1.msra.mxu0 0.0
  %3153 = vmatprep.subr.mxu0 0.0
  %3154 = vmatpush1.msra.mxu0 0.0
  %3155 = vmatprep.subr.mxu0 0.0
  %3156 = vmatpush1.msra.mxu0 0.0
  %3157 = vmatprep.subr.mxu0 0.0
  %3158 = vmatpush1.msra.mxu0 0.0
  %3159 = vmatprep.subr.mxu0 0.0
  %3160 = vmatpush1.msra.mxu0 0.0
  %3161 = vmatprep.subr.mxu0 0.0
  %3162 = vmatpush1.msra.mxu0 0.0
  %3163 = vmatprep.subr.mxu0 0.0
  %3164 = vmatpush1.msra.mxu0 0.0
  %3165 = vmatprep.subr.mxu0 0.0
  %3166 = vmatpush1.msra.mxu0 0.0
  %3167 = vmatprep.subr.mxu0 0.0
  %3168 = vmatpush1.msra.mxu0 0.0
  %3169 = vmatprep.subr.mxu0 0.0
  %3170 = vmatpush1.msra.mxu0 0.0
  %3171 = vmatprep.subr.mxu0 0.0
  %3172 = vmatpush1.msra.mxu0 0.0
  %3173 = vmatprep.subr.mxu0 0.0
  %3174 = vmatpush1.msra.mxu0 0.0
  %3175 = vmatprep.subr.mxu0 0.0
  %3176 = vmatpush1.msra.mxu0 0.0
  %3177 = vmatprep.subr.mxu0 0.0
  %3178 = vmatpush1.msra.mxu0 0.0
  %3179 = vmatprep.subr.mxu0 0.0
  %3180 = vmatpush1.msra.mxu0 0.0
  %3181 = vmatprep.subr.mxu0 0.0
  %3182 = vmatpush1.msra.mxu0 0.0
  %3183 = vmatprep.mubr.f32.mxu0 0.0
  %3184 = vmatmul.mubr.f32.gmra.mrb[0].mxu0 %v3092
  %v3185 = vpop.f32.mrb[0].mxu0
  %v3186 = vadd.f32 %v3117, %v3185
  %v3187 = vpop.f32.mrb[0].mxu0
  %3188 = vmatprep.mubr.f32.mxu0 0.0
  %3189 = vmatmul.mubr.f32.gmra.mrb[0].mxu0 %v3093
  %v3190 = vpop.f32.mrb[0].mxu0
  %v3191 = vadd.f32 %v3117, %v3190
  %v3192 = vpop.f32.mrb[0].mxu0
  %3193 = vdwg.mxu0
  %v3194 = vld [vmem:[%s3094 + $0x8] sm:$0xff]
  %v3195 = vld [vmem:[%s3094 + $0x20] sm:$0xff]
  %v3196 = vld [vmem:[%s3094 + $0x38] sm:$0xff]
  %v3197 = vld [vmem:[%s3094 + $0x50] sm:$0xff]
  %v3198 = vld [vmem:[%s3094 + $0x68] sm:$0xff]
  %v3199 = vld [vmem:[%s3094 + $0x80] sm:$0xff]
  %v3200 = vld [vmem:[%s3094 + $0x98] sm:$0xff]
  %v3201 = vld [vmem:[%s3094 + $0xb0] sm:$0xff]
  %v3202 = vld [vmem:[%s3094 + $0xc8] sm:$0xff]
  %v3203 = vld [vmem:[%s3094 + $0xe0] sm:$0xff]
  %v3204 = vld [vmem:[%s3094 + $0xf8] sm:$0xff]
  %v3205 = vld [vmem:[%s3094 + $0x110] sm:$0xff]
  %v3206 = vld [vmem:[%s3094 + $0x128] sm:$0xff]
  %v3207 = vld [vmem:[%s3094 + $0x140] sm:$0xff]
  %v3208 = vld [vmem:[%s3094 + $0x158] sm:$0xff]
  %v3209 = vld [vmem:[%s3094 + $0x170] sm:$0xff]
  %v3210 = vld [vmem:[%s3111 + $0x1] sm:$0x1]
  %v3212 = vlaneseq
  %v3213 = vshrl.u32 %v3212, 7
  %v3214 = vsub.s32 0, %v3213
  %v3215 = vrot.slane %v3210, %v3214
  %3217 = vmatprep.subr.mxu0 0.0
  %3218 = vmatpush1.msra.mxu0 %v3194
  %3219 = vmatprep.subr.mxu0 0.0
  %3220 = vmatpush1.msra.mxu0 %v3195
  %3221 = vmatprep.subr.mxu0 0.0
  %3222 = vmatpush1.msra.mxu0 %v3196
  %3223 = vmatprep.subr.mxu0 0.0
  %3224 = vmatpush1.msra.mxu0 %v3197
  %3225 = vmatprep.subr.mxu0 0.0
  %3226 = vmatpush1.msra.mxu0 %v3198
  %3227 = vmatprep.subr.mxu0 0.0
  %3228 = vmatpush1.msra.mxu0 %v3199
  %3229 = vmatprep.subr.mxu0 0.0
  %3230 = vmatpush1.msra.mxu0 %v3200
  %3231 = vmatprep.subr.mxu0 0.0
  %3232 = vmatpush1.msra.mxu0 %v3201
  %3233 = vmatprep.subr.mxu0 0.0
  %3234 = vmatpush1.msra.mxu0 %v3202
  %3235 = vmatprep.subr.mxu0 0.0
  %3236 = vmatpush1.msra.mxu0 %v3203
  %3237 = vmatprep.subr.mxu0 0.0
  %3238 = vmatpush1.msra.mxu0 %v3204
  %3239 = vmatprep.subr.mxu0 0.0
  %3240 = vmatpush1.msra.mxu0 %v3205
  %3241 = vmatprep.subr.mxu0 0.0
  %3242 = vmatpush1.msra.mxu0 %v3206
  %3243 = vmatprep.subr.mxu0 0.0
  %3244 = vmatpush1.msra.mxu0 %v3207
  %3245 = vmatprep.subr.mxu0 0.0
  %3246 = vmatpush1.msra.mxu0 %v3208
  %3247 = vmatprep.subr.mxu0 0.0
  %3248 = vmatpush1.msra.mxu0 %v3209
  %3249 = vmatprep.subr.mxu0 0.0
  %3250 = vmatpush1.msra.mxu0 0.0
  %3251 = vmatprep.subr.mxu0 0.0
  %3252 = vmatpush1.msra.mxu0 0.0
  %3253 = vmatprep.subr.mxu0 0.0
  %3254 = vmatpush1.msra.mxu0 0.0
  %3255 = vmatprep.subr.mxu0 0.0
  %3256 = vmatpush1.msra.mxu0 0.0
  %3257 = vmatprep.subr.mxu0 0.0
  %3258 = vmatpush1.msra.mxu0 0.0
  %3259 = vmatprep.subr.mxu0 0.0
  %3260 = vmatpush1.msra.mxu0 0.0
  %3261 = vmatprep.subr.mxu0 0.0
  %3262 = vmatpush1.msra.mxu0 0.0
  %3263 = vmatprep.subr.mxu0 0.0
  %3264 = vmatpush1.msra.mxu0 0.0
  %3265 = vmatprep.subr.mxu0 0.0
  %3266 = vmatpush1.msra.mxu0 0.0
  %3267 = vmatprep.subr.mxu0 0.0
  %3268 = vmatpush1.msra.mxu0 0.0
  %3269 = vmatprep.subr.mxu0 0.0
  %3270 = vmatpush1.msra.mxu0 0.0
  %3271 = vmatprep.subr.mxu0 0.0
  %3272 = vmatpush1.msra.mxu0 0.0
  %3273 = vmatprep.subr.mxu0 0.0
  %3274 = vmatpush1.msra.mxu0 0.0
  %3275 = vmatprep.subr.mxu0 0.0
  %3276 = vmatpush1.msra.mxu0 0.0
  %3277 = vmatprep.subr.mxu0 0.0
  %3278 = vmatpush1.msra.mxu0 0.0
  %3279 = vmatprep.subr.mxu0 0.0
  %3280 = vmatpush1.msra.mxu0 0.0
  %3281 = vmatprep.mubr.f32.mxu0 0.0
  %3282 = vmatmul.mubr.f32.gmra.mrb[0].mxu0 %v3092
  %v3283 = vpop.f32.mrb[0].mxu0
  %v3284 = vadd.f32 %v3215, %v3283
  %v3285 = vpop.f32.mrb[0].mxu0
  %3286 = vmatprep.mubr.f32.mxu0 0.0
  %3287 = vmatmul.mubr.f32.gmra.mrb[0].mxu0 %v3093
  %v3288 = vpop.f32.mrb[0].mxu0
  %v3289 = vadd.f32 %v3215, %v3288
  %v3290 = vpop.f32.mrb[0].mxu0
  %3291 = vdwg.mxu0
  %v3292 = vld [vmem:[%s3094 + $0x10] sm:$0xff]
  %v3293 = vld [vmem:[%s3094 + $0x28] sm:$0xff]
  %v3294 = vld [vmem:[%s3094 + $0x40] sm:$0xff]
  %v3295 = vld [vmem:[%s3094 + $0x58] sm:$0xff]
  %v3296 = vld [vmem:[%s3094 + $0x70] sm:$0xff]
  %v3297 = vld [vmem:[%s3094 + $0x88] sm:$0xff]
  %v3298 = vld [vmem:[%s3094 + $0xa0] sm:$0xff]
  %v3299 = vld [vmem:[%s3094 + $0xb8] sm:$0xff]
  %v3300 = vld [vmem:[%s3094 + $0xd0] sm:$0xff]
  %v3301 = vld [vmem:[%s3094 + $0xe8] sm:$0xff]
  %v3302 = vld [vmem:[%s3094 + $0x100] sm:$0xff]
  %v3303 = vld [vmem:[%s3094 + $0x118] sm:$0xff]
  %v3304 = vld [vmem:[%s3094 + $0x130] sm:$0xff]
  %v3305 = vld [vmem:[%s3094 + $0x148] sm:$0xff]
  %v3306 = vld [vmem:[%s3094 + $0x160] sm:$0xff]
  %v3307 = vld [vmem:[%s3094 + $0x178] sm:$0xff]
  %v3308 = vld [vmem:[%s3111 + $0x2] sm:$0x1]
  %v3310 = vlaneseq
  %v3311 = vshrl.u32 %v3310, 7
  %v3312 = vsub.s32 0, %v3311
  %v3313 = vrot.slane %v3308, %v3312
  %3315 = vmatprep.subr.mxu0 0.0
  %3316 = vmatpush1.msra.mxu0 %v3292
  %3317 = vmatprep.subr.mxu0 0.0
  %3318 = vmatpush1.msra.mxu0 %v3293
  %3319 = vmatprep.subr.mxu0 0.0
  %3320 = vmatpush1.msra.mxu0 %v3294
  %3321 = vmatprep.subr.mxu0 0.0
  %3322 = vmatpush1.msra.mxu0 %v3295
  %3323 = vmatprep.subr.mxu0 0.0
  %3324 = vmatpush1.msra.mxu0 %v3296
  %3325 = vmatprep.subr.mxu0 0.0
  %3326 = vmatpush1.msra.mxu0 %v3297
  %3327 = vmatprep.subr.mxu0 0.0
  %3328 = vmatpush1.msra.mxu0 %v3298
  %3329 = vmatprep.subr.mxu0 0.0
  %3330 = vmatpush1.msra.mxu0 %v3299
  %3331 = vmatprep.subr.mxu0 0.0
  %3332 = vmatpush1.msra.mxu0 %v3300
  %3333 = vmatprep.subr.mxu0 0.0
  %3334 = vmatpush1.msra.mxu0 %v3301
  %3335 = vmatprep.subr.mxu0 0.0
  %3336 = vmatpush1.msra.mxu0 %v3302
  %3337 = vmatprep.subr.mxu0 0.0
  %3338 = vmatpush1.msra.mxu0 %v3303
  %3339 = vmatprep.subr.mxu0 0.0
  %3340 = vmatpush1.msra.mxu0 %v3304
  %3341 = vmatprep.subr.mxu0 0.0
  %3342 = vmatpush1.msra.mxu0 %v3305
  %3343 = vmatprep.subr.mxu0 0.0
  %3344 = vmatpush1.msra.mxu0 %v3306
  %3345 = vmatprep.subr.mxu0 0.0
  %3346 = vmatpush1.msra.mxu0 %v3307
  %3347 = vmatprep.subr.mxu0 0.0
  %3348 = vmatpush1.msra.mxu0 0.0
  %3349 = vmatprep.subr.mxu0 0.0
  %3350 = vmatpush1.msra.mxu0 0.0
  %3351 = vmatprep.subr.mxu0 0.0
  %3352 = vmatpush1.msra.mxu0 0.0
  %3353 = vmatprep.subr.mxu0 0.0
  %3354 = vmatpush1.msra.mxu0 0.0
  %3355 = vmatprep.subr.mxu0 0.0
  %3356 = vmatpush1.msra.mxu0 0.0
  %3357 = vmatprep.subr.mxu0 0.0
  %3358 = vmatpush1.msra.mxu0 0.0
  %3359 = vmatprep.subr.mxu0 0.0
  %3360 = vmatpush1.msra.mxu0 0.0
  %3361 = vmatprep.subr.mxu0 0.0
  %3362 = vmatpush1.msra.mxu0 0.0
  %3363 = vmatprep.subr.mxu0 0.0
  %3364 = vmatpush1.msra.mxu0 0.0
  %3365 = vmatprep.subr.mxu0 0.0
  %3366 = vmatpush1.msra.mxu0 0.0
  %3367 = vmatprep.subr.mxu0 0.0
  %3368 = vmatpush1.msra.mxu0 0.0
  %3369 = vmatprep.subr.mxu0 0.0
  %3370 = vmatpush1.msra.mxu0 0.0
  %3371 = vmatprep.subr.mxu0 0.0
  %3372 = vmatpush1.msra.mxu0 0.0
  %3373 = vmatprep.subr.mxu0 0.0
  %3374 = vmatpush1.msra.mxu0 0.0
  %3375 = vmatprep.subr.mxu0 0.0
  %3376 = vmatpush1.msra.mxu0 0.0
  %3377 = vmatprep.subr.mxu0 0.0
  %3378 = vmatpush1.msra.mxu0 0.0
  %3379 = vmatprep.mubr.f32.mxu0 0.0
  %3380 = vmatmul.mubr.f32.gmra.mrb[0].mxu0 %v3092
  %v3381 = vpop.f32.mrb[0].mxu0
  %v3382 = vadd.f32 %v3313, %v3381
  %v3383 = vpop.f32.mrb[0].mxu0
  %3384 = vmatprep.mubr.f32.mxu0 0.0
  %3385 = vmatmul.mubr.f32.gmra.mrb[0].mxu0 %v3093
  %v3386 = vpop.f32.mrb[0].mxu0
  %v3387 = vadd.f32 %v3313, %v3386
  %v3388 = vpop.f32.mrb[0].mxu0
  %3389 = vdwg.mxu0
  %v3391 = vsel %vm592, %v3186, 0
  %v3394 = vsel %vm592, %v3191, 0
  %v3397 = vsel %vm592, %v3284, 0
  %v3400 = vsel %vm592, %v3289, 0
  %3402 = vmatprep.subr.mxu0 0.0
  %3403 = vmatpush1.xpose.msra.mxu0 %v3397
  %3404 = vmatprep.subr.mxu0 0.0
  %3405 = vmatpush1.xpose.msra.mxu0 %v3400
  %3406 = vmatprep.subr.mxu0 0.0
  %3407 = vmatpush1.xpose.msra.mxu0 0.0
  %3408 = vmatprep.subr.mxu0 0.0
  %3409 = vmatpush1.xpose.msra.mxu0 0.0
  %3410 = vmatprep.subr.mxu0 0.0
  %3411 = vmatpush1.xpose.msra.mxu0 0.0
  %3412 = vmatprep.subr.mxu0 0.0
  %3413 = vmatpush1.xpose.msra.mxu0 0.0
  %3414 = vmatprep.subr.mxu0 0.0
  %3415 = vmatpush1.xpose.msra.mxu0 0.0
  %3416 = vmatprep.subr.mxu0 0.0
  %3417 = vmatpush1.xpose.msra.mxu0 0.0
  %3418 = vmatprep.subr.mxu0 0.0
  %3419 = vmatpush1.xpose.msra.mxu0 0.0
  %3420 = vmatprep.subr.mxu0 0.0
  %3421 = vmatpush1.xpose.msra.mxu0 0.0
  %3422 = vmatprep.subr.mxu0 0.0
  %3423 = vmatpush1.xpose.msra.mxu0 0.0
  %3424 = vmatprep.subr.mxu0 0.0
  %3425 = vmatpush1.xpose.msra.mxu0 0.0
  %3426 = vmatprep.subr.mxu0 0.0
  %3427 = vmatpush1.xpose.msra.mxu0 0.0
  %3428 = vmatprep.subr.mxu0 0.0
  %3429 = vmatpush1.xpose.msra.mxu0 0.0
  %3430 = vmatprep.subr.mxu0 0.0
  %3431 = vmatpush1.xpose.msra.mxu0 0.0
  %3432 = vmatprep.subr.mxu0 0.0
  %3433 = vmatpush1.xpose.msra.mxu0 0.0
  %3434 = vmatprep.subr.mxu0 0.0
  %3435 = vmatpush1.xpose.msra.mxu0 0.0
  %3436 = vmatprep.subr.mxu0 0.0
  %3437 = vmatpush1.xpose.msra.mxu0 0.0
  %3438 = vmatprep.subr.mxu0 0.0
  %3439 = vmatpush1.xpose.msra.mxu0 0.0
  %3440 = vmatprep.subr.mxu0 0.0
  %3441 = vmatpush1.xpose.msra.mxu0 0.0
  %3442 = vmatprep.subr.mxu0 0.0
  %3443 = vmatpush1.xpose.msra.mxu0 0.0
  %3444 = vmatprep.subr.mxu0 0.0
  %3445 = vmatpush1.xpose.msra.mxu0 0.0
  %3446 = vmatprep.subr.mxu0 0.0
  %3447 = vmatpush1.xpose.msra.mxu0 0.0
  %3448 = vmatprep.subr.mxu0 0.0
  %3449 = vmatpush1.xpose.msra.mxu0 0.0
  %3450 = vmatprep.subr.mxu0 0.0
  %3451 = vmatpush1.xpose.msra.mxu0 0.0
  %3452 = vmatprep.subr.mxu0 0.0
  %3453 = vmatpush1.xpose.msra.mxu0 0.0
  %3454 = vmatprep.subr.mxu0 0.0
  %3455 = vmatpush1.xpose.msra.mxu0 0.0
  %3456 = vmatprep.subr.mxu0 0.0
  %3457 = vmatpush1.xpose.msra.mxu0 0.0
  %3458 = vmatprep.subr.mxu0 0.0
  %3459 = vmatpush1.xpose.msra.mxu0 0.0
  %3460 = vmatprep.subr.mxu0 0.0
  %3461 = vmatpush1.xpose.msra.mxu0 0.0
  %3462 = vmatprep.subr.mxu0 0.0
  %3463 = vmatpush1.xpose.msra.mxu0 0.0
  %3464 = vmatprep.subr.mxu0 0.0
  %3465 = vmatpush1.xpose.msra.mxu0 0.0
  %3466 = vmatprep.mubr.f32.mxu0 0.0
  %3467 = vmatmul.mubr.f32.gmra.mrb[0].mxu0 %v3391
  %v3468 = vpop.f32.mrb[0].mxu0
  %v3469 = vadd.f32 0.0, %v3468
  %v3470 = vpop.f32.mrb[0].mxu0
  %3471 = vmatprep.mubr.f32.mxu0 0.0
  %3472 = vmatmul.mubr.f32.gmra.mrb[0].mxu0 %v3394
  %v3473 = vpop.f32.mrb[0].mxu0
  %v3474 = vadd.f32 0.0, %v3473
  %v3475 = vpop.f32.mrb[0].mxu0
  %3476 = vdwg.mxu0
  %v3477 = vmul.f32 %v3469, 0.17677669
  %v3478 = vmul.f32 %v3474, 0.17677669
  %v3479 = vadd.f32 %v3477, %v294
  %v3480 = vadd.f32 %v3478, %v295
  %v3481 = vsel %vm684, %v3479, -inf
  %3482 = vmax.xlane.f32.xlu0 %v3481
  %v3483 = vpop.xlane.xlu0 %3482
  %v3484 = vsel %vm684, %v3480, -inf
  %3485 = vmax.xlane.f32.xlu0 %v3484
  %v3486 = vpop.xlane.xlu0 %3485
  %v3487 = vsub.f32 %v3479, %v3483
  %v3488 = vsub.f32 %v3480, %v3486
  %v3489 = vmul.f32 %v3487, 1.442695
  %v3490 = vpow.pop %v3489
  %v3491 = vmul.f32 %v3488, 1.442695
  %v3492 = vpow.pop %v3491
  %v3493 = vsel %vm684, %v3490, 0.0
  %3494 = vadd.xlane.f32.xlu0 %v3493
  %v3495 = vpop.xlane.xlu0 %3494
  %v3496 = vsel %vm684, %v3492, 0.0
  %3497 = vadd.xlane.f32.xlu0 %v3496
  %v3498 = vpop.xlane.xlu0 %3497
  %v3499 = vrcp.pop %v3495
  %v3500 = vmul.f32 %v3490, %v3499
  %v3501 = vrcp.pop %v3498
  %v3502 = vmul.f32 %v3492, %v3501
  %v3504 = vsel %vm684, %v3500, 0
  %v3507 = vsel %vm684, %v3502, 0
  %3509 = vmatprep.subr.mxu0 0.0
  %3510 = vmatpush1.msra.mxu0 %v3382
  %3511 = vmatprep.subr.mxu0 0.0
  %3512 = vmatpush1.msra.mxu0 %v3387
  %3513 = vmatprep.subr.mxu0 0.0
  %3514 = vmatpush1.msra.mxu0 0.0
  %3515 = vmatprep.subr.mxu0 0.0
  %3516 = vmatpush1.msra.mxu0 0.0
  %3517 = vmatprep.subr.mxu0 0.0
  %3518 = vmatpush1.msra.mxu0 0.0
  %3519 = vmatprep.subr.mxu0 0.0
  %3520 = vmatpush1.msra.mxu0 0.0
  %3521 = vmatprep.subr.mxu0 0.0
  %3522 = vmatpush1.msra.mxu0 0.0
  %3523 = vmatprep.subr.mxu0 0.0
  %3524 = vmatpush1.msra.mxu0 0.0
  %3525 = vmatprep.subr.mxu0 0.0
  %3526 = vmatpush1.msra.mxu0 0.0
  %3527 = vmatprep.subr.mxu0 0.0
  %3528 = vmatpush1.msra.mxu0 0.0
  %3529 = vmatprep.subr.mxu0 0.0
  %3530 = vmatpush1.msra.mxu0 0.0
  %3531 = vmatprep.subr.mxu0 0.0
  %3532 = vmatpush1.msra.mxu0 0.0
  %3533 = vmatprep.subr.mxu0 0.0
  %3534 = vmatpush1.msra.mxu0 0.0
  %3535 = vmatprep.subr.mxu0 0.0
  %3536 = vmatpush1.msra.mxu0 0.0
  %3537 = vmatprep.subr.mxu0 0.0
  %3538 = vmatpush1.msra.mxu0 0.0
  %3539 = vmatprep.subr.mxu0 0.0
  %3540 = vmatpush1.msra.mxu0 0.0
  %3541 = vmatprep.subr.mxu0 0.0
  %3542 = vmatpush1.msra.mxu0 0.0
  %3543 = vmatprep.subr.mxu0 0.0
  %3544 = vmatpush1.msra.mxu0 0.0
  %3545 = vmatprep.subr.mxu0 0.0
  %3546 = vmatpush1.msra.mxu0 0.0
  %3547 = vmatprep.subr.mxu0 0.0
  %3548 = vmatpush1.msra.mxu0 0.0
  %3549 = vmatprep.subr.mxu0 0.0
  %3550 = vmatpush1.msra.mxu0 0.0
  %3551 = vmatprep.subr.mxu0 0.0
  %3552 = vmatpush1.msra.mxu0 0.0
  %3553 = vmatprep.subr.mxu0 0.0
  %3554 = vmatpush1.msra.mxu0 0.0
  %3555 = vmatprep.subr.mxu0 0.0
  %3556 = vmatpush1.msra.mxu0 0.0
  %3557 = vmatprep.subr.mxu0 0.0
  %3558 = vmatpush1.msra.mxu0 0.0
  %3559 = vmatprep.subr.mxu0 0.0
  %3560 = vmatpush1.msra.mxu0 0.0
  %3561 = vmatprep.subr.mxu0 0.0
  %3562 = vmatpush1.msra.mxu0 0.0
  %3563 = vmatprep.subr.mxu0 0.0
  %3564 = vmatpush1.msra.mxu0 0.0
  %3565 = vmatprep.subr.mxu0 0.0
  %3566 = vmatpush1.msra.mxu0 0.0
  %3567 = vmatprep.subr.mxu0 0.0
  %3568 = vmatpush1.msra.mxu0 0.0
  %3569 = vmatprep.subr.mxu0 0.0
  %3570 = vmatpush1.msra.mxu0 0.0
  %3571 = vmatprep.subr.mxu0 0.0
  %3572 = vmatpush1.msra.mxu0 0.0
  %3573 = vmatprep.mubr.f32.mxu0 0.0
  %3574 = vmatmul.mubr.f32.gmra.mrb[0].mxu0 %v3504
  %v3575 = vpop.f32.mrb[0].mxu0
  %v3576 = vadd.f32 0.0, %v3575
  %v3577 = vpop.f32.mrb[0].mxu0
  %3578 = vmatprep.mubr.f32.mxu0 0.0
  %3579 = vmatmul.mubr.f32.gmra.mrb[0].mxu0 %v3507
  %v3580 = vpop.f32.mrb[0].mxu0
  %v3581 = vadd.f32 0.0, %v3580
  %v3582 = vpop.f32.mrb[0].mxu0
  %3583 = vdwg.mxu0
  %3584 = vrot.lane.b32.xlu0 %v3186, 96
  %v3585 = vpop.permute.xlu0 %3584
  %3586 = vrot.lane.b32.xlu0 %v3191, 96
  %v3587 = vpop.permute.xlu0 %3586
  %3588 = vrot.lane.b32.xlu0 %v3284, 96
  %v3589 = vpop.permute.xlu0 %3588
  %3590 = vrot.lane.b32.xlu0 %v3289, 96
  %v3591 = vpop.permute.xlu0 %3590
  %v3592 = vsel %vm592, %v3585, 0
  %v3594 = vsel %vm592, %v3587, 0
  %v3596 = vsel %vm592, %v3589, 0
  %v3598 = vsel %vm592, %v3591, 0
  %3600 = vmatprep.subr.mxu0 0.0
  %3601 = vmatpush1.xpose.msra.mxu0 %v3596
  %3602 = vmatprep.subr.mxu0 0.0
  %3603 = vmatpush1.xpose.msra.mxu0 %v3598
  %3604 = vmatprep.subr.mxu0 0.0
  %3605 = vmatpush1.xpose.msra.mxu0 0.0
  %3606 = vmatprep.subr.mxu0 0.0
  %3607 = vmatpush1.xpose.msra.mxu0 0.0
  %3608 = vmatprep.subr.mxu0 0.0
  %3609 = vmatpush1.xpose.msra.mxu0 0.0
  %3610 = vmatprep.subr.mxu0 0.0
  %3611 = vmatpush1.xpose.msra.mxu0 0.0
  %3612 = vmatprep.subr.mxu0 0.0
  %3613 = vmatpush1.xpose.msra.mxu0 0.0
  %3614 = vmatprep.subr.mxu0 0.0
  %3615 = vmatpush1.xpose.msra.mxu0 0.0
  %3616 = vmatprep.subr.mxu0 0.0
  %3617 = vmatpush1.xpose.msra.mxu0 0.0
  %3618 = vmatprep.subr.mxu0 0.0
  %3619 = vmatpush1.xpose.msra.mxu0 0.0
  %3620 = vmatprep.subr.mxu0 0.0
  %3621 = vmatpush1.xpose.msra.mxu0 0.0
  %3622 = vmatprep.subr.mxu0 0.0
  %3623 = vmatpush1.xpose.msra.mxu0 0.0
  %3624 = vmatprep.subr.mxu0 0.0
  %3625 = vmatpush1.xpose.msra.mxu0 0.0
  %3626 = vmatprep.subr.mxu0 0.0
  %3627 = vmatpush1.xpose.msra.mxu0 0.0
  %3628 = vmatprep.subr.mxu0 0.0
  %3629 = vmatpush1.xpose.msra.mxu0 0.0
  %3630 = vmatprep.subr.mxu0 0.0
  %3631 = vmatpush1.xpose.msra.mxu0 0.0
  %3632 = vmatprep.subr.mxu0 0.0
  %3633 = vmatpush1.xpose.msra.mxu0 0.0
  %3634 = vmatprep.subr.mxu0 0.0
  %3635 = vmatpush1.xpose.msra.mxu0 0.0
  %3636 = vmatprep.subr.mxu0 0.0
  %3637 = vmatpush1.xpose.msra.mxu0 0.0
  %3638 = vmatprep.subr.mxu0 0.0
  %3639 = vmatpush1.xpose.msra.mxu0 0.0
  %3640 = vmatprep.subr.mxu0 0.0
  %3641 = vmatpush1.xpose.msra.mxu0 0.0
  %3642 = vmatprep.subr.mxu0 0.0
  %3643 = vmatpush1.xpose.msra.mxu0 0.0
  %3644 = vmatprep.subr.mxu0 0.0
  %3645 = vmatpush1.xpose.msra.mxu0 0.0
  %3646 = vmatprep.subr.mxu0 0.0
  %3647 = vmatpush1.xpose.msra.mxu0 0.0
  %3648 = vmatprep.subr.mxu0 0.0
  %3649 = vmatpush1.xpose.msra.mxu0 0.0
  %3650 = vmatprep.subr.mxu0 0.0
  %3651 = vmatpush1.xpose.msra.mxu0 0.0
  %3652 = vmatprep.subr.mxu0 0.0
  %3653 = vmatpush1.xpose.msra.mxu0 0.0
  %3654 = vmatprep.subr.mxu0 0.0
  %3655 = vmatpush1.xpose.msra.mxu0 0.0
  %3656 = vmatprep.subr.mxu0 0.0
  %3657 = vmatpush1.xpose.msra.mxu0 0.0
  %3658 = vmatprep.subr.mxu0 0.0
  %3659 = vmatpush1.xpose.msra.mxu0 0.0
  %3660 = vmatprep.subr.mxu0 0.0
  %3661 = vmatpush1.xpose.msra.mxu0 0.0
  %3662 = vmatprep.subr.mxu0 0.0
  %3663 = vmatpush1.xpose.msra.mxu0 0.0
  %3664 = vmatprep.mubr.f32.mxu0 0.0
  %3665 = vmatmul.mubr.f32.gmra.mrb[0].mxu0 %v3592
  %v3666 = vpop.f32.mrb[0].mxu0
  %v3667 = vadd.f32 0.0, %v3666
  %v3668 = vpop.f32.mrb[0].mxu0
  %3669 = vmatprep.mubr.f32.mxu0 0.0
  %3670 = vmatmul.mubr.f32.gmra.mrb[0].mxu0 %v3594
  %v3671 = vpop.f32.mrb[0].mxu0
  %v3672 = vadd.f32 0.0, %v3671
  %v3673 = vpop.f32.mrb[0].mxu0
  %3674 = vdwg.mxu0
  %v3675 = vmul.f32 %v3667, 0.17677669
  %v3676 = vmul.f32 %v3672, 0.17677669
  %v3677 = vadd.f32 %v3675, %v294
  %v3678 = vadd.f32 %v3676, %v295
  %v3679 = vsel %vm684, %v3677, -inf
  %3680 = vmax.xlane.f32.xlu0 %v3679
  %v3681 = vpop.xlane.xlu0 %3680
  %v3682 = vsel %vm684, %v3678, -inf
  %3683 = vmax.xlane.f32.xlu0 %v3682
  %v3684 = vpop.xlane.xlu0 %3683
  %v3685 = vsub.f32 %v3677, %v3681
  %v3686 = vsub.f32 %v3678, %v3684
  %v3687 = vmul.f32 %v3685, 1.442695
  %v3688 = vpow.pop %v3687
  %v3689 = vmul.f32 %v3686, 1.442695
  %v3690 = vpow.pop %v3689
  %v3691 = vsel %vm684, %v3688, 0.0
  %3692 = vadd.xlane.f32.xlu0 %v3691
  %v3693 = vpop.xlane.xlu0 %3692
  %v3694 = vsel %vm684, %v3690, 0.0
  %3695 = vadd.xlane.f32.xlu0 %v3694
  %v3696 = vpop.xlane.xlu0 %3695
  %v3697 = vrcp.pop %v3693
  %v3698 = vmul.f32 %v3688, %v3697
  %v3699 = vrcp.pop %v3696
  %v3700 = vmul.f32 %v3690, %v3699
  %3703 = vrot.lane.b32.xlu0 %v3382, 96
  %v3704 = vpop.permute.xlu0 %3703
  %3705 = vrot.lane.b32.xlu0 %v3387, 96
  %v3706 = vpop.permute.xlu0 %3705
  %v3710 = vsel %vm684, %v3698, 0
  %v3713 = vsel %vm684, %v3700, 0
  %3715 = vmatprep.subr.mxu0 0.0
  %3716 = vmatpush1.msra.mxu0 %v3704
  %3717 = vmatprep.subr.mxu0 0.0
  %3718 = vmatpush1.msra.mxu0 %v3706
  %3719 = vmatprep.subr.mxu0 0.0
  %3720 = vmatpush1.msra.mxu0 0.0
  %3721 = vmatprep.subr.mxu0 0.0
  %3722 = vmatpush1.msra.mxu0 0.0
  %3723 = vmatprep.subr.mxu0 0.0
  %3724 = vmatpush1.msra.mxu0 0.0
  %3725 = vmatprep.subr.mxu0 0.0
  %3726 = vmatpush1.msra.mxu0 0.0
  %3727 = vmatprep.subr.mxu0 0.0
  %3728 = vmatpush1.msra.mxu0 0.0
  %3729 = vmatprep.subr.mxu0 0.0
  %3730 = vmatpush1.msra.mxu0 0.0
  %3731 = vmatprep.subr.mxu0 0.0
  %3732 = vmatpush1.msra.mxu0 0.0
  %3733 = vmatprep.subr.mxu0 0.0
  %3734 = vmatpush1.msra.mxu0 0.0
  %3735 = vmatprep.subr.mxu0 0.0
  %3736 = vmatpush1.msra.mxu0 0.0
  %3737 = vmatprep.subr.mxu0 0.0
  %3738 = vmatpush1.msra.mxu0 0.0
  %3739 = vmatprep.subr.mxu0 0.0
  %3740 = vmatpush1.msra.mxu0 0.0
  %3741 = vmatprep.subr.mxu0 0.0
  %3742 = vmatpush1.msra.mxu0 0.0
  %3743 = vmatprep.subr.mxu0 0.0
  %3744 = vmatpush1.msra.mxu0 0.0
  %3745 = vmatprep.subr.mxu0 0.0
  %3746 = vmatpush1.msra.mxu0 0.0
  %3747 = vmatprep.subr.mxu0 0.0
  %3748 = vmatpush1.msra.mxu0 0.0
  %3749 = vmatprep.subr.mxu0 0.0
  %3750 = vmatpush1.msra.mxu0 0.0
  %3751 = vmatprep.subr.mxu0 0.0
  %3752 = vmatpush1.msra.mxu0 0.0
  %3753 = vmatprep.subr.mxu0 0.0
  %3754 = vmatpush1.msra.mxu0 0.0
  %3755 = vmatprep.subr.mxu0 0.0
  %3756 = vmatpush1.msra.mxu0 0.0
  %3757 = vmatprep.subr.mxu0 0.0
  %3758 = vmatpush1.msra.mxu0 0.0
  %3759 = vmatprep.subr.mxu0 0.0
  %3760 = vmatpush1.msra.mxu0 0.0
  %3761 = vmatprep.subr.mxu0 0.0
  %3762 = vmatpush1.msra.mxu0 0.0
  %3763 = vmatprep.subr.mxu0 0.0
  %3764 = vmatpush1.msra.mxu0 0.0
  %3765 = vmatprep.subr.mxu0 0.0
  %3766 = vmatpush1.msra.mxu0 0.0
  %3767 = vmatprep.subr.mxu0 0.0
  %3768 = vmatpush1.msra.mxu0 0.0
  %3769 = vmatprep.subr.mxu0 0.0
  %3770 = vmatpush1.msra.mxu0 0.0
  %3771 = vmatprep.subr.mxu0 0.0
  %3772 = vmatpush1.msra.mxu0 0.0
  %3773 = vmatprep.subr.mxu0 0.0
  %3774 = vmatpush1.msra.mxu0 0.0
  %3775 = vmatprep.subr.mxu0 0.0
  %3776 = vmatpush1.msra.mxu0 0.0
  %3777 = vmatprep.subr.mxu0 0.0
  %3778 = vmatpush1.msra.mxu0 0.0
  %3779 = vmatprep.mubr.f32.mxu0 0.0
  %3780 = vmatmul.mubr.f32.gmra.mrb[0].mxu0 %v3710
  %v3781 = vpop.f32.mrb[0].mxu0
  %v3782 = vadd.f32 0.0, %v3781
  %v3783 = vpop.f32.mrb[0].mxu0
  %3784 = vmatprep.mubr.f32.mxu0 0.0
  %3785 = vmatmul.mubr.f32.gmra.mrb[0].mxu0 %v3713
  %v3786 = vpop.f32.mrb[0].mxu0
  %v3787 = vadd.f32 0.0, %v3786
  %v3788 = vpop.f32.mrb[0].mxu0
  %3789 = vdwg.mxu0
  %3790 = vrot.lane.b32.xlu0 %v3186, 64
  %v3791 = vpop.permute.xlu0 %3790
  %3792 = vrot.lane.b32.xlu0 %v3191, 64
  %v3793 = vpop.permute.xlu0 %3792
  %3794 = vrot.lane.b32.xlu0 %v3284, 64
  %v3795 = vpop.permute.xlu0 %3794
  %3796 = vrot.lane.b32.xlu0 %v3289, 64
  %v3797 = vpop.permute.xlu0 %3796
  %v3798 = vsel %vm592, %v3791, 0
  %v3800 = vsel %vm592, %v3793, 0
  %v3802 = vsel %vm592, %v3795, 0
  %v3804 = vsel %vm592, %v3797, 0
  %3806 = vmatprep.subr.mxu0 0.0
  %3807 = vmatpush1.xpose.msra.mxu0 %v3802
  %3808 = vmatprep.subr.mxu0 0.0
  %3809 = vmatpush1.xpose.msra.mxu0 %v3804
  %3810 = vmatprep.subr.mxu0 0.0
  %3811 = vmatpush1.xpose.msra.mxu0 0.0
  %3812 = vmatprep.subr.mxu0 0.0
  %3813 = vmatpush1.xpose.msra.mxu0 0.0
  %3814 = vmatprep.subr.mxu0 0.0
  %3815 = vmatpush1.xpose.msra.mxu0 0.0
  %3816 = vmatprep.subr.mxu0 0.0
  %3817 = vmatpush1.xpose.msra.mxu0 0.0
  %3818 = vmatprep.subr.mxu0 0.0
  %3819 = vmatpush1.xpose.msra.mxu0 0.0
  %3820 = vmatprep.subr.mxu0 0.0
  %3821 = vmatpush1.xpose.msra.mxu0 0.0
  %3822 = vmatprep.subr.mxu0 0.0
  %3823 = vmatpush1.xpose.msra.mxu0 0.0
  %3824 = vmatprep.subr.mxu0 0.0
  %3825 = vmatpush1.xpose.msra.mxu0 0.0
  %3826 = vmatprep.subr.mxu0 0.0
  %3827 = vmatpush1.xpose.msra.mxu0 0.0
  %3828 = vmatprep.subr.mxu0 0.0
  %3829 = vmatpush1.xpose.msra.mxu0 0.0
  %3830 = vmatprep.subr.mxu0 0.0
  %3831 = vmatpush1.xpose.msra.mxu0 0.0
  %3832 = vmatprep.subr.mxu0 0.0
  %3833 = vmatpush1.xpose.msra.mxu0 0.0
  %3834 = vmatprep.subr.mxu0 0.0
  %3835 = vmatpush1.xpose.msra.mxu0 0.0
  %3836 = vmatprep.subr.mxu0 0.0
  %3837 = vmatpush1.xpose.msra.mxu0 0.0
  %3838 = vmatprep.subr.mxu0 0.0
  %3839 = vmatpush1.xpose.msra.mxu0 0.0
  %3840 = vmatprep.subr.mxu0 0.0
  %3841 = vmatpush1.xpose.msra.mxu0 0.0
  %3842 = vmatprep.subr.mxu0 0.0
  %3843 = vmatpush1.xpose.msra.mxu0 0.0
  %3844 = vmatprep.subr.mxu0 0.0
  %3845 = vmatpush1.xpose.msra.mxu0 0.0
  %3846 = vmatprep.subr.mxu0 0.0
  %3847 = vmatpush1.xpose.msra.mxu0 0.0
  %3848 = vmatprep.subr.mxu0 0.0
  %3849 = vmatpush1.xpose.msra.mxu0 0.0
  %3850 = vmatprep.subr.mxu0 0.0
  %3851 = vmatpush1.xpose.msra.mxu0 0.0
  %3852 = vmatprep.subr.mxu0 0.0
  %3853 = vmatpush1.xpose.msra.mxu0 0.0
  %3854 = vmatprep.subr.mxu0 0.0
  %3855 = vmatpush1.xpose.msra.mxu0 0.0
  %3856 = vmatprep.subr.mxu0 0.0
  %3857 = vmatpush1.xpose.msra.mxu0 0.0
  %3858 = vmatprep.subr.mxu0 0.0
  %3859 = vmatpush1.xpose.msra.mxu0 0.0
  %3860 = vmatprep.subr.mxu0 0.0
  %3861 = vmatpush1.xpose.msra.mxu0 0.0
  %3862 = vmatprep.subr.mxu0 0.0
  %3863 = vmatpush1.xpose.msra.mxu0 0.0
  %3864 = vmatprep.subr.mxu0 0.0
  %3865 = vmatpush1.xpose.msra.mxu0 0.0
  %3866 = vmatprep.subr.mxu0 0.0
  %3867 = vmatpush1.xpose.msra.mxu0 0.0
  %3868 = vmatprep.subr.mxu0 0.0
  %3869 = vmatpush1.xpose.msra.mxu0 0.0
  %3870 = vmatprep.mubr.f32.mxu0 0.0
  %3871 = vmatmul.mubr.f32.gmra.mrb[0].mxu0 %v3798
  %v3872 = vpop.f32.mrb[0].mxu0
  %v3873 = vadd.f32 0.0, %v3872
  %v3874 = vpop.f32.mrb[0].mxu0
  %3875 = vmatprep.mubr.f32.mxu0 0.0
  %3876 = vmatmul.mubr.f32.gmra.mrb[0].mxu0 %v3800
  %v3877 = vpop.f32.mrb[0].mxu0
  %v3878 = vadd.f32 0.0, %v3877
  %v3879 = vpop.f32.mrb[0].mxu0
  %3880 = vdwg.mxu0
  %v3881 = vmul.f32 %v3873, 0.17677669
  %v3882 = vmul.f32 %v3878, 0.17677669
  %v3883 = vadd.f32 %v3881, %v294
  %v3884 = vadd.f32 %v3882, %v295
  %v3885 = vsel %vm684, %v3883, -inf
  %3886 = vmax.xlane.f32.xlu0 %v3885
  %v3887 = vpop.xlane.xlu0 %3886
  %v3888 = vsel %vm684, %v3884, -inf
  %3889 = vmax.xlane.f32.xlu0 %v3888
  %v3890 = vpop.xlane.xlu0 %3889
  %v3891 = vsub.f32 %v3883, %v3887
  %v3892 = vsub.f32 %v3884, %v3890
  %v3893 = vmul.f32 %v3891, 1.442695
  %v3894 = vpow.pop %v3893
  %v3895 = vmul.f32 %v3892, 1.442695
  %v3896 = vpow.pop %v3895
  %v3897 = vsel %vm684, %v3894, 0.0
  %3898 = vadd.xlane.f32.xlu0 %v3897
  %v3899 = vpop.xlane.xlu0 %3898
  %v3900 = vsel %vm684, %v3896, 0.0
  %3901 = vadd.xlane.f32.xlu0 %v3900
  %v3902 = vpop.xlane.xlu0 %3901
  %v3903 = vrcp.pop %v3899
  %v3904 = vmul.f32 %v3894, %v3903
  %v3905 = vrcp.pop %v3902
  %v3906 = vmul.f32 %v3896, %v3905
  %3907 = vrot.lane.b32.xlu0 %v3382, 64
  %v3908 = vpop.permute.xlu0 %3907
  %3909 = vrot.lane.b32.xlu0 %v3387, 64
  %v3910 = vpop.permute.xlu0 %3909
  %v3914 = vsel %vm684, %v3904, 0
  %v3917 = vsel %vm684, %v3906, 0
  %3919 = vmatprep.subr.mxu0 0.0
  %3920 = vmatpush1.msra.mxu0 %v3908
  %3921 = vmatprep.subr.mxu0 0.0
  %3922 = vmatpush1.msra.mxu0 %v3910
  %3923 = vmatprep.subr.mxu0 0.0
  %3924 = vmatpush1.msra.mxu0 0.0
  %3925 = vmatprep.subr.mxu0 0.0
  %3926 = vmatpush1.msra.mxu0 0.0
  %3927 = vmatprep.subr.mxu0 0.0
  %3928 = vmatpush1.msra.mxu0 0.0
  %3929 = vmatprep.subr.mxu0 0.0
  %3930 = vmatpush1.msra.mxu0 0.0
  %3931 = vmatprep.subr.mxu0 0.0
  %3932 = vmatpush1.msra.mxu0 0.0
  %3933 = vmatprep.subr.mxu0 0.0
  %3934 = vmatpush1.msra.mxu0 0.0
  %3935 = vmatprep.subr.mxu0 0.0
  %3936 = vmatpush1.msra.mxu0 0.0
  %3937 = vmatprep.subr.mxu0 0.0
  %3938 = vmatpush1.msra.mxu0 0.0
  %3939 = vmatprep.subr.mxu0 0.0
  %3940 = vmatpush1.msra.mxu0 0.0
  %3941 = vmatprep.subr.mxu0 0.0
  %3942 = vmatpush1.msra.mxu0 0.0
  %3943 = vmatprep.subr.mxu0 0.0
  %3944 = vmatpush1.msra.mxu0 0.0
  %3945 = vmatprep.subr.mxu0 0.0
  %3946 = vmatpush1.msra.mxu0 0.0
  %3947 = vmatprep.subr.mxu0 0.0
  %3948 = vmatpush1.msra.mxu0 0.0
  %3949 = vmatprep.subr.mxu0 0.0
  %3950 = vmatpush1.msra.mxu0 0.0
  %3951 = vmatprep.subr.mxu0 0.0
  %3952 = vmatpush1.msra.mxu0 0.0
  %3953 = vmatprep.subr.mxu0 0.0
  %3954 = vmatpush1.msra.mxu0 0.0
  %3955 = vmatprep.subr.mxu0 0.0
  %3956 = vmatpush1.msra.mxu0 0.0
  %3957 = vmatprep.subr.mxu0 0.0
  %3958 = vmatpush1.msra.mxu0 0.0
  %3959 = vmatprep.subr.mxu0 0.0
  %3960 = vmatpush1.msra.mxu0 0.0
  %3961 = vmatprep.subr.mxu0 0.0
  %3962 = vmatpush1.msra.mxu0 0.0
  %3963 = vmatprep.subr.mxu0 0.0
  %3964 = vmatpush1.msra.mxu0 0.0
  %3965 = vmatprep.subr.mxu0 0.0
  %3966 = vmatpush1.msra.mxu0 0.0
  %3967 = vmatprep.subr.mxu0 0.0
  %3968 = vmatpush1.msra.mxu0 0.0
  %3969 = vmatprep.subr.mxu0 0.0
  %3970 = vmatpush1.msra.mxu0 0.0
  %3971 = vmatprep.subr.mxu0 0.0
  %3972 = vmatpush1.msra.mxu0 0.0
  %3973 = vmatprep.subr.mxu0 0.0
  %3974 = vmatpush1.msra.mxu0 0.0
  %3975 = vmatprep.subr.mxu0 0.0
  %3976 = vmatpush1.msra.mxu0 0.0
  %3977 = vmatprep.subr.mxu0 0.0
  %3978 = vmatpush1.msra.mxu0 0.0
  %3979 = vmatprep.subr.mxu0 0.0
  %3980 = vmatpush1.msra.mxu0 0.0
  %3981 = vmatprep.subr.mxu0 0.0
  %3982 = vmatpush1.msra.mxu0 0.0
  %3983 = vmatprep.mubr.f32.mxu0 0.0
  %3984 = vmatmul.mubr.f32.gmra.mrb[0].mxu0 %v3914
  %v3985 = vpop.f32.mrb[0].mxu0
  %v3986 = vadd.f32 0.0, %v3985
  %v3987 = vpop.f32.mrb[0].mxu0
  %3988 = vmatprep.mubr.f32.mxu0 0.0
  %3989 = vmatmul.mubr.f32.gmra.mrb[0].mxu0 %v3917
  %v3990 = vpop.f32.mrb[0].mxu0
  %v3991 = vadd.f32 0.0, %v3990
  %v3992 = vpop.f32.mrb[0].mxu0
  %3993 = vdwg.mxu0
  %3994 = vrot.lane.b32.xlu0 %v3186, 32
  %v3995 = vpop.permute.xlu0 %3994
  %3996 = vrot.lane.b32.xlu0 %v3191, 32
  %v3997 = vpop.permute.xlu0 %3996
  %3998 = vrot.lane.b32.xlu0 %v3284, 32
  %v3999 = vpop.permute.xlu0 %3998
  %4000 = vrot.lane.b32.xlu0 %v3289, 32
  %v4001 = vpop.permute.xlu0 %4000
  %v4002 = vsel %vm592, %v3995, 0
  %v4004 = vsel %vm592, %v3997, 0
  %v4006 = vsel %vm592, %v3999, 0
  %v4008 = vsel %vm592, %v4001, 0
  %4010 = vmatprep.subr.mxu0 0.0
  %4011 = vmatpush1.xpose.msra.mxu0 %v4006
  %4012 = vmatprep.subr.mxu0 0.0
  %4013 = vmatpush1.xpose.msra.mxu0 %v4008
  %4014 = vmatprep.subr.mxu0 0.0
  %4015 = vmatpush1.xpose.msra.mxu0 0.0
  %4016 = vmatprep.subr.mxu0 0.0
  %4017 = vmatpush1.xpose.msra.mxu0 0.0
  %4018 = vmatprep.subr.mxu0 0.0
  %4019 = vmatpush1.xpose.msra.mxu0 0.0
  %4020 = vmatprep.subr.mxu0 0.0
  %4021 = vmatpush1.xpose.msra.mxu0 0.0
  %4022 = vmatprep.subr.mxu0 0.0
  %4023 = vmatpush1.xpose.msra.mxu0 0.0
  %4024 = vmatprep.subr.mxu0 0.0
  %4025 = vmatpush1.xpose.msra.mxu0 0.0
  %4026 = vmatprep.subr.mxu0 0.0
  %4027 = vmatpush1.xpose.msra.mxu0 0.0
  %4028 = vmatprep.subr.mxu0 0.0
  %4029 = vmatpush1.xpose.msra.mxu0 0.0
  %4030 = vmatprep.subr.mxu0 0.0
  %4031 = vmatpush1.xpose.msra.mxu0 0.0
  %4032 = vmatprep.subr.mxu0 0.0
  %4033 = vmatpush1.xpose.msra.mxu0 0.0
  %4034 = vmatprep.subr.mxu0 0.0
  %4035 = vmatpush1.xpose.msra.mxu0 0.0
  %4036 = vmatprep.subr.mxu0 0.0
  %4037 = vmatpush1.xpose.msra.mxu0 0.0
  %4038 = vmatprep.subr.mxu0 0.0
  %4039 = vmatpush1.xpose.msra.mxu0 0.0
  %4040 = vmatprep.subr.mxu0 0.0
  %4041 = vmatpush1.xpose.msra.mxu0 0.0
  %4042 = vmatprep.subr.mxu0 0.0
  %4043 = vmatpush1.xpose.msra.mxu0 0.0
  %4044 = vmatprep.subr.mxu0 0.0
  %4045 = vmatpush1.xpose.msra.mxu0 0.0
  %4046 = vmatprep.subr.mxu0 0.0
  %4047 = vmatpush1.xpose.msra.mxu0 0.0
  %4048 = vmatprep.subr.mxu0 0.0
  %4049 = vmatpush1.xpose.msra.mxu0 0.0
  %4050 = vmatprep.subr.mxu0 0.0
  %4051 = vmatpush1.xpose.msra.mxu0 0.0
  %4052 = vmatprep.subr.mxu0 0.0
  %4053 = vmatpush1.xpose.msra.mxu0 0.0
  %4054 = vmatprep.subr.mxu0 0.0
  %4055 = vmatpush1.xpose.msra.mxu0 0.0
  %4056 = vmatprep.subr.mxu0 0.0
  %4057 = vmatpush1.xpose.msra.mxu0 0.0
  %4058 = vmatprep.subr.mxu0 0.0
  %4059 = vmatpush1.xpose.msra.mxu0 0.0
  %4060 = vmatprep.subr.mxu0 0.0
  %4061 = vmatpush1.xpose.msra.mxu0 0.0
  %4062 = vmatprep.subr.mxu0 0.0
  %4063 = vmatpush1.xpose.msra.mxu0 0.0
  %4064 = vmatprep.subr.mxu0 0.0
  %4065 = vmatpush1.xpose.msra.mxu0 0.0
  %4066 = vmatprep.subr.mxu0 0.0
  %4067 = vmatpush1.xpose.msra.mxu0 0.0
  %4068 = vmatprep.subr.mxu0 0.0
  %4069 = vmatpush1.xpose.msra.mxu0 0.0
  %4070 = vmatprep.subr.mxu0 0.0
  %4071 = vmatpush1.xpose.msra.mxu0 0.0
  %4072 = vmatprep.subr.mxu0 0.0
  %4073 = vmatpush1.xpose.msra.mxu0 0.0
  %4074 = vmatprep.mubr.f32.mxu0 0.0
  %4075 = vmatmul.mubr.f32.gmra.mrb[0].mxu0 %v4002
  %v4076 = vpop.f32.mrb[0].mxu0
  %v4077 = vadd.f32 0.0, %v4076
  %v4078 = vpop.f32.mrb[0].mxu0
  %4079 = vmatprep.mubr.f32.mxu0 0.0
  %4080 = vmatmul.mubr.f32.gmra.mrb[0].mxu0 %v4004
  %v4081 = vpop.f32.mrb[0].mxu0
  %v4082 = vadd.f32 0.0, %v4081
  %v4083 = vpop.f32.mrb[0].mxu0
  %4084 = vdwg.mxu0
  %v4085 = vmul.f32 %v4077, 0.17677669
  %v4086 = vmul.f32 %v4082, 0.17677669
  %v4087 = vadd.f32 %v4085, %v294
  %v4088 = vadd.f32 %v4086, %v295
  %v4089 = vsel %vm684, %v4087, -inf
  %4090 = vmax.xlane.f32.xlu0 %v4089
  %v4091 = vpop.xlane.xlu0 %4090
  %v4092 = vsel %vm684, %v4088, -inf
  %4093 = vmax.xlane.f32.xlu0 %v4092
  %v4094 = vpop.xlane.xlu0 %4093
  %v4095 = vsub.f32 %v4087, %v4091
  %v4096 = vsub.f32 %v4088, %v4094
  %v4097 = vmul.f32 %v4095, 1.442695
  %v4098 = vpow.pop %v4097
  %v4099 = vmul.f32 %v4096, 1.442695
  %v4100 = vpow.pop %v4099
  %v4101 = vsel %vm684, %v4098, 0.0
  %4102 = vadd.xlane.f32.xlu0 %v4101
  %v4103 = vpop.xlane.xlu0 %4102
  %v4104 = vsel %vm684, %v4100, 0.0
  %4105 = vadd.xlane.f32.xlu0 %v4104
  %v4106 = vpop.xlane.xlu0 %4105
  %v4107 = vrcp.pop %v4103
  %v4108 = vmul.f32 %v4098, %v4107
  %v4109 = vrcp.pop %v4106
  %v4110 = vmul.f32 %v4100, %v4109
  %4111 = vrot.lane.b32.xlu0 %v3382, 32
  %v4112 = vpop.permute.xlu0 %4111
  %4113 = vrot.lane.b32.xlu0 %v3387, 32
  %v4114 = vpop.permute.xlu0 %4113
  %v4118 = vsel %vm684, %v4108, 0
  %v4121 = vsel %vm684, %v4110, 0
  %4123 = vmatprep.subr.mxu0 0.0
  %4124 = vmatpush1.msra.mxu0 %v4112
  %4125 = vmatprep.subr.mxu0 0.0
  %4126 = vmatpush1.msra.mxu0 %v4114
  %4127 = vmatprep.subr.mxu0 0.0
  %4128 = vmatpush1.msra.mxu0 0.0
  %4129 = vmatprep.subr.mxu0 0.0
  %4130 = vmatpush1.msra.mxu0 0.0
  %4131 = vmatprep.subr.mxu0 0.0
  %4132 = vmatpush1.msra.mxu0 0.0
  %4133 = vmatprep.subr.mxu0 0.0
  %4134 = vmatpush1.msra.mxu0 0.0
  %4135 = vmatprep.subr.mxu0 0.0
  %4136 = vmatpush1.msra.mxu0 0.0
  %4137 = vmatprep.subr.mxu0 0.0
  %4138 = vmatpush1.msra.mxu0 0.0
  %4139 = vmatprep.subr.mxu0 0.0
  %4140 = vmatpush1.msra.mxu0 0.0
  %4141 = vmatprep.subr.mxu0 0.0
  %4142 = vmatpush1.msra.mxu0 0.0
  %4143 = vmatprep.subr.mxu0 0.0
  %4144 = vmatpush1.msra.mxu0 0.0
  %4145 = vmatprep.subr.mxu0 0.0
  %4146 = vmatpush1.msra.mxu0 0.0
  %4147 = vmatprep.subr.mxu0 0.0
  %4148 = vmatpush1.msra.mxu0 0.0
  %4149 = vmatprep.subr.mxu0 0.0
  %4150 = vmatpush1.msra.mxu0 0.0
  %4151 = vmatprep.subr.mxu0 0.0
  %4152 = vmatpush1.msra.mxu0 0.0
  %4153 = vmatprep.subr.mxu0 0.0
  %4154 = vmatpush1.msra.mxu0 0.0
  %4155 = vmatprep.subr.mxu0 0.0
  %4156 = vmatpush1.msra.mxu0 0.0
  %4157 = vmatprep.subr.mxu0 0.0
  %4158 = vmatpush1.msra.mxu0 0.0
  %4159 = vmatprep.subr.mxu0 0.0
  %4160 = vmatpush1.msra.mxu0 0.0
  %4161 = vmatprep.subr.mxu0 0.0
  %4162 = vmatpush1.msra.mxu0 0.0
  %4163 = vmatprep.subr.mxu0 0.0
  %4164 = vmatpush1.msra.mxu0 0.0
  %4165 = vmatprep.subr.mxu0 0.0
  %4166 = vmatpush1.msra.mxu0 0.0
  %4167 = vmatprep.subr.mxu0 0.0
  %4168 = vmatpush1.msra.mxu0 0.0
  %4169 = vmatprep.subr.mxu0 0.0
  %4170 = vmatpush1.msra.mxu0 0.0
  %4171 = vmatprep.subr.mxu0 0.0
  %4172 = vmatpush1.msra.mxu0 0.0
  %4173 = vmatprep.subr.mxu0 0.0
  %4174 = vmatpush1.msra.mxu0 0.0
  %4175 = vmatprep.subr.mxu0 0.0
  %4176 = vmatpush1.msra.mxu0 0.0
  %4177 = vmatprep.subr.mxu0 0.0
  %4178 = vmatpush1.msra.mxu0 0.0
  %4179 = vmatprep.subr.mxu0 0.0
  %4180 = vmatpush1.msra.mxu0 0.0
  %4181 = vmatprep.subr.mxu0 0.0
  %4182 = vmatpush1.msra.mxu0 0.0
  %4183 = vmatprep.subr.mxu0 0.0
  %4184 = vmatpush1.msra.mxu0 0.0
  %4185 = vmatprep.subr.mxu0 0.0
  %4186 = vmatpush1.msra.mxu0 0.0
  %4187 = vmatprep.mubr.f32.mxu0 0.0
  %4188 = vmatmul.mubr.f32.gmra.mrb[0].mxu0 %v4118
  %v4189 = vpop.f32.mrb[0].mxu0
  %v4190 = vadd.f32 0.0, %v4189
  %v4191 = vpop.f32.mrb[0].mxu0
  %4192 = vmatprep.mubr.f32.mxu0 0.0
  %4193 = vmatmul.mubr.f32.gmra.mrb[0].mxu0 %v4121
  %v4194 = vpop.f32.mrb[0].mxu0
  %v4195 = vadd.f32 0.0, %v4194
  %v4196 = vpop.f32.mrb[0].mxu0
  %4197 = vdwg.mxu0
  %4200 = vrot.lane.b32.xlu0 %v3782, 32
  %v4201 = vpop.permute.xlu0 %4200
  %4202 = vrot.lane.b32.xlu0 %v3787, 32
  %v4203 = vpop.permute.xlu0 %4202
  %4208 = vrot.lane.b32.xlu0 %v3986, 64
  %v4209 = vpop.permute.xlu0 %4208
  %4210 = vrot.lane.b32.xlu0 %v3991, 64
  %v4211 = vpop.permute.xlu0 %4210
  %4216 = vrot.lane.b32.xlu0 %v4190, 96
  %v4217 = vpop.permute.xlu0 %4216
  %4218 = vrot.lane.b32.xlu0 %v4195, 96
  %v4219 = vpop.permute.xlu0 %4218
  %v4222 = vsel %vm592, %v3576, %v4201
  %v4223 = vsel %vm592, %v3581, %v4203
  %v4224 = vsel %vm1428, %v4222, %v4209
  %v4225 = vsel %vm1428, %v4223, %v4211
  %v4226 = vsel %vm1431, %v4224, %v4217
  %v4227 = vsel %vm1431, %v4225, %v4219
  %s4228 = scalar_lea.vmem %s8, 128
  %v4229 = vld [vmem:[%s4228] sm:$0xff]
  %v4230 = vld [vmem:[%s4228 + $0x8] sm:$0xff]
  %v4231 = vld [vmem:[%s4228 + $0x10] sm:$0xff]
  %v4232 = vld [vmem:[%s4228 + $0x18] sm:$0xff]
  %v4233 = vld [vmem:[%s4228 + $0x20] sm:$0xff]
  %v4234 = vld [vmem:[%s4228 + $0x28] sm:$0xff]
  %v4235 = vld [vmem:[%s4228 + $0x30] sm:$0xff]
  %v4236 = vld [vmem:[%s4228 + $0x38] sm:$0xff]
  %v4237 = vld [vmem:[%s4228 + $0x40] sm:$0xff]
  %v4238 = vld [vmem:[%s4228 + $0x48] sm:$0xff]
  %v4239 = vld [vmem:[%s4228 + $0x50] sm:$0xff]
  %v4240 = vld [vmem:[%s4228 + $0x58] sm:$0xff]
  %v4241 = vld [vmem:[%s4228 + $0x60] sm:$0xff]
  %v4242 = vld [vmem:[%s4228 + $0x68] sm:$0xff]
  %v4243 = vld [vmem:[%s4228 + $0x70] sm:$0xff]
  %v4244 = vld [vmem:[%s4228 + $0x78] sm:$0xff]
  %s4245 = scalar_lea.vmem %s9, 1
  %v4246 = vld [vmem:[%s4245] sm:$0x1]
  %v4248 = vlaneseq
  %v4249 = vshrl.u32 %v4248, 7
  %v4250 = vsub.s32 0, %v4249
  %v4251 = vrot.slane %v4246, %v4250
  %4253 = vmatprep.subr.mxu0 0.0
  %4254 = vmatpush1.msra.mxu0 %v4229
  %4255 = vmatprep.subr.mxu0 0.0
  %4256 = vmatpush1.msra.mxu0 %v4230
  %4257 = vmatprep.subr.mxu0 0.0
  %4258 = vmatpush1.msra.mxu0 %v4231
  %4259 = vmatprep.subr.mxu0 0.0
  %4260 = vmatpush1.msra.mxu0 %v4232
  %4261 = vmatprep.subr.mxu0 0.0
  %4262 = vmatpush1.msra.mxu0 %v4233
  %4263 = vmatprep.subr.mxu0 0.0
  %4264 = vmatpush1.msra.mxu0 %v4234
  %4265 = vmatprep.subr.mxu0 0.0
  %4266 = vmatpush1.msra.mxu0 %v4235
  %4267 = vmatprep.subr.mxu0 0.0
  %4268 = vmatpush1.msra.mxu0 %v4236
  %4269 = vmatprep.subr.mxu0 0.0
  %4270 = vmatpush1.msra.mxu0 %v4237
  %4271 = vmatprep.subr.mxu0 0.0
  %4272 = vmatpush1.msra.mxu0 %v4238
  %4273 = vmatprep.subr.mxu0 0.0
  %4274 = vmatpush1.msra.mxu0 %v4239
  %4275 = vmatprep.subr.mxu0 0.0
  %4276 = vmatpush1.msra.mxu0 %v4240
  %4277 = vmatprep.subr.mxu0 0.0
  %4278 = vmatpush1.msra.mxu0 %v4241
  %4279 = vmatprep.subr.mxu0 0.0
  %4280 = vmatpush1.msra.mxu0 %v4242
  %4281 = vmatprep.subr.mxu0 0.0
  %4282 = vmatpush1.msra.mxu0 %v4243
  %4283 = vmatprep.subr.mxu0 0.0
  %4284 = vmatpush1.msra.mxu0 %v4244
  %4285 = vmatprep.subr.mxu0 0.0
  %4286 = vmatpush1.msra.mxu0 0.0
  %4287 = vmatprep.subr.mxu0 0.0
  %4288 = vmatpush1.msra.mxu0 0.0
  %4289 = vmatprep.subr.mxu0 0.0
  %4290 = vmatpush1.msra.mxu0 0.0
  %4291 = vmatprep.subr.mxu0 0.0
  %4292 = vmatpush1.msra.mxu0 0.0
  %4293 = vmatprep.subr.mxu0 0.0
  %4294 = vmatpush1.msra.mxu0 0.0
  %4295 = vmatprep.subr.mxu0 0.0
  %4296 = vmatpush1.msra.mxu0 0.0
  %4297 = vmatprep.subr.mxu0 0.0
  %4298 = vmatpush1.msra.mxu0 0.0
  %4299 = vmatprep.subr.mxu0 0.0
  %4300 = vmatpush1.msra.mxu0 0.0
  %4301 = vmatprep.subr.mxu0 0.0
  %4302 = vmatpush1.msra.mxu0 0.0
  %4303 = vmatprep.subr.mxu0 0.0
  %4304 = vmatpush1.msra.mxu0 0.0
  %4305 = vmatprep.subr.mxu0 0.0
  %4306 = vmatpush1.msra.mxu0 0.0
  %4307 = vmatprep.subr.mxu0 0.0
  %4308 = vmatpush1.msra.mxu0 0.0
  %4309 = vmatprep.subr.mxu0 0.0
  %4310 = vmatpush1.msra.mxu0 0.0
  %4311 = vmatprep.subr.mxu0 0.0
  %4312 = vmatpush1.msra.mxu0 0.0
  %4313 = vmatprep.subr.mxu0 0.0
  %4314 = vmatpush1.msra.mxu0 0.0
  %4315 = vmatprep.subr.mxu0 0.0
  %4316 = vmatpush1.msra.mxu0 0.0
  %4317 = vmatprep.mubr.f32.mxu0 0.0
  %4318 = vmatmul.mubr.f32.gmra.mrb[0].mxu0 %v4226
  %v4319 = vpop.f32.mrb[0].mxu0
  %v4320 = vadd.f32 %v4251, %v4319
  %v4321 = vpop.f32.mrb[0].mxu0
  %4322 = vmatprep.mubr.f32.mxu0 0.0
  %4323 = vmatmul.mubr.f32.gmra.mrb[0].mxu0 %v4227
  %v4324 = vpop.f32.mrb[0].mxu0
  %v4325 = vadd.f32 %v4251, %v4324
  %v4326 = vpop.f32.mrb[0].mxu0
  %4327 = vdwg.mxu0
  %v4328 = vadd.f32 %v3092, %v4320
  %v4329 = vadd.f32 %v3093, %v4325
  %s4330 = scalar_lea.vmem %s14, 1
  %v4331 = vld [vmem:[%s4330] sm:$0x1]
  %s4332 = scalar_lea.vmem %s15, 1
  %v4333 = vld [vmem:[%s4332] sm:$0x1]
  %4334 = vadd.xlane.f32.xlu0 %v4328
  %v4335 = vpop.xlane.xlu0 %4334
  %4336 = vadd.xlane.f32.xlu0 %v4329
  %v4337 = vpop.xlane.xlu0 %4336
  %v4338 = vmul.f32 %v4335, %v1540
  %v4339 = vmul.f32 %v4337, %v1540
  %v4340 = vsub.f32 %v4328, %v4338
  %v4341 = vsub.f32 %v4329, %v4339
  %v4342 = vmul.f32 %v4340, %v4340
  %v4343 = vmul.f32 %v4341, %v4341
  %4344 = vadd.xlane.f32.xlu0 %v4342
  %v4345 = vpop.xlane.xlu0 %4344
  %4346 = vadd.xlane.f32.xlu0 %v4343
  %v4347 = vpop.xlane.xlu0 %4346
  %v4348 = vmul.f32 %v4345, %v1540
  %v4349 = vmul.f32 %v4347, %v1540
  %v4350 = vadd.f32 %v4348, 1e-05
  %v4351 = vadd.f32 %v4349, 1e-05
  %v4352 = vrsqrt.pop %v4350
  %v4353 = vrsqrt.pop %v4351
  %v4354 = vmul.f32 %v4340, %v4352
  %v4355 = vmul.f32 %v4341, %v4353
  %v4357 = vlaneseq
  %v4358 = vshrl.u32 %v4357, 7
  %v4359 = vsub.s32 0, %v4358
  %v4360 = vrot.slane %v4331, %v4359
  %v4362 = vmul.f32 %v4354, %v4360
  %v4363 = vmul.f32 %v4355, %v4360
  %v4365 = vlaneseq
  %v4366 = vshrl.u32 %v4365, 7
  %v4367 = vsub.s32 0, %v4366
  %v4368 = vrot.slane %v4333, %v4367
  %v4370 = vadd.f32 %v4362, %v4368
  %v4371 = vadd.f32 %v4363, %v4368
  %s4372 = scalar_lea.vmem %s10, 384
  %v4373 = vld [vmem:[%s4372] sm:$0xff]
  %v4374 = vld [vmem:[%s4372 + $0x18] sm:$0xff]
  %v4375 = vld [vmem:[%s4372 + $0x30] sm:$0xff]
  %v4376 = vld [vmem:[%s4372 + $0x48] sm:$0xff]
  %v4377 = vld [vmem:[%s4372 + $0x60] sm:$0xff]
  %v4378 = vld [vmem:[%s4372 + $0x78] sm:$0xff]
  %v4379 = vld [vmem:[%s4372 + $0x90] sm:$0xff]
  %v4380 = vld [vmem:[%s4372 + $0xa8] sm:$0xff]
  %v4381 = vld [vmem:[%s4372 + $0xc0] sm:$0xff]
  %v4382 = vld [vmem:[%s4372 + $0xd8] sm:$0xff]
  %v4383 = vld [vmem:[%s4372 + $0xf0] sm:$0xff]
  %v4384 = vld [vmem:[%s4372 + $0x108] sm:$0xff]
  %v4385 = vld [vmem:[%s4372 + $0x120] sm:$0xff]
  %v4386 = vld [vmem:[%s4372 + $0x138] sm:$0xff]
  %v4387 = vld [vmem:[%s4372 + $0x150] sm:$0xff]
  %v4388 = vld [vmem:[%s4372 + $0x168] sm:$0xff]
  %s4389 = scalar_lea.vmem %s11, 3
  %v4390 = vld [vmem:[%s4389] sm:$0x1]
  %v4392 = vlaneseq
  %v4393 = vshrl.u32 %v4392, 7
  %v4394 = vsub.s32 0, %v4393
  %v4395 = vrot.slane %v4390, %v4394
  %4397 = vmatprep.subr.mxu0 0.0
  %4398 = vmatpush1.msra.mxu0 %v4373
  %4399 = vmatprep.subr.mxu0 0.0
  %4400 = vmatpush1.msra.mxu0 %v4374
  %4401 = vmatprep.subr.mxu0 0.0
  %4402 = vmatpush1.msra.mxu0 %v4375
  %4403 = vmatprep.subr.mxu0 0.0
  %4404 = vmatpush1.msra.mxu0 %v4376
  %4405 = vmatprep.subr.mxu0 0.0
  %4406 = vmatpush1.msra.mxu0 %v4377
  %4407 = vmatprep.subr.mxu0 0.0
  %4408 = vmatpush1.msra.mxu0 %v4378
  %4409 = vmatprep.subr.mxu0 0.0
  %4410 = vmatpush1.msra.mxu0 %v4379
  %4411 = vmatprep.subr.mxu0 0.0
  %4412 = vmatpush1.msra.mxu0 %v4380
  %4413 = vmatprep.subr.mxu0 0.0
  %4414 = vmatpush1.msra.mxu0 %v4381
  %4415 = vmatprep.subr.mxu0 0.0
  %4416 = vmatpush1.msra.mxu0 %v4382
  %4417 = vmatprep.subr.mxu0 0.0
  %4418 = vmatpush1.msra.mxu0 %v4383
  %4419 = vmatprep.subr.mxu0 0.0
  %4420 = vmatpush1.msra.mxu0 %v4384
  %4421 = vmatprep.subr.mxu0 0.0
  %4422 = vmatpush1.msra.mxu0 %v4385
  %4423 = vmatprep.subr.mxu0 0.0
  %4424 = vmatpush1.msra.mxu0 %v4386
  %4425 = vmatprep.subr.mxu0 0.0
  %4426 = vmatpush1.msra.mxu0 %v4387
  %4427 = vmatprep.subr.mxu0 0.0
  %4428 = vmatpush1.msra.mxu0 %v4388
  %4429 = vmatprep.subr.mxu0 0.0
  %4430 = vmatpush1.msra.mxu0 0.0
  %4431 = vmatprep.subr.mxu0 0.0
  %4432 = vmatpush1.msra.mxu0 0.0
  %4433 = vmatprep.subr.mxu0 0.0
  %4434 = vmatpush1.msra.mxu0 0.0
  %4435 = vmatprep.subr.mxu0 0.0
  %4436 = vmatpush1.msra.mxu0 0.0
  %4437 = vmatprep.subr.mxu0 0.0
  %4438 = vmatpush1.msra.mxu0 0.0
  %4439 = vmatprep.subr.mxu0 0.0
  %4440 = vmatpush1.msra.mxu0 0.0
  %4441 = vmatprep.subr.mxu0 0.0
  %4442 = vmatpush1.msra.mxu0 0.0
  %4443 = vmatprep.subr.mxu0 0.0
  %4444 = vmatpush1.msra.mxu0 0.0
  %4445 = vmatprep.subr.mxu0 0.0
  %4446 = vmatpush1.msra.mxu0 0.0
  %4447 = vmatprep.subr.mxu0 0.0
  %4448 = vmatpush1.msra.mxu0 0.0
  %4449 = vmatprep.subr.mxu0 0.0
  %4450 = vmatpush1.msra.mxu0 0.0
  %4451 = vmatprep.subr.mxu0 0.0
  %4452 = vmatpush1.msra.mxu0 0.0
  %4453 = vmatprep.subr.mxu0 0.0
  %4454 = vmatpush1.msra.mxu0 0.0
  %4455 = vmatprep.subr.mxu0 0.0
  %4456 = vmatpush1.msra.mxu0 0.0
  %4457 = vmatprep.subr.mxu0 0.0
  %4458 = vmatpush1.msra.mxu0 0.0
  %4459 = vmatprep.subr.mxu0 0.0
  %4460 = vmatpush1.msra.mxu0 0.0
  %4461 = vmatprep.mubr.f32.mxu0 0.0
  %4462 = vmatmul.mubr.f32.gmra.mrb[0].mxu0 %v4370
  %v4463 = vpop.f32.mrb[0].mxu0
  %v4464 = vadd.f32 %v4395, %v4463
  %v4465 = vpop.f32.mrb[0].mxu0
  %4466 = vmatprep.mubr.f32.mxu0 0.0
  %4467 = vmatmul.mubr.f32.gmra.mrb[0].mxu0 %v4371
  %v4468 = vpop.f32.mrb[0].mxu0
  %v4469 = vadd.f32 %v4395, %v4468
  %v4470 = vpop.f32.mrb[0].mxu0
  %4471 = vdwg.mxu0
  %v4472 = vld [vmem:[%s4372 + $0x8] sm:$0xff]
  %v4473 = vld [vmem:[%s4372 + $0x20] sm:$0xff]
  %v4474 = vld [vmem:[%s4372 + $0x38] sm:$0xff]
  %v4475 = vld [vmem:[%s4372 + $0x50] sm:$0xff]
  %v4476 = vld [vmem:[%s4372 + $0x68] sm:$0xff]
  %v4477 = vld [vmem:[%s4372 + $0x80] sm:$0xff]
  %v4478 = vld [vmem:[%s4372 + $0x98] sm:$0xff]
  %v4479 = vld [vmem:[%s4372 + $0xb0] sm:$0xff]
  %v4480 = vld [vmem:[%s4372 + $0xc8] sm:$0xff]
  %v4481 = vld [vmem:[%s4372 + $0xe0] sm:$0xff]
  %v4482 = vld [vmem:[%s4372 + $0xf8] sm:$0xff]
  %v4483 = vld [vmem:[%s4372 + $0x110] sm:$0xff]
  %v4484 = vld [vmem:[%s4372 + $0x128] sm:$0xff]
  %v4485 = vld [vmem:[%s4372 + $0x140] sm:$0xff]
  %v4486 = vld [vmem:[%s4372 + $0x158] sm:$0xff]
  %v4487 = vld [vmem:[%s4372 + $0x170] sm:$0xff]
  %v4488 = vld [vmem:[%s4389 + $0x1] sm:$0x1]
  %v4490 = vlaneseq
  %v4491 = vshrl.u32 %v4490, 7
  %v4492 = vsub.s32 0, %v4491
  %v4493 = vrot.slane %v4488, %v4492
  %4495 = vmatprep.subr.mxu0 0.0
  %4496 = vmatpush1.msra.mxu0 %v4472
  %4497 = vmatprep.subr.mxu0 0.0
  %4498 = vmatpush1.msra.mxu0 %v4473
  %4499 = vmatprep.subr.mxu0 0.0
  %4500 = vmatpush1.msra.mxu0 %v4474
  %4501 = vmatprep.subr.mxu0 0.0
  %4502 = vmatpush1.msra.mxu0 %v4475
  %4503 = vmatprep.subr.mxu0 0.0
  %4504 = vmatpush1.msra.mxu0 %v4476
  %4505 = vmatprep.subr.mxu0 0.0
  %4506 = vmatpush1.msra.mxu0 %v4477
  %4507 = vmatprep.subr.mxu0 0.0
  %4508 = vmatpush1.msra.mxu0 %v4478
  %4509 = vmatprep.subr.mxu0 0.0
  %4510 = vmatpush1.msra.mxu0 %v4479
  %4511 = vmatprep.subr.mxu0 0.0
  %4512 = vmatpush1.msra.mxu0 %v4480
  %4513 = vmatprep.subr.mxu0 0.0
  %4514 = vmatpush1.msra.mxu0 %v4481
  %4515 = vmatprep.subr.mxu0 0.0
  %4516 = vmatpush1.msra.mxu0 %v4482
  %4517 = vmatprep.subr.mxu0 0.0
  %4518 = vmatpush1.msra.mxu0 %v4483
  %4519 = vmatprep.subr.mxu0 0.0
  %4520 = vmatpush1.msra.mxu0 %v4484
  %4521 = vmatprep.subr.mxu0 0.0
  %4522 = vmatpush1.msra.mxu0 %v4485
  %4523 = vmatprep.subr.mxu0 0.0
  %4524 = vmatpush1.msra.mxu0 %v4486
  %4525 = vmatprep.subr.mxu0 0.0
  %4526 = vmatpush1.msra.mxu0 %v4487
  %4527 = vmatprep.subr.mxu0 0.0
  %4528 = vmatpush1.msra.mxu0 0.0
  %4529 = vmatprep.subr.mxu0 0.0
  %4530 = vmatpush1.msra.mxu0 0.0
  %4531 = vmatprep.subr.mxu0 0.0
  %4532 = vmatpush1.msra.mxu0 0.0
  %4533 = vmatprep.subr.mxu0 0.0
  %4534 = vmatpush1.msra.mxu0 0.0
  %4535 = vmatprep.subr.mxu0 0.0
  %4536 = vmatpush1.msra.mxu0 0.0
  %4537 = vmatprep.subr.mxu0 0.0
  %4538 = vmatpush1.msra.mxu0 0.0
  %4539 = vmatprep.subr.mxu0 0.0
  %4540 = vmatpush1.msra.mxu0 0.0
  %4541 = vmatprep.subr.mxu0 0.0
  %4542 = vmatpush1.msra.mxu0 0.0
  %4543 = vmatprep.subr.mxu0 0.0
  %4544 = vmatpush1.msra.mxu0 0.0
  %4545 = vmatprep.subr.mxu0 0.0
  %4546 = vmatpush1.msra.mxu0 0.0
  %4547 = vmatprep.subr.mxu0 0.0
  %4548 = vmatpush1.msra.mxu0 0.0
  %4549 = vmatprep.subr.mxu0 0.0
  %4550 = vmatpush1.msra.mxu0 0.0
  %4551 = vmatprep.subr.mxu0 0.0
  %4552 = vmatpush1.msra.mxu0 0.0
  %4553 = vmatprep.subr.mxu0 0.0
  %4554 = vmatpush1.msra.mxu0 0.0
  %4555 = vmatprep.subr.mxu0 0.0
  %4556 = vmatpush1.msra.mxu0 0.0
  %4557 = vmatprep.subr.mxu0 0.0
  %4558 = vmatpush1.msra.mxu0 0.0
  %4559 = vmatprep.mubr.f32.mxu0 0.0
  %4560 = vmatmul.mubr.f32.gmra.mrb[0].mxu0 %v289
  %v4561 = vpop.f32.mrb[0].mxu0
  %v4562 = vadd.f32 %v4493, %v4561
  %v4563 = vpop.f32.mrb[0].mxu0
  %4564 = vdwg.mxu0
  %v4565 = vld [vmem:[%s4372 + $0x10] sm:$0xff]
  %v4566 = vld [vmem:[%s4372 + $0x28] sm:$0xff]
  %v4567 = vld [vmem:[%s4372 + $0x40] sm:$0xff]
  %v4568 = vld [vmem:[%s4372 + $0x58] sm:$0xff]
  %v4569 = vld [vmem:[%s4372 + $0x70] sm:$0xff]
  %v4570 = vld [vmem:[%s4372 + $0x88] sm:$0xff]
  %v4571 = vld [vmem:[%s4372 + $0xa0] sm:$0xff]
  %v4572 = vld [vmem:[%s4372 + $0xb8] sm:$0xff]
  %v4573 = vld [vmem:[%s4372 + $0xd0] sm:$0xff]
  %v4574 = vld [vmem:[%s4372 + $0xe8] sm:$0xff]
  %v4575 = vld [vmem:[%s4372 + $0x100] sm:$0xff]
  %v4576 = vld [vmem:[%s4372 + $0x118] sm:$0xff]
  %v4577 = vld [vmem:[%s4372 + $0x130] sm:$0xff]
  %v4578 = vld [vmem:[%s4372 + $0x148] sm:$0xff]
  %v4579 = vld [vmem:[%s4372 + $0x160] sm:$0xff]
  %v4580 = vld [vmem:[%s4372 + $0x178] sm:$0xff]
  %v4581 = vld [vmem:[%s4389 + $0x2] sm:$0x1]
  %v4583 = vlaneseq
  %v4584 = vshrl.u32 %v4583, 7
  %v4585 = vsub.s32 0, %v4584
  %v4586 = vrot.slane %v4581, %v4585
  %4588 = vmatprep.subr.mxu0 0.0
  %4589 = vmatpush1.msra.mxu0 %v4565
  %4590 = vmatprep.subr.mxu0 0.0
  %4591 = vmatpush1.msra.mxu0 %v4566
  %4592 = vmatprep.subr.mxu0 0.0
  %4593 = vmatpush1.msra.mxu0 %v4567
  %4594 = vmatprep.subr.mxu0 0.0
  %4595 = vmatpush1.msra.mxu0 %v4568
  %4596 = vmatprep.subr.mxu0 0.0
  %4597 = vmatpush1.msra.mxu0 %v4569
  %4598 = vmatprep.subr.mxu0 0.0
  %4599 = vmatpush1.msra.mxu0 %v4570
  %4600 = vmatprep.subr.mxu0 0.0
  %4601 = vmatpush1.msra.mxu0 %v4571
  %4602 = vmatprep.subr.mxu0 0.0
  %4603 = vmatpush1.msra.mxu0 %v4572
  %4604 = vmatprep.subr.mxu0 0.0
  %4605 = vmatpush1.msra.mxu0 %v4573
  %4606 = vmatprep.subr.mxu0 0.0
  %4607 = vmatpush1.msra.mxu0 %v4574
  %4608 = vmatprep.subr.mxu0 0.0
  %4609 = vmatpush1.msra.mxu0 %v4575
  %4610 = vmatprep.subr.mxu0 0.0
  %4611 = vmatpush1.msra.mxu0 %v4576
  %4612 = vmatprep.subr.mxu0 0.0
  %4613 = vmatpush1.msra.mxu0 %v4577
  %4614 = vmatprep.subr.mxu0 0.0
  %4615 = vmatpush1.msra.mxu0 %v4578
  %4616 = vmatprep.subr.mxu0 0.0
  %4617 = vmatpush1.msra.mxu0 %v4579
  %4618 = vmatprep.subr.mxu0 0.0
  %4619 = vmatpush1.msra.mxu0 %v4580
  %4620 = vmatprep.subr.mxu0 0.0
  %4621 = vmatpush1.msra.mxu0 0.0
  %4622 = vmatprep.subr.mxu0 0.0
  %4623 = vmatpush1.msra.mxu0 0.0
  %4624 = vmatprep.subr.mxu0 0.0
  %4625 = vmatpush1.msra.mxu0 0.0
  %4626 = vmatprep.subr.mxu0 0.0
  %4627 = vmatpush1.msra.mxu0 0.0
  %4628 = vmatprep.subr.mxu0 0.0
  %4629 = vmatpush1.msra.mxu0 0.0
  %4630 = vmatprep.subr.mxu0 0.0
  %4631 = vmatpush1.msra.mxu0 0.0
  %4632 = vmatprep.subr.mxu0 0.0
  %4633 = vmatpush1.msra.mxu0 0.0
  %4634 = vmatprep.subr.mxu0 0.0
  %4635 = vmatpush1.msra.mxu0 0.0
  %4636 = vmatprep.subr.mxu0 0.0
  %4637 = vmatpush1.msra.mxu0 0.0
  %4638 = vmatprep.subr.mxu0 0.0
  %4639 = vmatpush1.msra.mxu0 0.0
  %4640 = vmatprep.subr.mxu0 0.0
  %4641 = vmatpush1.msra.mxu0 0.0
  %4642 = vmatprep.subr.mxu0 0.0
  %4643 = vmatpush1.msra.mxu0 0.0
  %4644 = vmatprep.subr.mxu0 0.0
  %4645 = vmatpush1.msra.mxu0 0.0
  %4646 = vmatprep.subr.mxu0 0.0
  %4647 = vmatpush1.msra.mxu0 0.0
  %4648 = vmatprep.subr.mxu0 0.0
  %4649 = vmatpush1.msra.mxu0 0.0
  %4650 = vmatprep.subr.mxu0 0.0
  %4651 = vmatpush1.msra.mxu0 0.0
  %4652 = vmatprep.mubr.f32.mxu0 0.0
  %4653 = vmatmul.mubr.f32.gmra.mrb[0].mxu0 %v289
  %v4654 = vpop.f32.mrb[0].mxu0
  %v4655 = vadd.f32 %v4586, %v4654
  %v4656 = vpop.f32.mrb[0].mxu0
  %4657 = vdwg.mxu0
  %v4659 = vsel %vm592, %v4464, 0
  %v4662 = vsel %vm592, %v4469, 0
  %v4665 = vsel %vm592, %v4562, 0
  %4667 = vmatprep.subr.mxu0 0.0
  %4668 = vmatpush1.xpose.msra.mxu0 %v4665
  %4669 = vmatprep.subr.mxu0 0.0
  %4670 = vmatpush1.xpose.msra.mxu0 0.0
  %4671 = vmatprep.subr.mxu0 0.0
  %4672 = vmatpush1.xpose.msra.mxu0 0.0
  %4673 = vmatprep.subr.mxu0 0.0
  %4674 = vmatpush1.xpose.msra.mxu0 0.0
  %4675 = vmatprep.subr.mxu0 0.0
  %4676 = vmatpush1.xpose.msra.mxu0 0.0
  %4677 = vmatprep.subr.mxu0 0.0
  %4678 = vmatpush1.xpose.msra.mxu0 0.0
  %4679 = vmatprep.subr.mxu0 0.0
  %4680 = vmatpush1.xpose.msra.mxu0 0.0
  %4681 = vmatprep.subr.mxu0 0.0
  %4682 = vmatpush1.xpose.msra.mxu0 0.0
  %4683 = vmatprep.subr.mxu0 0.0
  %4684 = vmatpush1.xpose.msra.mxu0 0.0
  %4685 = vmatprep.subr.mxu0 0.0
  %4686 = vmatpush1.xpose.msra.mxu0 0.0
  %4687 = vmatprep.subr.mxu0 0.0
  %4688 = vmatpush1.xpose.msra.mxu0 0.0
  %4689 = vmatprep.subr.mxu0 0.0
  %4690 = vmatpush1.xpose.msra.mxu0 0.0
  %4691 = vmatprep.subr.mxu0 0.0
  %4692 = vmatpush1.xpose.msra.mxu0 0.0
  %4693 = vmatprep.subr.mxu0 0.0
  %4694 = vmatpush1.xpose.msra.mxu0 0.0
  %4695 = vmatprep.subr.mxu0 0.0
  %4696 = vmatpush1.xpose.msra.mxu0 0.0
  %4697 = vmatprep.subr.mxu0 0.0
  %4698 = vmatpush1.xpose.msra.mxu0 0.0
  %4699 = vmatprep.subr.mxu0 0.0
  %4700 = vmatpush1.xpose.msra.mxu0 0.0
  %4701 = vmatprep.subr.mxu0 0.0
  %4702 = vmatpush1.xpose.msra.mxu0 0.0
  %4703 = vmatprep.subr.mxu0 0.0
  %4704 = vmatpush1.xpose.msra.mxu0 0.0
  %4705 = vmatprep.subr.mxu0 0.0
  %4706 = vmatpush1.xpose.msra.mxu0 0.0
  %4707 = vmatprep.subr.mxu0 0.0
  %4708 = vmatpush1.xpose.msra.mxu0 0.0
  %4709 = vmatprep.subr.mxu0 0.0
  %4710 = vmatpush1.xpose.msra.mxu0 0.0
  %4711 = vmatprep.subr.mxu0 0.0
  %4712 = vmatpush1.xpose.msra.mxu0 0.0
  %4713 = vmatprep.subr.mxu0 0.0
  %4714 = vmatpush1.xpose.msra.mxu0 0.0
  %4715 = vmatprep.subr.mxu0 0.0
  %4716 = vmatpush1.xpose.msra.mxu0 0.0
  %4717 = vmatprep.subr.mxu0 0.0
  %4718 = vmatpush1.xpose.msra.mxu0 0.0
  %4719 = vmatprep.subr.mxu0 0.0
  %4720 = vmatpush1.xpose.msra.mxu0 0.0
  %4721 = vmatprep.subr.mxu0 0.0
  %4722 = vmatpush1.xpose.msra.mxu0 0.0
  %4723 = vmatprep.subr.mxu0 0.0
  %4724 = vmatpush1.xpose.msra.mxu0 0.0
  %4725 = vmatprep.subr.mxu0 0.0
  %4726 = vmatpush1.xpose.msra.mxu0 0.0
  %4727 = vmatprep.subr.mxu0 0.0
  %4728 = vmatpush1.xpose.msra.mxu0 0.0
  %4729 = vmatprep.subr.mxu0 0.0
  %4730 = vmatpush1.xpose.msra.mxu0 0.0
  %4731 = vmatprep.mubr.f32.mxu0 0.0
  %4732 = vmatmul.mubr.f32.gmra.mrb[0].mxu0 %v4659
  %v4733 = vpop.f32.mrb[0].mxu0
  %v4734 = vadd.f32 0.0, %v4733
  %v4735 = vpop.f32.mrb[0].mxu0
  %4736 = vmatprep.mubr.f32.mxu0 0.0
  %4737 = vmatmul.mubr.f32.gmra.mrb[0].mxu0 %v4662
  %v4738 = vpop.f32.mrb[0].mxu0
  %v4739 = vadd.f32 0.0, %v4738
  %v4740 = vpop.f32.mrb[0].mxu0
  %4741 = vdwg.mxu0
  %v4742 = vmul.f32 %v4734, 0.17677669
  %v4743 = vmul.f32 %v4739, 0.17677669
  %v4744 = vadd.f32 %v4742, %v296
  %v4745 = vadd.f32 %v4743, %v297
  %v4746 = vsel %vm1947, %v4744, -inf
  %4747 = vmax.xlane.f32.xlu0 %v4746
  %v4748 = vpop.xlane.xlu0 %4747
  %v4749 = vsel %vm1947, %v4745, -inf
  %4750 = vmax.xlane.f32.xlu0 %v4749
  %v4751 = vpop.xlane.xlu0 %4750
  %v4752 = vsub.f32 %v4744, %v4748
  %v4753 = vsub.f32 %v4745, %v4751
  %v4754 = vmul.f32 %v4752, 1.442695
  %v4755 = vpow.pop %v4754
  %v4756 = vmul.f32 %v4753, 1.442695
  %v4757 = vpow.pop %v4756
  %v4758 = vsel %vm1947, %v4755, 0.0
  %4759 = vadd.xlane.f32.xlu0 %v4758
  %v4760 = vpop.xlane.xlu0 %4759
  %v4761 = vsel %vm1947, %v4757, 0.0
  %4762 = vadd.xlane.f32.xlu0 %v4761
  %v4763 = vpop.xlane.xlu0 %4762
  %v4764 = vrcp.pop %v4760
  %v4765 = vmul.f32 %v4755, %v4764
  %v4766 = vrcp.pop %v4763
  %v4767 = vmul.f32 %v4757, %v4766
  %v4769 = vsel %vm1947, %v4765, 0
  %v4772 = vsel %vm1947, %v4767, 0
  %4774 = vmatprep.subr.mxu0 0.0
  %4775 = vmatpush1.msra.mxu0 %v4655
  %4776 = vmatprep.subr.mxu0 0.0
  %4777 = vmatpush1.msra.mxu0 0.0
  %4778 = vmatprep.subr.mxu0 0.0
  %4779 = vmatpush1.msra.mxu0 0.0
  %4780 = vmatprep.subr.mxu0 0.0
  %4781 = vmatpush1.msra.mxu0 0.0
  %4782 = vmatprep.subr.mxu0 0.0
  %4783 = vmatpush1.msra.mxu0 0.0
  %4784 = vmatprep.subr.mxu0 0.0
  %4785 = vmatpush1.msra.mxu0 0.0
  %4786 = vmatprep.subr.mxu0 0.0
  %4787 = vmatpush1.msra.mxu0 0.0
  %4788 = vmatprep.subr.mxu0 0.0
  %4789 = vmatpush1.msra.mxu0 0.0
  %4790 = vmatprep.subr.mxu0 0.0
  %4791 = vmatpush1.msra.mxu0 0.0
  %4792 = vmatprep.subr.mxu0 0.0
  %4793 = vmatpush1.msra.mxu0 0.0
  %4794 = vmatprep.subr.mxu0 0.0
  %4795 = vmatpush1.msra.mxu0 0.0
  %4796 = vmatprep.subr.mxu0 0.0
  %4797 = vmatpush1.msra.mxu0 0.0
  %4798 = vmatprep.subr.mxu0 0.0
  %4799 = vmatpush1.msra.mxu0 0.0
  %4800 = vmatprep.subr.mxu0 0.0
  %4801 = vmatpush1.msra.mxu0 0.0
  %4802 = vmatprep.subr.mxu0 0.0
  %4803 = vmatpush1.msra.mxu0 0.0
  %4804 = vmatprep.subr.mxu0 0.0
  %4805 = vmatpush1.msra.mxu0 0.0
  %4806 = vmatprep.subr.mxu0 0.0
  %4807 = vmatpush1.msra.mxu0 0.0
  %4808 = vmatprep.subr.mxu0 0.0
  %4809 = vmatpush1.msra.mxu0 0.0
  %4810 = vmatprep.subr.mxu0 0.0
  %4811 = vmatpush1.msra.mxu0 0.0
  %4812 = vmatprep.subr.mxu0 0.0
  %4813 = vmatpush1.msra.mxu0 0.0
  %4814 = vmatprep.subr.mxu0 0.0
  %4815 = vmatpush1.msra.mxu0 0.0
  %4816 = vmatprep.subr.mxu0 0.0
  %4817 = vmatpush1.msra.mxu0 0.0
  %4818 = vmatprep.subr.mxu0 0.0
  %4819 = vmatpush1.msra.mxu0 0.0
  %4820 = vmatprep.subr.mxu0 0.0
  %4821 = vmatpush1.msra.mxu0 0.0
  %4822 = vmatprep.subr.mxu0 0.0
  %4823 = vmatpush1.msra.mxu0 0.0
  %4824 = vmatprep.subr.mxu0 0.0
  %4825 = vmatpush1.msra.mxu0 0.0
  %4826 = vmatprep.subr.mxu0 0.0
  %4827 = vmatpush1.msra.mxu0 0.0
  %4828 = vmatprep.subr.mxu0 0.0
  %4829 = vmatpush1.msra.mxu0 0.0
  %4830 = vmatprep.subr.mxu0 0.0
  %4831 = vmatpush1.msra.mxu0 0.0
  %4832 = vmatprep.subr.mxu0 0.0
  %4833 = vmatpush1.msra.mxu0 0.0
  %4834 = vmatprep.subr.mxu0 0.0
  %4835 = vmatpush1.msra.mxu0 0.0
  %4836 = vmatprep.subr.mxu0 0.0
  %4837 = vmatpush1.msra.mxu0 0.0
  %4838 = vmatprep.mubr.f32.mxu0 0.0
  %4839 = vmatmul.mubr.f32.gmra.mrb[0].mxu0 %v4769
  %v4840 = vpop.f32.mrb[0].mxu0
  %v4841 = vadd.f32 0.0, %v4840
  %v4842 = vpop.f32.mrb[0].mxu0
  %4843 = vmatprep.mubr.f32.mxu0 0.0
  %4844 = vmatmul.mubr.f32.gmra.mrb[0].mxu0 %v4772
  %v4845 = vpop.f32.mrb[0].mxu0
  %v4846 = vadd.f32 0.0, %v4845
  %v4847 = vpop.f32.mrb[0].mxu0
  %4848 = vdwg.mxu0
  %4849 = vrot.lane.b32.xlu0 %v4464, 96
  %v4850 = vpop.permute.xlu0 %4849
  %4851 = vrot.lane.b32.xlu0 %v4469, 96
  %v4852 = vpop.permute.xlu0 %4851
  %4853 = vrot.lane.b32.xlu0 %v4562, 96
  %v4854 = vpop.permute.xlu0 %4853
  %v4855 = vsel %vm592, %v4850, 0
  %v4857 = vsel %vm592, %v4852, 0
  %v4859 = vsel %vm592, %v4854, 0
  %4861 = vmatprep.subr.mxu0 0.0
  %4862 = vmatpush1.xpose.msra.mxu0 %v4859
  %4863 = vmatprep.subr.mxu0 0.0
  %4864 = vmatpush1.xpose.msra.mxu0 0.0
  %4865 = vmatprep.subr.mxu0 0.0
  %4866 = vmatpush1.xpose.msra.mxu0 0.0
  %4867 = vmatprep.subr.mxu0 0.0
  %4868 = vmatpush1.xpose.msra.mxu0 0.0
  %4869 = vmatprep.subr.mxu0 0.0
  %4870 = vmatpush1.xpose.msra.mxu0 0.0
  %4871 = vmatprep.subr.mxu0 0.0
  %4872 = vmatpush1.xpose.msra.mxu0 0.0
  %4873 = vmatprep.subr.mxu0 0.0
  %4874 = vmatpush1.xpose.msra.mxu0 0.0
  %4875 = vmatprep.subr.mxu0 0.0
  %4876 = vmatpush1.xpose.msra.mxu0 0.0
  %4877 = vmatprep.subr.mxu0 0.0
  %4878 = vmatpush1.xpose.msra.mxu0 0.0
  %4879 = vmatprep.subr.mxu0 0.0
  %4880 = vmatpush1.xpose.msra.mxu0 0.0
  %4881 = vmatprep.subr.mxu0 0.0
  %4882 = vmatpush1.xpose.msra.mxu0 0.0
  %4883 = vmatprep.subr.mxu0 0.0
  %4884 = vmatpush1.xpose.msra.mxu0 0.0
  %4885 = vmatprep.subr.mxu0 0.0
  %4886 = vmatpush1.xpose.msra.mxu0 0.0
  %4887 = vmatprep.subr.mxu0 0.0
  %4888 = vmatpush1.xpose.msra.mxu0 0.0
  %4889 = vmatprep.subr.mxu0 0.0
  %4890 = vmatpush1.xpose.msra.mxu0 0.0
  %4891 = vmatprep.subr.mxu0 0.0
  %4892 = vmatpush1.xpose.msra.mxu0 0.0
  %4893 = vmatprep.subr.mxu0 0.0
  %4894 = vmatpush1.xpose.msra.mxu0 0.0
  %4895 = vmatprep.subr.mxu0 0.0
  %4896 = vmatpush1.xpose.msra.mxu0 0.0
  %4897 = vmatprep.subr.mxu0 0.0
  %4898 = vmatpush1.xpose.msra.mxu0 0.0
  %4899 = vmatprep.subr.mxu0 0.0
  %4900 = vmatpush1.xpose.msra.mxu0 0.0
  %4901 = vmatprep.subr.mxu0 0.0
  %4902 = vmatpush1.xpose.msra.mxu0 0.0
  %4903 = vmatprep.subr.mxu0 0.0
  %4904 = vmatpush1.xpose.msra.mxu0 0.0
  %4905 = vmatprep.subr.mxu0 0.0
  %4906 = vmatpush1.xpose.msra.mxu0 0.0
  %4907 = vmatprep.subr.mxu0 0.0
  %4908 = vmatpush1.xpose.msra.mxu0 0.0
  %4909 = vmatprep.subr.mxu0 0.0
  %4910 = vmatpush1.xpose.msra.mxu0 0.0
  %4911 = vmatprep.subr.mxu0 0.0
  %4912 = vmatpush1.xpose.msra.mxu0 0.0
  %4913 = vmatprep.subr.mxu0 0.0
  %4914 = vmatpush1.xpose.msra.mxu0 0.0
  %4915 = vmatprep.subr.mxu0 0.0
  %4916 = vmatpush1.xpose.msra.mxu0 0.0
  %4917 = vmatprep.subr.mxu0 0.0
  %4918 = vmatpush1.xpose.msra.mxu0 0.0
  %4919 = vmatprep.subr.mxu0 0.0
  %4920 = vmatpush1.xpose.msra.mxu0 0.0
  %4921 = vmatprep.subr.mxu0 0.0
  %4922 = vmatpush1.xpose.msra.mxu0 0.0
  %4923 = vmatprep.subr.mxu0 0.0
  %4924 = vmatpush1.xpose.msra.mxu0 0.0
  %4925 = vmatprep.mubr.f32.mxu0 0.0
  %4926 = vmatmul.mubr.f32.gmra.mrb[0].mxu0 %v4855
  %v4927 = vpop.f32.mrb[0].mxu0
  %v4928 = vadd.f32 0.0, %v4927
  %v4929 = vpop.f32.mrb[0].mxu0
  %4930 = vmatprep.mubr.f32.mxu0 0.0
  %4931 = vmatmul.mubr.f32.gmra.mrb[0].mxu0 %v4857
  %v4932 = vpop.f32.mrb[0].mxu0
  %v4933 = vadd.f32 0.0, %v4932
  %v4934 = vpop.f32.mrb[0].mxu0
  %4935 = vdwg.mxu0
  %v4936 = vmul.f32 %v4928, 0.17677669
  %v4937 = vmul.f32 %v4933, 0.17677669
  %v4938 = vadd.f32 %v4936, %v296
  %v4939 = vadd.f32 %v4937, %v297
  %v4940 = vsel %vm1947, %v4938, -inf
  %4941 = vmax.xlane.f32.xlu0 %v4940
  %v4942 = vpop.xlane.xlu0 %4941
  %v4943 = vsel %vm1947, %v4939, -inf
  %4944 = vmax.xlane.f32.xlu0 %v4943
  %v4945 = vpop.xlane.xlu0 %4944
  %v4946 = vsub.f32 %v4938, %v4942
  %v4947 = vsub.f32 %v4939, %v4945
  %v4948 = vmul.f32 %v4946, 1.442695
  %v4949 = vpow.pop %v4948
  %v4950 = vmul.f32 %v4947, 1.442695
  %v4951 = vpow.pop %v4950
  %v4952 = vsel %vm1947, %v4949, 0.0
  %4953 = vadd.xlane.f32.xlu0 %v4952
  %v4954 = vpop.xlane.xlu0 %4953
  %v4955 = vsel %vm1947, %v4951, 0.0
  %4956 = vadd.xlane.f32.xlu0 %v4955
  %v4957 = vpop.xlane.xlu0 %4956
  %v4958 = vrcp.pop %v4954
  %v4959 = vmul.f32 %v4949, %v4958
  %v4960 = vrcp.pop %v4957
  %v4961 = vmul.f32 %v4951, %v4960
  %4963 = vrot.lane.b32.xlu0 %v4655, 96
  %v4964 = vpop.permute.xlu0 %4963
  %v4967 = vsel %vm1947, %v4959, 0
  %v4970 = vsel %vm1947, %v4961, 0
  %4972 = vmatprep.subr.mxu0 0.0
  %4973 = vmatpush1.msra.mxu0 %v4964
  %4974 = vmatprep.subr.mxu0 0.0
  %4975 = vmatpush1.msra.mxu0 0.0
  %4976 = vmatprep.subr.mxu0 0.0
  %4977 = vmatpush1.msra.mxu0 0.0
  %4978 = vmatprep.subr.mxu0 0.0
  %4979 = vmatpush1.msra.mxu0 0.0
  %4980 = vmatprep.subr.mxu0 0.0
  %4981 = vmatpush1.msra.mxu0 0.0
  %4982 = vmatprep.subr.mxu0 0.0
  %4983 = vmatpush1.msra.mxu0 0.0
  %4984 = vmatprep.subr.mxu0 0.0
  %4985 = vmatpush1.msra.mxu0 0.0
  %4986 = vmatprep.subr.mxu0 0.0
  %4987 = vmatpush1.msra.mxu0 0.0
  %4988 = vmatprep.subr.mxu0 0.0
  %4989 = vmatpush1.msra.mxu0 0.0
  %4990 = vmatprep.subr.mxu0 0.0
  %4991 = vmatpush1.msra.mxu0 0.0
  %4992 = vmatprep.subr.mxu0 0.0
  %4993 = vmatpush1.msra.mxu0 0.0
  %4994 = vmatprep.subr.mxu0 0.0
  %4995 = vmatpush1.msra.mxu0 0.0
  %4996 = vmatprep.subr.mxu0 0.0
  %4997 = vmatpush1.msra.mxu0 0.0
  %4998 = vmatprep.subr.mxu0 0.0
  %4999 = vmatpush1.msra.mxu0 0.0
  %5000 = vmatprep.subr.mxu0 0.0
  %5001 = vmatpush1.msra.mxu0 0.0
  %5002 = vmatprep.subr.mxu0 0.0
  %5003 = vmatpush1.msra.mxu0 0.0
  %5004 = vmatprep.subr.mxu0 0.0
  %5005 = vmatpush1.msra.mxu0 0.0
  %5006 = vmatprep.subr.mxu0 0.0
  %5007 = vmatpush1.msra.mxu0 0.0
  %5008 = vmatprep.subr.mxu0 0.0
  %5009 = vmatpush1.msra.mxu0 0.0
  %5010 = vmatprep.subr.mxu0 0.0
  %5011 = vmatpush1.msra.mxu0 0.0
  %5012 = vmatprep.subr.mxu0 0.0
  %5013 = vmatpush1.msra.mxu0 0.0
  %5014 = vmatprep.subr.mxu0 0.0
  %5015 = vmatpush1.msra.mxu0 0.0
  %5016 = vmatprep.subr.mxu0 0.0
  %5017 = vmatpush1.msra.mxu0 0.0
  %5018 = vmatprep.subr.mxu0 0.0
  %5019 = vmatpush1.msra.mxu0 0.0
  %5020 = vmatprep.subr.mxu0 0.0
  %5021 = vmatpush1.msra.mxu0 0.0
  %5022 = vmatprep.subr.mxu0 0.0
  %5023 = vmatpush1.msra.mxu0 0.0
  %5024 = vmatprep.subr.mxu0 0.0
  %5025 = vmatpush1.msra.mxu0 0.0
  %5026 = vmatprep.subr.mxu0 0.0
  %5027 = vmatpush1.msra.mxu0 0.0
  %5028 = vmatprep.subr.mxu0 0.0
  %5029 = vmatpush1.msra.mxu0 0.0
  %5030 = vmatprep.subr.mxu0 0.0
  %5031 = vmatpush1.msra.mxu0 0.0
  %5032 = vmatprep.subr.mxu0 0.0
  %5033 = vmatpush1.msra.mxu0 0.0
  %5034 = vmatprep.subr.mxu0 0.0
  %5035 = vmatpush1.msra.mxu0 0.0
  %5036 = vmatprep.mubr.f32.mxu0 0.0
  %5037 = vmatmul.mubr.f32.gmra.mrb[0].mxu0 %v4967
  %v5038 = vpop.f32.mrb[0].mxu0
  %v5039 = vadd.f32 0.0, %v5038
  %v5040 = vpop.f32.mrb[0].mxu0
  %5041 = vmatprep.mubr.f32.mxu0 0.0
  %5042 = vmatmul.mubr.f32.gmra.mrb[0].mxu0 %v4970
  %v5043 = vpop.f32.mrb[0].mxu0
  %v5044 = vadd.f32 0.0, %v5043
  %v5045 = vpop.f32.mrb[0].mxu0
  %5046 = vdwg.mxu0
  %5047 = vrot.lane.b32.xlu0 %v4464, 64
  %v5048 = vpop.permute.xlu0 %5047
  %5049 = vrot.lane.b32.xlu0 %v4469, 64
  %v5050 = vpop.permute.xlu0 %5049
  %5051 = vrot.lane.b32.xlu0 %v4562, 64
  %v5052 = vpop.permute.xlu0 %5051
  %v5053 = vsel %vm592, %v5048, 0
  %v5055 = vsel %vm592, %v5050, 0
  %v5057 = vsel %vm592, %v5052, 0
  %5059 = vmatprep.subr.mxu0 0.0
  %5060 = vmatpush1.xpose.msra.mxu0 %v5057
  %5061 = vmatprep.subr.mxu0 0.0
  %5062 = vmatpush1.xpose.msra.mxu0 0.0
  %5063 = vmatprep.subr.mxu0 0.0
  %5064 = vmatpush1.xpose.msra.mxu0 0.0
  %5065 = vmatprep.subr.mxu0 0.0
  %5066 = vmatpush1.xpose.msra.mxu0 0.0
  %5067 = vmatprep.subr.mxu0 0.0
  %5068 = vmatpush1.xpose.msra.mxu0 0.0
  %5069 = vmatprep.subr.mxu0 0.0
  %5070 = vmatpush1.xpose.msra.mxu0 0.0
  %5071 = vmatprep.subr.mxu0 0.0
  %5072 = vmatpush1.xpose.msra.mxu0 0.0
  %5073 = vmatprep.subr.mxu0 0.0
  %5074 = vmatpush1.xpose.msra.mxu0 0.0
  %5075 = vmatprep.subr.mxu0 0.0
  %5076 = vmatpush1.xpose.msra.mxu0 0.0
  %5077 = vmatprep.subr.mxu0 0.0
  %5078 = vmatpush1.xpose.msra.mxu0 0.0
  %5079 = vmatprep.subr.mxu0 0.0
  %5080 = vmatpush1.xpose.msra.mxu0 0.0
  %5081 = vmatprep.subr.mxu0 0.0
  %5082 = vmatpush1.xpose.msra.mxu0 0.0
  %5083 = vmatprep.subr.mxu0 0.0
  %5084 = vmatpush1.xpose.msra.mxu0 0.0
  %5085 = vmatprep.subr.mxu0 0.0
  %5086 = vmatpush1.xpose.msra.mxu0 0.0
  %5087 = vmatprep.subr.mxu0 0.0
  %5088 = vmatpush1.xpose.msra.mxu0 0.0
  %5089 = vmatprep.subr.mxu0 0.0
  %5090 = vmatpush1.xpose.msra.mxu0 0.0
  %5091 = vmatprep.subr.mxu0 0.0
  %5092 = vmatpush1.xpose.msra.mxu0 0.0
  %5093 = vmatprep.subr.mxu0 0.0
  %5094 = vmatpush1.xpose.msra.mxu0 0.0
  %5095 = vmatprep.subr.mxu0 0.0
  %5096 = vmatpush1.xpose.msra.mxu0 0.0
  %5097 = vmatprep.subr.mxu0 0.0
  %5098 = vmatpush1.xpose.msra.mxu0 0.0
  %5099 = vmatprep.subr.mxu0 0.0
  %5100 = vmatpush1.xpose.msra.mxu0 0.0
  %5101 = vmatprep.subr.mxu0 0.0
  %5102 = vmatpush1.xpose.msra.mxu0 0.0
  %5103 = vmatprep.subr.mxu0 0.0
  %5104 = vmatpush1.xpose.msra.mxu0 0.0
  %5105 = vmatprep.subr.mxu0 0.0
  %5106 = vmatpush1.xpose.msra.mxu0 0.0
  %5107 = vmatprep.subr.mxu0 0.0
  %5108 = vmatpush1.xpose.msra.mxu0 0.0
  %5109 = vmatprep.subr.mxu0 0.0
  %5110 = vmatpush1.xpose.msra.mxu0 0.0
  %5111 = vmatprep.subr.mxu0 0.0
  %5112 = vmatpush1.xpose.msra.mxu0 0.0
  %5113 = vmatprep.subr.mxu0 0.0
  %5114 = vmatpush1.xpose.msra.mxu0 0.0
  %5115 = vmatprep.subr.mxu0 0.0
  %5116 = vmatpush1.xpose.msra.mxu0 0.0
  %5117 = vmatprep.subr.mxu0 0.0
  %5118 = vmatpush1.xpose.msra.mxu0 0.0
  %5119 = vmatprep.subr.mxu0 0.0
  %5120 = vmatpush1.xpose.msra.mxu0 0.0
  %5121 = vmatprep.subr.mxu0 0.0
  %5122 = vmatpush1.xpose.msra.mxu0 0.0
  %5123 = vmatprep.mubr.f32.mxu0 0.0
  %5124 = vmatmul.mubr.f32.gmra.mrb[0].mxu0 %v5053
  %v5125 = vpop.f32.mrb[0].mxu0
  %v5126 = vadd.f32 0.0, %v5125
  %v5127 = vpop.f32.mrb[0].mxu0
  %5128 = vmatprep.mubr.f32.mxu0 0.0
  %5129 = vmatmul.mubr.f32.gmra.mrb[0].mxu0 %v5055
  %v5130 = vpop.f32.mrb[0].mxu0
  %v5131 = vadd.f32 0.0, %v5130
  %v5132 = vpop.f32.mrb[0].mxu0
  %5133 = vdwg.mxu0
  %v5134 = vmul.f32 %v5126, 0.17677669
  %v5135 = vmul.f32 %v5131, 0.17677669
  %v5136 = vadd.f32 %v5134, %v296
  %v5137 = vadd.f32 %v5135, %v297
  %v5138 = vsel %vm1947, %v5136, -inf
  %5139 = vmax.xlane.f32.xlu0 %v5138
  %v5140 = vpop.xlane.xlu0 %5139
  %v5141 = vsel %vm1947, %v5137, -inf
  %5142 = vmax.xlane.f32.xlu0 %v5141
  %v5143 = vpop.xlane.xlu0 %5142
  %v5144 = vsub.f32 %v5136, %v5140
  %v5145 = vsub.f32 %v5137, %v5143
  %v5146 = vmul.f32 %v5144, 1.442695
  %v5147 = vpow.pop %v5146
  %v5148 = vmul.f32 %v5145, 1.442695
  %v5149 = vpow.pop %v5148
  %v5150 = vsel %vm1947, %v5147, 0.0
  %5151 = vadd.xlane.f32.xlu0 %v5150
  %v5152 = vpop.xlane.xlu0 %5151
  %v5153 = vsel %vm1947, %v5149, 0.0
  %5154 = vadd.xlane.f32.xlu0 %v5153
  %v5155 = vpop.xlane.xlu0 %5154
  %v5156 = vrcp.pop %v5152
  %v5157 = vmul.f32 %v5147, %v5156
  %v5158 = vrcp.pop %v5155
  %v5159 = vmul.f32 %v5149, %v5158
  %5160 = vrot.lane.b32.xlu0 %v4655, 64
  %v5161 = vpop.permute.xlu0 %5160
  %v5164 = vsel %vm1947, %v5157, 0
  %v5167 = vsel %vm1947, %v5159, 0
  %5169 = vmatprep.subr.mxu0 0.0
  %5170 = vmatpush1.msra.mxu0 %v5161
  %5171 = vmatprep.subr.mxu0 0.0
  %5172 = vmatpush1.msra.mxu0 0.0
  %5173 = vmatprep.subr.mxu0 0.0
  %5174 = vmatpush1.msra.mxu0 0.0
  %5175 = vmatprep.subr.mxu0 0.0
  %5176 = vmatpush1.msra.mxu0 0.0
  %5177 = vmatprep.subr.mxu0 0.0
  %5178 = vmatpush1.msra.mxu0 0.0
  %5179 = vmatprep.subr.mxu0 0.0
  %5180 = vmatpush1.msra.mxu0 0.0
  %5181 = vmatprep.subr.mxu0 0.0
  %5182 = vmatpush1.msra.mxu0 0.0
  %5183 = vmatprep.subr.mxu0 0.0
  %5184 = vmatpush1.msra.mxu0 0.0
  %5185 = vmatprep.subr.mxu0 0.0
  %5186 = vmatpush1.msra.mxu0 0.0
  %5187 = vmatprep.subr.mxu0 0.0
  %5188 = vmatpush1.msra.mxu0 0.0
  %5189 = vmatprep.subr.mxu0 0.0
  %5190 = vmatpush1.msra.mxu0 0.0
  %5191 = vmatprep.subr.mxu0 0.0
  %5192 = vmatpush1.msra.mxu0 0.0
  %5193 = vmatprep.subr.mxu0 0.0
  %5194 = vmatpush1.msra.mxu0 0.0
  %5195 = vmatprep.subr.mxu0 0.0
  %5196 = vmatpush1.msra.mxu0 0.0
  %5197 = vmatprep.subr.mxu0 0.0
  %5198 = vmatpush1.msra.mxu0 0.0
  %5199 = vmatprep.subr.mxu0 0.0
  %5200 = vmatpush1.msra.mxu0 0.0
  %5201 = vmatprep.subr.mxu0 0.0
  %5202 = vmatpush1.msra.mxu0 0.0
  %5203 = vmatprep.subr.mxu0 0.0
  %5204 = vmatpush1.msra.mxu0 0.0
  %5205 = vmatprep.subr.mxu0 0.0
  %5206 = vmatpush1.msra.mxu0 0.0
  %5207 = vmatprep.subr.mxu0 0.0
  %5208 = vmatpush1.msra.mxu0 0.0
  %5209 = vmatprep.subr.mxu0 0.0
  %5210 = vmatpush1.msra.mxu0 0.0
  %5211 = vmatprep.subr.mxu0 0.0
  %5212 = vmatpush1.msra.mxu0 0.0
  %5213 = vmatprep.subr.mxu0 0.0
  %5214 = vmatpush1.msra.mxu0 0.0
  %5215 = vmatprep.subr.mxu0 0.0
  %5216 = vmatpush1.msra.mxu0 0.0
  %5217 = vmatprep.subr.mxu0 0.0
  %5218 = vmatpush1.msra.mxu0 0.0
  %5219 = vmatprep.subr.mxu0 0.0
  %5220 = vmatpush1.msra.mxu0 0.0
  %5221 = vmatprep.subr.mxu0 0.0
  %5222 = vmatpush1.msra.mxu0 0.0
  %5223 = vmatprep.subr.mxu0 0.0
  %5224 = vmatpush1.msra.mxu0 0.0
  %5225 = vmatprep.subr.mxu0 0.0
  %5226 = vmatpush1.msra.mxu0 0.0
  %5227 = vmatprep.subr.mxu0 0.0
  %5228 = vmatpush1.msra.mxu0 0.0
  %5229 = vmatprep.subr.mxu0 0.0
  %5230 = vmatpush1.msra.mxu0 0.0
  %5231 = vmatprep.subr.mxu0 0.0
  %5232 = vmatpush1.msra.mxu0 0.0
  %5233 = vmatprep.mubr.f32.mxu0 0.0
  %5234 = vmatmul.mubr.f32.gmra.mrb[0].mxu0 %v5164
  %v5235 = vpop.f32.mrb[0].mxu0
  %v5236 = vadd.f32 0.0, %v5235
  %v5237 = vpop.f32.mrb[0].mxu0
  %5238 = vmatprep.mubr.f32.mxu0 0.0
  %5239 = vmatmul.mubr.f32.gmra.mrb[0].mxu0 %v5167
  %v5240 = vpop.f32.mrb[0].mxu0
  %v5241 = vadd.f32 0.0, %v5240
  %v5242 = vpop.f32.mrb[0].mxu0
  %5243 = vdwg.mxu0
  %5244 = vrot.lane.b32.xlu0 %v4464, 32
  %v5245 = vpop.permute.xlu0 %5244
  %5246 = vrot.lane.b32.xlu0 %v4469, 32
  %v5247 = vpop.permute.xlu0 %5246
  %5248 = vrot.lane.b32.xlu0 %v4562, 32
  %v5249 = vpop.permute.xlu0 %5248
  %v5250 = vsel %vm592, %v5245, 0
  %v5252 = vsel %vm592, %v5247, 0
  %v5254 = vsel %vm592, %v5249, 0
  %5256 = vmatprep.subr.mxu0 0.0
  %5257 = vmatpush1.xpose.msra.mxu0 %v5254
  %5258 = vmatprep.subr.mxu0 0.0
  %5259 = vmatpush1.xpose.msra.mxu0 0.0
  %5260 = vmatprep.subr.mxu0 0.0
  %5261 = vmatpush1.xpose.msra.mxu0 0.0
  %5262 = vmatprep.subr.mxu0 0.0
  %5263 = vmatpush1.xpose.msra.mxu0 0.0
  %5264 = vmatprep.subr.mxu0 0.0
  %5265 = vmatpush1.xpose.msra.mxu0 0.0
  %5266 = vmatprep.subr.mxu0 0.0
  %5267 = vmatpush1.xpose.msra.mxu0 0.0
  %5268 = vmatprep.subr.mxu0 0.0
  %5269 = vmatpush1.xpose.msra.mxu0 0.0
  %5270 = vmatprep.subr.mxu0 0.0
  %5271 = vmatpush1.xpose.msra.mxu0 0.0
  %5272 = vmatprep.subr.mxu0 0.0
  %5273 = vmatpush1.xpose.msra.mxu0 0.0
  %5274 = vmatprep.subr.mxu0 0.0
  %5275 = vmatpush1.xpose.msra.mxu0 0.0
  %5276 = vmatprep.subr.mxu0 0.0
  %5277 = vmatpush1.xpose.msra.mxu0 0.0
  %5278 = vmatprep.subr.mxu0 0.0
  %5279 = vmatpush1.xpose.msra.mxu0 0.0
  %5280 = vmatprep.subr.mxu0 0.0
  %5281 = vmatpush1.xpose.msra.mxu0 0.0
  %5282 = vmatprep.subr.mxu0 0.0
  %5283 = vmatpush1.xpose.msra.mxu0 0.0
  %5284 = vmatprep.subr.mxu0 0.0
  %5285 = vmatpush1.xpose.msra.mxu0 0.0
  %5286 = vmatprep.subr.mxu0 0.0
  %5287 = vmatpush1.xpose.msra.mxu0 0.0
  %5288 = vmatprep.subr.mxu0 0.0
  %5289 = vmatpush1.xpose.msra.mxu0 0.0
  %5290 = vmatprep.subr.mxu0 0.0
  %5291 = vmatpush1.xpose.msra.mxu0 0.0
  %5292 = vmatprep.subr.mxu0 0.0
  %5293 = vmatpush1.xpose.msra.mxu0 0.0
  %5294 = vmatprep.subr.mxu0 0.0
  %5295 = vmatpush1.xpose.msra.mxu0 0.0
  %5296 = vmatprep.subr.mxu0 0.0
  %5297 = vmatpush1.xpose.msra.mxu0 0.0
  %5298 = vmatprep.subr.mxu0 0.0
  %5299 = vmatpush1.xpose.msra.mxu0 0.0
  %5300 = vmatprep.subr.mxu0 0.0
  %5301 = vmatpush1.xpose.msra.mxu0 0.0
  %5302 = vmatprep.subr.mxu0 0.0
  %5303 = vmatpush1.xpose.msra.mxu0 0.0
  %5304 = vmatprep.subr.mxu0 0.0
  %5305 = vmatpush1.xpose.msra.mxu0 0.0
  %5306 = vmatprep.subr.mxu0 0.0
  %5307 = vmatpush1.xpose.msra.mxu0 0.0
  %5308 = vmatprep.subr.mxu0 0.0
  %5309 = vmatpush1.xpose.msra.mxu0 0.0
  %5310 = vmatprep.subr.mxu0 0.0
  %5311 = vmatpush1.xpose.msra.mxu0 0.0
  %5312 = vmatprep.subr.mxu0 0.0
  %5313 = vmatpush1.xpose.msra.mxu0 0.0
  %5314 = vmatprep.subr.mxu0 0.0
  %5315 = vmatpush1.xpose.msra.mxu0 0.0
  %5316 = vmatprep.subr.mxu0 0.0
  %5317 = vmatpush1.xpose.msra.mxu0 0.0
  %5318 = vmatprep.subr.mxu0 0.0
  %5319 = vmatpush1.xpose.msra.mxu0 0.0
  %5320 = vmatprep.mubr.f32.mxu0 0.0
  %5321 = vmatmul.mubr.f32.gmra.mrb[0].mxu0 %v5250
  %v5322 = vpop.f32.mrb[0].mxu0
  %v5323 = vadd.f32 0.0, %v5322
  %v5324 = vpop.f32.mrb[0].mxu0
  %5325 = vmatprep.mubr.f32.mxu0 0.0
  %5326 = vmatmul.mubr.f32.gmra.mrb[0].mxu0 %v5252
  %v5327 = vpop.f32.mrb[0].mxu0
  %v5328 = vadd.f32 0.0, %v5327
  %v5329 = vpop.f32.mrb[0].mxu0
  %5330 = vdwg.mxu0
  %v5331 = vmul.f32 %v5323, 0.17677669
  %v5332 = vmul.f32 %v5328, 0.17677669
  %v5333 = vadd.f32 %v5331, %v296
  %v5334 = vadd.f32 %v5332, %v297
  %v5335 = vsel %vm1947, %v5333, -inf
  %5336 = vmax.xlane.f32.xlu0 %v5335
  %v5337 = vpop.xlane.xlu0 %5336
  %v5338 = vsel %vm1947, %v5334, -inf
  %5339 = vmax.xlane.f32.xlu0 %v5338
  %v5340 = vpop.xlane.xlu0 %5339
  %v5341 = vsub.f32 %v5333, %v5337
  %v5342 = vsub.f32 %v5334, %v5340
  %v5343 = vmul.f32 %v5341, 1.442695
  %v5344 = vpow.pop %v5343
  %v5345 = vmul.f32 %v5342, 1.442695
  %v5346 = vpow.pop %v5345
  %v5347 = vsel %vm1947, %v5344, 0.0
  %5348 = vadd.xlane.f32.xlu0 %v5347
  %v5349 = vpop.xlane.xlu0 %5348
  %v5350 = vsel %vm1947, %v5346, 0.0
  %5351 = vadd.xlane.f32.xlu0 %v5350
  %v5352 = vpop.xlane.xlu0 %5351
  %v5353 = vrcp.pop %v5349
  %v5354 = vmul.f32 %v5344, %v5353
  %v5355 = vrcp.pop %v5352
  %v5356 = vmul.f32 %v5346, %v5355
  %5357 = vrot.lane.b32.xlu0 %v4655, 32
  %v5358 = vpop.permute.xlu0 %5357
  %v5361 = vsel %vm1947, %v5354, 0
  %v5364 = vsel %vm1947, %v5356, 0
  %5366 = vmatprep.subr.mxu0 0.0
  %5367 = vmatpush1.msra.mxu0 %v5358
  %5368 = vmatprep.subr.mxu0 0.0
  %5369 = vmatpush1.msra.mxu0 0.0
  %5370 = vmatprep.subr.mxu0 0.0
  %5371 = vmatpush1.msra.mxu0 0.0
  %5372 = vmatprep.subr.mxu0 0.0
  %5373 = vmatpush1.msra.mxu0 0.0
  %5374 = vmatprep.subr.mxu0 0.0
  %5375 = vmatpush1.msra.mxu0 0.0
  %5376 = vmatprep.subr.mxu0 0.0
  %5377 = vmatpush1.msra.mxu0 0.0
  %5378 = vmatprep.subr.mxu0 0.0
  %5379 = vmatpush1.msra.mxu0 0.0
  %5380 = vmatprep.subr.mxu0 0.0
  %5381 = vmatpush1.msra.mxu0 0.0
  %5382 = vmatprep.subr.mxu0 0.0
  %5383 = vmatpush1.msra.mxu0 0.0
  %5384 = vmatprep.subr.mxu0 0.0
  %5385 = vmatpush1.msra.mxu0 0.0
  %5386 = vmatprep.subr.mxu0 0.0
  %5387 = vmatpush1.msra.mxu0 0.0
  %5388 = vmatprep.subr.mxu0 0.0
  %5389 = vmatpush1.msra.mxu0 0.0
  %5390 = vmatprep.subr.mxu0 0.0
  %5391 = vmatpush1.msra.mxu0 0.0
  %5392 = vmatprep.subr.mxu0 0.0
  %5393 = vmatpush1.msra.mxu0 0.0
  %5394 = vmatprep.subr.mxu0 0.0
  %5395 = vmatpush1.msra.mxu0 0.0
  %5396 = vmatprep.subr.mxu0 0.0
  %5397 = vmatpush1.msra.mxu0 0.0
  %5398 = vmatprep.subr.mxu0 0.0
  %5399 = vmatpush1.msra.mxu0 0.0
  %5400 = vmatprep.subr.mxu0 0.0
  %5401 = vmatpush1.msra.mxu0 0.0
  %5402 = vmatprep.subr.mxu0 0.0
  %5403 = vmatpush1.msra.mxu0 0.0
  %5404 = vmatprep.subr.mxu0 0.0
  %5405 = vmatpush1.msra.mxu0 0.0
  %5406 = vmatprep.subr.mxu0 0.0
  %5407 = vmatpush1.msra.mxu0 0.0
  %5408 = vmatprep.subr.mxu0 0.0
  %5409 = vmatpush1.msra.mxu0 0.0
  %5410 = vmatprep.subr.mxu0 0.0
  %5411 = vmatpush1.msra.mxu0 0.0
  %5412 = vmatprep.subr.mxu0 0.0
  %5413 = vmatpush1.msra.mxu0 0.0
  %5414 = vmatprep.subr.mxu0 0.0
  %5415 = vmatpush1.msra.mxu0 0.0
  %5416 = vmatprep.subr.mxu0 0.0
  %5417 = vmatpush1.msra.mxu0 0.0
  %5418 = vmatprep.subr.mxu0 0.0
  %5419 = vmatpush1.msra.mxu0 0.0
  %5420 = vmatprep.subr.mxu0 0.0
  %5421 = vmatpush1.msra.mxu0 0.0
  %5422 = vmatprep.subr.mxu0 0.0
  %5423 = vmatpush1.msra.mxu0 0.0
  %5424 = vmatprep.subr.mxu0 0.0
  %5425 = vmatpush1.msra.mxu0 0.0
  %5426 = vmatprep.subr.mxu0 0.0
  %5427 = vmatpush1.msra.mxu0 0.0
  %5428 = vmatprep.subr.mxu0 0.0
  %5429 = vmatpush1.msra.mxu0 0.0
  %5430 = vmatprep.mubr.f32.mxu0 0.0
  %5431 = vmatmul.mubr.f32.gmra.mrb[0].mxu0 %v5361
  %v5432 = vpop.f32.mrb[0].mxu0
  %v5433 = vadd.f32 0.0, %v5432
  %v5434 = vpop.f32.mrb[0].mxu0
  %5435 = vmatprep.mubr.f32.mxu0 0.0
  %5436 = vmatmul.mubr.f32.gmra.mrb[0].mxu0 %v5364
  %v5437 = vpop.f32.mrb[0].mxu0
  %v5438 = vadd.f32 0.0, %v5437
  %v5439 = vpop.f32.mrb[0].mxu0
  %5440 = vdwg.mxu0
  %5443 = vrot.lane.b32.xlu0 %v5039, 32
  %v5444 = vpop.permute.xlu0 %5443
  %5445 = vrot.lane.b32.xlu0 %v5044, 32
  %v5446 = vpop.permute.xlu0 %5445
  %5451 = vrot.lane.b32.xlu0 %v5236, 64
  %v5452 = vpop.permute.xlu0 %5451
  %5453 = vrot.lane.b32.xlu0 %v5241, 64
  %v5454 = vpop.permute.xlu0 %5453
  %5459 = vrot.lane.b32.xlu0 %v5433, 96
  %v5460 = vpop.permute.xlu0 %5459
  %5461 = vrot.lane.b32.xlu0 %v5438, 96
  %v5462 = vpop.permute.xlu0 %5461
  %v5465 = vsel %vm592, %v4841, %v5444
  %v5466 = vsel %vm592, %v4846, %v5446
  %v5467 = vsel %vm1428, %v5465, %v5452
  %v5468 = vsel %vm1428, %v5466, %v5454
  %v5469 = vsel %vm1431, %v5467, %v5460
  %v5470 = vsel %vm1431, %v5468, %v5462
  %s5471 = scalar_lea.vmem %s12, 128
  %v5472 = vld [vmem:[%s5471] sm:$0xff]
  %v5473 = vld [vmem:[%s5471 + $0x8] sm:$0xff]
  %v5474 = vld [vmem:[%s5471 + $0x10] sm:$0xff]
  %v5475 = vld [vmem:[%s5471 + $0x18] sm:$0xff]
  %v5476 = vld [vmem:[%s5471 + $0x20] sm:$0xff]
  %v5477 = vld [vmem:[%s5471 + $0x28] sm:$0xff]
  %v5478 = vld [vmem:[%s5471 + $0x30] sm:$0xff]
  %v5479 = vld [vmem:[%s5471 + $0x38] sm:$0xff]
  %v5480 = vld [vmem:[%s5471 + $0x40] sm:$0xff]
  %v5481 = vld [vmem:[%s5471 + $0x48] sm:$0xff]
  %v5482 = vld [vmem:[%s5471 + $0x50] sm:$0xff]
  %v5483 = vld [vmem:[%s5471 + $0x58] sm:$0xff]
  %v5484 = vld [vmem:[%s5471 + $0x60] sm:$0xff]
  %v5485 = vld [vmem:[%s5471 + $0x68] sm:$0xff]
  %v5486 = vld [vmem:[%s5471 + $0x70] sm:$0xff]
  %v5487 = vld [vmem:[%s5471 + $0x78] sm:$0xff]
  %s5488 = scalar_lea.vmem %s13, 1
  %v5489 = vld [vmem:[%s5488] sm:$0x1]
  %v5491 = vlaneseq
  %v5492 = vshrl.u32 %v5491, 7
  %v5493 = vsub.s32 0, %v5492
  %v5494 = vrot.slane %v5489, %v5493
  %5496 = vmatprep.subr.mxu0 0.0
  %5497 = vmatpush1.msra.mxu0 %v5472
  %5498 = vmatprep.subr.mxu0 0.0
  %5499 = vmatpush1.msra.mxu0 %v5473
  %5500 = vmatprep.subr.mxu0 0.0
  %5501 = vmatpush1.msra.mxu0 %v5474
  %5502 = vmatprep.subr.mxu0 0.0
  %5503 = vmatpush1.msra.mxu0 %v5475
  %5504 = vmatprep.subr.mxu0 0.0
  %5505 = vmatpush1.msra.mxu0 %v5476
  %5506 = vmatprep.subr.mxu0 0.0
  %5507 = vmatpush1.msra.mxu0 %v5477
  %5508 = vmatprep.subr.mxu0 0.0
  %5509 = vmatpush1.msra.mxu0 %v5478
  %5510 = vmatprep.subr.mxu0 0.0
  %5511 = vmatpush1.msra.mxu0 %v5479
  %5512 = vmatprep.subr.mxu0 0.0
  %5513 = vmatpush1.msra.mxu0 %v5480
  %5514 = vmatprep.subr.mxu0 0.0
  %5515 = vmatpush1.msra.mxu0 %v5481
  %5516 = vmatprep.subr.mxu0 0.0
  %5517 = vmatpush1.msra.mxu0 %v5482
  %5518 = vmatprep.subr.mxu0 0.0
  %5519 = vmatpush1.msra.mxu0 %v5483
  %5520 = vmatprep.subr.mxu0 0.0
  %5521 = vmatpush1.msra.mxu0 %v5484
  %5522 = vmatprep.subr.mxu0 0.0
  %5523 = vmatpush1.msra.mxu0 %v5485
  %5524 = vmatprep.subr.mxu0 0.0
  %5525 = vmatpush1.msra.mxu0 %v5486
  %5526 = vmatprep.subr.mxu0 0.0
  %5527 = vmatpush1.msra.mxu0 %v5487
  %5528 = vmatprep.subr.mxu0 0.0
  %5529 = vmatpush1.msra.mxu0 0.0
  %5530 = vmatprep.subr.mxu0 0.0
  %5531 = vmatpush1.msra.mxu0 0.0
  %5532 = vmatprep.subr.mxu0 0.0
  %5533 = vmatpush1.msra.mxu0 0.0
  %5534 = vmatprep.subr.mxu0 0.0
  %5535 = vmatpush1.msra.mxu0 0.0
  %5536 = vmatprep.subr.mxu0 0.0
  %5537 = vmatpush1.msra.mxu0 0.0
  %5538 = vmatprep.subr.mxu0 0.0
  %5539 = vmatpush1.msra.mxu0 0.0
  %5540 = vmatprep.subr.mxu0 0.0
  %5541 = vmatpush1.msra.mxu0 0.0
  %5542 = vmatprep.subr.mxu0 0.0
  %5543 = vmatpush1.msra.mxu0 0.0
  %5544 = vmatprep.subr.mxu0 0.0
  %5545 = vmatpush1.msra.mxu0 0.0
  %5546 = vmatprep.subr.mxu0 0.0
  %5547 = vmatpush1.msra.mxu0 0.0
  %5548 = vmatprep.subr.mxu0 0.0
  %5549 = vmatpush1.msra.mxu0 0.0
  %5550 = vmatprep.subr.mxu0 0.0
  %5551 = vmatpush1.msra.mxu0 0.0
  %5552 = vmatprep.subr.mxu0 0.0
  %5553 = vmatpush1.msra.mxu0 0.0
  %5554 = vmatprep.subr.mxu0 0.0
  %5555 = vmatpush1.msra.mxu0 0.0
  %5556 = vmatprep.subr.mxu0 0.0
  %5557 = vmatpush1.msra.mxu0 0.0
  %5558 = vmatprep.subr.mxu0 0.0
  %5559 = vmatpush1.msra.mxu0 0.0
  %5560 = vmatprep.mubr.f32.mxu0 0.0
  %5561 = vmatmul.mubr.f32.gmra.mrb[0].mxu0 %v5469
  %v5562 = vpop.f32.mrb[0].mxu0
  %v5563 = vadd.f32 %v5494, %v5562
  %v5564 = vpop.f32.mrb[0].mxu0
  %5565 = vmatprep.mubr.f32.mxu0 0.0
  %5566 = vmatmul.mubr.f32.gmra.mrb[0].mxu0 %v5470
  %v5567 = vpop.f32.mrb[0].mxu0
  %v5568 = vadd.f32 %v5494, %v5567
  %v5569 = vpop.f32.mrb[0].mxu0
  %5570 = vdwg.mxu0
  %v5571 = vadd.f32 %v4370, %v5563
  %v5572 = vadd.f32 %v4371, %v5568
  %s5573 = scalar_lea.vmem %s16, 1
  %v5574 = vld [vmem:[%s5573] sm:$0x1]
  %s5575 = scalar_lea.vmem %s17, 1
  %v5576 = vld [vmem:[%s5575] sm:$0x1]
  %5577 = vadd.xlane.f32.xlu0 %v5571
  %v5578 = vpop.xlane.xlu0 %5577
  %5579 = vadd.xlane.f32.xlu0 %v5572
  %v5580 = vpop.xlane.xlu0 %5579
  %v5581 = vmul.f32 %v5578, %v1540
  %v5582 = vmul.f32 %v5580, %v1540
  %v5583 = vsub.f32 %v5571, %v5581
  %v5584 = vsub.f32 %v5572, %v5582
  %v5585 = vmul.f32 %v5583, %v5583
  %v5586 = vmul.f32 %v5584, %v5584
  %5587 = vadd.xlane.f32.xlu0 %v5585
  %v5588 = vpop.xlane.xlu0 %5587
  %5589 = vadd.xlane.f32.xlu0 %v5586
  %v5590 = vpop.xlane.xlu0 %5589
  %v5591 = vmul.f32 %v5588, %v1540
  %v5592 = vmul.f32 %v5590, %v1540
  %v5593 = vadd.f32 %v5591, 1e-05
  %v5594 = vadd.f32 %v5592, 1e-05
  %v5595 = vrsqrt.pop %v5593
  %v5596 = vrsqrt.pop %v5594
  %v5597 = vmul.f32 %v5583, %v5595
  %v5598 = vmul.f32 %v5584, %v5596
  %v5600 = vlaneseq
  %v5601 = vshrl.u32 %v5600, 7
  %v5602 = vsub.s32 0, %v5601
  %v5603 = vrot.slane %v5574, %v5602
  %v5605 = vmul.f32 %v5597, %v5603
  %v5606 = vmul.f32 %v5598, %v5603
  %v5608 = vlaneseq
  %v5609 = vshrl.u32 %v5608, 7
  %v5610 = vsub.s32 0, %v5609
  %v5611 = vrot.slane %v5576, %v5610
  %v5613 = vadd.f32 %v5605, %v5611
  %v5614 = vadd.f32 %v5606, %v5611
  %s5615 = scalar_lea.vmem %s20, 256
  %v5616 = vld [vmem:[%s5615] sm:$0xff]
  %v5617 = vld [vmem:[%s5615 + $0x8] sm:$0xff]
  %v5618 = vld [vmem:[%s5615 + $0x10] sm:$0xff]
  %v5619 = vld [vmem:[%s5615 + $0x18] sm:$0xff]
  %v5620 = vld [vmem:[%s5615 + $0x20] sm:$0xff]
  %v5621 = vld [vmem:[%s5615 + $0x28] sm:$0xff]
  %v5622 = vld [vmem:[%s5615 + $0x30] sm:$0xff]
  %v5623 = vld [vmem:[%s5615 + $0x38] sm:$0xff]
  %v5624 = vld [vmem:[%s5615 + $0x40] sm:$0xff]
  %v5625 = vld [vmem:[%s5615 + $0x48] sm:$0xff]
  %v5626 = vld [vmem:[%s5615 + $0x50] sm:$0xff]
  %v5627 = vld [vmem:[%s5615 + $0x58] sm:$0xff]
  %v5628 = vld [vmem:[%s5615 + $0x60] sm:$0xff]
  %v5629 = vld [vmem:[%s5615 + $0x68] sm:$0xff]
  %v5630 = vld [vmem:[%s5615 + $0x70] sm:$0xff]
  %v5631 = vld [vmem:[%s5615 + $0x78] sm:$0xff]
  %v5632 = vld [vmem:[%s5615 + $0x80] sm:$0xff]
  %v5633 = vld [vmem:[%s5615 + $0x88] sm:$0xff]
  %v5634 = vld [vmem:[%s5615 + $0x90] sm:$0xff]
  %v5635 = vld [vmem:[%s5615 + $0x98] sm:$0xff]
  %v5636 = vld [vmem:[%s5615 + $0xa0] sm:$0xff]
  %v5637 = vld [vmem:[%s5615 + $0xa8] sm:$0xff]
  %v5638 = vld [vmem:[%s5615 + $0xb0] sm:$0xff]
  %v5639 = vld [vmem:[%s5615 + $0xb8] sm:$0xff]
  %v5640 = vld [vmem:[%s5615 + $0xc0] sm:$0xff]
  %v5641 = vld [vmem:[%s5615 + $0xc8] sm:$0xff]
  %v5642 = vld [vmem:[%s5615 + $0xd0] sm:$0xff]
  %v5643 = vld [vmem:[%s5615 + $0xd8] sm:$0xff]
  %v5644 = vld [vmem:[%s5615 + $0xe0] sm:$0xff]
  %v5645 = vld [vmem:[%s5615 + $0xe8] sm:$0xff]
  %v5646 = vld [vmem:[%s5615 + $0xf0] sm:$0xff]
  %v5647 = vld [vmem:[%s5615 + $0xf8] sm:$0xff]
  %s5648 = scalar_lea.vmem %s21, 2
  %v5649 = vld [vmem:[%s5648] sm:$0x3]
  %v5651 = vlaneseq
  %v5652 = vshrl.u32 %v5651, 7
  %v5653 = vsub.s32 0, %v5652
  %v5654 = vrot.slane %v5649, %v5653
  %v5655 = vlaneseq
  %v5656 = vshrl.u32 %v5655, 7
  %v5657 = vsub.s32 1, %v5656
  %v5658 = vrot.slane %v5649, %v5657
  %5661 = vmatprep.subr.mxu0 %v5617
  %5662 = vmatpush1.msra.mxu0 %v5616
  %5663 = vmatprep.subr.mxu0 %v5619
  %5664 = vmatpush1.msra.mxu0 %v5618
  %5665 = vmatprep.subr.mxu0 %v5621
  %5666 = vmatpush1.msra.mxu0 %v5620
  %5667 = vmatprep.subr.mxu0 %v5623
  %5668 = vmatpush1.msra.mxu0 %v5622
  %5669 = vmatprep.subr.mxu0 %v5625
  %5670 = vmatpush1.msra.mxu0 %v5624
  %5671 = vmatprep.subr.mxu0 %v5627
  %5672 = vmatpush1.msra.mxu0 %v5626
  %5673 = vmatprep.subr.mxu0 %v5629
  %5674 = vmatpush1.msra.mxu0 %v5628
  %5675 = vmatprep.subr.mxu0 %v5631
  %5676 = vmatpush1.msra.mxu0 %v5630
  %5677 = vmatprep.subr.mxu0 %v5633
  %5678 = vmatpush1.msra.mxu0 %v5632
  %5679 = vmatprep.subr.mxu0 %v5635
  %5680 = vmatpush1.msra.mxu0 %v5634
  %5681 = vmatprep.subr.mxu0 %v5637
  %5682 = vmatpush1.msra.mxu0 %v5636
  %5683 = vmatprep.subr.mxu0 %v5639
  %5684 = vmatpush1.msra.mxu0 %v5638
  %5685 = vmatprep.subr.mxu0 %v5641
  %5686 = vmatpush1.msra.mxu0 %v5640
  %5687 = vmatprep.subr.mxu0 %v5643
  %5688 = vmatpush1.msra.mxu0 %v5642
  %5689 = vmatprep.subr.mxu0 %v5645
  %5690 = vmatpush1.msra.mxu0 %v5644
  %5691 = vmatprep.subr.mxu0 %v5647
  %5692 = vmatpush1.msra.mxu0 %v5646
  %5693 = vmatprep.subr.mxu0 0.0
  %5694 = vmatpush1.msra.mxu0 0.0
  %5695 = vmatprep.subr.mxu0 0.0
  %5696 = vmatpush1.msra.mxu0 0.0
  %5697 = vmatprep.subr.mxu0 0.0
  %5698 = vmatpush1.msra.mxu0 0.0
  %5699 = vmatprep.subr.mxu0 0.0
  %5700 = vmatpush1.msra.mxu0 0.0
  %5701 = vmatprep.subr.mxu0 0.0
  %5702 = vmatpush1.msra.mxu0 0.0
  %5703 = vmatprep.subr.mxu0 0.0
  %5704 = vmatpush1.msra.mxu0 0.0
  %5705 = vmatprep.subr.mxu0 0.0
  %5706 = vmatpush1.msra.mxu0 0.0
  %5707 = vmatprep.subr.mxu0 0.0
  %5708 = vmatpush1.msra.mxu0 0.0
  %5709 = vmatprep.subr.mxu0 0.0
  %5710 = vmatpush1.msra.mxu0 0.0
  %5711 = vmatprep.subr.mxu0 0.0
  %5712 = vmatpush1.msra.mxu0 0.0
  %5713 = vmatprep.subr.mxu0 0.0
  %5714 = vmatpush1.msra.mxu0 0.0
  %5715 = vmatprep.subr.mxu0 0.0
  %5716 = vmatpush1.msra.mxu0 0.0
  %5717 = vmatprep.subr.mxu0 0.0
  %5718 = vmatpush1.msra.mxu0 0.0
  %5719 = vmatprep.subr.mxu0 0.0
  %5720 = vmatpush1.msra.mxu0 0.0
  %5721 = vmatprep.subr.mxu0 0.0
  %5722 = vmatpush1.msra.mxu0 0.0
  %5723 = vmatprep.subr.mxu0 0.0
  %5724 = vmatpush1.msra.mxu0 0.0
  %5725 = vmatprep.mubr.f32.mxu0 0.0
  %5726 = vmatmul.mubr.f32.gmra.mrb[0].mxu0 %v5613
  %v5727 = vpop.f32.mrb[0].mxu0
  %v5728 = vadd.f32 %v5654, %v5727
  %v5729 = vpop.f32.mrb[0].mxu0
  %v5730 = vadd.f32 %v5658, %v5729
  %5731 = vmatprep.mubr.f32.mxu0 0.0
  %5732 = vmatmul.mubr.f32.gmra.mrb[0].mxu0 %v5614
  %v5733 = vpop.f32.mrb[0].mxu0
  %v5734 = vadd.f32 %v5654, %v5733
  %v5735 = vpop.f32.mrb[0].mxu0
  %v5736 = vadd.f32 %v5658, %v5735
  %5737 = vdwg.mxu0
  %v5738 = vmax.f32 %v5728, 0.0
  %v5739 = vmax.f32 %v5730, 0.0
  %v5740 = vmax.f32 %v5734, 0.0
  %v5741 = vmax.f32 %v5736, 0.0
  %s5742 = scalar_lea.vmem %s22, 256
  %v5743 = vld [vmem:[%s5742] sm:$0xff]
  %v5744 = vld [vmem:[%s5742 + $0x8] sm:$0xff]
  %v5745 = vld [vmem:[%s5742 + $0x10] sm:$0xff]
  %v5746 = vld [vmem:[%s5742 + $0x18] sm:$0xff]
  %v5747 = vld [vmem:[%s5742 + $0x20] sm:$0xff]
  %v5748 = vld [vmem:[%s5742 + $0x28] sm:$0xff]
  %v5749 = vld [vmem:[%s5742 + $0x30] sm:$0xff]
  %v5750 = vld [vmem:[%s5742 + $0x38] sm:$0xff]
  %v5751 = vld [vmem:[%s5742 + $0x40] sm:$0xff]
  %v5752 = vld [vmem:[%s5742 + $0x48] sm:$0xff]
  %v5753 = vld [vmem:[%s5742 + $0x50] sm:$0xff]
  %v5754 = vld [vmem:[%s5742 + $0x58] sm:$0xff]
  %v5755 = vld [vmem:[%s5742 + $0x60] sm:$0xff]
  %v5756 = vld [vmem:[%s5742 + $0x68] sm:$0xff]
  %v5757 = vld [vmem:[%s5742 + $0x70] sm:$0xff]
  %v5758 = vld [vmem:[%s5742 + $0x78] sm:$0xff]
  %v5759 = vld [vmem:[%s5742 + $0x80] sm:$0xff]
  %v5760 = vld [vmem:[%s5742 + $0x88] sm:$0xff]
  %v5761 = vld [vmem:[%s5742 + $0x90] sm:$0xff]
  %v5762 = vld [vmem:[%s5742 + $0x98] sm:$0xff]
  %v5763 = vld [vmem:[%s5742 + $0xa0] sm:$0xff]
  %v5764 = vld [vmem:[%s5742 + $0xa8] sm:$0xff]
  %v5765 = vld [vmem:[%s5742 + $0xb0] sm:$0xff]
  %v5766 = vld [vmem:[%s5742 + $0xb8] sm:$0xff]
  %v5767 = vld [vmem:[%s5742 + $0xc0] sm:$0xff]
  %v5768 = vld [vmem:[%s5742 + $0xc8] sm:$0xff]
  %v5769 = vld [vmem:[%s5742 + $0xd0] sm:$0xff]
  %v5770 = vld [vmem:[%s5742 + $0xd8] sm:$0xff]
  %v5771 = vld [vmem:[%s5742 + $0xe0] sm:$0xff]
  %v5772 = vld [vmem:[%s5742 + $0xe8] sm:$0xff]
  %v5773 = vld [vmem:[%s5742 + $0xf0] sm:$0xff]
  %v5774 = vld [vmem:[%s5742 + $0xf8] sm:$0xff]
  %s5775 = scalar_lea.vmem %s23, 1
  %v5776 = vld [vmem:[%s5775] sm:$0x1]
  %v5778 = vlaneseq
  %v5779 = vshrl.u32 %v5778, 7
  %v5780 = vsub.s32 0, %v5779
  %v5781 = vrot.slane %v5776, %v5780
  %5783 = vmatprep.subr.mxu0 0.0
  %5784 = vmatpush1.msra.mxu0 %v5743
  %5785 = vmatprep.subr.mxu0 0.0
  %5786 = vmatpush1.msra.mxu0 %v5744
  %5787 = vmatprep.subr.mxu0 0.0
  %5788 = vmatpush1.msra.mxu0 %v5745
  %5789 = vmatprep.subr.mxu0 0.0
  %5790 = vmatpush1.msra.mxu0 %v5746
  %5791 = vmatprep.subr.mxu0 0.0
  %5792 = vmatpush1.msra.mxu0 %v5747
  %5793 = vmatprep.subr.mxu0 0.0
  %5794 = vmatpush1.msra.mxu0 %v5748
  %5795 = vmatprep.subr.mxu0 0.0
  %5796 = vmatpush1.msra.mxu0 %v5749
  %5797 = vmatprep.subr.mxu0 0.0
  %5798 = vmatpush1.msra.mxu0 %v5750
  %5799 = vmatprep.subr.mxu0 0.0
  %5800 = vmatpush1.msra.mxu0 %v5751
  %5801 = vmatprep.subr.mxu0 0.0
  %5802 = vmatpush1.msra.mxu0 %v5752
  %5803 = vmatprep.subr.mxu0 0.0
  %5804 = vmatpush1.msra.mxu0 %v5753
  %5805 = vmatprep.subr.mxu0 0.0
  %5806 = vmatpush1.msra.mxu0 %v5754
  %5807 = vmatprep.subr.mxu0 0.0
  %5808 = vmatpush1.msra.mxu0 %v5755
  %5809 = vmatprep.subr.mxu0 0.0
  %5810 = vmatpush1.msra.mxu0 %v5756
  %5811 = vmatprep.subr.mxu0 0.0
  %5812 = vmatpush1.msra.mxu0 %v5757
  %5813 = vmatprep.subr.mxu0 0.0
  %5814 = vmatpush1.msra.mxu0 %v5758
  %5815 = vmatprep.subr.mxu0 0.0
  %5816 = vmatpush1.msra.mxu0 %v5759
  %5817 = vmatprep.subr.mxu0 0.0
  %5818 = vmatpush1.msra.mxu0 %v5760
  %5819 = vmatprep.subr.mxu0 0.0
  %5820 = vmatpush1.msra.mxu0 %v5761
  %5821 = vmatprep.subr.mxu0 0.0
  %5822 = vmatpush1.msra.mxu0 %v5762
  %5823 = vmatprep.subr.mxu0 0.0
  %5824 = vmatpush1.msra.mxu0 %v5763
  %5825 = vmatprep.subr.mxu0 0.0
  %5826 = vmatpush1.msra.mxu0 %v5764
  %5827 = vmatprep.subr.mxu0 0.0
  %5828 = vmatpush1.msra.mxu0 %v5765
  %5829 = vmatprep.subr.mxu0 0.0
  %5830 = vmatpush1.msra.mxu0 %v5766
  %5831 = vmatprep.subr.mxu0 0.0
  %5832 = vmatpush1.msra.mxu0 %v5767
  %5833 = vmatprep.subr.mxu0 0.0
  %5834 = vmatpush1.msra.mxu0 %v5768
  %5835 = vmatprep.subr.mxu0 0.0
  %5836 = vmatpush1.msra.mxu0 %v5769
  %5837 = vmatprep.subr.mxu0 0.0
  %5838 = vmatpush1.msra.mxu0 %v5770
  %5839 = vmatprep.subr.mxu0 0.0
  %5840 = vmatpush1.msra.mxu0 %v5771
  %5841 = vmatprep.subr.mxu0 0.0
  %5842 = vmatpush1.msra.mxu0 %v5772
  %5843 = vmatprep.subr.mxu0 0.0
  %5844 = vmatpush1.msra.mxu0 %v5773
  %5845 = vmatprep.subr.mxu0 0.0
  %5846 = vmatpush1.msra.mxu0 %v5774
  %5847 = vmatprep.mubr.f32.mxu0 %v5739
  %5848 = vmatmul.mubr.f32.gmra.mrb[0].mxu0 %v5738
  %v5849 = vpop.f32.mrb[0].mxu0
  %v5850 = vadd.f32 %v5781, %v5849
  %v5851 = vpop.f32.mrb[0].mxu0
  %5852 = vmatprep.mubr.f32.mxu0 %v5741
  %5853 = vmatmul.mubr.f32.gmra.mrb[0].mxu0 %v5740
  %v5854 = vpop.f32.mrb[0].mxu0
  %v5855 = vadd.f32 %v5781, %v5854
  %v5856 = vpop.f32.mrb[0].mxu0
  %5857 = vdwg.mxu0
  %v5858 = vadd.f32 %v5613, %v5850
  %v5859 = vadd.f32 %v5614, %v5855
  %s5860 = scalar_lea.vmem %s18, 1
  %v5861 = vld [vmem:[%s5860] sm:$0x1]
  %s5862 = scalar_lea.vmem %s19, 1
  %v5863 = vld [vmem:[%s5862] sm:$0x1]
  %5864 = vadd.xlane.f32.xlu0 %v5858
  %v5865 = vpop.xlane.xlu0 %5864
  %5866 = vadd.xlane.f32.xlu0 %v5859
  %v5867 = vpop.xlane.xlu0 %5866
  %v5868 = vmul.f32 %v5865, %v1540
  %v5869 = vmul.f32 %v5867, %v1540
  %v5870 = vsub.f32 %v5858, %v5868
  %v5871 = vsub.f32 %v5859, %v5869
  %v5872 = vmul.f32 %v5870, %v5870
  %v5873 = vmul.f32 %v5871, %v5871
  %5874 = vadd.xlane.f32.xlu0 %v5872
  %v5875 = vpop.xlane.xlu0 %5874
  %5876 = vadd.xlane.f32.xlu0 %v5873
  %v5877 = vpop.xlane.xlu0 %5876
  %v5878 = vmul.f32 %v5875, %v1540
  %v5879 = vmul.f32 %v5877, %v1540
  %v5880 = vadd.f32 %v5878, 1e-05
  %v5881 = vadd.f32 %v5879, 1e-05
  %v5882 = vrsqrt.pop %v5880
  %v5883 = vrsqrt.pop %v5881
  %v5884 = vmul.f32 %v5870, %v5882
  %v5885 = vmul.f32 %v5871, %v5883
  %v5887 = vlaneseq
  %v5888 = vshrl.u32 %v5887, 7
  %v5889 = vsub.s32 0, %v5888
  %v5890 = vrot.slane %v5861, %v5889
  %v5892 = vmul.f32 %v5884, %v5890
  %v5893 = vmul.f32 %v5885, %v5890
  %v5895 = vlaneseq
  %v5896 = vshrl.u32 %v5895, 7
  %v5897 = vsub.s32 0, %v5896
  %v5898 = vrot.slane %v5863, %v5897
  %v5900 = vadd.f32 %v5892, %v5898
  %v5901 = vadd.f32 %v5893, %v5898
  %v5902 = vld [vmem:[%s24] sm:$0xff]
  %v5903 = vld [vmem:[%s24 + $0x8] sm:$0xff]
  %v5904 = vld [vmem:[%s24 + $0x10] sm:$0xff]
  %v5905 = vld [vmem:[%s24 + $0x18] sm:$0xff]
  %v5906 = vld [vmem:[%s24 + $0x20] sm:$0xff]
  %v5907 = vld [vmem:[%s24 + $0x28] sm:$0xff]
  %v5908 = vld [vmem:[%s24 + $0x30] sm:$0xff]
  %v5909 = vld [vmem:[%s24 + $0x38] sm:$0xff]
  %v5910 = vld [vmem:[%s24 + $0x40] sm:$0xff]
  %v5911 = vld [vmem:[%s24 + $0x48] sm:$0xff]
  %v5912 = vld [vmem:[%s24 + $0x50] sm:$0xff]
  %v5913 = vld [vmem:[%s24 + $0x58] sm:$0xff]
  %v5914 = vld [vmem:[%s24 + $0x60] sm:$0xff]
  %v5915 = vld [vmem:[%s24 + $0x68] sm:$0xff]
  %v5916 = vld [vmem:[%s24 + $0x70] sm:$0xff]
  %v5917 = vld [vmem:[%s24 + $0x78] sm:$0xff]
  %v5918 = vld [vmem:[%s25] sm:$0x1]
  %v5920 = vlaneseq
  %v5921 = vshrl.u32 %v5920, 7
  %v5922 = vsub.s32 0, %v5921
  %v5923 = vrot.slane %v5918, %v5922
  %5925 = vmatprep.subr.mxu0 0.0
  %5926 = vmatpush1.msra.mxu0 %v5902
  %5927 = vmatprep.subr.mxu0 0.0
  %5928 = vmatpush1.msra.mxu0 %v5903
  %5929 = vmatprep.subr.mxu0 0.0
  %5930 = vmatpush1.msra.mxu0 %v5904
  %5931 = vmatprep.subr.mxu0 0.0
  %5932 = vmatpush1.msra.mxu0 %v5905
  %5933 = vmatprep.subr.mxu0 0.0
  %5934 = vmatpush1.msra.mxu0 %v5906
  %5935 = vmatprep.subr.mxu0 0.0
  %5936 = vmatpush1.msra.mxu0 %v5907
  %5937 = vmatprep.subr.mxu0 0.0
  %5938 = vmatpush1.msra.mxu0 %v5908
  %5939 = vmatprep.subr.mxu0 0.0
  %5940 = vmatpush1.msra.mxu0 %v5909
  %5941 = vmatprep.subr.mxu0 0.0
  %5942 = vmatpush1.msra.mxu0 %v5910
  %5943 = vmatprep.subr.mxu0 0.0
  %5944 = vmatpush1.msra.mxu0 %v5911
  %5945 = vmatprep.subr.mxu0 0.0
  %5946 = vmatpush1.msra.mxu0 %v5912
  %5947 = vmatprep.subr.mxu0 0.0
  %5948 = vmatpush1.msra.mxu0 %v5913
  %5949 = vmatprep.subr.mxu0 0.0
  %5950 = vmatpush1.msra.mxu0 %v5914
  %5951 = vmatprep.subr.mxu0 0.0
  %5952 = vmatpush1.msra.mxu0 %v5915
  %5953 = vmatprep.subr.mxu0 0.0
  %5954 = vmatpush1.msra.mxu0 %v5916
  %5955 = vmatprep.subr.mxu0 0.0
  %5956 = vmatpush1.msra.mxu0 %v5917
  %5957 = vmatprep.subr.mxu0 0.0
  %5958 = vmatpush1.msra.mxu0 0.0
  %5959 = vmatprep.subr.mxu0 0.0
  %5960 = vmatpush1.msra.mxu0 0.0
  %5961 = vmatprep.subr.mxu0 0.0
  %5962 = vmatpush1.msra.mxu0 0.0
  %5963 = vmatprep.subr.mxu0 0.0
  %5964 = vmatpush1.msra.mxu0 0.0
  %5965 = vmatprep.subr.mxu0 0.0
  %5966 = vmatpush1.msra.mxu0 0.0
  %5967 = vmatprep.subr.mxu0 0.0
  %5968 = vmatpush1.msra.mxu0 0.0
  %5969 = vmatprep.subr.mxu0 0.0
  %5970 = vmatpush1.msra.mxu0 0.0
  %5971 = vmatprep.subr.mxu0 0.0
  %5972 = vmatpush1.msra.mxu0 0.0
  %5973 = vmatprep.subr.mxu0 0.0
  %5974 = vmatpush1.msra.mxu0 0.0
  %5975 = vmatprep.subr.mxu0 0.0
  %5976 = vmatpush1.msra.mxu0 0.0
  %5977 = vmatprep.subr.mxu0 0.0
  %5978 = vmatpush1.msra.mxu0 0.0
  %5979 = vmatprep.subr.mxu0 0.0
  %5980 = vmatpush1.msra.mxu0 0.0
  %5981 = vmatprep.subr.mxu0 0.0
  %5982 = vmatpush1.msra.mxu0 0.0
  %5983 = vmatprep.subr.mxu0 0.0
  %5984 = vmatpush1.msra.mxu0 0.0
  %5985 = vmatprep.subr.mxu0 0.0
  %5986 = vmatpush1.msra.mxu0 0.0
  %5987 = vmatprep.subr.mxu0 0.0
  %5988 = vmatpush1.msra.mxu0 0.0
  %5989 = vmatprep.mubr.f32.mxu0 0.0
  %5990 = vmatmul.mubr.f32.gmra.mrb[0].mxu0 %v5900
  %v5991 = vpop.f32.mrb[0].mxu0
  %v5992 = vadd.f32 %v5923, %v5991
  %v5993 = vpop.f32.mrb[0].mxu0
  %5994 = vmatprep.mubr.f32.mxu0 0.0
  %5995 = vmatmul.mubr.f32.gmra.mrb[0].mxu0 %v5901
  %v5996 = vpop.f32.mrb[0].mxu0
  %v5997 = vadd.f32 %v5923, %v5996
  %v5998 = vpop.f32.mrb[0].mxu0
  %5999 = vdwg.mxu0
  %6000 = vst [vmem:[%s26] sm:$0xff] %v5992
  %6001 = vst [vmem:[%s26 + $0x8] sm:$0xff] %v5997
  // Predicated region
  $region106: #{_lambda_.1} parent=0 // pred_check
    _
  $region107: #{_lambda_.1} parent=0 // pred_check_branch
    %6003 = sbr.rel (0) target = $region109
  $region108: #{_lambda_.1} parent=0 // pred_region
    _
  $region109: #{_lambda_.1} parent=0 // pred_fallthru
    _
  // Predicated region
  $region110: #{_lambda_.1} parent=0 // pred_check
    _
  $region111: #{_lambda_.1} parent=0 // pred_check_branch
    %6005 = sbr.rel (0) target = $region113
  $region112: #{_lambda_.1} parent=0 // pred_region
    _
  $region113: #{_lambda_.1} parent=0 // pred_fallthru
    _

</llo_original>
